<compile_context>
chip_gen: v7x
topology: tpu7x:2x2x1
jax: 0.10.0
libtpu: 0.0.40
codegen_flags: <defaults>
</compile_context>

<pallas_src>
import numpy as np

import jax
import jax.numpy as jnp
from jax.experimental import pallas as pl
from jax.experimental.pallas import tpu as pltpu

EPS = 1e-5          # PyTorch BatchNorm2d default
NEG_SLOPE = 0.2     # LeakyReLU slope used by DCDiscriminator


def _leaky(y):
    return jnp.where(y > 0, y, NEG_SLOPE * y)


# ---------------------------------------------------------------------------
# In-kernel building blocks
# ---------------------------------------------------------------------------
def _conv_stride2(act, s_ref, a_ref):
    """4x4 / stride-2 / pad-1 conv on the packed layout.

    act:   [N*H,  W*Cin]        rows=(n, h),  lanes=(w, cin)
    s_ref: [4, N*Ho, N*H]       per-vertical-tap row selection (H stride + pad)
    a_ref: [4, W*Cin, Wo*Cout]  per-tap horizontal conv operator (W stride + pad)
    returns [N*Ho, Wo*Cout]     rows=(n, oh), lanes=(ow, cout)
    """
    acc = None
    for k in range(4):
        rows = jnp.dot(s_ref[k], act, preferred_element_type=jnp.float32)
        contrib = jnp.dot(rows, a_ref[k], preferred_element_type=jnp.float32)
        acc = contrib if acc is None else acc + contrib
    return acc


def _bn_lrelu(y, gb_ref, r_ref, rt_ref):
    """Training-mode BatchNorm2d (per channel over N,H,W) + LeakyReLU.

    y: [N*Ho, Wo*C]; gb: [2, C] = (gamma, beta); r: [Wo*C, C]; rt: [C, Wo*C].
    One-pass statistics: var = E[y^2] - mean^2 (biased, matches train mode).
    """
    c = gb_ref.shape[1]
    wo = y.shape[1] // c
    count = float(y.shape[0] * wo)                       # N * Ho * Wo
    s1 = jnp.sum(y, axis=0, keepdims=True)               # [1, Wo*C]
    s2 = jnp.sum(y * y, axis=0, keepdims=True)
    mean = jnp.dot(s1, r_ref[...], preferred_element_type=jnp.float32) / count
    msq = jnp.dot(s2, r_ref[...], preferred_element_type=jnp.float32) / count
    var = msq - mean * mean
    gb = gb_ref[...]
    scale = gb[0:1, :] * jax.lax.rsqrt(var + EPS)        # [1, C]
    shift = gb[1:2, :] - mean * scale
    scale_l = jnp.dot(scale, rt_ref[...], preferred_element_type=jnp.float32)
    shift_l = jnp.dot(shift, rt_ref[...], preferred_element_type=jnp.float32)
    return _leaky(y * scale_l + shift_l)


def dcdisc_kernel(x_ref,
                  s1_ref, a1_ref, b1_ref,
                  s2_ref, a2_ref, gb2_ref, r2_ref, rt2_ref,
                  s3_ref, a3_ref, gb3_ref, r3_ref, rt3_ref,
                  s4_ref, a4_ref, gb4_ref, r4_ref, rt4_ref,
                  w5_ref, g5_ref, b5_ref,
                  o_ref):
    """Entire DCDiscriminator forward, activations VMEM-resident."""
    act = x_ref[...]                                           # [N*64, 64*Cin]

    # conv1 (+ bias) + LeakyReLU   (no BN on the first layer)
    act = _leaky(_conv_stride2(act, s1_ref, a1_ref) + b1_ref[...])

    # conv2..conv4: conv + training-mode BN + LeakyReLU
    # (conv bias dropped -- BN mean subtraction cancels it exactly)
    act = _bn_lrelu(_conv_stride2(act, s2_ref, a2_ref), gb2_ref, r2_ref, rt2_ref)
    act = _bn_lrelu(_conv_stride2(act, s3_ref, a3_ref), gb3_ref, r3_ref, rt3_ref)
    act = _bn_lrelu(_conv_stride2(act, s4_ref, a4_ref), gb4_ref, r4_ref, rt4_ref)

    # conv5: full 4x4 window, Cout=1 -> one dot product per image (+ bias).
    z = act * w5_ref[...]                                      # [N*4, 4*C4]
    per_img = jnp.dot(g5_ref[...], z, preferred_element_type=jnp.float32)  # [N, 4*C4]
    o_ref[...] = jnp.sum(per_img, axis=1, keepdims=True) + b5_ref[...]     # [N, 1]


# ---------------------------------------------------------------------------
# Forward wrapper (the only XLA glue: one transpose/reshape of the input)
# ---------------------------------------------------------------------------
def dc_discriminator_forward(packed, x):
    """x: [N, num_channel, 64, 64] float32 (NCHW) -> [N] (after torch.squeeze)."""
    n, c, h, w = x.shape
    x2 = jnp.transpose(x, (0, 2, 3, 1)).reshape(n * h, w * c).astype(jnp.float32)

    def full_spec(shape):
        rank = len(shape)
        return pl.BlockSpec(shape, lambda i, _r=rank: (0,) * _r)

    in_specs = [full_spec(x2.shape)] + [full_spec(tuple(p.shape)) for p in packed]
    out = pl.pallas_call(
        dcdisc_kernel,
        out_shape=jax.ShapeDtypeStruct((n, 1), jnp.float32),
        grid=(1,),
        in_specs=in_specs,
        out_specs=pl.BlockSpec((n, 1), lambda i: (0, 0)),
        compiler_params=pltpu.CompilerParams(dimension_semantics=("arbitrary",)),
    )(x2, *packed)
    # conv5 output is [N,1,1,1] in PyTorch; torch.squeeze removes all 1-dims.
    return jnp.squeeze(out)


# ---------------------------------------------------------------------------
# One-time parameter packing (numpy, outside the jitted forward)
# ---------------------------------------------------------------------------
def pack_params(params, *, n_img, num_channel, height, width):
    def row_select(H, Ho):
        s = np.zeros((4, n_img * Ho, n_img * H), np.float32)
        for i in range(4):
            for n in range(n_img):
                for oh in range(Ho):
                    hh = 2 * oh + i - 1
                    if 0 <= hh < H:
                        s[i, n * Ho + oh, n * H + hh] = 1.0
        return s

    def conv_op(w, W, Wo):
        cout, cin = w.shape[0], w.shape[1]
        a = np.zeros((4, W * cin, Wo * cout), np.float32)
        for i in range(4):
            for ow in range(Wo):
                for j in range(4):
                    ww = 2 * ow + j - 1
                    if 0 <= ww < W:
                        # A[i, (w, ci), (ow, co)] = weight[co, ci, i, j]
                        a[i, ww * cin:(ww + 1) * cin,
                          ow * cout:(ow + 1) * cout] = w[:, :, i, j].T
        return a

    def chan_reduce(Wo, C):
        r = np.zeros((Wo * C, C), np.float32)
        for ow in range(Wo):
            r[ow * C:(ow + 1) * C, :] = np.eye(C, dtype=np.float32)
        return r

    packed = []
    H, W = height, width
    for li, name in enumerate(("conv1", "conv2", "conv3", "conv4")):
        w, b, gamma, beta = (np.asarray(t, np.float32) for t in params[name])
        cout = w.shape[0]
        Ho, Wo = H // 2, W // 2
        packed.append(jnp.asarray(row_select(H, Ho)))                 # S  [4, N*Ho, N*H]
        packed.append(jnp.asarray(conv_op(w, W, Wo)))                 # A  [4, W*Cin, Wo*Cout]
        if li == 0:
            packed.append(jnp.asarray(np.tile(b, Wo)[None, :]))       # bias lanes [1, Wo*Cout]
        else:
            # Conv bias dropped: training-mode BN mean subtraction cancels it.
            packed.append(jnp.asarray(np.stack([gamma, beta])))       # [2, Cout]
            r = chan_reduce(Wo, cout)
            packed.append(jnp.asarray(r))                             # [Wo*Cout, Cout]
            packed.append(jnp.asarray(np.ascontiguousarray(r.T)))     # [Cout, Wo*Cout]
        H, W = Ho, Wo

    # conv5: 4x4 / stride 1 / pad 0 on the 4x4 conv4 output.
    w5, b5, _, _ = (np.asarray(t, np.float32) for t in params["conv5"])
    c4 = w5.shape[1]
    w5_rows = w5[0].transpose(1, 2, 0).reshape(4, 4 * c4)             # [i, j*C4 + ci]
    packed.append(jnp.asarray(np.tile(w5_rows, (n_img, 1))))          # [N*4, 4*C4]
    g = np.zeros((n_img, n_img * 4), np.float32)
    for n in range(n_img):
        g[n, n * 4:(n + 1) * 4] = 1.0
    packed.append(jnp.asarray(g))                                     # [N, N*4]
    packed.append(jnp.asarray(b5.reshape(1, 1)))                      # [1, 1]
    return tuple(packed)


# ---------------------------------------------------------------------------
# Parameters + pure-XLA reference (for the self check)
# ---------------------------------------------------------------------------
def init_params(key, num_channel=1, d=8):
    """PyTorch-layout params; biases / BN affine randomized so the self check
    below exercises every code path (forward semantics are init-independent)."""
    def conv_p(k, cout, cin, ksz):
        kw, kb, kg, kt = jax.random.split(k, 4)
        w = jax.random.normal(kw, (cout, cin, ksz, ksz), jnp.float32) * 0.02
        b = 0.1 * jax.random.normal(kb, (cout,), jnp.float32)
        gamma = 1.0 + 0.1 * jax.random.normal(kg, (cout,), jnp.float32)
        beta = 0.1 * jax.random.normal(kt, (cout,), jnp.float32)
        return (w, b, gamma, beta)

    ks = jax.random.split(key, 5)
    return {
        "conv1": conv_p(ks[0], d,     num_channel, 4),
        "conv2": conv_p(ks[1], d * 2, d,           4),
        "conv3": conv_p(ks[2], d * 4, d * 2,       4),
        "conv4": conv_p(ks[3], d * 8, d * 4,       4),
        "conv5": conv_p(ks[4], 1,     d * 8,       4),
    }


def reference_forward(params, x):
    """Plain-XLA replica of DCDiscriminator.forward (training-mode BN)."""
    def conv(h, w, b, stride, pad):
        y = jax.lax.conv_general_dilated(
            h, w, window_strides=(stride, stride),
            padding=((pad, pad), (pad, pad)),
            dimension_numbers=("NCHW", "OIHW", "NCHW"))
        return y + b[None, :, None, None]

    def bn(y, gamma, beta):
        mean = jnp.mean(y, axis=(0, 2, 3), keepdims=True)
        var = jnp.mean(jnp.square(y - mean), axis=(0, 2, 3), keepdims=True)
        yhat = (y - mean) * jax.lax.rsqrt(var + EPS)
        return yhat * gamma[None, :, None, None] + beta[None, :, None, None]

    w1, b1, _, _ = params["conv1"]
    w2, b2, g2, t2 = params["conv2"]
    w3, b3, g3, t3 = params["conv3"]
    w4, b4, g4, t4 = params["conv4"]
    w5, b5, _, _ = params["conv5"]
    h = _leaky(conv(x, w1, b1, 2, 1))
    h = _leaky(bn(conv(h, w2, b2, 2, 1), g2, t2))
    h = _leaky(bn(conv(h, w3, b3, 2, 1), g3, t3))
    h = _leaky(bn(conv(h, w4, b4, 2, 1), g4, t4))
    h = conv(h, w5, b5, 1, 0)
    return jnp.squeeze(h)


if __name__ == "__main__":
    key = jax.random.PRNGKey(0)
    k_param, k_data = jax.random.split(key)

    # DCGAN discriminator needs 64x64 spatial (64->32->16->8->4->1);
    # small-but-consistent sizes: batch=2, num_channel=1, d=8.
    N, num_channel, d, S = 2, 1, 8, 64
    params = init_params(k_param, num_channel=num_channel, d=d)
    packed = pack_params(params, n_img=N, num_channel=num_channel, height=S, width=S)
    x = jax.random.normal(k_data, (N, num_channel, S, S), jnp.float32)

    fwd = jax.jit(dc_discriminator_forward)
    out = jax.block_until_ready(fwd(packed, x))

    assert out.shape == (N,), f"unexpected output shape {out.shape}"
    assert bool(jnp.all(jnp.isfinite(out))), "non-finite output"

    # Semantics check against the plain-XLA reference of the PyTorch forward.
    ref = jax.block_until_ready(jax.jit(reference_forward)(params, x))
    assert np.allclose(np.asarray(out), np.asarray(ref), rtol=5e-2, atol=3e-2), (
        f"kernel/reference mismatch: {np.asarray(out)} vs {np.asarray(ref)}")

    print("KERNEL_OK")
</pallas_src>

<mosaic_0001>
module attributes {stable_mosaic.version = 11 : i64} {
  func.func @dcdisc_kernel(%arg0: i32, %arg1: memref<128x64xf32, #tpu.memory_space<vmem>>, %arg2: memref<4x64x128xf32, #tpu.memory_space<vmem>>, %arg3: memref<4x64x256xf32, #tpu.memory_space<vmem>>, %arg4: memref<1x256xf32, #tpu.memory_space<vmem>>, %arg5: memref<4x32x64xf32, #tpu.memory_space<vmem>>, %arg6: memref<4x256x256xf32, #tpu.memory_space<vmem>>, %arg7: memref<2x16xf32, #tpu.memory_space<vmem>>, %arg8: memref<256x16xf32, #tpu.memory_space<vmem>>, %arg9: memref<16x256xf32, #tpu.memory_space<vmem>>, %arg10: memref<4x16x32xf32, #tpu.memory_space<vmem>>, %arg11: memref<4x256x256xf32, #tpu.memory_space<vmem>>, %arg12: memref<2x32xf32, #tpu.memory_space<vmem>>, %arg13: memref<256x32xf32, #tpu.memory_space<vmem>>, %arg14: memref<32x256xf32, #tpu.memory_space<vmem>>, %arg15: memref<4x8x16xf32, #tpu.memory_space<vmem>>, %arg16: memref<4x256x256xf32, #tpu.memory_space<vmem>>, %arg17: memref<2x64xf32, #tpu.memory_space<vmem>>, %arg18: memref<256x64xf32, #tpu.memory_space<vmem>>, %arg19: memref<64x256xf32, #tpu.memory_space<vmem>>, %arg20: memref<8x256xf32, #tpu.memory_space<vmem>>, %arg21: memref<2x8xf32, #tpu.memory_space<vmem>>, %arg22: memref<1x1xf32, #tpu.memory_space<vmem>>, %arg23: memref<2x1xf32, #tpu.memory_space<vmem>>) attributes {dimension_semantics = [#tpu.dimension_semantics<arbitrary>], iteration_bounds = array<i64: 1>, scalar_prefetch = 0 : i64, scratch_operands = 0 : i64, tpu.core_type = #tpu.core_type<tc>, window_params = [{pipeline_mode = #tpu.pipeline_mode<synchronous>, transform_indices = @transform_0, window_bounds = array<i64: 128, 64>}, {pipeline_mode = #tpu.pipeline_mode<synchronous>, transform_indices = @transform_1, window_bounds = array<i64: 4, 64, 128>}, {pipeline_mode = #tpu.pipeline_mode<synchronous>, transform_indices = @transform_2, window_bounds = array<i64: 4, 64, 256>}, {pipeline_mode = #tpu.pipeline_mode<synchronous>, transform_indices = @transform_3, window_bounds = array<i64: 1, 256>}, {pipeline_mode = #tpu.pipeline_mode<synchronous>, transform_indices = @transform_4, window_bounds = array<i64: 4, 32, 64>}, {pipeline_mode = #tpu.pipeline_mode<synchronous>, transform_indices = @transform_5, window_bounds = array<i64: 4, 256, 256>}, {pipeline_mode = #tpu.pipeline_mode<synchronous>, transform_indices = @transform_6, window_bounds = array<i64: 2, 16>}, {pipeline_mode = #tpu.pipeline_mode<synchronous>, transform_indices = @transform_7, window_bounds = array<i64: 256, 16>}, {pipeline_mode = #tpu.pipeline_mode<synchronous>, transform_indices = @transform_8, window_bounds = array<i64: 16, 256>}, {pipeline_mode = #tpu.pipeline_mode<synchronous>, transform_indices = @transform_9, window_bounds = array<i64: 4, 16, 32>}, {pipeline_mode = #tpu.pipeline_mode<synchronous>, transform_indices = @transform_10, window_bounds = array<i64: 4, 256, 256>}, {pipeline_mode = #tpu.pipeline_mode<synchronous>, transform_indices = @transform_11, window_bounds = array<i64: 2, 32>}, {pipeline_mode = #tpu.pipeline_mode<synchronous>, transform_indices = @transform_12, window_bounds = array<i64: 256, 32>}, {pipeline_mode = #tpu.pipeline_mode<synchronous>, transform_indices = @transform_13, window_bounds = array<i64: 32, 256>}, {pipeline_mode = #tpu.pipeline_mode<synchronous>, transform_indices = @transform_14, window_bounds = array<i64: 4, 8, 16>}, {pipeline_mode = #tpu.pipeline_mode<synchronous>, transform_indices = @transform_15, window_bounds = array<i64: 4, 256, 256>}, {pipeline_mode = #tpu.pipeline_mode<synchronous>, transform_indices = @transform_16, window_bounds = array<i64: 2, 64>}, {pipeline_mode = #tpu.pipeline_mode<synchronous>, transform_indices = @transform_17, window_bounds = array<i64: 256, 64>}, {pipeline_mode = #tpu.pipeline_mode<synchronous>, transform_indices = @transform_18, window_bounds = array<i64: 64, 256>}, {pipeline_mode = #tpu.pipeline_mode<synchronous>, transform_indices = @transform_19, window_bounds = array<i64: 8, 256>}, {pipeline_mode = #tpu.pipeline_mode<synchronous>, transform_indices = @transform_20, window_bounds = array<i64: 2, 8>}, {pipeline_mode = #tpu.pipeline_mode<synchronous>, transform_indices = @transform_21, window_bounds = array<i64: 1, 1>}, {pipeline_mode = #tpu.pipeline_mode<synchronous>, transform_indices = @transform_22, window_bounds = array<i64: 2, 1>}]} {
    %c0 = arith.constant 0 : index
    %c0_0 = arith.constant 0 : index
    %0 = vector.load %arg1[%c0, %c0_0] : memref<128x64xf32, #tpu.memory_space<vmem>>, vector<128x64xf32>
    %c0_1 = arith.constant 0 : index
    %c0_2 = arith.constant 0 : index
    %c0_3 = arith.constant 0 : index
    %1 = vector.load %arg2[%c0_1, %c0_2, %c0_3] : memref<4x64x128xf32, #tpu.memory_space<vmem>>, vector<1x64x128xf32>
    %2 = vector.shape_cast %1 : vector<1x64x128xf32> to vector<64x128xf32>
    %cst = arith.constant dense<0.000000e+00> : vector<64x64xf32>
    %3 = tpu.matmul %2, %0, %cst {dimension_numbers = #tpu.dot_dimension_numbers<[1], [0], [0], [1], [0, 0, 1, 1], [], []>} : vector<64x128xf32>, vector<128x64xf32>, vector<64x64xf32> -> vector<64x64xf32>
    %c0_4 = arith.constant 0 : index
    %c0_5 = arith.constant 0 : index
    %c0_6 = arith.constant 0 : index
    %4 = vector.load %arg3[%c0_4, %c0_5, %c0_6] : memref<4x64x256xf32, #tpu.memory_space<vmem>>, vector<1x64x256xf32>
    %5 = vector.shape_cast %4 : vector<1x64x256xf32> to vector<64x256xf32>
    %cst_7 = arith.constant dense<0.000000e+00> : vector<64x256xf32>
    %6 = tpu.matmul %3, %5, %cst_7 {dimension_numbers = #tpu.dot_dimension_numbers<[1], [0], [0], [1], [0, 0, 1, 1], [], []>} : vector<64x64xf32>, vector<64x256xf32>, vector<64x256xf32> -> vector<64x256xf32>
    %c1 = arith.constant 1 : index
    %c0_8 = arith.constant 0 : index
    %c0_9 = arith.constant 0 : index
    %7 = vector.load %arg2[%c1, %c0_8, %c0_9] : memref<4x64x128xf32, #tpu.memory_space<vmem>>, vector<1x64x128xf32>
    %8 = vector.shape_cast %7 : vector<1x64x128xf32> to vector<64x128xf32>
    %cst_10 = arith.constant dense<0.000000e+00> : vector<64x64xf32>
    %9 = tpu.matmul %8, %0, %cst_10 {dimension_numbers = #tpu.dot_dimension_numbers<[1], [0], [0], [1], [0, 0, 1, 1], [], []>} : vector<64x128xf32>, vector<128x64xf32>, vector<64x64xf32> -> vector<64x64xf32>
    %c1_11 = arith.constant 1 : index
    %c0_12 = arith.constant 0 : index
    %c0_13 = arith.constant 0 : index
    %10 = vector.load %arg3[%c1_11, %c0_12, %c0_13] : memref<4x64x256xf32, #tpu.memory_space<vmem>>, vector<1x64x256xf32>
    %11 = vector.shape_cast %10 : vector<1x64x256xf32> to vector<64x256xf32>
    %cst_14 = arith.constant dense<0.000000e+00> : vector<64x256xf32>
    %12 = tpu.matmul %9, %11, %cst_14 {dimension_numbers = #tpu.dot_dimension_numbers<[1], [0], [0], [1], [0, 0, 1, 1], [], []>} : vector<64x64xf32>, vector<64x256xf32>, vector<64x256xf32> -> vector<64x256xf32>
    %13 = arith.addf %6, %12 : vector<64x256xf32>
    %c2 = arith.constant 2 : index
    %c0_15 = arith.constant 0 : index
    %c0_16 = arith.constant 0 : index
    %14 = vector.load %arg2[%c2, %c0_15, %c0_16] : memref<4x64x128xf32, #tpu.memory_space<vmem>>, vector<1x64x128xf32>
    %15 = vector.shape_cast %14 : vector<1x64x128xf32> to vector<64x128xf32>
    %cst_17 = arith.constant dense<0.000000e+00> : vector<64x64xf32>
    %16 = tpu.matmul %15, %0, %cst_17 {dimension_numbers = #tpu.dot_dimension_numbers<[1], [0], [0], [1], [0, 0, 1, 1], [], []>} : vector<64x128xf32>, vector<128x64xf32>, vector<64x64xf32> -> vector<64x64xf32>
    %c2_18 = arith.constant 2 : index
    %c0_19 = arith.constant 0 : index
    %c0_20 = arith.constant 0 : index
    %17 = vector.load %arg3[%c2_18, %c0_19, %c0_20] : memref<4x64x256xf32, #tpu.memory_space<vmem>>, vector<1x64x256xf32>
    %18 = vector.shape_cast %17 : vector<1x64x256xf32> to vector<64x256xf32>
    %cst_21 = arith.constant dense<0.000000e+00> : vector<64x256xf32>
    %19 = tpu.matmul %16, %18, %cst_21 {dimension_numbers = #tpu.dot_dimension_numbers<[1], [0], [0], [1], [0, 0, 1, 1], [], []>} : vector<64x64xf32>, vector<64x256xf32>, vector<64x256xf32> -> vector<64x256xf32>
    %20 = arith.addf %13, %19 : vector<64x256xf32>
    %c3 = arith.constant 3 : index
    %c0_22 = arith.constant 0 : index
    %c0_23 = arith.constant 0 : index
    %21 = vector.load %arg2[%c3, %c0_22, %c0_23] : memref<4x64x128xf32, #tpu.memory_space<vmem>>, vector<1x64x128xf32>
    %22 = vector.shape_cast %21 : vector<1x64x128xf32> to vector<64x128xf32>
    %cst_24 = arith.constant dense<0.000000e+00> : vector<64x64xf32>
    %23 = tpu.matmul %22, %0, %cst_24 {dimension_numbers = #tpu.dot_dimension_numbers<[1], [0], [0], [1], [0, 0, 1, 1], [], []>} : vector<64x128xf32>, vector<128x64xf32>, vector<64x64xf32> -> vector<64x64xf32>
    %c3_25 = arith.constant 3 : index
    %c0_26 = arith.constant 0 : index
    %c0_27 = arith.constant 0 : index
    %24 = vector.load %arg3[%c3_25, %c0_26, %c0_27] : memref<4x64x256xf32, #tpu.memory_space<vmem>>, vector<1x64x256xf32>
    %25 = vector.shape_cast %24 : vector<1x64x256xf32> to vector<64x256xf32>
    %cst_28 = arith.constant dense<0.000000e+00> : vector<64x256xf32>
    %26 = tpu.matmul %23, %25, %cst_28 {dimension_numbers = #tpu.dot_dimension_numbers<[1], [0], [0], [1], [0, 0, 1, 1], [], []>} : vector<64x64xf32>, vector<64x256xf32>, vector<64x256xf32> -> vector<64x256xf32>
    %27 = arith.addf %20, %26 : vector<64x256xf32>
    %c0_29 = arith.constant 0 : index
    %c0_30 = arith.constant 0 : index
    %28 = vector.load %arg4[%c0_29, %c0_30] : memref<1x256xf32, #tpu.memory_space<vmem>>, vector<1x256xf32>
    %29 = vector.broadcast %28 : vector<1x256xf32> to vector<64x256xf32>
    %30 = arith.addf %27, %29 : vector<64x256xf32>
    %cst_31 = arith.constant 0.000000e+00 : f32
    %31 = vector.broadcast %cst_31 : f32 to vector<64x256xf32>
    %32 = arith.cmpf ogt, %30, %31 : vector<64x256xf32>
    %cst_32 = arith.constant 2.000000e-01 : f32
    %33 = vector.broadcast %cst_32 : f32 to vector<64x256xf32>
    %34 = arith.mulf %33, %30 : vector<64x256xf32>
    %35 = arith.select %32, %30, %34 : vector<64x256xi1>, vector<64x256xf32>
    %c0_33 = arith.constant 0 : index
    %c0_34 = arith.constant 0 : index
    %c0_35 = arith.constant 0 : index
    %36 = vector.load %arg5[%c0_33, %c0_34, %c0_35] : memref<4x32x64xf32, #tpu.memory_space<vmem>>, vector<1x32x64xf32>
    %37 = vector.shape_cast %36 : vector<1x32x64xf32> to vector<32x64xf32>
    %cst_36 = arith.constant dense<0.000000e+00> : vector<32x256xf32>
    %38 = tpu.matmul %37, %35, %cst_36 {dimension_numbers = #tpu.dot_dimension_numbers<[1], [0], [0], [1], [0, 0, 1, 1], [], []>} : vector<32x64xf32>, vector<64x256xf32>, vector<32x256xf32> -> vector<32x256xf32>
    %c0_37 = arith.constant 0 : index
    %c0_38 = arith.constant 0 : index
    %c0_39 = arith.constant 0 : index
    %39 = vector.load %arg6[%c0_37, %c0_38, %c0_39] : memref<4x256x256xf32, #tpu.memory_space<vmem>>, vector<1x256x256xf32>
    %40 = vector.shape_cast %39 : vector<1x256x256xf32> to vector<256x256xf32>
    %cst_40 = arith.constant dense<0.000000e+00> : vector<32x256xf32>
    %41 = tpu.matmul %38, %40, %cst_40 {dimension_numbers = #tpu.dot_dimension_numbers<[1], [0], [0], [1], [0, 0, 1, 1], [], []>} : vector<32x256xf32>, vector<256x256xf32>, vector<32x256xf32> -> vector<32x256xf32>
    %c1_41 = arith.constant 1 : index
    %c0_42 = arith.constant 0 : index
    %c0_43 = arith.constant 0 : index
    %42 = vector.load %arg5[%c1_41, %c0_42, %c0_43] : memref<4x32x64xf32, #tpu.memory_space<vmem>>, vector<1x32x64xf32>
    %43 = vector.shape_cast %42 : vector<1x32x64xf32> to vector<32x64xf32>
    %cst_44 = arith.constant dense<0.000000e+00> : vector<32x256xf32>
    %44 = tpu.matmul %43, %35, %cst_44 {dimension_numbers = #tpu.dot_dimension_numbers<[1], [0], [0], [1], [0, 0, 1, 1], [], []>} : vector<32x64xf32>, vector<64x256xf32>, vector<32x256xf32> -> vector<32x256xf32>
    %c1_45 = arith.constant 1 : index
    %c0_46 = arith.constant 0 : index
    %c0_47 = arith.constant 0 : index
    %45 = vector.load %arg6[%c1_45, %c0_46, %c0_47] : memref<4x256x256xf32, #tpu.memory_space<vmem>>, vector<1x256x256xf32>
    %46 = vector.shape_cast %45 : vector<1x256x256xf32> to vector<256x256xf32>
    %cst_48 = arith.constant dense<0.000000e+00> : vector<32x256xf32>
    %47 = tpu.matmul %44, %46, %cst_48 {dimension_numbers = #tpu.dot_dimension_numbers<[1], [0], [0], [1], [0, 0, 1, 1], [], []>} : vector<32x256xf32>, vector<256x256xf32>, vector<32x256xf32> -> vector<32x256xf32>
    %48 = arith.addf %41, %47 : vector<32x256xf32>
    %c2_49 = arith.constant 2 : index
    %c0_50 = arith.constant 0 : index
    %c0_51 = arith.constant 0 : index
    %49 = vector.load %arg5[%c2_49, %c0_50, %c0_51] : memref<4x32x64xf32, #tpu.memory_space<vmem>>, vector<1x32x64xf32>
    %50 = vector.shape_cast %49 : vector<1x32x64xf32> to vector<32x64xf32>
    %cst_52 = arith.constant dense<0.000000e+00> : vector<32x256xf32>
    %51 = tpu.matmul %50, %35, %cst_52 {dimension_numbers = #tpu.dot_dimension_numbers<[1], [0], [0], [1], [0, 0, 1, 1], [], []>} : vector<32x64xf32>, vector<64x256xf32>, vector<32x256xf32> -> vector<32x256xf32>
    %c2_53 = arith.constant 2 : index
    %c0_54 = arith.constant 0 : index
    %c0_55 = arith.constant 0 : index
    %52 = vector.load %arg6[%c2_53, %c0_54, %c0_55] : memref<4x256x256xf32, #tpu.memory_space<vmem>>, vector<1x256x256xf32>
    %53 = vector.shape_cast %52 : vector<1x256x256xf32> to vector<256x256xf32>
    %cst_56 = arith.constant dense<0.000000e+00> : vector<32x256xf32>
    %54 = tpu.matmul %51, %53, %cst_56 {dimension_numbers = #tpu.dot_dimension_numbers<[1], [0], [0], [1], [0, 0, 1, 1], [], []>} : vector<32x256xf32>, vector<256x256xf32>, vector<32x256xf32> -> vector<32x256xf32>
    %55 = arith.addf %48, %54 : vector<32x256xf32>
    %c3_57 = arith.constant 3 : index
    %c0_58 = arith.constant 0 : index
    %c0_59 = arith.constant 0 : index
    %56 = vector.load %arg5[%c3_57, %c0_58, %c0_59] : memref<4x32x64xf32, #tpu.memory_space<vmem>>, vector<1x32x64xf32>
    %57 = vector.shape_cast %56 : vector<1x32x64xf32> to vector<32x64xf32>
    %cst_60 = arith.constant dense<0.000000e+00> : vector<32x256xf32>
    %58 = tpu.matmul %57, %35, %cst_60 {dimension_numbers = #tpu.dot_dimension_numbers<[1], [0], [0], [1], [0, 0, 1, 1], [], []>} : vector<32x64xf32>, vector<64x256xf32>, vector<32x256xf32> -> vector<32x256xf32>
    %c3_61 = arith.constant 3 : index
    %c0_62 = arith.constant 0 : index
    %c0_63 = arith.constant 0 : index
    %59 = vector.load %arg6[%c3_61, %c0_62, %c0_63] : memref<4x256x256xf32, #tpu.memory_space<vmem>>, vector<1x256x256xf32>
    %60 = vector.shape_cast %59 : vector<1x256x256xf32> to vector<256x256xf32>
    %cst_64 = arith.constant dense<0.000000e+00> : vector<32x256xf32>
    %61 = tpu.matmul %58, %60, %cst_64 {dimension_numbers = #tpu.dot_dimension_numbers<[1], [0], [0], [1], [0, 0, 1, 1], [], []>} : vector<32x256xf32>, vector<256x256xf32>, vector<32x256xf32> -> vector<32x256xf32>
    %62 = arith.addf %55, %61 : vector<32x256xf32>
    %cst_65 = arith.constant dense<0.000000e+00> : vector<256xf32>
    %63 = vector.multi_reduction <add>, %62, %cst_65 [0] : vector<32x256xf32> to vector<256xf32>
    %64 = vector.shape_cast %63 : vector<256xf32> to vector<1x256xf32>
    %65 = arith.mulf %62, %62 : vector<32x256xf32>
    %cst_66 = arith.constant dense<0.000000e+00> : vector<256xf32>
    %66 = vector.multi_reduction <add>, %65, %cst_66 [0] : vector<32x256xf32> to vector<256xf32>
    %67 = vector.shape_cast %66 : vector<256xf32> to vector<1x256xf32>
    %c0_67 = arith.constant 0 : index
    %c0_68 = arith.constant 0 : index
    %68 = vector.load %arg8[%c0_67, %c0_68] : memref<256x16xf32, #tpu.memory_space<vmem>>, vector<256x16xf32>
    %cst_69 = arith.constant dense<0.000000e+00> : vector<1x16xf32>
    %69 = tpu.matmul %64, %68, %cst_69 {dimension_numbers = #tpu.dot_dimension_numbers<[1], [0], [0], [1], [0, 0, 1, 1], [], []>} : vector<1x256xf32>, vector<256x16xf32>, vector<1x16xf32> -> vector<1x16xf32>
    %cst_70 = arith.constant 5.120000e+02 : f32
    %70 = vector.broadcast %cst_70 : f32 to vector<1x16xf32>
    %71 = arith.divf %69, %70 : vector<1x16xf32>
    %c0_71 = arith.constant 0 : index
    %c0_72 = arith.constant 0 : index
    %72 = vector.load %arg8[%c0_71, %c0_72] : memref<256x16xf32, #tpu.memory_space<vmem>>, vector<256x16xf32>
    %cst_73 = arith.constant dense<0.000000e+00> : vector<1x16xf32>
    %73 = tpu.matmul %67, %72, %cst_73 {dimension_numbers = #tpu.dot_dimension_numbers<[1], [0], [0], [1], [0, 0, 1, 1], [], []>} : vector<1x256xf32>, vector<256x16xf32>, vector<1x16xf32> -> vector<1x16xf32>
    %cst_74 = arith.constant 5.120000e+02 : f32
    %74 = vector.broadcast %cst_74 : f32 to vector<1x16xf32>
    %75 = arith.divf %73, %74 : vector<1x16xf32>
    %76 = arith.mulf %71, %71 : vector<1x16xf32>
    %77 = arith.subf %75, %76 : vector<1x16xf32>
    %c0_75 = arith.constant 0 : index
    %c0_76 = arith.constant 0 : index
    %78 = vector.load %arg7[%c0_75, %c0_76] : memref<2x16xf32, #tpu.memory_space<vmem>>, vector<2x16xf32>
    %79 = vector.extract_strided_slice %78 {offsets = [0, 0], sizes = [1, 16], strides = [1, 1]} : vector<2x16xf32> to vector<1x16xf32>
    %cst_77 = arith.constant 9.99999974E-6 : f32
    %80 = vector.broadcast %cst_77 : f32 to vector<1x16xf32>
    %81 = arith.addf %77, %80 : vector<1x16xf32>
    %82 = math.rsqrt %81 : vector<1x16xf32>
    %83 = arith.mulf %79, %82 : vector<1x16xf32>
    %84 = vector.extract_strided_slice %78 {offsets = [1, 0], sizes = [1, 16], strides = [1, 1]} : vector<2x16xf32> to vector<1x16xf32>
    %85 = arith.mulf %71, %83 : vector<1x16xf32>
    %86 = arith.subf %84, %85 : vector<1x16xf32>
    %c0_78 = arith.constant 0 : index
    %c0_79 = arith.constant 0 : index
    %87 = vector.load %arg9[%c0_78, %c0_79] : memref<16x256xf32, #tpu.memory_space<vmem>>, vector<16x256xf32>
    %cst_80 = arith.constant dense<0.000000e+00> : vector<1x256xf32>
    %88 = tpu.matmul %83, %87, %cst_80 {dimension_numbers = #tpu.dot_dimension_numbers<[1], [0], [0], [1], [0, 0, 1, 1], [], []>} : vector<1x16xf32>, vector<16x256xf32>, vector<1x256xf32> -> vector<1x256xf32>
    %c0_81 = arith.constant 0 : index
    %c0_82 = arith.constant 0 : index
    %89 = vector.load %arg9[%c0_81, %c0_82] : memref<16x256xf32, #tpu.memory_space<vmem>>, vector<16x256xf32>
    %cst_83 = arith.constant dense<0.000000e+00> : vector<1x256xf32>
    %90 = tpu.matmul %86, %89, %cst_83 {dimension_numbers = #tpu.dot_dimension_numbers<[1], [0], [0], [1], [0, 0, 1, 1], [], []>} : vector<1x16xf32>, vector<16x256xf32>, vector<1x256xf32> -> vector<1x256xf32>
    %91 = vector.broadcast %88 : vector<1x256xf32> to vector<32x256xf32>
    %92 = arith.mulf %62, %91 : vector<32x256xf32>
    %93 = vector.broadcast %90 : vector<1x256xf32> to vector<32x256xf32>
    %94 = arith.addf %92, %93 : vector<32x256xf32>
    %cst_84 = arith.constant 0.000000e+00 : f32
    %95 = vector.broadcast %cst_84 : f32 to vector<32x256xf32>
    %96 = arith.cmpf ogt, %94, %95 : vector<32x256xf32>
    %cst_85 = arith.constant 2.000000e-01 : f32
    %97 = vector.broadcast %cst_85 : f32 to vector<32x256xf32>
    %98 = arith.mulf %97, %94 : vector<32x256xf32>
    %99 = arith.select %96, %94, %98 : vector<32x256xi1>, vector<32x256xf32>
    %c0_86 = arith.constant 0 : index
    %c0_87 = arith.constant 0 : index
    %c0_88 = arith.constant 0 : index
    %100 = vector.load %arg10[%c0_86, %c0_87, %c0_88] : memref<4x16x32xf32, #tpu.memory_space<vmem>>, vector<1x16x32xf32>
    %101 = vector.shape_cast %100 : vector<1x16x32xf32> to vector<16x32xf32>
    %cst_89 = arith.constant dense<0.000000e+00> : vector<16x256xf32>
    %102 = tpu.matmul %101, %99, %cst_89 {dimension_numbers = #tpu.dot_dimension_numbers<[1], [0], [0], [1], [0, 0, 1, 1], [], []>} : vector<16x32xf32>, vector<32x256xf32>, vector<16x256xf32> -> vector<16x256xf32>
    %c0_90 = arith.constant 0 : index
    %c0_91 = arith.constant 0 : index
    %c0_92 = arith.constant 0 : index
    %103 = vector.load %arg11[%c0_90, %c0_91, %c0_92] : memref<4x256x256xf32, #tpu.memory_space<vmem>>, vector<1x256x256xf32>
    %104 = vector.shape_cast %103 : vector<1x256x256xf32> to vector<256x256xf32>
    %cst_93 = arith.constant dense<0.000000e+00> : vector<16x256xf32>
    %105 = tpu.matmul %102, %104, %cst_93 {dimension_numbers = #tpu.dot_dimension_numbers<[1], [0], [0], [1], [0, 0, 1, 1], [], []>} : vector<16x256xf32>, vector<256x256xf32>, vector<16x256xf32> -> vector<16x256xf32>
    %c1_94 = arith.constant 1 : index
    %c0_95 = arith.constant 0 : index
    %c0_96 = arith.constant 0 : index
    %106 = vector.load %arg10[%c1_94, %c0_95, %c0_96] : memref<4x16x32xf32, #tpu.memory_space<vmem>>, vector<1x16x32xf32>
    %107 = vector.shape_cast %106 : vector<1x16x32xf32> to vector<16x32xf32>
    %cst_97 = arith.constant dense<0.000000e+00> : vector<16x256xf32>
    %108 = tpu.matmul %107, %99, %cst_97 {dimension_numbers = #tpu.dot_dimension_numbers<[1], [0], [0], [1], [0, 0, 1, 1], [], []>} : vector<16x32xf32>, vector<32x256xf32>, vector<16x256xf32> -> vector<16x256xf32>
    %c1_98 = arith.constant 1 : index
    %c0_99 = arith.constant 0 : index
    %c0_100 = arith.constant 0 : index
    %109 = vector.load %arg11[%c1_98, %c0_99, %c0_100] : memref<4x256x256xf32, #tpu.memory_space<vmem>>, vector<1x256x256xf32>
    %110 = vector.shape_cast %109 : vector<1x256x256xf32> to vector<256x256xf32>
    %cst_101 = arith.constant dense<0.000000e+00> : vector<16x256xf32>
    %111 = tpu.matmul %108, %110, %cst_101 {dimension_numbers = #tpu.dot_dimension_numbers<[1], [0], [0], [1], [0, 0, 1, 1], [], []>} : vector<16x256xf32>, vector<256x256xf32>, vector<16x256xf32> -> vector<16x256xf32>
    %112 = arith.addf %105, %111 : vector<16x256xf32>
    %c2_102 = arith.constant 2 : index
    %c0_103 = arith.constant 0 : index
    %c0_104 = arith.constant 0 : index
    %113 = vector.load %arg10[%c2_102, %c0_103, %c0_104] : memref<4x16x32xf32, #tpu.memory_space<vmem>>, vector<1x16x32xf32>
    %114 = vector.shape_cast %113 : vector<1x16x32xf32> to vector<16x32xf32>
    %cst_105 = arith.constant dense<0.000000e+00> : vector<16x256xf32>
    %115 = tpu.matmul %114, %99, %cst_105 {dimension_numbers = #tpu.dot_dimension_numbers<[1], [0], [0], [1], [0, 0, 1, 1], [], []>} : vector<16x32xf32>, vector<32x256xf32>, vector<16x256xf32> -> vector<16x256xf32>
    %c2_106 = arith.constant 2 : index
    %c0_107 = arith.constant 0 : index
    %c0_108 = arith.constant 0 : index
    %116 = vector.load %arg11[%c2_106, %c0_107, %c0_108] : memref<4x256x256xf32, #tpu.memory_space<vmem>>, vector<1x256x256xf32>
    %117 = vector.shape_cast %116 : vector<1x256x256xf32> to vector<256x256xf32>
    %cst_109 = arith.constant dense<0.000000e+00> : vector<16x256xf32>
    %118 = tpu.matmul %115, %117, %cst_109 {dimension_numbers = #tpu.dot_dimension_numbers<[1], [0], [0], [1], [0, 0, 1, 1], [], []>} : vector<16x256xf32>, vector<256x256xf32>, vector<16x256xf32> -> vector<16x256xf32>
    %119 = arith.addf %112, %118 : vector<16x256xf32>
    %c3_110 = arith.constant 3 : index
    %c0_111 = arith.constant 0 : index
    %c0_112 = arith.constant 0 : index
    %120 = vector.load %arg10[%c3_110, %c0_111, %c0_112] : memref<4x16x32xf32, #tpu.memory_space<vmem>>, vector<1x16x32xf32>
    %121 = vector.shape_cast %120 : vector<1x16x32xf32> to vector<16x32xf32>
    %cst_113 = arith.constant dense<0.000000e+00> : vector<16x256xf32>
    %122 = tpu.matmul %121, %99, %cst_113 {dimension_numbers = #tpu.dot_dimension_numbers<[1], [0], [0], [1], [0, 0, 1, 1], [], []>} : vector<16x32xf32>, vector<32x256xf32>, vector<16x256xf32> -> vector<16x256xf32>
    %c3_114 = arith.constant 3 : index
    %c0_115 = arith.constant 0 : index
    %c0_116 = arith.constant 0 : index
    %123 = vector.load %arg11[%c3_114, %c0_115, %c0_116] : memref<4x256x256xf32, #tpu.memory_space<vmem>>, vector<1x256x256xf32>
    %124 = vector.shape_cast %123 : vector<1x256x256xf32> to vector<256x256xf32>
    %cst_117 = arith.constant dense<0.000000e+00> : vector<16x256xf32>
    %125 = tpu.matmul %122, %124, %cst_117 {dimension_numbers = #tpu.dot_dimension_numbers<[1], [0], [0], [1], [0, 0, 1, 1], [], []>} : vector<16x256xf32>, vector<256x256xf32>, vector<16x256xf32> -> vector<16x256xf32>
    %126 = arith.addf %119, %125 : vector<16x256xf32>
    %cst_118 = arith.constant dense<0.000000e+00> : vector<256xf32>
    %127 = vector.multi_reduction <add>, %126, %cst_118 [0] : vector<16x256xf32> to vector<256xf32>
    %128 = vector.shape_cast %127 : vector<256xf32> to vector<1x256xf32>
    %129 = arith.mulf %126, %126 : vector<16x256xf32>
    %cst_119 = arith.constant dense<0.000000e+00> : vector<256xf32>
    %130 = vector.multi_reduction <add>, %129, %cst_119 [0] : vector<16x256xf32> to vector<256xf32>
    %131 = vector.shape_cast %130 : vector<256xf32> to vector<1x256xf32>
    %c0_120 = arith.constant 0 : index
    %c0_121 = arith.constant 0 : index
    %132 = vector.load %arg13[%c0_120, %c0_121] : memref<256x32xf32, #tpu.memory_space<vmem>>, vector<256x32xf32>
    %cst_122 = arith.constant dense<0.000000e+00> : vector<1x32xf32>
    %133 = tpu.matmul %128, %132, %cst_122 {dimension_numbers = #tpu.dot_dimension_numbers<[1], [0], [0], [1], [0, 0, 1, 1], [], []>} : vector<1x256xf32>, vector<256x32xf32>, vector<1x32xf32> -> vector<1x32xf32>
    %cst_123 = arith.constant 1.280000e+02 : f32
    %134 = vector.broadcast %cst_123 : f32 to vector<1x32xf32>
    %135 = arith.divf %133, %134 : vector<1x32xf32>
    %c0_124 = arith.constant 0 : index
    %c0_125 = arith.constant 0 : index
    %136 = vector.load %arg13[%c0_124, %c0_125] : memref<256x32xf32, #tpu.memory_space<vmem>>, vector<256x32xf32>
    %cst_126 = arith.constant dense<0.000000e+00> : vector<1x32xf32>
    %137 = tpu.matmul %131, %136, %cst_126 {dimension_numbers = #tpu.dot_dimension_numbers<[1], [0], [0], [1], [0, 0, 1, 1], [], []>} : vector<1x256xf32>, vector<256x32xf32>, vector<1x32xf32> -> vector<1x32xf32>
    %cst_127 = arith.constant 1.280000e+02 : f32
    %138 = vector.broadcast %cst_127 : f32 to vector<1x32xf32>
    %139 = arith.divf %137, %138 : vector<1x32xf32>
    %140 = arith.mulf %135, %135 : vector<1x32xf32>
    %141 = arith.subf %139, %140 : vector<1x32xf32>
    %c0_128 = arith.constant 0 : index
    %c0_129 = arith.constant 0 : index
    %142 = vector.load %arg12[%c0_128, %c0_129] : memref<2x32xf32, #tpu.memory_space<vmem>>, vector<2x32xf32>
    %143 = vector.extract_strided_slice %142 {offsets = [0, 0], sizes = [1, 32], strides = [1, 1]} : vector<2x32xf32> to vector<1x32xf32>
    %cst_130 = arith.constant 9.99999974E-6 : f32
    %144 = vector.broadcast %cst_130 : f32 to vector<1x32xf32>
    %145 = arith.addf %141, %144 : vector<1x32xf32>
    %146 = math.rsqrt %145 : vector<1x32xf32>
    %147 = arith.mulf %143, %146 : vector<1x32xf32>
    %148 = vector.extract_strided_slice %142 {offsets = [1, 0], sizes = [1, 32], strides = [1, 1]} : vector<2x32xf32> to vector<1x32xf32>
    %149 = arith.mulf %135, %147 : vector<1x32xf32>
    %150 = arith.subf %148, %149 : vector<1x32xf32>
    %c0_131 = arith.constant 0 : index
    %c0_132 = arith.constant 0 : index
    %151 = vector.load %arg14[%c0_131, %c0_132] : memref<32x256xf32, #tpu.memory_space<vmem>>, vector<32x256xf32>
    %cst_133 = arith.constant dense<0.000000e+00> : vector<1x256xf32>
    %152 = tpu.matmul %147, %151, %cst_133 {dimension_numbers = #tpu.dot_dimension_numbers<[1], [0], [0], [1], [0, 0, 1, 1], [], []>} : vector<1x32xf32>, vector<32x256xf32>, vector<1x256xf32> -> vector<1x256xf32>
    %c0_134 = arith.constant 0 : index
    %c0_135 = arith.constant 0 : index
    %153 = vector.load %arg14[%c0_134, %c0_135] : memref<32x256xf32, #tpu.memory_space<vmem>>, vector<32x256xf32>
    %cst_136 = arith.constant dense<0.000000e+00> : vector<1x256xf32>
    %154 = tpu.matmul %150, %153, %cst_136 {dimension_numbers = #tpu.dot_dimension_numbers<[1], [0], [0], [1], [0, 0, 1, 1], [], []>} : vector<1x32xf32>, vector<32x256xf32>, vector<1x256xf32> -> vector<1x256xf32>
    %155 = vector.broadcast %152 : vector<1x256xf32> to vector<16x256xf32>
    %156 = arith.mulf %126, %155 : vector<16x256xf32>
    %157 = vector.broadcast %154 : vector<1x256xf32> to vector<16x256xf32>
    %158 = arith.addf %156, %157 : vector<16x256xf32>
    %cst_137 = arith.constant 0.000000e+00 : f32
    %159 = vector.broadcast %cst_137 : f32 to vector<16x256xf32>
    %160 = arith.cmpf ogt, %158, %159 : vector<16x256xf32>
    %cst_138 = arith.constant 2.000000e-01 : f32
    %161 = vector.broadcast %cst_138 : f32 to vector<16x256xf32>
    %162 = arith.mulf %161, %158 : vector<16x256xf32>
    %163 = arith.select %160, %158, %162 : vector<16x256xi1>, vector<16x256xf32>
    %c0_139 = arith.constant 0 : index
    %c0_140 = arith.constant 0 : index
    %c0_141 = arith.constant 0 : index
    %164 = vector.load %arg15[%c0_139, %c0_140, %c0_141] : memref<4x8x16xf32, #tpu.memory_space<vmem>>, vector<1x8x16xf32>
    %165 = vector.shape_cast %164 : vector<1x8x16xf32> to vector<8x16xf32>
    %cst_142 = arith.constant dense<0.000000e+00> : vector<8x256xf32>
    %166 = tpu.matmul %165, %163, %cst_142 {dimension_numbers = #tpu.dot_dimension_numbers<[1], [0], [0], [1], [0, 0, 1, 1], [], []>} : vector<8x16xf32>, vector<16x256xf32>, vector<8x256xf32> -> vector<8x256xf32>
    %c0_143 = arith.constant 0 : index
    %c0_144 = arith.constant 0 : index
    %c0_145 = arith.constant 0 : index
    %167 = vector.load %arg16[%c0_143, %c0_144, %c0_145] : memref<4x256x256xf32, #tpu.memory_space<vmem>>, vector<1x256x256xf32>
    %168 = vector.shape_cast %167 : vector<1x256x256xf32> to vector<256x256xf32>
    %cst_146 = arith.constant dense<0.000000e+00> : vector<8x256xf32>
    %169 = tpu.matmul %166, %168, %cst_146 {dimension_numbers = #tpu.dot_dimension_numbers<[1], [0], [0], [1], [0, 0, 1, 1], [], []>} : vector<8x256xf32>, vector<256x256xf32>, vector<8x256xf32> -> vector<8x256xf32>
    %c1_147 = arith.constant 1 : index
    %c0_148 = arith.constant 0 : index
    %c0_149 = arith.constant 0 : index
    %170 = vector.load %arg15[%c1_147, %c0_148, %c0_149] : memref<4x8x16xf32, #tpu.memory_space<vmem>>, vector<1x8x16xf32>
    %171 = vector.shape_cast %170 : vector<1x8x16xf32> to vector<8x16xf32>
    %cst_150 = arith.constant dense<0.000000e+00> : vector<8x256xf32>
    %172 = tpu.matmul %171, %163, %cst_150 {dimension_numbers = #tpu.dot_dimension_numbers<[1], [0], [0], [1], [0, 0, 1, 1], [], []>} : vector<8x16xf32>, vector<16x256xf32>, vector<8x256xf32> -> vector<8x256xf32>
    %c1_151 = arith.constant 1 : index
    %c0_152 = arith.constant 0 : index
    %c0_153 = arith.constant 0 : index
    %173 = vector.load %arg16[%c1_151, %c0_152, %c0_153] : memref<4x256x256xf32, #tpu.memory_space<vmem>>, vector<1x256x256xf32>
    %174 = vector.shape_cast %173 : vector<1x256x256xf32> to vector<256x256xf32>
    %cst_154 = arith.constant dense<0.000000e+00> : vector<8x256xf32>
    %175 = tpu.matmul %172, %174, %cst_154 {dimension_numbers = #tpu.dot_dimension_numbers<[1], [0], [0], [1], [0, 0, 1, 1], [], []>} : vector<8x256xf32>, vector<256x256xf32>, vector<8x256xf32> -> vector<8x256xf32>
    %176 = arith.addf %169, %175 : vector<8x256xf32>
    %c2_155 = arith.constant 2 : index
    %c0_156 = arith.constant 0 : index
    %c0_157 = arith.constant 0 : index
    %177 = vector.load %arg15[%c2_155, %c0_156, %c0_157] : memref<4x8x16xf32, #tpu.memory_space<vmem>>, vector<1x8x16xf32>
    %178 = vector.shape_cast %177 : vector<1x8x16xf32> to vector<8x16xf32>
    %cst_158 = arith.constant dense<0.000000e+00> : vector<8x256xf32>
    %179 = tpu.matmul %178, %163, %cst_158 {dimension_numbers = #tpu.dot_dimension_numbers<[1], [0], [0], [1], [0, 0, 1, 1], [], []>} : vector<8x16xf32>, vector<16x256xf32>, vector<8x256xf32> -> vector<8x256xf32>
    %c2_159 = arith.constant 2 : index
    %c0_160 = arith.constant 0 : index
    %c0_161 = arith.constant 0 : index
    %180 = vector.load %arg16[%c2_159, %c0_160, %c0_161] : memref<4x256x256xf32, #tpu.memory_space<vmem>>, vector<1x256x256xf32>
    %181 = vector.shape_cast %180 : vector<1x256x256xf32> to vector<256x256xf32>
    %cst_162 = arith.constant dense<0.000000e+00> : vector<8x256xf32>
    %182 = tpu.matmul %179, %181, %cst_162 {dimension_numbers = #tpu.dot_dimension_numbers<[1], [0], [0], [1], [0, 0, 1, 1], [], []>} : vector<8x256xf32>, vector<256x256xf32>, vector<8x256xf32> -> vector<8x256xf32>
    %183 = arith.addf %176, %182 : vector<8x256xf32>
    %c3_163 = arith.constant 3 : index
    %c0_164 = arith.constant 0 : index
    %c0_165 = arith.constant 0 : index
    %184 = vector.load %arg15[%c3_163, %c0_164, %c0_165] : memref<4x8x16xf32, #tpu.memory_space<vmem>>, vector<1x8x16xf32>
    %185 = vector.shape_cast %184 : vector<1x8x16xf32> to vector<8x16xf32>
    %cst_166 = arith.constant dense<0.000000e+00> : vector<8x256xf32>
    %186 = tpu.matmul %185, %163, %cst_166 {dimension_numbers = #tpu.dot_dimension_numbers<[1], [0], [0], [1], [0, 0, 1, 1], [], []>} : vector<8x16xf32>, vector<16x256xf32>, vector<8x256xf32> -> vector<8x256xf32>
    %c3_167 = arith.constant 3 : index
    %c0_168 = arith.constant 0 : index
    %c0_169 = arith.constant 0 : index
    %187 = vector.load %arg16[%c3_167, %c0_168, %c0_169] : memref<4x256x256xf32, #tpu.memory_space<vmem>>, vector<1x256x256xf32>
    %188 = vector.shape_cast %187 : vector<1x256x256xf32> to vector<256x256xf32>
    %cst_170 = arith.constant dense<0.000000e+00> : vector<8x256xf32>
    %189 = tpu.matmul %186, %188, %cst_170 {dimension_numbers = #tpu.dot_dimension_numbers<[1], [0], [0], [1], [0, 0, 1, 1], [], []>} : vector<8x256xf32>, vector<256x256xf32>, vector<8x256xf32> -> vector<8x256xf32>
    %190 = arith.addf %183, %189 : vector<8x256xf32>
    %cst_171 = arith.constant dense<0.000000e+00> : vector<256xf32>
    %191 = vector.multi_reduction <add>, %190, %cst_171 [0] : vector<8x256xf32> to vector<256xf32>
    %192 = vector.shape_cast %191 : vector<256xf32> to vector<1x256xf32>
    %193 = arith.mulf %190, %190 : vector<8x256xf32>
    %cst_172 = arith.constant dense<0.000000e+00> : vector<256xf32>
    %194 = vector.multi_reduction <add>, %193, %cst_172 [0] : vector<8x256xf32> to vector<256xf32>
    %195 = vector.shape_cast %194 : vector<256xf32> to vector<1x256xf32>
    %c0_173 = arith.constant 0 : index
    %c0_174 = arith.constant 0 : index
    %196 = vector.load %arg18[%c0_173, %c0_174] : memref<256x64xf32, #tpu.memory_space<vmem>>, vector<256x64xf32>
    %cst_175 = arith.constant dense<0.000000e+00> : vector<1x64xf32>
    %197 = tpu.matmul %192, %196, %cst_175 {dimension_numbers = #tpu.dot_dimension_numbers<[1], [0], [0], [1], [0, 0, 1, 1], [], []>} : vector<1x256xf32>, vector<256x64xf32>, vector<1x64xf32> -> vector<1x64xf32>
    %cst_176 = arith.constant 3.200000e+01 : f32
    %198 = vector.broadcast %cst_176 : f32 to vector<1x64xf32>
    %199 = arith.divf %197, %198 : vector<1x64xf32>
    %c0_177 = arith.constant 0 : index
    %c0_178 = arith.constant 0 : index
    %200 = vector.load %arg18[%c0_177, %c0_178] : memref<256x64xf32, #tpu.memory_space<vmem>>, vector<256x64xf32>
    %cst_179 = arith.constant dense<0.000000e+00> : vector<1x64xf32>
    %201 = tpu.matmul %195, %200, %cst_179 {dimension_numbers = #tpu.dot_dimension_numbers<[1], [0], [0], [1], [0, 0, 1, 1], [], []>} : vector<1x256xf32>, vector<256x64xf32>, vector<1x64xf32> -> vector<1x64xf32>
    %cst_180 = arith.constant 3.200000e+01 : f32
    %202 = vector.broadcast %cst_180 : f32 to vector<1x64xf32>
    %203 = arith.divf %201, %202 : vector<1x64xf32>
    %204 = arith.mulf %199, %199 : vector<1x64xf32>
    %205 = arith.subf %203, %204 : vector<1x64xf32>
    %c0_181 = arith.constant 0 : index
    %c0_182 = arith.constant 0 : index
    %206 = vector.load %arg17[%c0_181, %c0_182] : memref<2x64xf32, #tpu.memory_space<vmem>>, vector<2x64xf32>
    %207 = vector.extract_strided_slice %206 {offsets = [0, 0], sizes = [1, 64], strides = [1, 1]} : vector<2x64xf32> to vector<1x64xf32>
    %cst_183 = arith.constant 9.99999974E-6 : f32
    %208 = vector.broadcast %cst_183 : f32 to vector<1x64xf32>
    %209 = arith.addf %205, %208 : vector<1x64xf32>
    %210 = math.rsqrt %209 : vector<1x64xf32>
    %211 = arith.mulf %207, %210 : vector<1x64xf32>
    %212 = vector.extract_strided_slice %206 {offsets = [1, 0], sizes = [1, 64], strides = [1, 1]} : vector<2x64xf32> to vector<1x64xf32>
    %213 = arith.mulf %199, %211 : vector<1x64xf32>
    %214 = arith.subf %212, %213 : vector<1x64xf32>
    %c0_184 = arith.constant 0 : index
    %c0_185 = arith.constant 0 : index
    %215 = vector.load %arg19[%c0_184, %c0_185] : memref<64x256xf32, #tpu.memory_space<vmem>>, vector<64x256xf32>
    %cst_186 = arith.constant dense<0.000000e+00> : vector<1x256xf32>
    %216 = tpu.matmul %211, %215, %cst_186 {dimension_numbers = #tpu.dot_dimension_numbers<[1], [0], [0], [1], [0, 0, 1, 1], [], []>} : vector<1x64xf32>, vector<64x256xf32>, vector<1x256xf32> -> vector<1x256xf32>
    %c0_187 = arith.constant 0 : index
    %c0_188 = arith.constant 0 : index
    %217 = vector.load %arg19[%c0_187, %c0_188] : memref<64x256xf32, #tpu.memory_space<vmem>>, vector<64x256xf32>
    %cst_189 = arith.constant dense<0.000000e+00> : vector<1x256xf32>
    %218 = tpu.matmul %214, %217, %cst_189 {dimension_numbers = #tpu.dot_dimension_numbers<[1], [0], [0], [1], [0, 0, 1, 1], [], []>} : vector<1x64xf32>, vector<64x256xf32>, vector<1x256xf32> -> vector<1x256xf32>
    %219 = vector.broadcast %216 : vector<1x256xf32> to vector<8x256xf32>
    %220 = arith.mulf %190, %219 : vector<8x256xf32>
    %221 = vector.broadcast %218 : vector<1x256xf32> to vector<8x256xf32>
    %222 = arith.addf %220, %221 : vector<8x256xf32>
    %cst_190 = arith.constant 0.000000e+00 : f32
    %223 = vector.broadcast %cst_190 : f32 to vector<8x256xf32>
    %224 = arith.cmpf ogt, %222, %223 : vector<8x256xf32>
    %cst_191 = arith.constant 2.000000e-01 : f32
    %225 = vector.broadcast %cst_191 : f32 to vector<8x256xf32>
    %226 = arith.mulf %225, %222 : vector<8x256xf32>
    %227 = arith.select %224, %222, %226 : vector<8x256xi1>, vector<8x256xf32>
    %c0_192 = arith.constant 0 : index
    %c0_193 = arith.constant 0 : index
    %228 = vector.load %arg20[%c0_192, %c0_193] : memref<8x256xf32, #tpu.memory_space<vmem>>, vector<8x256xf32>
    %229 = arith.mulf %227, %228 : vector<8x256xf32>
    %c0_194 = arith.constant 0 : index
    %c0_195 = arith.constant 0 : index
    %230 = vector.load %arg21[%c0_194, %c0_195] : memref<2x8xf32, #tpu.memory_space<vmem>>, vector<2x8xf32>
    %cst_196 = arith.constant dense<0.000000e+00> : vector<2x256xf32>
    %231 = tpu.matmul %230, %229, %cst_196 {dimension_numbers = #tpu.dot_dimension_numbers<[1], [0], [0], [1], [0, 0, 1, 1], [], []>} : vector<2x8xf32>, vector<8x256xf32>, vector<2x256xf32> -> vector<2x256xf32>
    %cst_197 = arith.constant dense<0.000000e+00> : vector<2xf32>
    %232 = vector.multi_reduction <add>, %231, %cst_197 [1] : vector<2x256xf32> to vector<2xf32>
    %233 = vector.shape_cast %232 : vector<2xf32> to vector<2x1xf32>
    %c0_198 = arith.constant 0 : index
    %c0_199 = arith.constant 0 : index
    %234 = vector.load %arg22[%c0_198, %c0_199] : memref<1x1xf32, #tpu.memory_space<vmem>>, vector<1x1xf32>
    %235 = vector.broadcast %234 : vector<1x1xf32> to vector<2x1xf32>
    %236 = arith.addf %233, %235 : vector<2x1xf32>
    %c0_200 = arith.constant 0 : index
    %c0_201 = arith.constant 0 : index
    %237 = vector.load %arg23[%c0_200, %c0_201] : memref<2x1xf32, #tpu.memory_space<vmem>>, vector<2x1xf32>
    tpu.vector_store %arg23[%c0_200, %c0_201], %236 {strides = array<i32>} : memref<2x1xf32, #tpu.memory_space<vmem>>, vector<2x1xf32>,
    return
  }
  func.func @transform_0(%arg0: i32) -> (i32, i32) {
    %c0_i32 = arith.constant 0 : i32
    %c0_i32_0 = arith.constant 0 : i32
    %c0_i32_1 = arith.constant 0 : i32
    return %c0_i32, %c0_i32_0 : i32, i32
  }
  func.func @transform_1(%arg0: i32) -> (i32, i32, i32) {
    %c0_i32 = arith.constant 0 : i32
    %c0_i32_0 = arith.constant 0 : i32
    %c0_i32_1 = arith.constant 0 : i32
    %c0_i32_2 = arith.constant 0 : i32
    return %c0_i32, %c0_i32_0, %c0_i32_1 : i32, i32, i32
  }
  func.func @transform_2(%arg0: i32) -> (i32, i32, i32) {
    %c0_i32 = arith.constant 0 : i32
    %c0_i32_0 = arith.constant 0 : i32
    %c0_i32_1 = arith.constant 0 : i32
    %c0_i32_2 = arith.constant 0 : i32
    return %c0_i32, %c0_i32_0, %c0_i32_1 : i32, i32, i32
  }
  func.func @transform_3(%arg0: i32) -> (i32, i32) {
    %c0_i32 = arith.constant 0 : i32
    %c0_i32_0 = arith.constant 0 : i32
    %c0_i32_1 = arith.constant 0 : i32
    return %c0_i32, %c0_i32_0 : i32, i32
  }
  func.func @transform_4(%arg0: i32) -> (i32, i32, i32) {
    %c0_i32 = arith.constant 0 : i32
    %c0_i32_0 = arith.constant 0 : i32
    %c0_i32_1 = arith.constant 0 : i32
    %c0_i32_2 = arith.constant 0 : i32
    return %c0_i32, %c0_i32_0, %c0_i32_1 : i32, i32, i32
  }
  func.func @transform_5(%arg0: i32) -> (i32, i32, i32) {
    %c0_i32 = arith.constant 0 : i32
    %c0_i32_0 = arith.constant 0 : i32
    %c0_i32_1 = arith.constant 0 : i32
    %c0_i32_2 = arith.constant 0 : i32
    return %c0_i32, %c0_i32_0, %c0_i32_1 : i32, i32, i32
  }
  func.func @transform_6(%arg0: i32) -> (i32, i32) {
    %c0_i32 = arith.constant 0 : i32
    %c0_i32_0 = arith.constant 0 : i32
    %c0_i32_1 = arith.constant 0 : i32
    return %c0_i32, %c0_i32_0 : i32, i32
  }
  func.func @transform_7(%arg0: i32) -> (i32, i32) {
    %c0_i32 = arith.constant 0 : i32
    %c0_i32_0 = arith.constant 0 : i32
    %c0_i32_1 = arith.constant 0 : i32
    return %c0_i32, %c0_i32_0 : i32, i32
  }
  func.func @transform_8(%arg0: i32) -> (i32, i32) {
    %c0_i32 = arith.constant 0 : i32
    %c0_i32_0 = arith.constant 0 : i32
    %c0_i32_1 = arith.constant 0 : i32
    return %c0_i32, %c0_i32_0 : i32, i32
  }
  func.func @transform_9(%arg0: i32) -> (i32, i32, i32) {
    %c0_i32 = arith.constant 0 : i32
    %c0_i32_0 = arith.constant 0 : i32
    %c0_i32_1 = arith.constant 0 : i32
    %c0_i32_2 = arith.constant 0 : i32
    return %c0_i32, %c0_i32_0, %c0_i32_1 : i32, i32, i32
  }
  func.func @transform_10(%arg0: i32) -> (i32, i32, i32) {
    %c0_i32 = arith.constant 0 : i32
    %c0_i32_0 = arith.constant 0 : i32
    %c0_i32_1 = arith.constant 0 : i32
    %c0_i32_2 = arith.constant 0 : i32
    return %c0_i32, %c0_i32_0, %c0_i32_1 : i32, i32, i32
  }
  func.func @transform_11(%arg0: i32) -> (i32, i32) {
    %c0_i32 = arith.constant 0 : i32
    %c0_i32_0 = arith.constant 0 : i32
    %c0_i32_1 = arith.constant 0 : i32
    return %c0_i32, %c0_i32_0 : i32, i32
  }
  func.func @transform_12(%arg0: i32) -> (i32, i32) {
    %c0_i32 = arith.constant 0 : i32
    %c0_i32_0 = arith.constant 0 : i32
    %c0_i32_1 = arith.constant 0 : i32
    return %c0_i32, %c0_i32_0 : i32, i32
  }
  func.func @transform_13(%arg0: i32) -> (i32, i32) {
    %c0_i32 = arith.constant 0 : i32
    %c0_i32_0 = arith.constant 0 : i32
    %c0_i32_1 = arith.constant 0 : i32
    return %c0_i32, %c0_i32_0 : i32, i32
  }
  func.func @transform_14(%arg0: i32) -> (i32, i32, i32) {
    %c0_i32 = arith.constant 0 : i32
    %c0_i32_0 = arith.constant 0 : i32
    %c0_i32_1 = arith.constant 0 : i32
    %c0_i32_2 = arith.constant 0 : i32
    return %c0_i32, %c0_i32_0, %c0_i32_1 : i32, i32, i32
  }
  func.func @transform_15(%arg0: i32) -> (i32, i32, i32) {
    %c0_i32 = arith.constant 0 : i32
    %c0_i32_0 = arith.constant 0 : i32
    %c0_i32_1 = arith.constant 0 : i32
    %c0_i32_2 = arith.constant 0 : i32
    return %c0_i32, %c0_i32_0, %c0_i32_1 : i32, i32, i32
  }
  func.func @transform_16(%arg0: i32) -> (i32, i32) {
    %c0_i32 = arith.constant 0 : i32
    %c0_i32_0 = arith.constant 0 : i32
    %c0_i32_1 = arith.constant 0 : i32
    return %c0_i32, %c0_i32_0 : i32, i32
  }
  func.func @transform_17(%arg0: i32) -> (i32, i32) {
    %c0_i32 = arith.constant 0 : i32
    %c0_i32_0 = arith.constant 0 : i32
    %c0_i32_1 = arith.constant 0 : i32
    return %c0_i32, %c0_i32_0 : i32, i32
  }
  func.func @transform_18(%arg0: i32) -> (i32, i32) {
    %c0_i32 = arith.constant 0 : i32
    %c0_i32_0 = arith.constant 0 : i32
    %c0_i32_1 = arith.constant 0 : i32
    return %c0_i32, %c0_i32_0 : i32, i32
  }
  func.func @transform_19(%arg0: i32) -> (i32, i32) {
    %c0_i32 = arith.constant 0 : i32
    %c0_i32_0 = arith.constant 0 : i32
    %c0_i32_1 = arith.constant 0 : i32
    return %c0_i32, %c0_i32_0 : i32, i32
  }
  func.func @transform_20(%arg0: i32) -> (i32, i32) {
    %c0_i32 = arith.constant 0 : i32
    %c0_i32_0 = arith.constant 0 : i32
    %c0_i32_1 = arith.constant 0 : i32
    return %c0_i32, %c0_i32_0 : i32, i32
  }
  func.func @transform_21(%arg0: i32) -> (i32, i32) {
    %c0_i32 = arith.constant 0 : i32
    %c0_i32_0 = arith.constant 0 : i32
    %c0_i32_1 = arith.constant 0 : i32
    return %c0_i32, %c0_i32_0 : i32, i32
  }
  func.func @transform_22(%arg0: i32) -> (i32, i32) {
    %c0_i32 = arith.constant 0 : i32
    %c0_i32_0 = arith.constant 0 : i32
    %c0_i32_1 = arith.constant 0 : i32
    return %c0_i32, %c0_i32_0 : i32, i32
  }
}

</mosaic_0001>

<llo_original>
// kernel: dc_discriminator_forward.1
$region0: #{dc_discriminator_forward.1}
  #allocation0 [shape = 'u32[]', space=smem, size = 0x4, offset = 0x4, fixed_abs, tag = 'smem constant byte address 0x4 - core index']
  #allocation1 [shape = 'u32[144,128]{1,0:T(1,128)}', space=vmem, size = 0x12000, scoped, tag = 'internal scratch']
  #allocation2 [shape = 'f32[1,1]{1,0:T(1,128)S(1)}', space=vmem, size = 0x200, scoped, tag = 'scoped memory for dc_discriminator_forward.1']
  %s0 = inlined_call_operand.vmem [shape: f32[128,64], index: 0, kind: input, shape index: {}]
  %s1 = inlined_call_operand.vmem [shape: f32[4,64,128], index: 1, kind: input, shape index: {}]
  %s2 = inlined_call_operand.vmem [shape: f32[4,64,256], index: 2, kind: input, shape index: {}]
  %s3 = inlined_call_operand.vmem [shape: f32[1,256], index: 3, kind: input, shape index: {}]
  %s4 = inlined_call_operand.hbm [shape: f32[4,32,64], index: 4, kind: input, shape index: {}]
  %s5 = inlined_call_operand.hbm [shape: f32[4,256,256], index: 5, kind: input, shape index: {}]
  %s6 = inlined_call_operand.hbm [shape: f32[2,16], index: 6, kind: input, shape index: {}]
  %s7 = inlined_call_operand.vmem [shape: f32[256,16], index: 7, kind: input, shape index: {}]
  %s8 = inlined_call_operand.hbm [shape: f32[16,256], index: 8, kind: input, shape index: {}]
  %s9 = inlined_call_operand.hbm [shape: f32[4,16,32], index: 9, kind: input, shape index: {}]
  %s10 = inlined_call_operand.hbm [shape: f32[4,256,256], index: 10, kind: input, shape index: {}]
  %s11 = inlined_call_operand.vmem [shape: f32[2,32], index: 11, kind: input, shape index: {}]
  %s12 = inlined_call_operand.vmem [shape: f32[256,32], index: 12, kind: input, shape index: {}]
  %s13 = inlined_call_operand.hbm [shape: f32[32,256], index: 13, kind: input, shape index: {}]
  %s14 = inlined_call_operand.hbm [shape: f32[4,8,16], index: 14, kind: input, shape index: {}]
  %s15 = inlined_call_operand.hbm [shape: f32[4,256,256], index: 15, kind: input, shape index: {}]
  %s16 = inlined_call_operand.vmem [shape: f32[2,64], index: 16, kind: input, shape index: {}]
  %s17 = inlined_call_operand.vmem [shape: f32[256,64], index: 17, kind: input, shape index: {}]
  %s18 = inlined_call_operand.vmem [shape: f32[64,256], index: 18, kind: input, shape index: {}]
  %s19 = inlined_call_operand.vmem [shape: f32[8,256], index: 19, kind: input, shape index: {}]
  %s20 = inlined_call_operand.vmem [shape: f32[2,8], index: 20, kind: input, shape index: {}]
  %s21 = inlined_call_operand.<no memory space> [shape: f32[1,1], index: 21, kind: input, shape index: {}]
  %s22 = inlined_call_operand.vmem [shape: f32[2,1], index: 22, kind: output, shape index: {}]
  %s23 = sld [smem:[#allocation0]]
  $region134: #{dc_discriminator_forward.1} parent=0
    _
  %s25 = ssub.s32 1, %s23
  %s26 = scalar_select 0, %s25, %s23
  %v27 = vstv %s21
  %28 = vst [vmem:[#allocation2] sm:$0x1] %v27
  $region1: #{dc_discriminator_forward.1} parent=0
    #allocation3 [shape = 'u8[65536]{0}', space=vmem, size = 0x10000, scoped, tag = 'input window, operand 4, single buffered']
    #allocation4 [shape = 's32[1]{0}', space=sflag, size = 0x4, scoped, tag = 'scoped memory for dc_discriminator_forward.1']
    #allocation5 [shape = 'u8[1048576]{0}', space=vmem, size = 0x100000, scoped, tag = 'input window, operand 5, single buffered']
    #allocation6 [shape = 's32[1]{0}', space=sflag, size = 0x4, scoped, tag = 'scoped memory for dc_discriminator_forward.1']
    #allocation7 [shape = 'u8[1024]{0}', space=vmem, size = 0x400, scoped, tag = 'input window, operand 6, single buffered']
    #allocation8 [shape = 'u8[16384]{0}', space=vmem, size = 0x4000, scoped, tag = 'input window, operand 8, single buffered']
    #allocation9 [shape = 's32[1]{0}', space=sflag, size = 0x4, scoped, tag = 'scoped memory for dc_discriminator_forward.1']
    #allocation10 [shape = 'u8[32768]{0}', space=vmem, size = 0x8000, scoped, tag = 'input window, operand 9, single buffered']
    #allocation11 [shape = 'u8[1048576]{0}', space=vmem, size = 0x100000, scoped, tag = 'input window, operand 10, single buffered']
    #allocation12 [shape = 's32[1]{0}', space=sflag, size = 0x4, scoped, tag = 'scoped memory for dc_discriminator_forward.1']
    #allocation13 [shape = 'u8[32768]{0}', space=vmem, size = 0x8000, scoped, tag = 'input window, operand 13, single buffered']
    #allocation14 [shape = 'u8[16384]{0}', space=vmem, size = 0x4000, scoped, tag = 'input window, operand 14, single buffered']
    #allocation15 [shape = 's32[1]{0}', space=sflag, size = 0x4, scoped, tag = 'scoped memory for dc_discriminator_forward.1']
    #allocation16 [shape = 'u8[1048576]{0}', space=vmem, size = 0x100000, scoped, tag = 'input window, operand 15, single buffered']
    %29 = vsyncpa [#allocation4], 0
    %30 = vsyncpa [#allocation6], 0
    %31 = vsyncpa [#allocation9], 0
    %32 = vsyncpa [#allocation12], 0
    %33 = vsyncpa [#allocation15], 0
    // Predicated region
    $region2: #{dc_discriminator_forward.1} parent=1 // pred_check
      _
    $region3: #{dc_discriminator_forward.1} parent=1 // pred_check_branch
      %35 = sbr.rel (0) target = $region5
    $region4: #{dc_discriminator_forward.1} parent=1 // pred_region
      _
    $region5: #{dc_discriminator_forward.1} parent=1 // pred_fallthru
      _
    // Predicated region
    $region6: #{dc_discriminator_forward.1} parent=1 // pred_check
      _
    $region7: #{dc_discriminator_forward.1} parent=1 // pred_check_branch
      %37 = sbr.rel (0) target = $region9
    $region8: #{dc_discriminator_forward.1} parent=1 // pred_region
      _
    $region9: #{dc_discriminator_forward.1} parent=1 // pred_fallthru
      _
    // Predicated region
    $region10: #{dc_discriminator_forward.1} parent=1 // pred_check
      _
    $region11: #{dc_discriminator_forward.1} parent=1 // pred_check_branch
      %39 = sbr.rel (0) target = $region13
    $region12: #{dc_discriminator_forward.1} parent=1 // pred_region
      _
    $region13: #{dc_discriminator_forward.1} parent=1 // pred_fallthru
      _
    // Predicated region
    $region14: #{dc_discriminator_forward.1} parent=1 // pred_check
      _
    $region15: #{dc_discriminator_forward.1} parent=1 // pred_check_branch
      %41 = sbr.rel (0) target = $region17
    $region16: #{dc_discriminator_forward.1} parent=1 // pred_region
      _
    $region17: #{dc_discriminator_forward.1} parent=1 // pred_fallthru
      _
    // Predicated region
    $region18: #{dc_discriminator_forward.1} parent=1 // pred_check
      _
    $region19: #{dc_discriminator_forward.1} parent=1 // pred_check_branch
      %43 = sbr.rel (0) target = $region21
    $region20: #{dc_discriminator_forward.1} parent=1 // pred_region
      %s45 = ssub.s32 2048, 2048
      %46 = vsyncadd [#allocation4], %s45
      %s47 = sshll.u32 [#allocation3], 4
      %s48 = int_to_ptr.vmem [resolvable:$true] %s47
      %53 = dma.hbm_to_vmem [thread:$0]  %s4, 2048, %s48, [#allocation4], 128, 128, 8
    $region21: #{dc_discriminator_forward.1} parent=1 // pred_fallthru
      _
    // Predicated region
    $region22: #{dc_discriminator_forward.1} parent=1 // pred_check
      _
    $region23: #{dc_discriminator_forward.1} parent=1 // pred_check_branch
      %55 = sbr.rel (0) target = $region25
    $region24: #{dc_discriminator_forward.1} parent=1 // pred_region
      %s57 = ssub.s32 32768, 32768
      %58 = vsyncadd [#allocation6], %s57
      %s59 = sshll.u32 [#allocation5], 4
      %s60 = int_to_ptr.vmem [resolvable:$true] %s59
      %65 = dma.hbm_to_vmem [thread:$0]  %s5, 32768, %s60, [#allocation6], 256, 256, 16
    $region25: #{dc_discriminator_forward.1} parent=1 // pred_fallthru
      _
    // Predicated region
    $region26: #{dc_discriminator_forward.1} parent=1 // pred_check
      _
    $region27: #{dc_discriminator_forward.1} parent=1 // pred_check_branch
      %67 = sbr.rel (0) target = $region29
    $region28: #{dc_discriminator_forward.1} parent=1 // pred_region
      %s69 = ssub.s32 32, 32
      %70 = vsyncadd [#allocation6], %s69
      %s72 = sshll.u32 [#allocation7], 4
      %s73 = int_to_ptr.vmem [resolvable:$true] %s72
      %75 = dma.hbm_to_vmem [thread:$0]  %s6, 32, %s73, [#allocation6]
    $region29: #{dc_discriminator_forward.1} parent=1 // pred_fallthru
      _
    // Predicated region
    $region30: #{dc_discriminator_forward.1} parent=1 // pred_check
      _
    $region31: #{dc_discriminator_forward.1} parent=1 // pred_check_branch
      %77 = sbr.rel (0) target = $region33
    $region32: #{dc_discriminator_forward.1} parent=1 // pred_region
      _
    $region33: #{dc_discriminator_forward.1} parent=1 // pred_fallthru
      _
    // Predicated region
    $region34: #{dc_discriminator_forward.1} parent=1 // pred_check
      _
    $region35: #{dc_discriminator_forward.1} parent=1 // pred_check_branch
      %79 = sbr.rel (0) target = $region37
    $region36: #{dc_discriminator_forward.1} parent=1 // pred_region
      %s81 = ssub.s32 512, 512
      %82 = vsyncadd [#allocation9], %s81
      %s83 = sshll.u32 [#allocation8], 4
      %s84 = int_to_ptr.vmem [resolvable:$true] %s83
      %89 = dma.hbm_to_vmem [thread:$0]  %s8, 512, %s84, [#allocation9], 256, 256, 16
    $region37: #{dc_discriminator_forward.1} parent=1 // pred_fallthru
      _
    // Predicated region
    $region38: #{dc_discriminator_forward.1} parent=1 // pred_check
      _
    $region39: #{dc_discriminator_forward.1} parent=1 // pred_check_branch
      %91 = sbr.rel (0) target = $region41
    $region40: #{dc_discriminator_forward.1} parent=1 // pred_region
      %s93 = ssub.s32 1024, 1024
      %94 = vsyncadd [#allocation9], %s93
      %s95 = sshll.u32 [#allocation10], 4
      %s96 = int_to_ptr.vmem [resolvable:$true] %s95
      %101 = dma.hbm_to_vmem [thread:$0]  %s9, 1024, %s96, [#allocation9], 128, 128, 8
    $region41: #{dc_discriminator_forward.1} parent=1 // pred_fallthru
      _
    // Predicated region
    $region42: #{dc_discriminator_forward.1} parent=1 // pred_check
      _
    $region43: #{dc_discriminator_forward.1} parent=1 // pred_check_branch
      %103 = sbr.rel (0) target = $region45
    $region44: #{dc_discriminator_forward.1} parent=1 // pred_region
      %s105 = ssub.s32 32768, 32768
      %106 = vsyncadd [#allocation12], %s105
      %s107 = sshll.u32 [#allocation11], 4
      %s108 = int_to_ptr.vmem [resolvable:$true] %s107
      %113 = dma.hbm_to_vmem [thread:$0]  %s10, 32768, %s108, [#allocation12], 256, 256, 16
    $region45: #{dc_discriminator_forward.1} parent=1 // pred_fallthru
      _
    // Predicated region
    $region46: #{dc_discriminator_forward.1} parent=1 // pred_check
      _
    $region47: #{dc_discriminator_forward.1} parent=1 // pred_check_branch
      %115 = sbr.rel (0) target = $region49
    $region48: #{dc_discriminator_forward.1} parent=1 // pred_region
      _
    $region49: #{dc_discriminator_forward.1} parent=1 // pred_fallthru
      _
    // Predicated region
    $region50: #{dc_discriminator_forward.1} parent=1 // pred_check
      _
    $region51: #{dc_discriminator_forward.1} parent=1 // pred_check_branch
      %117 = sbr.rel (0) target = $region53
    $region52: #{dc_discriminator_forward.1} parent=1 // pred_region
      _
    $region53: #{dc_discriminator_forward.1} parent=1 // pred_fallthru
      _
    // Predicated region
    $region54: #{dc_discriminator_forward.1} parent=1 // pred_check
      _
    $region55: #{dc_discriminator_forward.1} parent=1 // pred_check_branch
      %119 = sbr.rel (0) target = $region57
    $region56: #{dc_discriminator_forward.1} parent=1 // pred_region
      %s121 = ssub.s32 1024, 1024
      %122 = vsyncadd [#allocation12], %s121
      %s123 = sshll.u32 [#allocation13], 4
      %s124 = int_to_ptr.vmem [resolvable:$true] %s123
      %129 = dma.hbm_to_vmem [thread:$0]  %s13, 1024, %s124, [#allocation12], 256, 256, 16
    $region57: #{dc_discriminator_forward.1} parent=1 // pred_fallthru
      _
    // Predicated region
    $region58: #{dc_discriminator_forward.1} parent=1 // pred_check
      _
    $region59: #{dc_discriminator_forward.1} parent=1 // pred_check_branch
      %131 = sbr.rel (0) target = $region61
    $region60: #{dc_discriminator_forward.1} parent=1 // pred_region
      %s133 = ssub.s32 512, 512
      %134 = vsyncadd [#allocation15], %s133
      %s135 = sshll.u32 [#allocation14], 4
      %s136 = int_to_ptr.vmem [resolvable:$true] %s135
      %141 = dma.hbm_to_vmem [thread:$0]  %s14, 512, %s136, [#allocation15], 128, 128, 8
    $region61: #{dc_discriminator_forward.1} parent=1 // pred_fallthru
      _
    // Predicated region
    $region62: #{dc_discriminator_forward.1} parent=1 // pred_check
      _
    $region63: #{dc_discriminator_forward.1} parent=1 // pred_check_branch
      %143 = sbr.rel (0) target = $region65
    $region64: #{dc_discriminator_forward.1} parent=1 // pred_region
      %s145 = ssub.s32 32768, 32768
      %146 = vsyncadd [#allocation15], %s145
      %s147 = sshll.u32 [#allocation16], 4
      %s148 = int_to_ptr.vmem [resolvable:$true] %s147
      %153 = dma.hbm_to_vmem [thread:$0]  %s15, 32768, %s148, [#allocation15], 256, 256, 16
    $region65: #{dc_discriminator_forward.1} parent=1 // pred_fallthru
      _
    // Predicated region
    $region66: #{dc_discriminator_forward.1} parent=1 // pred_check
      _
    $region67: #{dc_discriminator_forward.1} parent=1 // pred_check_branch
      %155 = sbr.rel (0) target = $region69
    $region68: #{dc_discriminator_forward.1} parent=1 // pred_region
      _
    $region69: #{dc_discriminator_forward.1} parent=1 // pred_fallthru
      _
    // Predicated region
    $region70: #{dc_discriminator_forward.1} parent=1 // pred_check
      _
    $region71: #{dc_discriminator_forward.1} parent=1 // pred_check_branch
      %157 = sbr.rel (0) target = $region73
    $region72: #{dc_discriminator_forward.1} parent=1 // pred_region
      _
    $region73: #{dc_discriminator_forward.1} parent=1 // pred_fallthru
      _
    // Predicated region
    $region74: #{dc_discriminator_forward.1} parent=1 // pred_check
      _
    $region75: #{dc_discriminator_forward.1} parent=1 // pred_check_branch
      %159 = sbr.rel (0) target = $region77
    $region76: #{dc_discriminator_forward.1} parent=1 // pred_region
      _
    $region77: #{dc_discriminator_forward.1} parent=1 // pred_fallthru
      _
    // Predicated region
    $region78: #{dc_discriminator_forward.1} parent=1 // pred_check
      _
    $region79: #{dc_discriminator_forward.1} parent=1 // pred_check_branch
      %161 = sbr.rel (0) target = $region81
    $region80: #{dc_discriminator_forward.1} parent=1 // pred_region
      _
    $region81: #{dc_discriminator_forward.1} parent=1 // pred_fallthru
      _
    // Predicated region
    $region82: #{dc_discriminator_forward.1} parent=1 // pred_check
      _
    $region83: #{dc_discriminator_forward.1} parent=1 // pred_check_branch
      %163 = sbr.rel (0) target = $region85
    $region84: #{dc_discriminator_forward.1} parent=1 // pred_region
      _
    $region85: #{dc_discriminator_forward.1} parent=1 // pred_fallthru
      _
    // Predicated region
    $region86: #{dc_discriminator_forward.1} parent=1 // pred_check
      _
    $region87: #{dc_discriminator_forward.1} parent=1 // pred_check_branch
      %165 = sbr.rel (0) target = $region89
    $region88: #{dc_discriminator_forward.1} parent=1 // pred_region
      _
    $region89: #{dc_discriminator_forward.1} parent=1 // pred_fallthru
      _
    // Predicated region
    $region90: #{dc_discriminator_forward.1} parent=1 // pred_check
      _
    $region91: #{dc_discriminator_forward.1} parent=1 // pred_check_branch
      %167 = sbr.rel (0) target = $region93
    $region92: #{dc_discriminator_forward.1} parent=1 // pred_region
      %168 = dma.done [#allocation4], 2048
    $region93: #{dc_discriminator_forward.1} parent=1 // pred_fallthru
      _
    // Predicated region
    $region94: #{dc_discriminator_forward.1} parent=1 // pred_check
      _
    $region95: #{dc_discriminator_forward.1} parent=1 // pred_check_branch
      %170 = sbr.rel (0) target = $region97
    $region96: #{dc_discriminator_forward.1} parent=1 // pred_region
      %171 = dma.done [#allocation6], 32768
    $region97: #{dc_discriminator_forward.1} parent=1 // pred_fallthru
      _
    // Predicated region
    $region98: #{dc_discriminator_forward.1} parent=1 // pred_check
      _
    $region99: #{dc_discriminator_forward.1} parent=1 // pred_check_branch
      %173 = sbr.rel (0) target = $region101
    $region100: #{dc_discriminator_forward.1} parent=1 // pred_region
      %174 = dma.done [#allocation6], 32
    $region101: #{dc_discriminator_forward.1} parent=1 // pred_fallthru
      _
    // Predicated region
    $region102: #{dc_discriminator_forward.1} parent=1 // pred_check
      _
    $region103: #{dc_discriminator_forward.1} parent=1 // pred_check_branch
      %176 = sbr.rel (0) target = $region105
    $region104: #{dc_discriminator_forward.1} parent=1 // pred_region
      %177 = dma.done [#allocation9], 512
    $region105: #{dc_discriminator_forward.1} parent=1 // pred_fallthru
      _
    // Predicated region
    $region106: #{dc_discriminator_forward.1} parent=1 // pred_check
      _
    $region107: #{dc_discriminator_forward.1} parent=1 // pred_check_branch
      %179 = sbr.rel (0) target = $region109
    $region108: #{dc_discriminator_forward.1} parent=1 // pred_region
      %180 = dma.done [#allocation9], 1024
    $region109: #{dc_discriminator_forward.1} parent=1 // pred_fallthru
      _
    // Predicated region
    $region110: #{dc_discriminator_forward.1} parent=1 // pred_check
      _
    $region111: #{dc_discriminator_forward.1} parent=1 // pred_check_branch
      %182 = sbr.rel (0) target = $region113
    $region112: #{dc_discriminator_forward.1} parent=1 // pred_region
      %183 = dma.done [#allocation12], 32768
    $region113: #{dc_discriminator_forward.1} parent=1 // pred_fallthru
      _
    // Predicated region
    $region114: #{dc_discriminator_forward.1} parent=1 // pred_check
      _
    $region115: #{dc_discriminator_forward.1} parent=1 // pred_check_branch
      %185 = sbr.rel (0) target = $region117
    $region116: #{dc_discriminator_forward.1} parent=1 // pred_region
      %186 = dma.done [#allocation12], 1024
    $region117: #{dc_discriminator_forward.1} parent=1 // pred_fallthru
      _
    // Predicated region
    $region118: #{dc_discriminator_forward.1} parent=1 // pred_check
      _
    $region119: #{dc_discriminator_forward.1} parent=1 // pred_check_branch
      %188 = sbr.rel (0) target = $region121
    $region120: #{dc_discriminator_forward.1} parent=1 // pred_region
      %189 = dma.done [#allocation15], 512
    $region121: #{dc_discriminator_forward.1} parent=1 // pred_fallthru
      _
    // Predicated region
    $region122: #{dc_discriminator_forward.1} parent=1 // pred_check
      _
    $region123: #{dc_discriminator_forward.1} parent=1 // pred_check_branch
      %191 = sbr.rel (0) target = $region125
    $region124: #{dc_discriminator_forward.1} parent=1 // pred_region
      %192 = dma.done [#allocation15], 32768
    $region125: #{dc_discriminator_forward.1} parent=1 // pred_fallthru
      _
    %v193 = vld [vmem:[%s0] sm:$0xff]
    %v194 = vld [vmem:[%s0 + $0x8] sm:$0xff]
    %v195 = vld [vmem:[%s0 + $0x10] sm:$0xff]
    %v196 = vld [vmem:[%s0 + $0x18] sm:$0xff]
    %v197 = vld [vmem:[%s0 + $0x20] sm:$0xff]
    %v198 = vld [vmem:[%s0 + $0x28] sm:$0xff]
    %v199 = vld [vmem:[%s0 + $0x30] sm:$0xff]
    %v200 = vld [vmem:[%s0 + $0x38] sm:$0xff]
    %v201 = vld [vmem:[%s0 + $0x40] sm:$0xff]
    %v202 = vld [vmem:[%s0 + $0x48] sm:$0xff]
    %v203 = vld [vmem:[%s0 + $0x50] sm:$0xff]
    %v204 = vld [vmem:[%s0 + $0x58] sm:$0xff]
    %v205 = vld [vmem:[%s0 + $0x60] sm:$0xff]
    %v206 = vld [vmem:[%s0 + $0x68] sm:$0xff]
    %v207 = vld [vmem:[%s0 + $0x70] sm:$0xff]
    %v208 = vld [vmem:[%s0 + $0x78] sm:$0xff]
    %v209 = vld [vmem:[%s1] sm:$0xff]
    %v210 = vld [vmem:[%s1 + $0x8] sm:$0xff]
    %v211 = vld [vmem:[%s1 + $0x10] sm:$0xff]
    %v212 = vld [vmem:[%s1 + $0x18] sm:$0xff]
    %v213 = vld [vmem:[%s1 + $0x20] sm:$0xff]
    %v214 = vld [vmem:[%s1 + $0x28] sm:$0xff]
    %v215 = vld [vmem:[%s1 + $0x30] sm:$0xff]
    %v216 = vld [vmem:[%s1 + $0x38] sm:$0xff]
    %217 = vmatprep.subr.mxu0 0.0
    %218 = vmatpush1.msra.mxu0 %v193
    %219 = vmatprep.subr.mxu0 0.0
    %220 = vmatpush1.msra.mxu0 %v194
    %221 = vmatprep.subr.mxu0 0.0
    %222 = vmatpush1.msra.mxu0 %v195
    %223 = vmatprep.subr.mxu0 0.0
    %224 = vmatpush1.msra.mxu0 %v196
    %225 = vmatprep.subr.mxu0 0.0
    %226 = vmatpush1.msra.mxu0 %v197
    %227 = vmatprep.subr.mxu0 0.0
    %228 = vmatpush1.msra.mxu0 %v198
    %229 = vmatprep.subr.mxu0 0.0
    %230 = vmatpush1.msra.mxu0 %v199
    %231 = vmatprep.subr.mxu0 0.0
    %232 = vmatpush1.msra.mxu0 %v200
    %233 = vmatprep.subr.mxu0 0.0
    %234 = vmatpush1.msra.mxu0 %v201
    %235 = vmatprep.subr.mxu0 0.0
    %236 = vmatpush1.msra.mxu0 %v202
    %237 = vmatprep.subr.mxu0 0.0
    %238 = vmatpush1.msra.mxu0 %v203
    %239 = vmatprep.subr.mxu0 0.0
    %240 = vmatpush1.msra.mxu0 %v204
    %241 = vmatprep.subr.mxu0 0.0
    %242 = vmatpush1.msra.mxu0 %v205
    %243 = vmatprep.subr.mxu0 0.0
    %244 = vmatpush1.msra.mxu0 %v206
    %245 = vmatprep.subr.mxu0 0.0
    %246 = vmatpush1.msra.mxu0 %v207
    %247 = vmatprep.subr.mxu0 0.0
    %248 = vmatpush1.msra.mxu0 %v208
    %249 = vmatprep.subr.mxu0 0.0
    %250 = vmatpush1.msra.mxu0 0.0
    %251 = vmatprep.subr.mxu0 0.0
    %252 = vmatpush1.msra.mxu0 0.0
    %253 = vmatprep.subr.mxu0 0.0
    %254 = vmatpush1.msra.mxu0 0.0
    %255 = vmatprep.subr.mxu0 0.0
    %256 = vmatpush1.msra.mxu0 0.0
    %257 = vmatprep.subr.mxu0 0.0
    %258 = vmatpush1.msra.mxu0 0.0
    %259 = vmatprep.subr.mxu0 0.0
    %260 = vmatpush1.msra.mxu0 0.0
    %261 = vmatprep.subr.mxu0 0.0
    %262 = vmatpush1.msra.mxu0 0.0
    %263 = vmatprep.subr.mxu0 0.0
    %264 = vmatpush1.msra.mxu0 0.0
    %265 = vmatprep.subr.mxu0 0.0
    %266 = vmatpush1.msra.mxu0 0.0
    %267 = vmatprep.subr.mxu0 0.0
    %268 = vmatpush1.msra.mxu0 0.0
    %269 = vmatprep.subr.mxu0 0.0
    %270 = vmatpush1.msra.mxu0 0.0
    %271 = vmatprep.subr.mxu0 0.0
    %272 = vmatpush1.msra.mxu0 0.0
    %273 = vmatprep.subr.mxu0 0.0
    %274 = vmatpush1.msra.mxu0 0.0
    %275 = vmatprep.subr.mxu0 0.0
    %276 = vmatpush1.msra.mxu0 0.0
    %277 = vmatprep.subr.mxu0 0.0
    %278 = vmatpush1.msra.mxu0 0.0
    %279 = vmatprep.subr.mxu0 0.0
    %280 = vmatpush1.msra.mxu0 0.0
    %281 = vmatprep.mubr.f32.mxu0 0.0
    %282 = vmatmul.mubr.f32.gmra.mrb[0].mxu0 %v209
    %v283 = vpop.f32.mrb[0].mxu0
    %v284 = vadd.f32 0.0, %v283
    %v285 = vpop.f32.mrb[0].mxu0
    %286 = vmatprep.mubr.f32.mxu0 0.0
    %287 = vmatmul.mubr.f32.gmra.mrb[0].mxu0 %v210
    %v288 = vpop.f32.mrb[0].mxu0
    %v289 = vadd.f32 0.0, %v288
    %v290 = vpop.f32.mrb[0].mxu0
    %291 = vmatprep.mubr.f32.mxu0 0.0
    %292 = vmatmul.mubr.f32.gmra.mrb[0].mxu0 %v211
    %v293 = vpop.f32.mrb[0].mxu0
    %v294 = vadd.f32 0.0, %v293
    %v295 = vpop.f32.mrb[0].mxu0
    %296 = vmatprep.mubr.f32.mxu0 0.0
    %297 = vmatmul.mubr.f32.gmra.mrb[0].mxu0 %v212
    %v298 = vpop.f32.mrb[0].mxu0
    %v299 = vadd.f32 0.0, %v298
    %v300 = vpop.f32.mrb[0].mxu0
    %301 = vmatprep.mubr.f32.mxu0 0.0
    %302 = vmatmul.mubr.f32.gmra.mrb[0].mxu0 %v213
    %v303 = vpop.f32.mrb[0].mxu0
    %v304 = vadd.f32 0.0, %v303
    %v305 = vpop.f32.mrb[0].mxu0
    %306 = vmatprep.mubr.f32.mxu0 0.0
    %307 = vmatmul.mubr.f32.gmra.mrb[0].mxu0 %v214
    %v308 = vpop.f32.mrb[0].mxu0
    %v309 = vadd.f32 0.0, %v308
    %v310 = vpop.f32.mrb[0].mxu0
    %311 = vmatprep.mubr.f32.mxu0 0.0
    %312 = vmatmul.mubr.f32.gmra.mrb[0].mxu0 %v215
    %v313 = vpop.f32.mrb[0].mxu0
    %v314 = vadd.f32 0.0, %v313
    %v315 = vpop.f32.mrb[0].mxu0
    %316 = vmatprep.mubr.f32.mxu0 0.0
    %317 = vmatmul.mubr.f32.gmra.mrb[0].mxu0 %v216
    %v318 = vpop.f32.mrb[0].mxu0
    %v319 = vadd.f32 0.0, %v318
    %v320 = vpop.f32.mrb[0].mxu0
    %321 = vdwg.mxu0
    %v322 = vld [vmem:[%s2] sm:$0xff]
    %v323 = vld [vmem:[%s2 + $0x8] sm:$0xff]
    %v324 = vld [vmem:[%s2 + $0x10] sm:$0xff]
    %v325 = vld [vmem:[%s2 + $0x18] sm:$0xff]
    %v326 = vld [vmem:[%s2 + $0x20] sm:$0xff]
    %v327 = vld [vmem:[%s2 + $0x28] sm:$0xff]
    %v328 = vld [vmem:[%s2 + $0x30] sm:$0xff]
    %v329 = vld [vmem:[%s2 + $0x38] sm:$0xff]
    %v330 = vld [vmem:[%s2 + $0x40] sm:$0xff]
    %v331 = vld [vmem:[%s2 + $0x48] sm:$0xff]
    %v332 = vld [vmem:[%s2 + $0x50] sm:$0xff]
    %v333 = vld [vmem:[%s2 + $0x58] sm:$0xff]
    %v334 = vld [vmem:[%s2 + $0x60] sm:$0xff]
    %v335 = vld [vmem:[%s2 + $0x68] sm:$0xff]
    %v336 = vld [vmem:[%s2 + $0x70] sm:$0xff]
    %v337 = vld [vmem:[%s2 + $0x78] sm:$0xff]
    %s338 = scalar_lea.vmem %s1, 64
    %v339 = vld [vmem:[%s338] sm:$0xff]
    %v340 = vld [vmem:[%s338 + $0x8] sm:$0xff]
    %v341 = vld [vmem:[%s338 + $0x10] sm:$0xff]
    %v342 = vld [vmem:[%s338 + $0x18] sm:$0xff]
    %v343 = vld [vmem:[%s338 + $0x20] sm:$0xff]
    %v344 = vld [vmem:[%s338 + $0x28] sm:$0xff]
    %v345 = vld [vmem:[%s338 + $0x30] sm:$0xff]
    %v346 = vld [vmem:[%s338 + $0x38] sm:$0xff]
    %347 = vmatprep.subr.mxu0 0.0
    %348 = vmatpush1.msra.mxu0 %v193
    %349 = vmatprep.subr.mxu0 0.0
    %350 = vmatpush1.msra.mxu0 %v194
    %351 = vmatprep.subr.mxu0 0.0
    %352 = vmatpush1.msra.mxu0 %v195
    %353 = vmatprep.subr.mxu0 0.0
    %354 = vmatpush1.msra.mxu0 %v196
    %355 = vmatprep.subr.mxu0 0.0
    %356 = vmatpush1.msra.mxu0 %v197
    %357 = vmatprep.subr.mxu0 0.0
    %358 = vmatpush1.msra.mxu0 %v198
    %359 = vmatprep.subr.mxu0 0.0
    %360 = vmatpush1.msra.mxu0 %v199
    %361 = vmatprep.subr.mxu0 0.0
    %362 = vmatpush1.msra.mxu0 %v200
    %363 = vmatprep.subr.mxu0 0.0
    %364 = vmatpush1.msra.mxu0 %v201
    %365 = vmatprep.subr.mxu0 0.0
    %366 = vmatpush1.msra.mxu0 %v202
    %367 = vmatprep.subr.mxu0 0.0
    %368 = vmatpush1.msra.mxu0 %v203
    %369 = vmatprep.subr.mxu0 0.0
    %370 = vmatpush1.msra.mxu0 %v204
    %371 = vmatprep.subr.mxu0 0.0
    %372 = vmatpush1.msra.mxu0 %v205
    %373 = vmatprep.subr.mxu0 0.0
    %374 = vmatpush1.msra.mxu0 %v206
    %375 = vmatprep.subr.mxu0 0.0
    %376 = vmatpush1.msra.mxu0 %v207
    %377 = vmatprep.subr.mxu0 0.0
    %378 = vmatpush1.msra.mxu0 %v208
    %379 = vmatprep.subr.mxu0 0.0
    %380 = vmatpush1.msra.mxu0 0.0
    %381 = vmatprep.subr.mxu0 0.0
    %382 = vmatpush1.msra.mxu0 0.0
    %383 = vmatprep.subr.mxu0 0.0
    %384 = vmatpush1.msra.mxu0 0.0
    %385 = vmatprep.subr.mxu0 0.0
    %386 = vmatpush1.msra.mxu0 0.0
    %387 = vmatprep.subr.mxu0 0.0
    %388 = vmatpush1.msra.mxu0 0.0
    %389 = vmatprep.subr.mxu0 0.0
    %390 = vmatpush1.msra.mxu0 0.0
    %391 = vmatprep.subr.mxu0 0.0
    %392 = vmatpush1.msra.mxu0 0.0
    %393 = vmatprep.subr.mxu0 0.0
    %394 = vmatpush1.msra.mxu0 0.0
    %395 = vmatprep.subr.mxu0 0.0
    %396 = vmatpush1.msra.mxu0 0.0
    %397 = vmatprep.subr.mxu0 0.0
    %398 = vmatpush1.msra.mxu0 0.0
    %399 = vmatprep.subr.mxu0 0.0
    %400 = vmatpush1.msra.mxu0 0.0
    %401 = vmatprep.subr.mxu0 0.0
    %402 = vmatpush1.msra.mxu0 0.0
    %403 = vmatprep.subr.mxu0 0.0
    %404 = vmatpush1.msra.mxu0 0.0
    %405 = vmatprep.subr.mxu0 0.0
    %406 = vmatpush1.msra.mxu0 0.0
    %407 = vmatprep.subr.mxu0 0.0
    %408 = vmatpush1.msra.mxu0 0.0
    %409 = vmatprep.subr.mxu0 0.0
    %410 = vmatpush1.msra.mxu0 0.0
    %411 = vmatprep.mubr.f32.mxu0 0.0
    %412 = vmatmul.mubr.f32.gmra.mrb[0].mxu0 %v339
    %v413 = vpop.f32.mrb[0].mxu0
    %v414 = vadd.f32 0.0, %v413
    %v415 = vpop.f32.mrb[0].mxu0
    %416 = vmatprep.mubr.f32.mxu0 0.0
    %417 = vmatmul.mubr.f32.gmra.mrb[0].mxu0 %v340
    %v418 = vpop.f32.mrb[0].mxu0
    %v419 = vadd.f32 0.0, %v418
    %v420 = vpop.f32.mrb[0].mxu0
    %421 = vmatprep.mubr.f32.mxu0 0.0
    %422 = vmatmul.mubr.f32.gmra.mrb[0].mxu0 %v341
    %v423 = vpop.f32.mrb[0].mxu0
    %v424 = vadd.f32 0.0, %v423
    %v425 = vpop.f32.mrb[0].mxu0
    %426 = vmatprep.mubr.f32.mxu0 0.0
    %427 = vmatmul.mubr.f32.gmra.mrb[0].mxu0 %v342
    %v428 = vpop.f32.mrb[0].mxu0
    %v429 = vadd.f32 0.0, %v428
    %v430 = vpop.f32.mrb[0].mxu0
    %431 = vmatprep.mubr.f32.mxu0 0.0
    %432 = vmatmul.mubr.f32.gmra.mrb[0].mxu0 %v343
    %v433 = vpop.f32.mrb[0].mxu0
    %v434 = vadd.f32 0.0, %v433
    %v435 = vpop.f32.mrb[0].mxu0
    %436 = vmatprep.mubr.f32.mxu0 0.0
    %437 = vmatmul.mubr.f32.gmra.mrb[0].mxu0 %v344
    %v438 = vpop.f32.mrb[0].mxu0
    %v439 = vadd.f32 0.0, %v438
    %v440 = vpop.f32.mrb[0].mxu0
    %441 = vmatprep.mubr.f32.mxu0 0.0
    %442 = vmatmul.mubr.f32.gmra.mrb[0].mxu0 %v345
    %v443 = vpop.f32.mrb[0].mxu0
    %v444 = vadd.f32 0.0, %v443
    %v445 = vpop.f32.mrb[0].mxu0
    %446 = vmatprep.mubr.f32.mxu0 0.0
    %447 = vmatmul.mubr.f32.gmra.mrb[0].mxu0 %v346
    %v448 = vpop.f32.mrb[0].mxu0
    %v449 = vadd.f32 0.0, %v448
    %v450 = vpop.f32.mrb[0].mxu0
    %451 = vdwg.mxu0
    %s452 = scalar_lea.vmem %s2, 128
    %v453 = vld [vmem:[%s452] sm:$0xff]
    %v454 = vld [vmem:[%s452 + $0x8] sm:$0xff]
    %v455 = vld [vmem:[%s452 + $0x10] sm:$0xff]
    %v456 = vld [vmem:[%s452 + $0x18] sm:$0xff]
    %v457 = vld [vmem:[%s452 + $0x20] sm:$0xff]
    %v458 = vld [vmem:[%s452 + $0x28] sm:$0xff]
    %v459 = vld [vmem:[%s452 + $0x30] sm:$0xff]
    %v460 = vld [vmem:[%s452 + $0x38] sm:$0xff]
    %v461 = vld [vmem:[%s452 + $0x40] sm:$0xff]
    %v462 = vld [vmem:[%s452 + $0x48] sm:$0xff]
    %v463 = vld [vmem:[%s452 + $0x50] sm:$0xff]
    %v464 = vld [vmem:[%s452 + $0x58] sm:$0xff]
    %v465 = vld [vmem:[%s452 + $0x60] sm:$0xff]
    %v466 = vld [vmem:[%s452 + $0x68] sm:$0xff]
    %v467 = vld [vmem:[%s452 + $0x70] sm:$0xff]
    %v468 = vld [vmem:[%s452 + $0x78] sm:$0xff]
    %vm469 = vcmask 523264
    %v471 = vsel %vm469, %v414, 0
    %v474 = vsel %vm469, %v419, 0
    %v477 = vsel %vm469, %v424, 0
    %v480 = vsel %vm469, %v429, 0
    %v483 = vsel %vm469, %v434, 0
    %v486 = vsel %vm469, %v439, 0
    %v489 = vsel %vm469, %v444, 0
    %v492 = vsel %vm469, %v449, 0
    %494 = vmatprep.subr.mxu0 %v454
    %495 = vmatpush1.msra.mxu0 %v453
    %496 = vmatprep.subr.mxu0 %v456
    %497 = vmatpush1.msra.mxu0 %v455
    %498 = vmatprep.subr.mxu0 %v458
    %499 = vmatpush1.msra.mxu0 %v457
    %500 = vmatprep.subr.mxu0 %v460
    %501 = vmatpush1.msra.mxu0 %v459
    %502 = vmatprep.subr.mxu0 %v462
    %503 = vmatpush1.msra.mxu0 %v461
    %504 = vmatprep.subr.mxu0 %v464
    %505 = vmatpush1.msra.mxu0 %v463
    %506 = vmatprep.subr.mxu0 %v466
    %507 = vmatpush1.msra.mxu0 %v465
    %508 = vmatprep.subr.mxu0 %v468
    %509 = vmatpush1.msra.mxu0 %v467
    %510 = vmatprep.subr.mxu0 0.0
    %511 = vmatpush1.msra.mxu0 0.0
    %512 = vmatprep.subr.mxu0 0.0
    %513 = vmatpush1.msra.mxu0 0.0
    %514 = vmatprep.subr.mxu0 0.0
    %515 = vmatpush1.msra.mxu0 0.0
    %516 = vmatprep.subr.mxu0 0.0
    %517 = vmatpush1.msra.mxu0 0.0
    %518 = vmatprep.subr.mxu0 0.0
    %519 = vmatpush1.msra.mxu0 0.0
    %520 = vmatprep.subr.mxu0 0.0
    %521 = vmatpush1.msra.mxu0 0.0
    %522 = vmatprep.subr.mxu0 0.0
    %523 = vmatpush1.msra.mxu0 0.0
    %524 = vmatprep.subr.mxu0 0.0
    %525 = vmatpush1.msra.mxu0 0.0
    %526 = vmatprep.subr.mxu0 0.0
    %527 = vmatpush1.msra.mxu0 0.0
    %528 = vmatprep.subr.mxu0 0.0
    %529 = vmatpush1.msra.mxu0 0.0
    %530 = vmatprep.subr.mxu0 0.0
    %531 = vmatpush1.msra.mxu0 0.0
    %532 = vmatprep.subr.mxu0 0.0
    %533 = vmatpush1.msra.mxu0 0.0
    %534 = vmatprep.subr.mxu0 0.0
    %535 = vmatpush1.msra.mxu0 0.0
    %536 = vmatprep.subr.mxu0 0.0
    %537 = vmatpush1.msra.mxu0 0.0
    %538 = vmatprep.subr.mxu0 0.0
    %539 = vmatpush1.msra.mxu0 0.0
    %540 = vmatprep.subr.mxu0 0.0
    %541 = vmatpush1.msra.mxu0 0.0
    %542 = vmatprep.subr.mxu0 0.0
    %543 = vmatpush1.msra.mxu0 0.0
    %544 = vmatprep.subr.mxu0 0.0
    %545 = vmatpush1.msra.mxu0 0.0
    %546 = vmatprep.subr.mxu0 0.0
    %547 = vmatpush1.msra.mxu0 0.0
    %548 = vmatprep.subr.mxu0 0.0
    %549 = vmatpush1.msra.mxu0 0.0
    %550 = vmatprep.subr.mxu0 0.0
    %551 = vmatpush1.msra.mxu0 0.0
    %552 = vmatprep.subr.mxu0 0.0
    %553 = vmatpush1.msra.mxu0 0.0
    %554 = vmatprep.subr.mxu0 0.0
    %555 = vmatpush1.msra.mxu0 0.0
    %556 = vmatprep.subr.mxu0 0.0
    %557 = vmatpush1.msra.mxu0 0.0
    %558 = vmatprep.mubr.f32.mxu0 0.0
    %559 = vmatmul.mubr.f32.gmra.mrb[0].mxu0 %v471
    %v560 = vpop.f32.mrb[0].mxu0
    %v561 = vadd.f32 0.0, %v560
    %v562 = vpop.f32.mrb[0].mxu0
    %v563 = vadd.f32 0.0, %v562
    %564 = vmatprep.mubr.f32.mxu0 0.0
    %565 = vmatmul.mubr.f32.gmra.mrb[0].mxu0 %v474
    %v566 = vpop.f32.mrb[0].mxu0
    %v567 = vadd.f32 0.0, %v566
    %v568 = vpop.f32.mrb[0].mxu0
    %v569 = vadd.f32 0.0, %v568
    %570 = vmatprep.mubr.f32.mxu0 0.0
    %571 = vmatmul.mubr.f32.gmra.mrb[0].mxu0 %v477
    %v572 = vpop.f32.mrb[0].mxu0
    %v573 = vadd.f32 0.0, %v572
    %v574 = vpop.f32.mrb[0].mxu0
    %v575 = vadd.f32 0.0, %v574
    %576 = vmatprep.mubr.f32.mxu0 0.0
    %577 = vmatmul.mubr.f32.gmra.mrb[0].mxu0 %v480
    %v578 = vpop.f32.mrb[0].mxu0
    %v579 = vadd.f32 0.0, %v578
    %v580 = vpop.f32.mrb[0].mxu0
    %v581 = vadd.f32 0.0, %v580
    %582 = vmatprep.mubr.f32.mxu0 0.0
    %583 = vmatmul.mubr.f32.gmra.mrb[0].mxu0 %v483
    %v584 = vpop.f32.mrb[0].mxu0
    %v585 = vadd.f32 0.0, %v584
    %v586 = vpop.f32.mrb[0].mxu0
    %v587 = vadd.f32 0.0, %v586
    %588 = vmatprep.mubr.f32.mxu0 0.0
    %589 = vmatmul.mubr.f32.gmra.mrb[0].mxu0 %v486
    %v590 = vpop.f32.mrb[0].mxu0
    %v591 = vadd.f32 0.0, %v590
    %v592 = vpop.f32.mrb[0].mxu0
    %v593 = vadd.f32 0.0, %v592
    %594 = vmatprep.mubr.f32.mxu0 0.0
    %595 = vmatmul.mubr.f32.gmra.mrb[0].mxu0 %v489
    %v596 = vpop.f32.mrb[0].mxu0
    %v597 = vadd.f32 0.0, %v596
    %v598 = vpop.f32.mrb[0].mxu0
    %v599 = vadd.f32 0.0, %v598
    %600 = vmatprep.mubr.f32.mxu0 0.0
    %601 = vmatmul.mubr.f32.gmra.mrb[0].mxu0 %v492
    %v602 = vpop.f32.mrb[0].mxu0
    %v603 = vadd.f32 0.0, %v602
    %v604 = vpop.f32.mrb[0].mxu0
    %v605 = vadd.f32 0.0, %v604
    %606 = vdwg.mxu0
    %v608 = vsel %vm469, %v284, 0
    %v611 = vsel %vm469, %v289, 0
    %v614 = vsel %vm469, %v294, 0
    %v617 = vsel %vm469, %v299, 0
    %v620 = vsel %vm469, %v304, 0
    %v623 = vsel %vm469, %v309, 0
    %v626 = vsel %vm469, %v314, 0
    %v629 = vsel %vm469, %v319, 0
    %631 = vmatprep.subr.mxu0 %v323
    %632 = vmatpush1.msra.mxu0 %v322
    %633 = vmatprep.subr.mxu0 %v325
    %634 = vmatpush1.msra.mxu0 %v324
    %635 = vmatprep.subr.mxu0 %v327
    %636 = vmatpush1.msra.mxu0 %v326
    %637 = vmatprep.subr.mxu0 %v329
    %638 = vmatpush1.msra.mxu0 %v328
    %639 = vmatprep.subr.mxu0 %v331
    %640 = vmatpush1.msra.mxu0 %v330
    %641 = vmatprep.subr.mxu0 %v333
    %642 = vmatpush1.msra.mxu0 %v332
    %643 = vmatprep.subr.mxu0 %v335
    %644 = vmatpush1.msra.mxu0 %v334
    %645 = vmatprep.subr.mxu0 %v337
    %646 = vmatpush1.msra.mxu0 %v336
    %647 = vmatprep.subr.mxu0 0.0
    %648 = vmatpush1.msra.mxu0 0.0
    %649 = vmatprep.subr.mxu0 0.0
    %650 = vmatpush1.msra.mxu0 0.0
    %651 = vmatprep.subr.mxu0 0.0
    %652 = vmatpush1.msra.mxu0 0.0
    %653 = vmatprep.subr.mxu0 0.0
    %654 = vmatpush1.msra.mxu0 0.0
    %655 = vmatprep.subr.mxu0 0.0
    %656 = vmatpush1.msra.mxu0 0.0
    %657 = vmatprep.subr.mxu0 0.0
    %658 = vmatpush1.msra.mxu0 0.0
    %659 = vmatprep.subr.mxu0 0.0
    %660 = vmatpush1.msra.mxu0 0.0
    %661 = vmatprep.subr.mxu0 0.0
    %662 = vmatpush1.msra.mxu0 0.0
    %663 = vmatprep.subr.mxu0 0.0
    %664 = vmatpush1.msra.mxu0 0.0
    %665 = vmatprep.subr.mxu0 0.0
    %666 = vmatpush1.msra.mxu0 0.0
    %667 = vmatprep.subr.mxu0 0.0
    %668 = vmatpush1.msra.mxu0 0.0
    %669 = vmatprep.subr.mxu0 0.0
    %670 = vmatpush1.msra.mxu0 0.0
    %671 = vmatprep.subr.mxu0 0.0
    %672 = vmatpush1.msra.mxu0 0.0
    %673 = vmatprep.subr.mxu0 0.0
    %674 = vmatpush1.msra.mxu0 0.0
    %675 = vmatprep.subr.mxu0 0.0
    %676 = vmatpush1.msra.mxu0 0.0
    %677 = vmatprep.subr.mxu0 0.0
    %678 = vmatpush1.msra.mxu0 0.0
    %679 = vmatprep.subr.mxu0 0.0
    %680 = vmatpush1.msra.mxu0 0.0
    %681 = vmatprep.subr.mxu0 0.0
    %682 = vmatpush1.msra.mxu0 0.0
    %683 = vmatprep.subr.mxu0 0.0
    %684 = vmatpush1.msra.mxu0 0.0
    %685 = vmatprep.subr.mxu0 0.0
    %686 = vmatpush1.msra.mxu0 0.0
    %687 = vmatprep.subr.mxu0 0.0
    %688 = vmatpush1.msra.mxu0 0.0
    %689 = vmatprep.subr.mxu0 0.0
    %690 = vmatpush1.msra.mxu0 0.0
    %691 = vmatprep.subr.mxu0 0.0
    %692 = vmatpush1.msra.mxu0 0.0
    %693 = vmatprep.subr.mxu0 0.0
    %694 = vmatpush1.msra.mxu0 0.0
    %695 = vmatprep.mubr.f32.mxu0 0.0
    %696 = vmatmul.mubr.f32.gmra.mrb[0].mxu0 %v608
    %v697 = vpop.f32.mrb[0].mxu0
    %v698 = vadd.f32 %v561, %v697
    %v699 = vpop.f32.mrb[0].mxu0
    %v700 = vadd.f32 %v563, %v699
    %701 = vmatprep.mubr.f32.mxu0 0.0
    %702 = vmatmul.mubr.f32.gmra.mrb[0].mxu0 %v611
    %v703 = vpop.f32.mrb[0].mxu0
    %v704 = vadd.f32 %v567, %v703
    %v705 = vpop.f32.mrb[0].mxu0
    %v706 = vadd.f32 %v569, %v705
    %707 = vmatprep.mubr.f32.mxu0 0.0
    %708 = vmatmul.mubr.f32.gmra.mrb[0].mxu0 %v614
    %v709 = vpop.f32.mrb[0].mxu0
    %v710 = vadd.f32 %v573, %v709
    %v711 = vpop.f32.mrb[0].mxu0
    %v712 = vadd.f32 %v575, %v711
    %713 = vmatprep.mubr.f32.mxu0 0.0
    %714 = vmatmul.mubr.f32.gmra.mrb[0].mxu0 %v617
    %v715 = vpop.f32.mrb[0].mxu0
    %v716 = vadd.f32 %v579, %v715
    %v717 = vpop.f32.mrb[0].mxu0
    %v718 = vadd.f32 %v581, %v717
    %719 = vmatprep.mubr.f32.mxu0 0.0
    %720 = vmatmul.mubr.f32.gmra.mrb[0].mxu0 %v620
    %v721 = vpop.f32.mrb[0].mxu0
    %v722 = vadd.f32 %v585, %v721
    %v723 = vpop.f32.mrb[0].mxu0
    %v724 = vadd.f32 %v587, %v723
    %725 = vmatprep.mubr.f32.mxu0 0.0
    %726 = vmatmul.mubr.f32.gmra.mrb[0].mxu0 %v623
    %v727 = vpop.f32.mrb[0].mxu0
    %v728 = vadd.f32 %v591, %v727
    %v729 = vpop.f32.mrb[0].mxu0
    %v730 = vadd.f32 %v593, %v729
    %731 = vmatprep.mubr.f32.mxu0 0.0
    %732 = vmatmul.mubr.f32.gmra.mrb[0].mxu0 %v626
    %v733 = vpop.f32.mrb[0].mxu0
    %v734 = vadd.f32 %v597, %v733
    %v735 = vpop.f32.mrb[0].mxu0
    %v736 = vadd.f32 %v599, %v735
    %737 = vmatprep.mubr.f32.mxu0 0.0
    %738 = vmatmul.mubr.f32.gmra.mrb[0].mxu0 %v629
    %v739 = vpop.f32.mrb[0].mxu0
    %v740 = vadd.f32 %v603, %v739
    %v741 = vpop.f32.mrb[0].mxu0
    %v742 = vadd.f32 %v605, %v741
    %743 = vdwg.mxu0
    %s744 = scalar_lea.vmem %s1, 128
    %v745 = vld [vmem:[%s744] sm:$0xff]
    %v746 = vld [vmem:[%s744 + $0x8] sm:$0xff]
    %v747 = vld [vmem:[%s744 + $0x10] sm:$0xff]
    %v748 = vld [vmem:[%s744 + $0x18] sm:$0xff]
    %v749 = vld [vmem:[%s744 + $0x20] sm:$0xff]
    %v750 = vld [vmem:[%s744 + $0x28] sm:$0xff]
    %v751 = vld [vmem:[%s744 + $0x30] sm:$0xff]
    %v752 = vld [vmem:[%s744 + $0x38] sm:$0xff]
    %753 = vmatprep.subr.mxu0 0.0
    %754 = vmatpush1.msra.mxu0 %v193
    %755 = vmatprep.subr.mxu0 0.0
    %756 = vmatpush1.msra.mxu0 %v194
    %757 = vmatprep.subr.mxu0 0.0
    %758 = vmatpush1.msra.mxu0 %v195
    %759 = vmatprep.subr.mxu0 0.0
    %760 = vmatpush1.msra.mxu0 %v196
    %761 = vmatprep.subr.mxu0 0.0
    %762 = vmatpush1.msra.mxu0 %v197
    %763 = vmatprep.subr.mxu0 0.0
    %764 = vmatpush1.msra.mxu0 %v198
    %765 = vmatprep.subr.mxu0 0.0
    %766 = vmatpush1.msra.mxu0 %v199
    %767 = vmatprep.subr.mxu0 0.0
    %768 = vmatpush1.msra.mxu0 %v200
    %769 = vmatprep.subr.mxu0 0.0
    %770 = vmatpush1.msra.mxu0 %v201
    %771 = vmatprep.subr.mxu0 0.0
    %772 = vmatpush1.msra.mxu0 %v202
    %773 = vmatprep.subr.mxu0 0.0
    %774 = vmatpush1.msra.mxu0 %v203
    %775 = vmatprep.subr.mxu0 0.0
    %776 = vmatpush1.msra.mxu0 %v204
    %777 = vmatprep.subr.mxu0 0.0
    %778 = vmatpush1.msra.mxu0 %v205
    %779 = vmatprep.subr.mxu0 0.0
    %780 = vmatpush1.msra.mxu0 %v206
    %781 = vmatprep.subr.mxu0 0.0
    %782 = vmatpush1.msra.mxu0 %v207
    %783 = vmatprep.subr.mxu0 0.0
    %784 = vmatpush1.msra.mxu0 %v208
    %785 = vmatprep.subr.mxu0 0.0
    %786 = vmatpush1.msra.mxu0 0.0
    %787 = vmatprep.subr.mxu0 0.0
    %788 = vmatpush1.msra.mxu0 0.0
    %789 = vmatprep.subr.mxu0 0.0
    %790 = vmatpush1.msra.mxu0 0.0
    %791 = vmatprep.subr.mxu0 0.0
    %792 = vmatpush1.msra.mxu0 0.0
    %793 = vmatprep.subr.mxu0 0.0
    %794 = vmatpush1.msra.mxu0 0.0
    %795 = vmatprep.subr.mxu0 0.0
    %796 = vmatpush1.msra.mxu0 0.0
    %797 = vmatprep.subr.mxu0 0.0
    %798 = vmatpush1.msra.mxu0 0.0
    %799 = vmatprep.subr.mxu0 0.0
    %800 = vmatpush1.msra.mxu0 0.0
    %801 = vmatprep.subr.mxu0 0.0
    %802 = vmatpush1.msra.mxu0 0.0
    %803 = vmatprep.subr.mxu0 0.0
    %804 = vmatpush1.msra.mxu0 0.0
    %805 = vmatprep.subr.mxu0 0.0
    %806 = vmatpush1.msra.mxu0 0.0
    %807 = vmatprep.subr.mxu0 0.0
    %808 = vmatpush1.msra.mxu0 0.0
    %809 = vmatprep.subr.mxu0 0.0
    %810 = vmatpush1.msra.mxu0 0.0
    %811 = vmatprep.subr.mxu0 0.0
    %812 = vmatpush1.msra.mxu0 0.0
    %813 = vmatprep.subr.mxu0 0.0
    %814 = vmatpush1.msra.mxu0 0.0
    %815 = vmatprep.subr.mxu0 0.0
    %816 = vmatpush1.msra.mxu0 0.0
    %817 = vmatprep.mubr.f32.mxu0 0.0
    %818 = vmatmul.mubr.f32.gmra.mrb[0].mxu0 %v745
    %v819 = vpop.f32.mrb[0].mxu0
    %v820 = vadd.f32 0.0, %v819
    %v821 = vpop.f32.mrb[0].mxu0
    %822 = vmatprep.mubr.f32.mxu0 0.0
    %823 = vmatmul.mubr.f32.gmra.mrb[0].mxu0 %v746
    %v824 = vpop.f32.mrb[0].mxu0
    %v825 = vadd.f32 0.0, %v824
    %v826 = vpop.f32.mrb[0].mxu0
    %827 = vmatprep.mubr.f32.mxu0 0.0
    %828 = vmatmul.mubr.f32.gmra.mrb[0].mxu0 %v747
    %v829 = vpop.f32.mrb[0].mxu0
    %v830 = vadd.f32 0.0, %v829
    %v831 = vpop.f32.mrb[0].mxu0
    %832 = vmatprep.mubr.f32.mxu0 0.0
    %833 = vmatmul.mubr.f32.gmra.mrb[0].mxu0 %v748
    %v834 = vpop.f32.mrb[0].mxu0
    %v835 = vadd.f32 0.0, %v834
    %v836 = vpop.f32.mrb[0].mxu0
    %837 = vmatprep.mubr.f32.mxu0 0.0
    %838 = vmatmul.mubr.f32.gmra.mrb[0].mxu0 %v749
    %v839 = vpop.f32.mrb[0].mxu0
    %v840 = vadd.f32 0.0, %v839
    %v841 = vpop.f32.mrb[0].mxu0
    %842 = vmatprep.mubr.f32.mxu0 0.0
    %843 = vmatmul.mubr.f32.gmra.mrb[0].mxu0 %v750
    %v844 = vpop.f32.mrb[0].mxu0
    %v845 = vadd.f32 0.0, %v844
    %v846 = vpop.f32.mrb[0].mxu0
    %847 = vmatprep.mubr.f32.mxu0 0.0
    %848 = vmatmul.mubr.f32.gmra.mrb[0].mxu0 %v751
    %v849 = vpop.f32.mrb[0].mxu0
    %v850 = vadd.f32 0.0, %v849
    %v851 = vpop.f32.mrb[0].mxu0
    %852 = vmatprep.mubr.f32.mxu0 0.0
    %853 = vmatmul.mubr.f32.gmra.mrb[0].mxu0 %v752
    %v854 = vpop.f32.mrb[0].mxu0
    %v855 = vadd.f32 0.0, %v854
    %v856 = vpop.f32.mrb[0].mxu0
    %857 = vdwg.mxu0
    %s858 = scalar_lea.vmem %s2, 256
    %v859 = vld [vmem:[%s858] sm:$0xff]
    %v860 = vld [vmem:[%s858 + $0x8] sm:$0xff]
    %v861 = vld [vmem:[%s858 + $0x10] sm:$0xff]
    %v862 = vld [vmem:[%s858 + $0x18] sm:$0xff]
    %v863 = vld [vmem:[%s858 + $0x20] sm:$0xff]
    %v864 = vld [vmem:[%s858 + $0x28] sm:$0xff]
    %v865 = vld [vmem:[%s858 + $0x30] sm:$0xff]
    %v866 = vld [vmem:[%s858 + $0x38] sm:$0xff]
    %v867 = vld [vmem:[%s858 + $0x40] sm:$0xff]
    %v868 = vld [vmem:[%s858 + $0x48] sm:$0xff]
    %v869 = vld [vmem:[%s858 + $0x50] sm:$0xff]
    %v870 = vld [vmem:[%s858 + $0x58] sm:$0xff]
    %v871 = vld [vmem:[%s858 + $0x60] sm:$0xff]
    %v872 = vld [vmem:[%s858 + $0x68] sm:$0xff]
    %v873 = vld [vmem:[%s858 + $0x70] sm:$0xff]
    %v874 = vld [vmem:[%s858 + $0x78] sm:$0xff]
    %v876 = vsel %vm469, %v820, 0
    %v879 = vsel %vm469, %v825, 0
    %v882 = vsel %vm469, %v830, 0
    %v885 = vsel %vm469, %v835, 0
    %v888 = vsel %vm469, %v840, 0
    %v891 = vsel %vm469, %v845, 0
    %v894 = vsel %vm469, %v850, 0
    %v897 = vsel %vm469, %v855, 0
    %899 = vmatprep.subr.mxu0 %v860
    %900 = vmatpush1.msra.mxu0 %v859
    %901 = vmatprep.subr.mxu0 %v862
    %902 = vmatpush1.msra.mxu0 %v861
    %903 = vmatprep.subr.mxu0 %v864
    %904 = vmatpush1.msra.mxu0 %v863
    %905 = vmatprep.subr.mxu0 %v866
    %906 = vmatpush1.msra.mxu0 %v865
    %907 = vmatprep.subr.mxu0 %v868
    %908 = vmatpush1.msra.mxu0 %v867
    %909 = vmatprep.subr.mxu0 %v870
    %910 = vmatpush1.msra.mxu0 %v869
    %911 = vmatprep.subr.mxu0 %v872
    %912 = vmatpush1.msra.mxu0 %v871
    %913 = vmatprep.subr.mxu0 %v874
    %914 = vmatpush1.msra.mxu0 %v873
    %915 = vmatprep.subr.mxu0 0.0
    %916 = vmatpush1.msra.mxu0 0.0
    %917 = vmatprep.subr.mxu0 0.0
    %918 = vmatpush1.msra.mxu0 0.0
    %919 = vmatprep.subr.mxu0 0.0
    %920 = vmatpush1.msra.mxu0 0.0
    %921 = vmatprep.subr.mxu0 0.0
    %922 = vmatpush1.msra.mxu0 0.0
    %923 = vmatprep.subr.mxu0 0.0
    %924 = vmatpush1.msra.mxu0 0.0
    %925 = vmatprep.subr.mxu0 0.0
    %926 = vmatpush1.msra.mxu0 0.0
    %927 = vmatprep.subr.mxu0 0.0
    %928 = vmatpush1.msra.mxu0 0.0
    %929 = vmatprep.subr.mxu0 0.0
    %930 = vmatpush1.msra.mxu0 0.0
    %931 = vmatprep.subr.mxu0 0.0
    %932 = vmatpush1.msra.mxu0 0.0
    %933 = vmatprep.subr.mxu0 0.0
    %934 = vmatpush1.msra.mxu0 0.0
    %935 = vmatprep.subr.mxu0 0.0
    %936 = vmatpush1.msra.mxu0 0.0
    %937 = vmatprep.subr.mxu0 0.0
    %938 = vmatpush1.msra.mxu0 0.0
    %939 = vmatprep.subr.mxu0 0.0
    %940 = vmatpush1.msra.mxu0 0.0
    %941 = vmatprep.subr.mxu0 0.0
    %942 = vmatpush1.msra.mxu0 0.0
    %943 = vmatprep.subr.mxu0 0.0
    %944 = vmatpush1.msra.mxu0 0.0
    %945 = vmatprep.subr.mxu0 0.0
    %946 = vmatpush1.msra.mxu0 0.0
    %947 = vmatprep.subr.mxu0 0.0
    %948 = vmatpush1.msra.mxu0 0.0
    %949 = vmatprep.subr.mxu0 0.0
    %950 = vmatpush1.msra.mxu0 0.0
    %951 = vmatprep.subr.mxu0 0.0
    %952 = vmatpush1.msra.mxu0 0.0
    %953 = vmatprep.subr.mxu0 0.0
    %954 = vmatpush1.msra.mxu0 0.0
    %955 = vmatprep.subr.mxu0 0.0
    %956 = vmatpush1.msra.mxu0 0.0
    %957 = vmatprep.subr.mxu0 0.0
    %958 = vmatpush1.msra.mxu0 0.0
    %959 = vmatprep.subr.mxu0 0.0
    %960 = vmatpush1.msra.mxu0 0.0
    %961 = vmatprep.subr.mxu0 0.0
    %962 = vmatpush1.msra.mxu0 0.0
    %963 = vmatprep.mubr.f32.mxu0 0.0
    %964 = vmatmul.mubr.f32.gmra.mrb[0].mxu0 %v876
    %v965 = vpop.f32.mrb[0].mxu0
    %v966 = vadd.f32 0.0, %v965
    %v967 = vpop.f32.mrb[0].mxu0
    %v968 = vadd.f32 0.0, %v967
    %969 = vmatprep.mubr.f32.mxu0 0.0
    %970 = vmatmul.mubr.f32.gmra.mrb[0].mxu0 %v879
    %v971 = vpop.f32.mrb[0].mxu0
    %v972 = vadd.f32 0.0, %v971
    %v973 = vpop.f32.mrb[0].mxu0
    %v974 = vadd.f32 0.0, %v973
    %975 = vmatprep.mubr.f32.mxu0 0.0
    %976 = vmatmul.mubr.f32.gmra.mrb[0].mxu0 %v882
    %v977 = vpop.f32.mrb[0].mxu0
    %v978 = vadd.f32 0.0, %v977
    %v979 = vpop.f32.mrb[0].mxu0
    %v980 = vadd.f32 0.0, %v979
    %981 = vmatprep.mubr.f32.mxu0 0.0
    %982 = vmatmul.mubr.f32.gmra.mrb[0].mxu0 %v885
    %v983 = vpop.f32.mrb[0].mxu0
    %v984 = vadd.f32 0.0, %v983
    %v985 = vpop.f32.mrb[0].mxu0
    %v986 = vadd.f32 0.0, %v985
    %987 = vmatprep.mubr.f32.mxu0 0.0
    %988 = vmatmul.mubr.f32.gmra.mrb[0].mxu0 %v888
    %v989 = vpop.f32.mrb[0].mxu0
    %v990 = vadd.f32 0.0, %v989
    %v991 = vpop.f32.mrb[0].mxu0
    %v992 = vadd.f32 0.0, %v991
    %993 = vmatprep.mubr.f32.mxu0 0.0
    %994 = vmatmul.mubr.f32.gmra.mrb[0].mxu0 %v891
    %v995 = vpop.f32.mrb[0].mxu0
    %v996 = vadd.f32 0.0, %v995
    %v997 = vpop.f32.mrb[0].mxu0
    %v998 = vadd.f32 0.0, %v997
    %999 = vmatprep.mubr.f32.mxu0 0.0
    %1000 = vmatmul.mubr.f32.gmra.mrb[0].mxu0 %v894
    %v1001 = vpop.f32.mrb[0].mxu0
    %v1002 = vadd.f32 0.0, %v1001
    %v1003 = vpop.f32.mrb[0].mxu0
    %v1004 = vadd.f32 0.0, %v1003
    %1005 = vmatprep.mubr.f32.mxu0 0.0
    %1006 = vmatmul.mubr.f32.gmra.mrb[0].mxu0 %v897
    %v1007 = vpop.f32.mrb[0].mxu0
    %v1008 = vadd.f32 0.0, %v1007
    %v1009 = vpop.f32.mrb[0].mxu0
    %v1010 = vadd.f32 0.0, %v1009
    %1011 = vdwg.mxu0
    %v1012 = vadd.f32 %v698, %v966
    %v1013 = vadd.f32 %v700, %v968
    %v1014 = vadd.f32 %v704, %v972
    %v1015 = vadd.f32 %v706, %v974
    %v1016 = vadd.f32 %v710, %v978
    %v1017 = vadd.f32 %v712, %v980
    %v1018 = vadd.f32 %v716, %v984
    %v1019 = vadd.f32 %v718, %v986
    %v1020 = vadd.f32 %v722, %v990
    %v1021 = vadd.f32 %v724, %v992
    %v1022 = vadd.f32 %v728, %v996
    %v1023 = vadd.f32 %v730, %v998
    %v1024 = vadd.f32 %v734, %v1002
    %v1025 = vadd.f32 %v736, %v1004
    %v1026 = vadd.f32 %v740, %v1008
    %v1027 = vadd.f32 %v742, %v1010
    %s1028 = scalar_lea.vmem %s1, 192
    %v1029 = vld [vmem:[%s1028] sm:$0xff]
    %v1030 = vld [vmem:[%s1028 + $0x8] sm:$0xff]
    %v1031 = vld [vmem:[%s1028 + $0x10] sm:$0xff]
    %v1032 = vld [vmem:[%s1028 + $0x18] sm:$0xff]
    %v1033 = vld [vmem:[%s1028 + $0x20] sm:$0xff]
    %v1034 = vld [vmem:[%s1028 + $0x28] sm:$0xff]
    %v1035 = vld [vmem:[%s1028 + $0x30] sm:$0xff]
    %v1036 = vld [vmem:[%s1028 + $0x38] sm:$0xff]
    %1037 = vmatprep.subr.mxu0 0.0
    %1038 = vmatpush1.msra.mxu0 %v193
    %1039 = vmatprep.subr.mxu0 0.0
    %1040 = vmatpush1.msra.mxu0 %v194
    %1041 = vmatprep.subr.mxu0 0.0
    %1042 = vmatpush1.msra.mxu0 %v195
    %1043 = vmatprep.subr.mxu0 0.0
    %1044 = vmatpush1.msra.mxu0 %v196
    %1045 = vmatprep.subr.mxu0 0.0
    %1046 = vmatpush1.msra.mxu0 %v197
    %1047 = vmatprep.subr.mxu0 0.0
    %1048 = vmatpush1.msra.mxu0 %v198
    %1049 = vmatprep.subr.mxu0 0.0
    %1050 = vmatpush1.msra.mxu0 %v199
    %1051 = vmatprep.subr.mxu0 0.0
    %1052 = vmatpush1.msra.mxu0 %v200
    %1053 = vmatprep.subr.mxu0 0.0
    %1054 = vmatpush1.msra.mxu0 %v201
    %1055 = vmatprep.subr.mxu0 0.0
    %1056 = vmatpush1.msra.mxu0 %v202
    %1057 = vmatprep.subr.mxu0 0.0
    %1058 = vmatpush1.msra.mxu0 %v203
    %1059 = vmatprep.subr.mxu0 0.0
    %1060 = vmatpush1.msra.mxu0 %v204
    %1061 = vmatprep.subr.mxu0 0.0
    %1062 = vmatpush1.msra.mxu0 %v205
    %1063 = vmatprep.subr.mxu0 0.0
    %1064 = vmatpush1.msra.mxu0 %v206
    %1065 = vmatprep.subr.mxu0 0.0
    %1066 = vmatpush1.msra.mxu0 %v207
    %1067 = vmatprep.subr.mxu0 0.0
    %1068 = vmatpush1.msra.mxu0 %v208
    %1069 = vmatprep.subr.mxu0 0.0
    %1070 = vmatpush1.msra.mxu0 0.0
    %1071 = vmatprep.subr.mxu0 0.0
    %1072 = vmatpush1.msra.mxu0 0.0
    %1073 = vmatprep.subr.mxu0 0.0
    %1074 = vmatpush1.msra.mxu0 0.0
    %1075 = vmatprep.subr.mxu0 0.0
    %1076 = vmatpush1.msra.mxu0 0.0
    %1077 = vmatprep.subr.mxu0 0.0
    %1078 = vmatpush1.msra.mxu0 0.0
    %1079 = vmatprep.subr.mxu0 0.0
    %1080 = vmatpush1.msra.mxu0 0.0
    %1081 = vmatprep.subr.mxu0 0.0
    %1082 = vmatpush1.msra.mxu0 0.0
    %1083 = vmatprep.subr.mxu0 0.0
    %1084 = vmatpush1.msra.mxu0 0.0
    %1085 = vmatprep.subr.mxu0 0.0
    %1086 = vmatpush1.msra.mxu0 0.0
    %1087 = vmatprep.subr.mxu0 0.0
    %1088 = vmatpush1.msra.mxu0 0.0
    %1089 = vmatprep.subr.mxu0 0.0
    %1090 = vmatpush1.msra.mxu0 0.0
    %1091 = vmatprep.subr.mxu0 0.0
    %1092 = vmatpush1.msra.mxu0 0.0
    %1093 = vmatprep.subr.mxu0 0.0
    %1094 = vmatpush1.msra.mxu0 0.0
    %1095 = vmatprep.subr.mxu0 0.0
    %1096 = vmatpush1.msra.mxu0 0.0
    %1097 = vmatprep.subr.mxu0 0.0
    %1098 = vmatpush1.msra.mxu0 0.0
    %1099 = vmatprep.subr.mxu0 0.0
    %1100 = vmatpush1.msra.mxu0 0.0
    %1101 = vmatprep.mubr.f32.mxu0 0.0
    %1102 = vmatmul.mubr.f32.gmra.mrb[0].mxu0 %v1029
    %v1103 = vpop.f32.mrb[0].mxu0
    %v1104 = vadd.f32 0.0, %v1103
    %v1105 = vpop.f32.mrb[0].mxu0
    %1106 = vmatprep.mubr.f32.mxu0 0.0
    %1107 = vmatmul.mubr.f32.gmra.mrb[0].mxu0 %v1030
    %v1108 = vpop.f32.mrb[0].mxu0
    %v1109 = vadd.f32 0.0, %v1108
    %v1110 = vpop.f32.mrb[0].mxu0
    %1111 = vmatprep.mubr.f32.mxu0 0.0
    %1112 = vmatmul.mubr.f32.gmra.mrb[0].mxu0 %v1031
    %v1113 = vpop.f32.mrb[0].mxu0
    %v1114 = vadd.f32 0.0, %v1113
    %v1115 = vpop.f32.mrb[0].mxu0
    %1116 = vmatprep.mubr.f32.mxu0 0.0
    %1117 = vmatmul.mubr.f32.gmra.mrb[0].mxu0 %v1032
    %v1118 = vpop.f32.mrb[0].mxu0
    %v1119 = vadd.f32 0.0, %v1118
    %v1120 = vpop.f32.mrb[0].mxu0
    %1121 = vmatprep.mubr.f32.mxu0 0.0
    %1122 = vmatmul.mubr.f32.gmra.mrb[0].mxu0 %v1033
    %v1123 = vpop.f32.mrb[0].mxu0
    %v1124 = vadd.f32 0.0, %v1123
    %v1125 = vpop.f32.mrb[0].mxu0
    %1126 = vmatprep.mubr.f32.mxu0 0.0
    %1127 = vmatmul.mubr.f32.gmra.mrb[0].mxu0 %v1034
    %v1128 = vpop.f32.mrb[0].mxu0
    %v1129 = vadd.f32 0.0, %v1128
    %v1130 = vpop.f32.mrb[0].mxu0
    %1131 = vmatprep.mubr.f32.mxu0 0.0
    %1132 = vmatmul.mubr.f32.gmra.mrb[0].mxu0 %v1035
    %v1133 = vpop.f32.mrb[0].mxu0
    %v1134 = vadd.f32 0.0, %v1133
    %v1135 = vpop.f32.mrb[0].mxu0
    %1136 = vmatprep.mubr.f32.mxu0 0.0
    %1137 = vmatmul.mubr.f32.gmra.mrb[0].mxu0 %v1036
    %v1138 = vpop.f32.mrb[0].mxu0
    %v1139 = vadd.f32 0.0, %v1138
    %v1140 = vpop.f32.mrb[0].mxu0
    %1141 = vdwg.mxu0
    %s1142 = scalar_lea.vmem %s2, 384
    %v1143 = vld [vmem:[%s1142] sm:$0xff]
    %v1144 = vld [vmem:[%s1142 + $0x8] sm:$0xff]
    %v1145 = vld [vmem:[%s1142 + $0x10] sm:$0xff]
    %v1146 = vld [vmem:[%s1142 + $0x18] sm:$0xff]
    %v1147 = vld [vmem:[%s1142 + $0x20] sm:$0xff]
    %v1148 = vld [vmem:[%s1142 + $0x28] sm:$0xff]
    %v1149 = vld [vmem:[%s1142 + $0x30] sm:$0xff]
    %v1150 = vld [vmem:[%s1142 + $0x38] sm:$0xff]
    %v1151 = vld [vmem:[%s1142 + $0x40] sm:$0xff]
    %v1152 = vld [vmem:[%s1142 + $0x48] sm:$0xff]
    %v1153 = vld [vmem:[%s1142 + $0x50] sm:$0xff]
    %v1154 = vld [vmem:[%s1142 + $0x58] sm:$0xff]
    %v1155 = vld [vmem:[%s1142 + $0x60] sm:$0xff]
    %v1156 = vld [vmem:[%s1142 + $0x68] sm:$0xff]
    %v1157 = vld [vmem:[%s1142 + $0x70] sm:$0xff]
    %v1158 = vld [vmem:[%s1142 + $0x78] sm:$0xff]
    %v1160 = vsel %vm469, %v1104, 0
    %v1163 = vsel %vm469, %v1109, 0
    %v1166 = vsel %vm469, %v1114, 0
    %v1169 = vsel %vm469, %v1119, 0
    %v1172 = vsel %vm469, %v1124, 0
    %v1175 = vsel %vm469, %v1129, 0
    %v1178 = vsel %vm469, %v1134, 0
    %v1181 = vsel %vm469, %v1139, 0
    %1183 = vmatprep.subr.mxu0 %v1144
    %1184 = vmatpush1.msra.mxu0 %v1143
    %1185 = vmatprep.subr.mxu0 %v1146
    %1186 = vmatpush1.msra.mxu0 %v1145
    %1187 = vmatprep.subr.mxu0 %v1148
    %1188 = vmatpush1.msra.mxu0 %v1147
    %1189 = vmatprep.subr.mxu0 %v1150
    %1190 = vmatpush1.msra.mxu0 %v1149
    %1191 = vmatprep.subr.mxu0 %v1152
    %1192 = vmatpush1.msra.mxu0 %v1151
    %1193 = vmatprep.subr.mxu0 %v1154
    %1194 = vmatpush1.msra.mxu0 %v1153
    %1195 = vmatprep.subr.mxu0 %v1156
    %1196 = vmatpush1.msra.mxu0 %v1155
    %1197 = vmatprep.subr.mxu0 %v1158
    %1198 = vmatpush1.msra.mxu0 %v1157
    %1199 = vmatprep.subr.mxu0 0.0
    %1200 = vmatpush1.msra.mxu0 0.0
    %1201 = vmatprep.subr.mxu0 0.0
    %1202 = vmatpush1.msra.mxu0 0.0
    %1203 = vmatprep.subr.mxu0 0.0
    %1204 = vmatpush1.msra.mxu0 0.0
    %1205 = vmatprep.subr.mxu0 0.0
    %1206 = vmatpush1.msra.mxu0 0.0
    %1207 = vmatprep.subr.mxu0 0.0
    %1208 = vmatpush1.msra.mxu0 0.0
    %1209 = vmatprep.subr.mxu0 0.0
    %1210 = vmatpush1.msra.mxu0 0.0
    %1211 = vmatprep.subr.mxu0 0.0
    %1212 = vmatpush1.msra.mxu0 0.0
    %1213 = vmatprep.subr.mxu0 0.0
    %1214 = vmatpush1.msra.mxu0 0.0
    %1215 = vmatprep.subr.mxu0 0.0
    %1216 = vmatpush1.msra.mxu0 0.0
    %1217 = vmatprep.subr.mxu0 0.0
    %1218 = vmatpush1.msra.mxu0 0.0
    %1219 = vmatprep.subr.mxu0 0.0
    %1220 = vmatpush1.msra.mxu0 0.0
    %1221 = vmatprep.subr.mxu0 0.0
    %1222 = vmatpush1.msra.mxu0 0.0
    %1223 = vmatprep.subr.mxu0 0.0
    %1224 = vmatpush1.msra.mxu0 0.0
    %1225 = vmatprep.subr.mxu0 0.0
    %1226 = vmatpush1.msra.mxu0 0.0
    %1227 = vmatprep.subr.mxu0 0.0
    %1228 = vmatpush1.msra.mxu0 0.0
    %1229 = vmatprep.subr.mxu0 0.0
    %1230 = vmatpush1.msra.mxu0 0.0
    %1231 = vmatprep.subr.mxu0 0.0
    %1232 = vmatpush1.msra.mxu0 0.0
    %1233 = vmatprep.subr.mxu0 0.0
    %1234 = vmatpush1.msra.mxu0 0.0
    %1235 = vmatprep.subr.mxu0 0.0
    %1236 = vmatpush1.msra.mxu0 0.0
    %1237 = vmatprep.subr.mxu0 0.0
    %1238 = vmatpush1.msra.mxu0 0.0
    %1239 = vmatprep.subr.mxu0 0.0
    %1240 = vmatpush1.msra.mxu0 0.0
    %1241 = vmatprep.subr.mxu0 0.0
    %1242 = vmatpush1.msra.mxu0 0.0
    %1243 = vmatprep.subr.mxu0 0.0
    %1244 = vmatpush1.msra.mxu0 0.0
    %1245 = vmatprep.subr.mxu0 0.0
    %1246 = vmatpush1.msra.mxu0 0.0
    %1247 = vmatprep.mubr.f32.mxu0 0.0
    %1248 = vmatmul.mubr.f32.gmra.mrb[0].mxu0 %v1160
    %v1249 = vpop.f32.mrb[0].mxu0
    %v1250 = vadd.f32 0.0, %v1249
    %v1251 = vpop.f32.mrb[0].mxu0
    %v1252 = vadd.f32 0.0, %v1251
    %1253 = vmatprep.mubr.f32.mxu0 0.0
    %1254 = vmatmul.mubr.f32.gmra.mrb[0].mxu0 %v1163
    %v1255 = vpop.f32.mrb[0].mxu0
    %v1256 = vadd.f32 0.0, %v1255
    %v1257 = vpop.f32.mrb[0].mxu0
    %v1258 = vadd.f32 0.0, %v1257
    %1259 = vmatprep.mubr.f32.mxu0 0.0
    %1260 = vmatmul.mubr.f32.gmra.mrb[0].mxu0 %v1166
    %v1261 = vpop.f32.mrb[0].mxu0
    %v1262 = vadd.f32 0.0, %v1261
    %v1263 = vpop.f32.mrb[0].mxu0
    %v1264 = vadd.f32 0.0, %v1263
    %1265 = vmatprep.mubr.f32.mxu0 0.0
    %1266 = vmatmul.mubr.f32.gmra.mrb[0].mxu0 %v1169
    %v1267 = vpop.f32.mrb[0].mxu0
    %v1268 = vadd.f32 0.0, %v1267
    %v1269 = vpop.f32.mrb[0].mxu0
    %v1270 = vadd.f32 0.0, %v1269
    %1271 = vmatprep.mubr.f32.mxu0 0.0
    %1272 = vmatmul.mubr.f32.gmra.mrb[0].mxu0 %v1172
    %v1273 = vpop.f32.mrb[0].mxu0
    %v1274 = vadd.f32 0.0, %v1273
    %v1275 = vpop.f32.mrb[0].mxu0
    %v1276 = vadd.f32 0.0, %v1275
    %1277 = vmatprep.mubr.f32.mxu0 0.0
    %1278 = vmatmul.mubr.f32.gmra.mrb[0].mxu0 %v1175
    %v1279 = vpop.f32.mrb[0].mxu0
    %v1280 = vadd.f32 0.0, %v1279
    %v1281 = vpop.f32.mrb[0].mxu0
    %v1282 = vadd.f32 0.0, %v1281
    %1283 = vmatprep.mubr.f32.mxu0 0.0
    %1284 = vmatmul.mubr.f32.gmra.mrb[0].mxu0 %v1178
    %v1285 = vpop.f32.mrb[0].mxu0
    %v1286 = vadd.f32 0.0, %v1285
    %v1287 = vpop.f32.mrb[0].mxu0
    %v1288 = vadd.f32 0.0, %v1287
    %1289 = vmatprep.mubr.f32.mxu0 0.0
    %1290 = vmatmul.mubr.f32.gmra.mrb[0].mxu0 %v1181
    %v1291 = vpop.f32.mrb[0].mxu0
    %v1292 = vadd.f32 0.0, %v1291
    %v1293 = vpop.f32.mrb[0].mxu0
    %v1294 = vadd.f32 0.0, %v1293
    %1295 = vdwg.mxu0
    %v1296 = vadd.f32 %v1012, %v1250
    %v1297 = vadd.f32 %v1013, %v1252
    %v1298 = vadd.f32 %v1014, %v1256
    %v1299 = vadd.f32 %v1015, %v1258
    %v1300 = vadd.f32 %v1016, %v1262
    %v1301 = vadd.f32 %v1017, %v1264
    %v1302 = vadd.f32 %v1018, %v1268
    %v1303 = vadd.f32 %v1019, %v1270
    %v1304 = vadd.f32 %v1020, %v1274
    %v1305 = vadd.f32 %v1021, %v1276
    %v1306 = vadd.f32 %v1022, %v1280
    %v1307 = vadd.f32 %v1023, %v1282
    %v1308 = vadd.f32 %v1024, %v1286
    %v1309 = vadd.f32 %v1025, %v1288
    %v1310 = vadd.f32 %v1026, %v1292
    %v1311 = vadd.f32 %v1027, %v1294
    %v1312 = vld [vmem:[%s3] sm:$0x3]
    %v1314 = vlaneseq
    %v1315 = vshrl.u32 %v1314, 7
    %v1316 = vsub.s32 0, %v1315
    %v1317 = vrot.slane %v1312, %v1316
    %v1318 = vlaneseq
    %v1319 = vshrl.u32 %v1318, 7
    %v1320 = vsub.s32 1, %v1319
    %v1321 = vrot.slane %v1312, %v1320
    %v1324 = vadd.f32 %v1296, %v1317
    %v1325 = vadd.f32 %v1297, %v1321
    %v1326 = vadd.f32 %v1298, %v1317
    %v1327 = vadd.f32 %v1299, %v1321
    %v1328 = vadd.f32 %v1300, %v1317
    %v1329 = vadd.f32 %v1301, %v1321
    %v1330 = vadd.f32 %v1302, %v1317
    %v1331 = vadd.f32 %v1303, %v1321
    %v1332 = vadd.f32 %v1304, %v1317
    %v1333 = vadd.f32 %v1305, %v1321
    %v1334 = vadd.f32 %v1306, %v1317
    %v1335 = vadd.f32 %v1307, %v1321
    %v1336 = vadd.f32 %v1308, %v1317
    %v1337 = vadd.f32 %v1309, %v1321
    %v1338 = vadd.f32 %v1310, %v1317
    %v1339 = vadd.f32 %v1311, %v1321
    %vm1340 = vcmp.gt.f32.partialorder %v1324, 0.0
    %vm1341 = vcmp.gt.f32.partialorder %v1325, 0.0
    %vm1342 = vcmp.gt.f32.partialorder %v1326, 0.0
    %vm1343 = vcmp.gt.f32.partialorder %v1327, 0.0
    %vm1344 = vcmp.gt.f32.partialorder %v1328, 0.0
    %vm1345 = vcmp.gt.f32.partialorder %v1329, 0.0
    %vm1346 = vcmp.gt.f32.partialorder %v1330, 0.0
    %vm1347 = vcmp.gt.f32.partialorder %v1331, 0.0
    %vm1348 = vcmp.gt.f32.partialorder %v1332, 0.0
    %vm1349 = vcmp.gt.f32.partialorder %v1333, 0.0
    %vm1350 = vcmp.gt.f32.partialorder %v1334, 0.0
    %vm1351 = vcmp.gt.f32.partialorder %v1335, 0.0
    %vm1352 = vcmp.gt.f32.partialorder %v1336, 0.0
    %vm1353 = vcmp.gt.f32.partialorder %v1337, 0.0
    %vm1354 = vcmp.gt.f32.partialorder %v1338, 0.0
    %vm1355 = vcmp.gt.f32.partialorder %v1339, 0.0
    %v1356 = vmul.f32 %v1324, 0.2
    %v1357 = vmul.f32 %v1325, 0.2
    %v1358 = vmul.f32 %v1326, 0.2
    %v1359 = vmul.f32 %v1327, 0.2
    %v1360 = vmul.f32 %v1328, 0.2
    %v1361 = vmul.f32 %v1329, 0.2
    %v1362 = vmul.f32 %v1330, 0.2
    %v1363 = vmul.f32 %v1331, 0.2
    %v1364 = vmul.f32 %v1332, 0.2
    %v1365 = vmul.f32 %v1333, 0.2
    %v1366 = vmul.f32 %v1334, 0.2
    %v1367 = vmul.f32 %v1335, 0.2
    %v1368 = vmul.f32 %v1336, 0.2
    %v1369 = vmul.f32 %v1337, 0.2
    %v1370 = vmul.f32 %v1338, 0.2
    %v1371 = vmul.f32 %v1339, 0.2
    %v1372 = vsel %vm1340, %v1324, %v1356
    %v1373 = vsel %vm1341, %v1325, %v1357
    %v1374 = vsel %vm1342, %v1326, %v1358
    %v1375 = vsel %vm1343, %v1327, %v1359
    %v1376 = vsel %vm1344, %v1328, %v1360
    %v1377 = vsel %vm1345, %v1329, %v1361
    %v1378 = vsel %vm1346, %v1330, %v1362
    %v1379 = vsel %vm1347, %v1331, %v1363
    %v1380 = vsel %vm1348, %v1332, %v1364
    %v1381 = vsel %vm1349, %v1333, %v1365
    %v1382 = vsel %vm1350, %v1334, %v1366
    %v1383 = vsel %vm1351, %v1335, %v1367
    %v1384 = vsel %vm1352, %v1336, %v1368
    %v1385 = vsel %vm1353, %v1337, %v1369
    %v1386 = vsel %vm1354, %v1338, %v1370
    %v1387 = vsel %vm1355, %v1339, %v1371
    %v1388 = vld [vmem:[#allocation3] sm:$0xff]
    %v1389 = vld [vmem:[#allocation3 + $0x8] sm:$0xff]
    %v1390 = vld [vmem:[#allocation3 + $0x10] sm:$0xff]
    %v1391 = vld [vmem:[#allocation3 + $0x18] sm:$0xff]
    %v1393 = vsel %vm469, %v1388, 0
    %v1396 = vsel %vm469, %v1389, 0
    %v1399 = vsel %vm469, %v1390, 0
    %v1402 = vsel %vm469, %v1391, 0
    %1404 = vmatprep.subr.mxu0 %v1373
    %1405 = vmatpush1.msra.mxu0 %v1372
    %1406 = vmatprep.subr.mxu0 %v1375
    %1407 = vmatpush1.msra.mxu0 %v1374
    %1408 = vmatprep.subr.mxu0 %v1377
    %1409 = vmatpush1.msra.mxu0 %v1376
    %1410 = vmatprep.subr.mxu0 %v1379
    %1411 = vmatpush1.msra.mxu0 %v1378
    %1412 = vmatprep.subr.mxu0 %v1381
    %1413 = vmatpush1.msra.mxu0 %v1380
    %1414 = vmatprep.subr.mxu0 %v1383
    %1415 = vmatpush1.msra.mxu0 %v1382
    %1416 = vmatprep.subr.mxu0 %v1385
    %1417 = vmatpush1.msra.mxu0 %v1384
    %1418 = vmatprep.subr.mxu0 %v1387
    %1419 = vmatpush1.msra.mxu0 %v1386
    %1420 = vmatprep.subr.mxu0 0.0
    %1421 = vmatpush1.msra.mxu0 0.0
    %1422 = vmatprep.subr.mxu0 0.0
    %1423 = vmatpush1.msra.mxu0 0.0
    %1424 = vmatprep.subr.mxu0 0.0
    %1425 = vmatpush1.msra.mxu0 0.0
    %1426 = vmatprep.subr.mxu0 0.0
    %1427 = vmatpush1.msra.mxu0 0.0
    %1428 = vmatprep.subr.mxu0 0.0
    %1429 = vmatpush1.msra.mxu0 0.0
    %1430 = vmatprep.subr.mxu0 0.0
    %1431 = vmatpush1.msra.mxu0 0.0
    %1432 = vmatprep.subr.mxu0 0.0
    %1433 = vmatpush1.msra.mxu0 0.0
    %1434 = vmatprep.subr.mxu0 0.0
    %1435 = vmatpush1.msra.mxu0 0.0
    %1436 = vmatprep.subr.mxu0 0.0
    %1437 = vmatpush1.msra.mxu0 0.0
    %1438 = vmatprep.subr.mxu0 0.0
    %1439 = vmatpush1.msra.mxu0 0.0
    %1440 = vmatprep.subr.mxu0 0.0
    %1441 = vmatpush1.msra.mxu0 0.0
    %1442 = vmatprep.subr.mxu0 0.0
    %1443 = vmatpush1.msra.mxu0 0.0
    %1444 = vmatprep.subr.mxu0 0.0
    %1445 = vmatpush1.msra.mxu0 0.0
    %1446 = vmatprep.subr.mxu0 0.0
    %1447 = vmatpush1.msra.mxu0 0.0
    %1448 = vmatprep.subr.mxu0 0.0
    %1449 = vmatpush1.msra.mxu0 0.0
    %1450 = vmatprep.subr.mxu0 0.0
    %1451 = vmatpush1.msra.mxu0 0.0
    %1452 = vmatprep.subr.mxu0 0.0
    %1453 = vmatpush1.msra.mxu0 0.0
    %1454 = vmatprep.subr.mxu0 0.0
    %1455 = vmatpush1.msra.mxu0 0.0
    %1456 = vmatprep.subr.mxu0 0.0
    %1457 = vmatpush1.msra.mxu0 0.0
    %1458 = vmatprep.subr.mxu0 0.0
    %1459 = vmatpush1.msra.mxu0 0.0
    %1460 = vmatprep.subr.mxu0 0.0
    %1461 = vmatpush1.msra.mxu0 0.0
    %1462 = vmatprep.subr.mxu0 0.0
    %1463 = vmatpush1.msra.mxu0 0.0
    %1464 = vmatprep.subr.mxu0 0.0
    %1465 = vmatpush1.msra.mxu0 0.0
    %1466 = vmatprep.subr.mxu0 0.0
    %1467 = vmatpush1.msra.mxu0 0.0
    %1468 = vmatprep.mubr.f32.mxu0 0.0
    %1469 = vmatmul.mubr.f32.gmra.mrb[0].mxu0 %v1393
    %v1470 = vpop.f32.mrb[0].mxu0
    %v1471 = vadd.f32 0.0, %v1470
    %v1472 = vpop.f32.mrb[0].mxu0
    %v1473 = vadd.f32 0.0, %v1472
    %1474 = vmatprep.mubr.f32.mxu0 0.0
    %1475 = vmatmul.mubr.f32.gmra.mrb[0].mxu0 %v1396
    %v1476 = vpop.f32.mrb[0].mxu0
    %v1477 = vadd.f32 0.0, %v1476
    %v1478 = vpop.f32.mrb[0].mxu0
    %v1479 = vadd.f32 0.0, %v1478
    %1480 = vmatprep.mubr.f32.mxu0 0.0
    %1481 = vmatmul.mubr.f32.gmra.mrb[0].mxu0 %v1399
    %v1482 = vpop.f32.mrb[0].mxu0
    %v1483 = vadd.f32 0.0, %v1482
    %v1484 = vpop.f32.mrb[0].mxu0
    %v1485 = vadd.f32 0.0, %v1484
    %1486 = vmatprep.mubr.f32.mxu0 0.0
    %1487 = vmatmul.mubr.f32.gmra.mrb[0].mxu0 %v1402
    %v1488 = vpop.f32.mrb[0].mxu0
    %v1489 = vadd.f32 0.0, %v1488
    %v1490 = vpop.f32.mrb[0].mxu0
    %v1491 = vadd.f32 0.0, %v1490
    %1492 = vdwg.mxu0
    %v1493 = vld [vmem:[#allocation5] sm:$0xff]
    %v1494 = vld [vmem:[#allocation5 + $0x8] sm:$0xff]
    %v1495 = vld [vmem:[#allocation5 + $0x10] sm:$0xff]
    %v1496 = vld [vmem:[#allocation5 + $0x18] sm:$0xff]
    %v1497 = vld [vmem:[#allocation5 + $0x20] sm:$0xff]
    %v1498 = vld [vmem:[#allocation5 + $0x28] sm:$0xff]
    %v1499 = vld [vmem:[#allocation5 + $0x30] sm:$0xff]
    %v1500 = vld [vmem:[#allocation5 + $0x38] sm:$0xff]
    %v1501 = vld [vmem:[#allocation5 + $0x40] sm:$0xff]
    %v1502 = vld [vmem:[#allocation5 + $0x48] sm:$0xff]
    %v1503 = vld [vmem:[#allocation5 + $0x50] sm:$0xff]
    %v1504 = vld [vmem:[#allocation5 + $0x58] sm:$0xff]
    %v1505 = vld [vmem:[#allocation5 + $0x60] sm:$0xff]
    %v1506 = vld [vmem:[#allocation5 + $0x68] sm:$0xff]
    %v1507 = vld [vmem:[#allocation5 + $0x70] sm:$0xff]
    %v1508 = vld [vmem:[#allocation5 + $0x78] sm:$0xff]
    %v1509 = vld [vmem:[#allocation5 + $0x80] sm:$0xff]
    %v1510 = vld [vmem:[#allocation5 + $0x88] sm:$0xff]
    %v1511 = vld [vmem:[#allocation5 + $0x90] sm:$0xff]
    %v1512 = vld [vmem:[#allocation5 + $0x98] sm:$0xff]
    %v1513 = vld [vmem:[#allocation5 + $0xa0] sm:$0xff]
    %v1514 = vld [vmem:[#allocation5 + $0xa8] sm:$0xff]
    %v1515 = vld [vmem:[#allocation5 + $0xb0] sm:$0xff]
    %v1516 = vld [vmem:[#allocation5 + $0xb8] sm:$0xff]
    %v1517 = vld [vmem:[#allocation5 + $0xc0] sm:$0xff]
    %v1518 = vld [vmem:[#allocation5 + $0xc8] sm:$0xff]
    %v1519 = vld [vmem:[#allocation5 + $0xd0] sm:$0xff]
    %v1520 = vld [vmem:[#allocation5 + $0xd8] sm:$0xff]
    %v1521 = vld [vmem:[#allocation5 + $0xe0] sm:$0xff]
    %v1522 = vld [vmem:[#allocation5 + $0xe8] sm:$0xff]
    %v1523 = vld [vmem:[#allocation5 + $0xf0] sm:$0xff]
    %v1524 = vld [vmem:[#allocation5 + $0xf8] sm:$0xff]
    %v1525 = vld [vmem:[#allocation5 + $0x100] sm:$0xff]
    %v1526 = vld [vmem:[#allocation5 + $0x108] sm:$0xff]
    %v1527 = vld [vmem:[#allocation5 + $0x110] sm:$0xff]
    %v1528 = vld [vmem:[#allocation5 + $0x118] sm:$0xff]
    %v1529 = vld [vmem:[#allocation5 + $0x120] sm:$0xff]
    %v1530 = vld [vmem:[#allocation5 + $0x128] sm:$0xff]
    %v1531 = vld [vmem:[#allocation5 + $0x130] sm:$0xff]
    %v1532 = vld [vmem:[#allocation5 + $0x138] sm:$0xff]
    %v1533 = vld [vmem:[#allocation5 + $0x140] sm:$0xff]
    %v1534 = vld [vmem:[#allocation5 + $0x148] sm:$0xff]
    %v1535 = vld [vmem:[#allocation5 + $0x150] sm:$0xff]
    %v1536 = vld [vmem:[#allocation5 + $0x158] sm:$0xff]
    %v1537 = vld [vmem:[#allocation5 + $0x160] sm:$0xff]
    %v1538 = vld [vmem:[#allocation5 + $0x168] sm:$0xff]
    %v1539 = vld [vmem:[#allocation5 + $0x170] sm:$0xff]
    %v1540 = vld [vmem:[#allocation5 + $0x178] sm:$0xff]
    %v1541 = vld [vmem:[#allocation5 + $0x180] sm:$0xff]
    %v1542 = vld [vmem:[#allocation5 + $0x188] sm:$0xff]
    %v1543 = vld [vmem:[#allocation5 + $0x190] sm:$0xff]
    %v1544 = vld [vmem:[#allocation5 + $0x198] sm:$0xff]
    %v1545 = vld [vmem:[#allocation5 + $0x1a0] sm:$0xff]
    %v1546 = vld [vmem:[#allocation5 + $0x1a8] sm:$0xff]
    %v1547 = vld [vmem:[#allocation5 + $0x1b0] sm:$0xff]
    %v1548 = vld [vmem:[#allocation5 + $0x1b8] sm:$0xff]
    %v1549 = vld [vmem:[#allocation5 + $0x1c0] sm:$0xff]
    %v1550 = vld [vmem:[#allocation5 + $0x1c8] sm:$0xff]
    %v1551 = vld [vmem:[#allocation5 + $0x1d0] sm:$0xff]
    %v1552 = vld [vmem:[#allocation5 + $0x1d8] sm:$0xff]
    %v1553 = vld [vmem:[#allocation5 + $0x1e0] sm:$0xff]
    %v1554 = vld [vmem:[#allocation5 + $0x1e8] sm:$0xff]
    %v1555 = vld [vmem:[#allocation5 + $0x1f0] sm:$0xff]
    %v1556 = vld [vmem:[#allocation5 + $0x1f8] sm:$0xff]
    %s1557 = scalar_lea.vmem [#allocation3], 32
    %v1558 = vld [vmem:[%s1557] sm:$0xff]
    %v1559 = vld [vmem:[%s1557 + $0x8] sm:$0xff]
    %v1560 = vld [vmem:[%s1557 + $0x10] sm:$0xff]
    %v1561 = vld [vmem:[%s1557 + $0x18] sm:$0xff]
    %v1563 = vsel %vm469, %v1558, 0
    %v1566 = vsel %vm469, %v1559, 0
    %v1569 = vsel %vm469, %v1560, 0
    %v1572 = vsel %vm469, %v1561, 0
    %1574 = vmatprep.subr.mxu0 %v1373
    %1575 = vmatpush1.msra.mxu0 %v1372
    %1576 = vmatprep.subr.mxu0 %v1375
    %1577 = vmatpush1.msra.mxu0 %v1374
    %1578 = vmatprep.subr.mxu0 %v1377
    %1579 = vmatpush1.msra.mxu0 %v1376
    %1580 = vmatprep.subr.mxu0 %v1379
    %1581 = vmatpush1.msra.mxu0 %v1378
    %1582 = vmatprep.subr.mxu0 %v1381
    %1583 = vmatpush1.msra.mxu0 %v1380
    %1584 = vmatprep.subr.mxu0 %v1383
    %1585 = vmatpush1.msra.mxu0 %v1382
    %1586 = vmatprep.subr.mxu0 %v1385
    %1587 = vmatpush1.msra.mxu0 %v1384
    %1588 = vmatprep.subr.mxu0 %v1387
    %1589 = vmatpush1.msra.mxu0 %v1386
    %1590 = vmatprep.subr.mxu0 0.0
    %1591 = vmatpush1.msra.mxu0 0.0
    %1592 = vmatprep.subr.mxu0 0.0
    %1593 = vmatpush1.msra.mxu0 0.0
    %1594 = vmatprep.subr.mxu0 0.0
    %1595 = vmatpush1.msra.mxu0 0.0
    %1596 = vmatprep.subr.mxu0 0.0
    %1597 = vmatpush1.msra.mxu0 0.0
    %1598 = vmatprep.subr.mxu0 0.0
    %1599 = vmatpush1.msra.mxu0 0.0
    %1600 = vmatprep.subr.mxu0 0.0
    %1601 = vmatpush1.msra.mxu0 0.0
    %1602 = vmatprep.subr.mxu0 0.0
    %1603 = vmatpush1.msra.mxu0 0.0
    %1604 = vmatprep.subr.mxu0 0.0
    %1605 = vmatpush1.msra.mxu0 0.0
    %1606 = vmatprep.subr.mxu0 0.0
    %1607 = vmatpush1.msra.mxu0 0.0
    %1608 = vmatprep.subr.mxu0 0.0
    %1609 = vmatpush1.msra.mxu0 0.0
    %1610 = vmatprep.subr.mxu0 0.0
    %1611 = vmatpush1.msra.mxu0 0.0
    %1612 = vmatprep.subr.mxu0 0.0
    %1613 = vmatpush1.msra.mxu0 0.0
    %1614 = vmatprep.subr.mxu0 0.0
    %1615 = vmatpush1.msra.mxu0 0.0
    %1616 = vmatprep.subr.mxu0 0.0
    %1617 = vmatpush1.msra.mxu0 0.0
    %1618 = vmatprep.subr.mxu0 0.0
    %1619 = vmatpush1.msra.mxu0 0.0
    %1620 = vmatprep.subr.mxu0 0.0
    %1621 = vmatpush1.msra.mxu0 0.0
    %1622 = vmatprep.subr.mxu0 0.0
    %1623 = vmatpush1.msra.mxu0 0.0
    %1624 = vmatprep.subr.mxu0 0.0
    %1625 = vmatpush1.msra.mxu0 0.0
    %1626 = vmatprep.subr.mxu0 0.0
    %1627 = vmatpush1.msra.mxu0 0.0
    %1628 = vmatprep.subr.mxu0 0.0
    %1629 = vmatpush1.msra.mxu0 0.0
    %1630 = vmatprep.subr.mxu0 0.0
    %1631 = vmatpush1.msra.mxu0 0.0
    %1632 = vmatprep.subr.mxu0 0.0
    %1633 = vmatpush1.msra.mxu0 0.0
    %1634 = vmatprep.subr.mxu0 0.0
    %1635 = vmatpush1.msra.mxu0 0.0
    %1636 = vmatprep.subr.mxu0 0.0
    %1637 = vmatpush1.msra.mxu0 0.0
    %1638 = vmatprep.mubr.f32.mxu0 0.0
    %1639 = vmatmul.mubr.f32.gmra.mrb[0].mxu0 %v1563
    %v1640 = vpop.f32.mrb[0].mxu0
    %v1641 = vadd.f32 0.0, %v1640
    %v1642 = vpop.f32.mrb[0].mxu0
    %v1643 = vadd.f32 0.0, %v1642
    %1644 = vmatprep.mubr.f32.mxu0 0.0
    %1645 = vmatmul.mubr.f32.gmra.mrb[0].mxu0 %v1566
    %v1646 = vpop.f32.mrb[0].mxu0
    %v1647 = vadd.f32 0.0, %v1646
    %v1648 = vpop.f32.mrb[0].mxu0
    %v1649 = vadd.f32 0.0, %v1648
    %1650 = vmatprep.mubr.f32.mxu0 0.0
    %1651 = vmatmul.mubr.f32.gmra.mrb[0].mxu0 %v1569
    %v1652 = vpop.f32.mrb[0].mxu0
    %v1653 = vadd.f32 0.0, %v1652
    %v1654 = vpop.f32.mrb[0].mxu0
    %v1655 = vadd.f32 0.0, %v1654
    %1656 = vmatprep.mubr.f32.mxu0 0.0
    %1657 = vmatmul.mubr.f32.gmra.mrb[0].mxu0 %v1572
    %v1658 = vpop.f32.mrb[0].mxu0
    %v1659 = vadd.f32 0.0, %v1658
    %v1660 = vpop.f32.mrb[0].mxu0
    %v1661 = vadd.f32 0.0, %v1660
    %1662 = vdwg.mxu0
    %s1663 = scalar_lea.vmem [#allocation5], 512
    %v1664 = vld [vmem:[%s1663] sm:$0xff]
    %v1665 = vld [vmem:[%s1663 + $0x8] sm:$0xff]
    %v1666 = vld [vmem:[%s1663 + $0x10] sm:$0xff]
    %v1667 = vld [vmem:[%s1663 + $0x18] sm:$0xff]
    %v1668 = vld [vmem:[%s1663 + $0x20] sm:$0xff]
    %v1669 = vld [vmem:[%s1663 + $0x28] sm:$0xff]
    %v1670 = vld [vmem:[%s1663 + $0x30] sm:$0xff]
    %v1671 = vld [vmem:[%s1663 + $0x38] sm:$0xff]
    %v1672 = vld [vmem:[%s1663 + $0x40] sm:$0xff]
    %v1673 = vld [vmem:[%s1663 + $0x48] sm:$0xff]
    %v1674 = vld [vmem:[%s1663 + $0x50] sm:$0xff]
    %v1675 = vld [vmem:[%s1663 + $0x58] sm:$0xff]
    %v1676 = vld [vmem:[%s1663 + $0x60] sm:$0xff]
    %v1677 = vld [vmem:[%s1663 + $0x68] sm:$0xff]
    %v1678 = vld [vmem:[%s1663 + $0x70] sm:$0xff]
    %v1679 = vld [vmem:[%s1663 + $0x78] sm:$0xff]
    %v1680 = vld [vmem:[%s1663 + $0x80] sm:$0xff]
    %v1681 = vld [vmem:[%s1663 + $0x88] sm:$0xff]
    %v1682 = vld [vmem:[%s1663 + $0x90] sm:$0xff]
    %v1683 = vld [vmem:[%s1663 + $0x98] sm:$0xff]
    %v1684 = vld [vmem:[%s1663 + $0xa0] sm:$0xff]
    %v1685 = vld [vmem:[%s1663 + $0xa8] sm:$0xff]
    %v1686 = vld [vmem:[%s1663 + $0xb0] sm:$0xff]
    %v1687 = vld [vmem:[%s1663 + $0xb8] sm:$0xff]
    %v1688 = vld [vmem:[%s1663 + $0xc0] sm:$0xff]
    %v1689 = vld [vmem:[%s1663 + $0xc8] sm:$0xff]
    %v1690 = vld [vmem:[%s1663 + $0xd0] sm:$0xff]
    %v1691 = vld [vmem:[%s1663 + $0xd8] sm:$0xff]
    %v1692 = vld [vmem:[%s1663 + $0xe0] sm:$0xff]
    %v1693 = vld [vmem:[%s1663 + $0xe8] sm:$0xff]
    %v1694 = vld [vmem:[%s1663 + $0xf0] sm:$0xff]
    %v1695 = vld [vmem:[%s1663 + $0xf8] sm:$0xff]
    %v1696 = vld [vmem:[%s1663 + $0x100] sm:$0xff]
    %v1697 = vld [vmem:[%s1663 + $0x108] sm:$0xff]
    %v1698 = vld [vmem:[%s1663 + $0x110] sm:$0xff]
    %v1699 = vld [vmem:[%s1663 + $0x118] sm:$0xff]
    %v1700 = vld [vmem:[%s1663 + $0x120] sm:$0xff]
    %v1701 = vld [vmem:[%s1663 + $0x128] sm:$0xff]
    %v1702 = vld [vmem:[%s1663 + $0x130] sm:$0xff]
    %v1703 = vld [vmem:[%s1663 + $0x138] sm:$0xff]
    %v1704 = vld [vmem:[%s1663 + $0x140] sm:$0xff]
    %v1705 = vld [vmem:[%s1663 + $0x148] sm:$0xff]
    %v1706 = vld [vmem:[%s1663 + $0x150] sm:$0xff]
    %v1707 = vld [vmem:[%s1663 + $0x158] sm:$0xff]
    %v1708 = vld [vmem:[%s1663 + $0x160] sm:$0xff]
    %v1709 = vld [vmem:[%s1663 + $0x168] sm:$0xff]
    %v1710 = vld [vmem:[%s1663 + $0x170] sm:$0xff]
    %v1711 = vld [vmem:[%s1663 + $0x178] sm:$0xff]
    %v1712 = vld [vmem:[%s1663 + $0x180] sm:$0xff]
    %v1713 = vld [vmem:[%s1663 + $0x188] sm:$0xff]
    %v1714 = vld [vmem:[%s1663 + $0x190] sm:$0xff]
    %v1715 = vld [vmem:[%s1663 + $0x198] sm:$0xff]
    %v1716 = vld [vmem:[%s1663 + $0x1a0] sm:$0xff]
    %v1717 = vld [vmem:[%s1663 + $0x1a8] sm:$0xff]
    %v1718 = vld [vmem:[%s1663 + $0x1b0] sm:$0xff]
    %v1719 = vld [vmem:[%s1663 + $0x1b8] sm:$0xff]
    %v1720 = vld [vmem:[%s1663 + $0x1c0] sm:$0xff]
    %v1721 = vld [vmem:[%s1663 + $0x1c8] sm:$0xff]
    %v1722 = vld [vmem:[%s1663 + $0x1d0] sm:$0xff]
    %v1723 = vld [vmem:[%s1663 + $0x1d8] sm:$0xff]
    %v1724 = vld [vmem:[%s1663 + $0x1e0] sm:$0xff]
    %v1725 = vld [vmem:[%s1663 + $0x1e8] sm:$0xff]
    %v1726 = vld [vmem:[%s1663 + $0x1f0] sm:$0xff]
    %v1727 = vld [vmem:[%s1663 + $0x1f8] sm:$0xff]
    %1728 = vmatprep.subr.mxu0 %v1665
    %1729 = vmatpush1.msra.mxu0 %v1664
    %1730 = vmatprep.subr.mxu0 %v1667
    %1731 = vmatpush1.msra.mxu0 %v1666
    %1732 = vmatprep.subr.mxu0 %v1669
    %1733 = vmatpush1.msra.mxu0 %v1668
    %1734 = vmatprep.subr.mxu0 %v1671
    %1735 = vmatpush1.msra.mxu0 %v1670
    %1736 = vmatprep.subr.mxu0 %v1673
    %1737 = vmatpush1.msra.mxu0 %v1672
    %1738 = vmatprep.subr.mxu0 %v1675
    %1739 = vmatpush1.msra.mxu0 %v1674
    %1740 = vmatprep.subr.mxu0 %v1677
    %1741 = vmatpush1.msra.mxu0 %v1676
    %1742 = vmatprep.subr.mxu0 %v1679
    %1743 = vmatpush1.msra.mxu0 %v1678
    %1744 = vmatprep.subr.mxu0 %v1681
    %1745 = vmatpush1.msra.mxu0 %v1680
    %1746 = vmatprep.subr.mxu0 %v1683
    %1747 = vmatpush1.msra.mxu0 %v1682
    %1748 = vmatprep.subr.mxu0 %v1685
    %1749 = vmatpush1.msra.mxu0 %v1684
    %1750 = vmatprep.subr.mxu0 %v1687
    %1751 = vmatpush1.msra.mxu0 %v1686
    %1752 = vmatprep.subr.mxu0 %v1689
    %1753 = vmatpush1.msra.mxu0 %v1688
    %1754 = vmatprep.subr.mxu0 %v1691
    %1755 = vmatpush1.msra.mxu0 %v1690
    %1756 = vmatprep.subr.mxu0 %v1693
    %1757 = vmatpush1.msra.mxu0 %v1692
    %1758 = vmatprep.subr.mxu0 %v1695
    %1759 = vmatpush1.msra.mxu0 %v1694
    %1760 = vmatprep.subr.mxu0 %v1697
    %1761 = vmatpush1.msra.mxu0 %v1696
    %1762 = vmatprep.subr.mxu0 %v1699
    %1763 = vmatpush1.msra.mxu0 %v1698
    %1764 = vmatprep.subr.mxu0 %v1701
    %1765 = vmatpush1.msra.mxu0 %v1700
    %1766 = vmatprep.subr.mxu0 %v1703
    %1767 = vmatpush1.msra.mxu0 %v1702
    %1768 = vmatprep.subr.mxu0 %v1705
    %1769 = vmatpush1.msra.mxu0 %v1704
    %1770 = vmatprep.subr.mxu0 %v1707
    %1771 = vmatpush1.msra.mxu0 %v1706
    %1772 = vmatprep.subr.mxu0 %v1709
    %1773 = vmatpush1.msra.mxu0 %v1708
    %1774 = vmatprep.subr.mxu0 %v1711
    %1775 = vmatpush1.msra.mxu0 %v1710
    %1776 = vmatprep.subr.mxu0 %v1713
    %1777 = vmatpush1.msra.mxu0 %v1712
    %1778 = vmatprep.subr.mxu0 %v1715
    %1779 = vmatpush1.msra.mxu0 %v1714
    %1780 = vmatprep.subr.mxu0 %v1717
    %1781 = vmatpush1.msra.mxu0 %v1716
    %1782 = vmatprep.subr.mxu0 %v1719
    %1783 = vmatpush1.msra.mxu0 %v1718
    %1784 = vmatprep.subr.mxu0 %v1721
    %1785 = vmatpush1.msra.mxu0 %v1720
    %1786 = vmatprep.subr.mxu0 %v1723
    %1787 = vmatpush1.msra.mxu0 %v1722
    %1788 = vmatprep.subr.mxu0 %v1725
    %1789 = vmatpush1.msra.mxu0 %v1724
    %1790 = vmatprep.subr.mxu0 %v1727
    %1791 = vmatpush1.msra.mxu0 %v1726
    %1792 = vmatprep.mubr.f32.mxu0 %v1643
    %1793 = vmatmul.mubr.f32.gmra.mrb[0].mxu0 %v1641
    %v1794 = vpop.f32.mrb[0].mxu0
    %v1795 = vadd.f32 0.0, %v1794
    %v1796 = vpop.f32.mrb[0].mxu0
    %v1797 = vadd.f32 0.0, %v1796
    %1798 = vmatprep.mubr.f32.mxu0 %v1649
    %1799 = vmatmul.mubr.f32.gmra.mrb[0].mxu0 %v1647
    %v1800 = vpop.f32.mrb[0].mxu0
    %v1801 = vadd.f32 0.0, %v1800
    %v1802 = vpop.f32.mrb[0].mxu0
    %v1803 = vadd.f32 0.0, %v1802
    %1804 = vmatprep.mubr.f32.mxu0 %v1655
    %1805 = vmatmul.mubr.f32.gmra.mrb[0].mxu0 %v1653
    %v1806 = vpop.f32.mrb[0].mxu0
    %v1807 = vadd.f32 0.0, %v1806
    %v1808 = vpop.f32.mrb[0].mxu0
    %v1809 = vadd.f32 0.0, %v1808
    %1810 = vmatprep.mubr.f32.mxu0 %v1661
    %1811 = vmatmul.mubr.f32.gmra.mrb[0].mxu0 %v1659
    %v1812 = vpop.f32.mrb[0].mxu0
    %v1813 = vadd.f32 0.0, %v1812
    %v1814 = vpop.f32.mrb[0].mxu0
    %v1815 = vadd.f32 0.0, %v1814
    %1816 = vdwg.mxu0
    %1817 = vmatprep.subr.mxu0 %v1494
    %1818 = vmatpush1.msra.mxu0 %v1493
    %1819 = vmatprep.subr.mxu0 %v1496
    %1820 = vmatpush1.msra.mxu0 %v1495
    %1821 = vmatprep.subr.mxu0 %v1498
    %1822 = vmatpush1.msra.mxu0 %v1497
    %1823 = vmatprep.subr.mxu0 %v1500
    %1824 = vmatpush1.msra.mxu0 %v1499
    %1825 = vmatprep.subr.mxu0 %v1502
    %1826 = vmatpush1.msra.mxu0 %v1501
    %1827 = vmatprep.subr.mxu0 %v1504
    %1828 = vmatpush1.msra.mxu0 %v1503
    %1829 = vmatprep.subr.mxu0 %v1506
    %1830 = vmatpush1.msra.mxu0 %v1505
    %1831 = vmatprep.subr.mxu0 %v1508
    %1832 = vmatpush1.msra.mxu0 %v1507
    %1833 = vmatprep.subr.mxu0 %v1510
    %1834 = vmatpush1.msra.mxu0 %v1509
    %1835 = vmatprep.subr.mxu0 %v1512
    %1836 = vmatpush1.msra.mxu0 %v1511
    %1837 = vmatprep.subr.mxu0 %v1514
    %1838 = vmatpush1.msra.mxu0 %v1513
    %1839 = vmatprep.subr.mxu0 %v1516
    %1840 = vmatpush1.msra.mxu0 %v1515
    %1841 = vmatprep.subr.mxu0 %v1518
    %1842 = vmatpush1.msra.mxu0 %v1517
    %1843 = vmatprep.subr.mxu0 %v1520
    %1844 = vmatpush1.msra.mxu0 %v1519
    %1845 = vmatprep.subr.mxu0 %v1522
    %1846 = vmatpush1.msra.mxu0 %v1521
    %1847 = vmatprep.subr.mxu0 %v1524
    %1848 = vmatpush1.msra.mxu0 %v1523
    %1849 = vmatprep.subr.mxu0 %v1526
    %1850 = vmatpush1.msra.mxu0 %v1525
    %1851 = vmatprep.subr.mxu0 %v1528
    %1852 = vmatpush1.msra.mxu0 %v1527
    %1853 = vmatprep.subr.mxu0 %v1530
    %1854 = vmatpush1.msra.mxu0 %v1529
    %1855 = vmatprep.subr.mxu0 %v1532
    %1856 = vmatpush1.msra.mxu0 %v1531
    %1857 = vmatprep.subr.mxu0 %v1534
    %1858 = vmatpush1.msra.mxu0 %v1533
    %1859 = vmatprep.subr.mxu0 %v1536
    %1860 = vmatpush1.msra.mxu0 %v1535
    %1861 = vmatprep.subr.mxu0 %v1538
    %1862 = vmatpush1.msra.mxu0 %v1537
    %1863 = vmatprep.subr.mxu0 %v1540
    %1864 = vmatpush1.msra.mxu0 %v1539
    %1865 = vmatprep.subr.mxu0 %v1542
    %1866 = vmatpush1.msra.mxu0 %v1541
    %1867 = vmatprep.subr.mxu0 %v1544
    %1868 = vmatpush1.msra.mxu0 %v1543
    %1869 = vmatprep.subr.mxu0 %v1546
    %1870 = vmatpush1.msra.mxu0 %v1545
    %1871 = vmatprep.subr.mxu0 %v1548
    %1872 = vmatpush1.msra.mxu0 %v1547
    %1873 = vmatprep.subr.mxu0 %v1550
    %1874 = vmatpush1.msra.mxu0 %v1549
    %1875 = vmatprep.subr.mxu0 %v1552
    %1876 = vmatpush1.msra.mxu0 %v1551
    %1877 = vmatprep.subr.mxu0 %v1554
    %1878 = vmatpush1.msra.mxu0 %v1553
    %1879 = vmatprep.subr.mxu0 %v1556
    %1880 = vmatpush1.msra.mxu0 %v1555
    %1881 = vmatprep.mubr.f32.mxu0 %v1473
    %1882 = vmatmul.mubr.f32.gmra.mrb[0].mxu0 %v1471
    %v1883 = vpop.f32.mrb[0].mxu0
    %v1884 = vadd.f32 %v1795, %v1883
    %v1885 = vpop.f32.mrb[0].mxu0
    %v1886 = vadd.f32 %v1797, %v1885
    %1887 = vmatprep.mubr.f32.mxu0 %v1479
    %1888 = vmatmul.mubr.f32.gmra.mrb[0].mxu0 %v1477
    %v1889 = vpop.f32.mrb[0].mxu0
    %v1890 = vadd.f32 %v1801, %v1889
    %v1891 = vpop.f32.mrb[0].mxu0
    %v1892 = vadd.f32 %v1803, %v1891
    %1893 = vmatprep.mubr.f32.mxu0 %v1485
    %1894 = vmatmul.mubr.f32.gmra.mrb[0].mxu0 %v1483
    %v1895 = vpop.f32.mrb[0].mxu0
    %v1896 = vadd.f32 %v1807, %v1895
    %v1897 = vpop.f32.mrb[0].mxu0
    %v1898 = vadd.f32 %v1809, %v1897
    %1899 = vmatprep.mubr.f32.mxu0 %v1491
    %1900 = vmatmul.mubr.f32.gmra.mrb[0].mxu0 %v1489
    %v1901 = vpop.f32.mrb[0].mxu0
    %v1902 = vadd.f32 %v1813, %v1901
    %v1903 = vpop.f32.mrb[0].mxu0
    %v1904 = vadd.f32 %v1815, %v1903
    %1905 = vdwg.mxu0
    %s1906 = scalar_lea.vmem [#allocation3], 64
    %v1907 = vld [vmem:[%s1906] sm:$0xff]
    %v1908 = vld [vmem:[%s1906 + $0x8] sm:$0xff]
    %v1909 = vld [vmem:[%s1906 + $0x10] sm:$0xff]
    %v1910 = vld [vmem:[%s1906 + $0x18] sm:$0xff]
    %v1912 = vsel %vm469, %v1907, 0
    %v1915 = vsel %vm469, %v1908, 0
    %v1918 = vsel %vm469, %v1909, 0
    %v1921 = vsel %vm469, %v1910, 0
    %1923 = vmatprep.subr.mxu0 %v1373
    %1924 = vmatpush1.msra.mxu0 %v1372
    %1925 = vmatprep.subr.mxu0 %v1375
    %1926 = vmatpush1.msra.mxu0 %v1374
    %1927 = vmatprep.subr.mxu0 %v1377
    %1928 = vmatpush1.msra.mxu0 %v1376
    %1929 = vmatprep.subr.mxu0 %v1379
    %1930 = vmatpush1.msra.mxu0 %v1378
    %1931 = vmatprep.subr.mxu0 %v1381
    %1932 = vmatpush1.msra.mxu0 %v1380
    %1933 = vmatprep.subr.mxu0 %v1383
    %1934 = vmatpush1.msra.mxu0 %v1382
    %1935 = vmatprep.subr.mxu0 %v1385
    %1936 = vmatpush1.msra.mxu0 %v1384
    %1937 = vmatprep.subr.mxu0 %v1387
    %1938 = vmatpush1.msra.mxu0 %v1386
    %1939 = vmatprep.subr.mxu0 0.0
    %1940 = vmatpush1.msra.mxu0 0.0
    %1941 = vmatprep.subr.mxu0 0.0
    %1942 = vmatpush1.msra.mxu0 0.0
    %1943 = vmatprep.subr.mxu0 0.0
    %1944 = vmatpush1.msra.mxu0 0.0
    %1945 = vmatprep.subr.mxu0 0.0
    %1946 = vmatpush1.msra.mxu0 0.0
    %1947 = vmatprep.subr.mxu0 0.0
    %1948 = vmatpush1.msra.mxu0 0.0
    %1949 = vmatprep.subr.mxu0 0.0
    %1950 = vmatpush1.msra.mxu0 0.0
    %1951 = vmatprep.subr.mxu0 0.0
    %1952 = vmatpush1.msra.mxu0 0.0
    %1953 = vmatprep.subr.mxu0 0.0
    %1954 = vmatpush1.msra.mxu0 0.0
    %1955 = vmatprep.subr.mxu0 0.0
    %1956 = vmatpush1.msra.mxu0 0.0
    %1957 = vmatprep.subr.mxu0 0.0
    %1958 = vmatpush1.msra.mxu0 0.0
    %1959 = vmatprep.subr.mxu0 0.0
    %1960 = vmatpush1.msra.mxu0 0.0
    %1961 = vmatprep.subr.mxu0 0.0
    %1962 = vmatpush1.msra.mxu0 0.0
    %1963 = vmatprep.subr.mxu0 0.0
    %1964 = vmatpush1.msra.mxu0 0.0
    %1965 = vmatprep.subr.mxu0 0.0
    %1966 = vmatpush1.msra.mxu0 0.0
    %1967 = vmatprep.subr.mxu0 0.0
    %1968 = vmatpush1.msra.mxu0 0.0
    %1969 = vmatprep.subr.mxu0 0.0
    %1970 = vmatpush1.msra.mxu0 0.0
    %1971 = vmatprep.subr.mxu0 0.0
    %1972 = vmatpush1.msra.mxu0 0.0
    %1973 = vmatprep.subr.mxu0 0.0
    %1974 = vmatpush1.msra.mxu0 0.0
    %1975 = vmatprep.subr.mxu0 0.0
    %1976 = vmatpush1.msra.mxu0 0.0
    %1977 = vmatprep.subr.mxu0 0.0
    %1978 = vmatpush1.msra.mxu0 0.0
    %1979 = vmatprep.subr.mxu0 0.0
    %1980 = vmatpush1.msra.mxu0 0.0
    %1981 = vmatprep.subr.mxu0 0.0
    %1982 = vmatpush1.msra.mxu0 0.0
    %1983 = vmatprep.subr.mxu0 0.0
    %1984 = vmatpush1.msra.mxu0 0.0
    %1985 = vmatprep.subr.mxu0 0.0
    %1986 = vmatpush1.msra.mxu0 0.0
    %1987 = vmatprep.mubr.f32.mxu0 0.0
    %1988 = vmatmul.mubr.f32.gmra.mrb[0].mxu0 %v1912
    %v1989 = vpop.f32.mrb[0].mxu0
    %v1990 = vadd.f32 0.0, %v1989
    %v1991 = vpop.f32.mrb[0].mxu0
    %v1992 = vadd.f32 0.0, %v1991
    %1993 = vmatprep.mubr.f32.mxu0 0.0
    %1994 = vmatmul.mubr.f32.gmra.mrb[0].mxu0 %v1915
    %v1995 = vpop.f32.mrb[0].mxu0
    %v1996 = vadd.f32 0.0, %v1995
    %v1997 = vpop.f32.mrb[0].mxu0
    %v1998 = vadd.f32 0.0, %v1997
    %1999 = vmatprep.mubr.f32.mxu0 0.0
    %2000 = vmatmul.mubr.f32.gmra.mrb[0].mxu0 %v1918
    %v2001 = vpop.f32.mrb[0].mxu0
    %v2002 = vadd.f32 0.0, %v2001
    %v2003 = vpop.f32.mrb[0].mxu0
    %v2004 = vadd.f32 0.0, %v2003
    %2005 = vmatprep.mubr.f32.mxu0 0.0
    %2006 = vmatmul.mubr.f32.gmra.mrb[0].mxu0 %v1921
    %v2007 = vpop.f32.mrb[0].mxu0
    %v2008 = vadd.f32 0.0, %v2007
    %v2009 = vpop.f32.mrb[0].mxu0
    %v2010 = vadd.f32 0.0, %v2009
    %2011 = vdwg.mxu0
    %s2012 = scalar_lea.vmem [#allocation5], 1024
    %v2013 = vld [vmem:[%s2012] sm:$0xff]
    %v2014 = vld [vmem:[%s2012 + $0x8] sm:$0xff]
    %v2015 = vld [vmem:[%s2012 + $0x10] sm:$0xff]
    %v2016 = vld [vmem:[%s2012 + $0x18] sm:$0xff]
    %v2017 = vld [vmem:[%s2012 + $0x20] sm:$0xff]
    %v2018 = vld [vmem:[%s2012 + $0x28] sm:$0xff]
    %v2019 = vld [vmem:[%s2012 + $0x30] sm:$0xff]
    %v2020 = vld [vmem:[%s2012 + $0x38] sm:$0xff]
    %v2021 = vld [vmem:[%s2012 + $0x40] sm:$0xff]
    %v2022 = vld [vmem:[%s2012 + $0x48] sm:$0xff]
    %v2023 = vld [vmem:[%s2012 + $0x50] sm:$0xff]
    %v2024 = vld [vmem:[%s2012 + $0x58] sm:$0xff]
    %v2025 = vld [vmem:[%s2012 + $0x60] sm:$0xff]
    %v2026 = vld [vmem:[%s2012 + $0x68] sm:$0xff]
    %v2027 = vld [vmem:[%s2012 + $0x70] sm:$0xff]
    %v2028 = vld [vmem:[%s2012 + $0x78] sm:$0xff]
    %v2029 = vld [vmem:[%s2012 + $0x80] sm:$0xff]
    %v2030 = vld [vmem:[%s2012 + $0x88] sm:$0xff]
    %v2031 = vld [vmem:[%s2012 + $0x90] sm:$0xff]
    %v2032 = vld [vmem:[%s2012 + $0x98] sm:$0xff]
    %v2033 = vld [vmem:[%s2012 + $0xa0] sm:$0xff]
    %v2034 = vld [vmem:[%s2012 + $0xa8] sm:$0xff]
    %v2035 = vld [vmem:[%s2012 + $0xb0] sm:$0xff]
    %v2036 = vld [vmem:[%s2012 + $0xb8] sm:$0xff]
    %v2037 = vld [vmem:[%s2012 + $0xc0] sm:$0xff]
    %v2038 = vld [vmem:[%s2012 + $0xc8] sm:$0xff]
    %v2039 = vld [vmem:[%s2012 + $0xd0] sm:$0xff]
    %v2040 = vld [vmem:[%s2012 + $0xd8] sm:$0xff]
    %v2041 = vld [vmem:[%s2012 + $0xe0] sm:$0xff]
    %v2042 = vld [vmem:[%s2012 + $0xe8] sm:$0xff]
    %v2043 = vld [vmem:[%s2012 + $0xf0] sm:$0xff]
    %v2044 = vld [vmem:[%s2012 + $0xf8] sm:$0xff]
    %v2045 = vld [vmem:[%s2012 + $0x100] sm:$0xff]
    %v2046 = vld [vmem:[%s2012 + $0x108] sm:$0xff]
    %v2047 = vld [vmem:[%s2012 + $0x110] sm:$0xff]
    %v2048 = vld [vmem:[%s2012 + $0x118] sm:$0xff]
    %v2049 = vld [vmem:[%s2012 + $0x120] sm:$0xff]
    %v2050 = vld [vmem:[%s2012 + $0x128] sm:$0xff]
    %v2051 = vld [vmem:[%s2012 + $0x130] sm:$0xff]
    %v2052 = vld [vmem:[%s2012 + $0x138] sm:$0xff]
    %v2053 = vld [vmem:[%s2012 + $0x140] sm:$0xff]
    %v2054 = vld [vmem:[%s2012 + $0x148] sm:$0xff]
    %v2055 = vld [vmem:[%s2012 + $0x150] sm:$0xff]
    %v2056 = vld [vmem:[%s2012 + $0x158] sm:$0xff]
    %v2057 = vld [vmem:[%s2012 + $0x160] sm:$0xff]
    %v2058 = vld [vmem:[%s2012 + $0x168] sm:$0xff]
    %v2059 = vld [vmem:[%s2012 + $0x170] sm:$0xff]
    %v2060 = vld [vmem:[%s2012 + $0x178] sm:$0xff]
    %v2061 = vld [vmem:[%s2012 + $0x180] sm:$0xff]
    %v2062 = vld [vmem:[%s2012 + $0x188] sm:$0xff]
    %v2063 = vld [vmem:[%s2012 + $0x190] sm:$0xff]
    %v2064 = vld [vmem:[%s2012 + $0x198] sm:$0xff]
    %v2065 = vld [vmem:[%s2012 + $0x1a0] sm:$0xff]
    %v2066 = vld [vmem:[%s2012 + $0x1a8] sm:$0xff]
    %v2067 = vld [vmem:[%s2012 + $0x1b0] sm:$0xff]
    %v2068 = vld [vmem:[%s2012 + $0x1b8] sm:$0xff]
    %v2069 = vld [vmem:[%s2012 + $0x1c0] sm:$0xff]
    %v2070 = vld [vmem:[%s2012 + $0x1c8] sm:$0xff]
    %v2071 = vld [vmem:[%s2012 + $0x1d0] sm:$0xff]
    %v2072 = vld [vmem:[%s2012 + $0x1d8] sm:$0xff]
    %v2073 = vld [vmem:[%s2012 + $0x1e0] sm:$0xff]
    %v2074 = vld [vmem:[%s2012 + $0x1e8] sm:$0xff]
    %v2075 = vld [vmem:[%s2012 + $0x1f0] sm:$0xff]
    %v2076 = vld [vmem:[%s2012 + $0x1f8] sm:$0xff]
    %2077 = vmatprep.subr.mxu0 %v2014
    %2078 = vmatpush1.msra.mxu0 %v2013
    %2079 = vmatprep.subr.mxu0 %v2016
    %2080 = vmatpush1.msra.mxu0 %v2015
    %2081 = vmatprep.subr.mxu0 %v2018
    %2082 = vmatpush1.msra.mxu0 %v2017
    %2083 = vmatprep.subr.mxu0 %v2020
    %2084 = vmatpush1.msra.mxu0 %v2019
    %2085 = vmatprep.subr.mxu0 %v2022
    %2086 = vmatpush1.msra.mxu0 %v2021
    %2087 = vmatprep.subr.mxu0 %v2024
    %2088 = vmatpush1.msra.mxu0 %v2023
    %2089 = vmatprep.subr.mxu0 %v2026
    %2090 = vmatpush1.msra.mxu0 %v2025
    %2091 = vmatprep.subr.mxu0 %v2028
    %2092 = vmatpush1.msra.mxu0 %v2027
    %2093 = vmatprep.subr.mxu0 %v2030
    %2094 = vmatpush1.msra.mxu0 %v2029
    %2095 = vmatprep.subr.mxu0 %v2032
    %2096 = vmatpush1.msra.mxu0 %v2031
    %2097 = vmatprep.subr.mxu0 %v2034
    %2098 = vmatpush1.msra.mxu0 %v2033
    %2099 = vmatprep.subr.mxu0 %v2036
    %2100 = vmatpush1.msra.mxu0 %v2035
    %2101 = vmatprep.subr.mxu0 %v2038
    %2102 = vmatpush1.msra.mxu0 %v2037
    %2103 = vmatprep.subr.mxu0 %v2040
    %2104 = vmatpush1.msra.mxu0 %v2039
    %2105 = vmatprep.subr.mxu0 %v2042
    %2106 = vmatpush1.msra.mxu0 %v2041
    %2107 = vmatprep.subr.mxu0 %v2044
    %2108 = vmatpush1.msra.mxu0 %v2043
    %2109 = vmatprep.subr.mxu0 %v2046
    %2110 = vmatpush1.msra.mxu0 %v2045
    %2111 = vmatprep.subr.mxu0 %v2048
    %2112 = vmatpush1.msra.mxu0 %v2047
    %2113 = vmatprep.subr.mxu0 %v2050
    %2114 = vmatpush1.msra.mxu0 %v2049
    %2115 = vmatprep.subr.mxu0 %v2052
    %2116 = vmatpush1.msra.mxu0 %v2051
    %2117 = vmatprep.subr.mxu0 %v2054
    %2118 = vmatpush1.msra.mxu0 %v2053
    %2119 = vmatprep.subr.mxu0 %v2056
    %2120 = vmatpush1.msra.mxu0 %v2055
    %2121 = vmatprep.subr.mxu0 %v2058
    %2122 = vmatpush1.msra.mxu0 %v2057
    %2123 = vmatprep.subr.mxu0 %v2060
    %2124 = vmatpush1.msra.mxu0 %v2059
    %2125 = vmatprep.subr.mxu0 %v2062
    %2126 = vmatpush1.msra.mxu0 %v2061
    %2127 = vmatprep.subr.mxu0 %v2064
    %2128 = vmatpush1.msra.mxu0 %v2063
    %2129 = vmatprep.subr.mxu0 %v2066
    %2130 = vmatpush1.msra.mxu0 %v2065
    %2131 = vmatprep.subr.mxu0 %v2068
    %2132 = vmatpush1.msra.mxu0 %v2067
    %2133 = vmatprep.subr.mxu0 %v2070
    %2134 = vmatpush1.msra.mxu0 %v2069
    %2135 = vmatprep.subr.mxu0 %v2072
    %2136 = vmatpush1.msra.mxu0 %v2071
    %2137 = vmatprep.subr.mxu0 %v2074
    %2138 = vmatpush1.msra.mxu0 %v2073
    %2139 = vmatprep.subr.mxu0 %v2076
    %2140 = vmatpush1.msra.mxu0 %v2075
    %2141 = vmatprep.mubr.f32.mxu0 %v1992
    %2142 = vmatmul.mubr.f32.gmra.mrb[0].mxu0 %v1990
    %v2143 = vpop.f32.mrb[0].mxu0
    %v2144 = vadd.f32 0.0, %v2143
    %v2145 = vpop.f32.mrb[0].mxu0
    %v2146 = vadd.f32 0.0, %v2145
    %2147 = vmatprep.mubr.f32.mxu0 %v1998
    %2148 = vmatmul.mubr.f32.gmra.mrb[0].mxu0 %v1996
    %v2149 = vpop.f32.mrb[0].mxu0
    %v2150 = vadd.f32 0.0, %v2149
    %v2151 = vpop.f32.mrb[0].mxu0
    %v2152 = vadd.f32 0.0, %v2151
    %2153 = vmatprep.mubr.f32.mxu0 %v2004
    %2154 = vmatmul.mubr.f32.gmra.mrb[0].mxu0 %v2002
    %v2155 = vpop.f32.mrb[0].mxu0
    %v2156 = vadd.f32 0.0, %v2155
    %v2157 = vpop.f32.mrb[0].mxu0
    %v2158 = vadd.f32 0.0, %v2157
    %2159 = vmatprep.mubr.f32.mxu0 %v2010
    %2160 = vmatmul.mubr.f32.gmra.mrb[0].mxu0 %v2008
    %v2161 = vpop.f32.mrb[0].mxu0
    %v2162 = vadd.f32 0.0, %v2161
    %v2163 = vpop.f32.mrb[0].mxu0
    %v2164 = vadd.f32 0.0, %v2163
    %2165 = vdwg.mxu0
    %v2166 = vadd.f32 %v1884, %v2144
    %v2167 = vadd.f32 %v1886, %v2146
    %v2168 = vadd.f32 %v1890, %v2150
    %v2169 = vadd.f32 %v1892, %v2152
    %v2170 = vadd.f32 %v1896, %v2156
    %v2171 = vadd.f32 %v1898, %v2158
    %v2172 = vadd.f32 %v1902, %v2162
    %v2173 = vadd.f32 %v1904, %v2164
    %s2174 = scalar_lea.vmem [#allocation3], 96
    %v2175 = vld [vmem:[%s2174] sm:$0xff]
    %v2176 = vld [vmem:[%s2174 + $0x8] sm:$0xff]
    %v2177 = vld [vmem:[%s2174 + $0x10] sm:$0xff]
    %v2178 = vld [vmem:[%s2174 + $0x18] sm:$0xff]
    %v2180 = vsel %vm469, %v2175, 0
    %v2183 = vsel %vm469, %v2176, 0
    %v2186 = vsel %vm469, %v2177, 0
    %v2189 = vsel %vm469, %v2178, 0
    %2191 = vmatprep.subr.mxu0 %v1373
    %2192 = vmatpush1.msra.mxu0 %v1372
    %2193 = vmatprep.subr.mxu0 %v1375
    %2194 = vmatpush1.msra.mxu0 %v1374
    %2195 = vmatprep.subr.mxu0 %v1377
    %2196 = vmatpush1.msra.mxu0 %v1376
    %2197 = vmatprep.subr.mxu0 %v1379
    %2198 = vmatpush1.msra.mxu0 %v1378
    %2199 = vmatprep.subr.mxu0 %v1381
    %2200 = vmatpush1.msra.mxu0 %v1380
    %2201 = vmatprep.subr.mxu0 %v1383
    %2202 = vmatpush1.msra.mxu0 %v1382
    %2203 = vmatprep.subr.mxu0 %v1385
    %2204 = vmatpush1.msra.mxu0 %v1384
    %2205 = vmatprep.subr.mxu0 %v1387
    %2206 = vmatpush1.msra.mxu0 %v1386
    %2207 = vmatprep.subr.mxu0 0.0
    %2208 = vmatpush1.msra.mxu0 0.0
    %2209 = vmatprep.subr.mxu0 0.0
    %2210 = vmatpush1.msra.mxu0 0.0
    %2211 = vmatprep.subr.mxu0 0.0
    %2212 = vmatpush1.msra.mxu0 0.0
    %2213 = vmatprep.subr.mxu0 0.0
    %2214 = vmatpush1.msra.mxu0 0.0
    %2215 = vmatprep.subr.mxu0 0.0
    %2216 = vmatpush1.msra.mxu0 0.0
    %2217 = vmatprep.subr.mxu0 0.0
    %2218 = vmatpush1.msra.mxu0 0.0
    %2219 = vmatprep.subr.mxu0 0.0
    %2220 = vmatpush1.msra.mxu0 0.0
    %2221 = vmatprep.subr.mxu0 0.0
    %2222 = vmatpush1.msra.mxu0 0.0
    %2223 = vmatprep.subr.mxu0 0.0
    %2224 = vmatpush1.msra.mxu0 0.0
    %2225 = vmatprep.subr.mxu0 0.0
    %2226 = vmatpush1.msra.mxu0 0.0
    %2227 = vmatprep.subr.mxu0 0.0
    %2228 = vmatpush1.msra.mxu0 0.0
    %2229 = vmatprep.subr.mxu0 0.0
    %2230 = vmatpush1.msra.mxu0 0.0
    %2231 = vmatprep.subr.mxu0 0.0
    %2232 = vmatpush1.msra.mxu0 0.0
    %2233 = vmatprep.subr.mxu0 0.0
    %2234 = vmatpush1.msra.mxu0 0.0
    %2235 = vmatprep.subr.mxu0 0.0
    %2236 = vmatpush1.msra.mxu0 0.0
    %2237 = vmatprep.subr.mxu0 0.0
    %2238 = vmatpush1.msra.mxu0 0.0
    %2239 = vmatprep.subr.mxu0 0.0
    %2240 = vmatpush1.msra.mxu0 0.0
    %2241 = vmatprep.subr.mxu0 0.0
    %2242 = vmatpush1.msra.mxu0 0.0
    %2243 = vmatprep.subr.mxu0 0.0
    %2244 = vmatpush1.msra.mxu0 0.0
    %2245 = vmatprep.subr.mxu0 0.0
    %2246 = vmatpush1.msra.mxu0 0.0
    %2247 = vmatprep.subr.mxu0 0.0
    %2248 = vmatpush1.msra.mxu0 0.0
    %2249 = vmatprep.subr.mxu0 0.0
    %2250 = vmatpush1.msra.mxu0 0.0
    %2251 = vmatprep.subr.mxu0 0.0
    %2252 = vmatpush1.msra.mxu0 0.0
    %2253 = vmatprep.subr.mxu0 0.0
    %2254 = vmatpush1.msra.mxu0 0.0
    %2255 = vmatprep.mubr.f32.mxu0 0.0
    %2256 = vmatmul.mubr.f32.gmra.mrb[0].mxu0 %v2180
    %v2257 = vpop.f32.mrb[0].mxu0
    %v2258 = vadd.f32 0.0, %v2257
    %v2259 = vpop.f32.mrb[0].mxu0
    %v2260 = vadd.f32 0.0, %v2259
    %2261 = vmatprep.mubr.f32.mxu0 0.0
    %2262 = vmatmul.mubr.f32.gmra.mrb[0].mxu0 %v2183
    %v2263 = vpop.f32.mrb[0].mxu0
    %v2264 = vadd.f32 0.0, %v2263
    %v2265 = vpop.f32.mrb[0].mxu0
    %v2266 = vadd.f32 0.0, %v2265
    %2267 = vmatprep.mubr.f32.mxu0 0.0
    %2268 = vmatmul.mubr.f32.gmra.mrb[0].mxu0 %v2186
    %v2269 = vpop.f32.mrb[0].mxu0
    %v2270 = vadd.f32 0.0, %v2269
    %v2271 = vpop.f32.mrb[0].mxu0
    %v2272 = vadd.f32 0.0, %v2271
    %2273 = vmatprep.mubr.f32.mxu0 0.0
    %2274 = vmatmul.mubr.f32.gmra.mrb[0].mxu0 %v2189
    %v2275 = vpop.f32.mrb[0].mxu0
    %v2276 = vadd.f32 0.0, %v2275
    %v2277 = vpop.f32.mrb[0].mxu0
    %v2278 = vadd.f32 0.0, %v2277
    %2279 = vdwg.mxu0
    %s2280 = scalar_lea.vmem [#allocation5], 1536
    %v2281 = vld [vmem:[%s2280] sm:$0xff]
    %v2282 = vld [vmem:[%s2280 + $0x8] sm:$0xff]
    %v2283 = vld [vmem:[%s2280 + $0x10] sm:$0xff]
    %v2284 = vld [vmem:[%s2280 + $0x18] sm:$0xff]
    %v2285 = vld [vmem:[%s2280 + $0x20] sm:$0xff]
    %v2286 = vld [vmem:[%s2280 + $0x28] sm:$0xff]
    %v2287 = vld [vmem:[%s2280 + $0x30] sm:$0xff]
    %v2288 = vld [vmem:[%s2280 + $0x38] sm:$0xff]
    %v2289 = vld [vmem:[%s2280 + $0x40] sm:$0xff]
    %v2290 = vld [vmem:[%s2280 + $0x48] sm:$0xff]
    %v2291 = vld [vmem:[%s2280 + $0x50] sm:$0xff]
    %v2292 = vld [vmem:[%s2280 + $0x58] sm:$0xff]
    %v2293 = vld [vmem:[%s2280 + $0x60] sm:$0xff]
    %v2294 = vld [vmem:[%s2280 + $0x68] sm:$0xff]
    %v2295 = vld [vmem:[%s2280 + $0x70] sm:$0xff]
    %v2296 = vld [vmem:[%s2280 + $0x78] sm:$0xff]
    %v2297 = vld [vmem:[%s2280 + $0x80] sm:$0xff]
    %v2298 = vld [vmem:[%s2280 + $0x88] sm:$0xff]
    %v2299 = vld [vmem:[%s2280 + $0x90] sm:$0xff]
    %v2300 = vld [vmem:[%s2280 + $0x98] sm:$0xff]
    %v2301 = vld [vmem:[%s2280 + $0xa0] sm:$0xff]
    %v2302 = vld [vmem:[%s2280 + $0xa8] sm:$0xff]
    %v2303 = vld [vmem:[%s2280 + $0xb0] sm:$0xff]
    %v2304 = vld [vmem:[%s2280 + $0xb8] sm:$0xff]
    %v2305 = vld [vmem:[%s2280 + $0xc0] sm:$0xff]
    %v2306 = vld [vmem:[%s2280 + $0xc8] sm:$0xff]
    %v2307 = vld [vmem:[%s2280 + $0xd0] sm:$0xff]
    %v2308 = vld [vmem:[%s2280 + $0xd8] sm:$0xff]
    %v2309 = vld [vmem:[%s2280 + $0xe0] sm:$0xff]
    %v2310 = vld [vmem:[%s2280 + $0xe8] sm:$0xff]
    %v2311 = vld [vmem:[%s2280 + $0xf0] sm:$0xff]
    %v2312 = vld [vmem:[%s2280 + $0xf8] sm:$0xff]
    %v2313 = vld [vmem:[%s2280 + $0x100] sm:$0xff]
    %v2314 = vld [vmem:[%s2280 + $0x108] sm:$0xff]
    %v2315 = vld [vmem:[%s2280 + $0x110] sm:$0xff]
    %v2316 = vld [vmem:[%s2280 + $0x118] sm:$0xff]
    %v2317 = vld [vmem:[%s2280 + $0x120] sm:$0xff]
    %v2318 = vld [vmem:[%s2280 + $0x128] sm:$0xff]
    %v2319 = vld [vmem:[%s2280 + $0x130] sm:$0xff]
    %v2320 = vld [vmem:[%s2280 + $0x138] sm:$0xff]
    %v2321 = vld [vmem:[%s2280 + $0x140] sm:$0xff]
    %v2322 = vld [vmem:[%s2280 + $0x148] sm:$0xff]
    %v2323 = vld [vmem:[%s2280 + $0x150] sm:$0xff]
    %v2324 = vld [vmem:[%s2280 + $0x158] sm:$0xff]
    %v2325 = vld [vmem:[%s2280 + $0x160] sm:$0xff]
    %v2326 = vld [vmem:[%s2280 + $0x168] sm:$0xff]
    %v2327 = vld [vmem:[%s2280 + $0x170] sm:$0xff]
    %v2328 = vld [vmem:[%s2280 + $0x178] sm:$0xff]
    %v2329 = vld [vmem:[%s2280 + $0x180] sm:$0xff]
    %v2330 = vld [vmem:[%s2280 + $0x188] sm:$0xff]
    %v2331 = vld [vmem:[%s2280 + $0x190] sm:$0xff]
    %v2332 = vld [vmem:[%s2280 + $0x198] sm:$0xff]
    %v2333 = vld [vmem:[%s2280 + $0x1a0] sm:$0xff]
    %v2334 = vld [vmem:[%s2280 + $0x1a8] sm:$0xff]
    %v2335 = vld [vmem:[%s2280 + $0x1b0] sm:$0xff]
    %v2336 = vld [vmem:[%s2280 + $0x1b8] sm:$0xff]
    %v2337 = vld [vmem:[%s2280 + $0x1c0] sm:$0xff]
    %v2338 = vld [vmem:[%s2280 + $0x1c8] sm:$0xff]
    %v2339 = vld [vmem:[%s2280 + $0x1d0] sm:$0xff]
    %v2340 = vld [vmem:[%s2280 + $0x1d8] sm:$0xff]
    %v2341 = vld [vmem:[%s2280 + $0x1e0] sm:$0xff]
    %v2342 = vld [vmem:[%s2280 + $0x1e8] sm:$0xff]
    %v2343 = vld [vmem:[%s2280 + $0x1f0] sm:$0xff]
    %v2344 = vld [vmem:[%s2280 + $0x1f8] sm:$0xff]
    %2345 = vmatprep.subr.mxu0 %v2282
    %2346 = vmatpush1.msra.mxu0 %v2281
    %2347 = vmatprep.subr.mxu0 %v2284
    %2348 = vmatpush1.msra.mxu0 %v2283
    %2349 = vmatprep.subr.mxu0 %v2286
    %2350 = vmatpush1.msra.mxu0 %v2285
    %2351 = vmatprep.subr.mxu0 %v2288
    %2352 = vmatpush1.msra.mxu0 %v2287
    %2353 = vmatprep.subr.mxu0 %v2290
    %2354 = vmatpush1.msra.mxu0 %v2289
    %2355 = vmatprep.subr.mxu0 %v2292
    %2356 = vmatpush1.msra.mxu0 %v2291
    %2357 = vmatprep.subr.mxu0 %v2294
    %2358 = vmatpush1.msra.mxu0 %v2293
    %2359 = vmatprep.subr.mxu0 %v2296
    %2360 = vmatpush1.msra.mxu0 %v2295
    %2361 = vmatprep.subr.mxu0 %v2298
    %2362 = vmatpush1.msra.mxu0 %v2297
    %2363 = vmatprep.subr.mxu0 %v2300
    %2364 = vmatpush1.msra.mxu0 %v2299
    %2365 = vmatprep.subr.mxu0 %v2302
    %2366 = vmatpush1.msra.mxu0 %v2301
    %2367 = vmatprep.subr.mxu0 %v2304
    %2368 = vmatpush1.msra.mxu0 %v2303
    %2369 = vmatprep.subr.mxu0 %v2306
    %2370 = vmatpush1.msra.mxu0 %v2305
    %2371 = vmatprep.subr.mxu0 %v2308
    %2372 = vmatpush1.msra.mxu0 %v2307
    %2373 = vmatprep.subr.mxu0 %v2310
    %2374 = vmatpush1.msra.mxu0 %v2309
    %2375 = vmatprep.subr.mxu0 %v2312
    %2376 = vmatpush1.msra.mxu0 %v2311
    %2377 = vmatprep.subr.mxu0 %v2314
    %2378 = vmatpush1.msra.mxu0 %v2313
    %2379 = vmatprep.subr.mxu0 %v2316
    %2380 = vmatpush1.msra.mxu0 %v2315
    %2381 = vmatprep.subr.mxu0 %v2318
    %2382 = vmatpush1.msra.mxu0 %v2317
    %2383 = vmatprep.subr.mxu0 %v2320
    %2384 = vmatpush1.msra.mxu0 %v2319
    %2385 = vmatprep.subr.mxu0 %v2322
    %2386 = vmatpush1.msra.mxu0 %v2321
    %2387 = vmatprep.subr.mxu0 %v2324
    %2388 = vmatpush1.msra.mxu0 %v2323
    %2389 = vmatprep.subr.mxu0 %v2326
    %2390 = vmatpush1.msra.mxu0 %v2325
    %2391 = vmatprep.subr.mxu0 %v2328
    %2392 = vmatpush1.msra.mxu0 %v2327
    %2393 = vmatprep.subr.mxu0 %v2330
    %2394 = vmatpush1.msra.mxu0 %v2329
    %2395 = vmatprep.subr.mxu0 %v2332
    %2396 = vmatpush1.msra.mxu0 %v2331
    %2397 = vmatprep.subr.mxu0 %v2334
    %2398 = vmatpush1.msra.mxu0 %v2333
    %2399 = vmatprep.subr.mxu0 %v2336
    %2400 = vmatpush1.msra.mxu0 %v2335
    %2401 = vmatprep.subr.mxu0 %v2338
    %2402 = vmatpush1.msra.mxu0 %v2337
    %2403 = vmatprep.subr.mxu0 %v2340
    %2404 = vmatpush1.msra.mxu0 %v2339
    %2405 = vmatprep.subr.mxu0 %v2342
    %2406 = vmatpush1.msra.mxu0 %v2341
    %2407 = vmatprep.subr.mxu0 %v2344
    %2408 = vmatpush1.msra.mxu0 %v2343
    %2409 = vmatprep.mubr.f32.mxu0 %v2260
    %2410 = vmatmul.mubr.f32.gmra.mrb[0].mxu0 %v2258
    %v2411 = vpop.f32.mrb[0].mxu0
    %v2412 = vadd.f32 0.0, %v2411
    %v2413 = vpop.f32.mrb[0].mxu0
    %v2414 = vadd.f32 0.0, %v2413
    %2415 = vmatprep.mubr.f32.mxu0 %v2266
    %2416 = vmatmul.mubr.f32.gmra.mrb[0].mxu0 %v2264
    %v2417 = vpop.f32.mrb[0].mxu0
    %v2418 = vadd.f32 0.0, %v2417
    %v2419 = vpop.f32.mrb[0].mxu0
    %v2420 = vadd.f32 0.0, %v2419
    %2421 = vmatprep.mubr.f32.mxu0 %v2272
    %2422 = vmatmul.mubr.f32.gmra.mrb[0].mxu0 %v2270
    %v2423 = vpop.f32.mrb[0].mxu0
    %v2424 = vadd.f32 0.0, %v2423
    %v2425 = vpop.f32.mrb[0].mxu0
    %v2426 = vadd.f32 0.0, %v2425
    %2427 = vmatprep.mubr.f32.mxu0 %v2278
    %2428 = vmatmul.mubr.f32.gmra.mrb[0].mxu0 %v2276
    %v2429 = vpop.f32.mrb[0].mxu0
    %v2430 = vadd.f32 0.0, %v2429
    %v2431 = vpop.f32.mrb[0].mxu0
    %v2432 = vadd.f32 0.0, %v2431
    %2433 = vdwg.mxu0
    %v2434 = vadd.f32 %v2166, %v2412
    %v2435 = vadd.f32 %v2167, %v2414
    %v2436 = vadd.f32 %v2168, %v2418
    %v2437 = vadd.f32 %v2169, %v2420
    %v2438 = vadd.f32 %v2170, %v2424
    %v2439 = vadd.f32 %v2171, %v2426
    %v2440 = vadd.f32 %v2172, %v2430
    %v2441 = vadd.f32 %v2173, %v2432
    %v2442 = vadd.f32 %v2434, %v2436
    %v2443 = vadd.f32 %v2442, %v2438
    %v2444 = vadd.f32 %v2443, %v2440
    %v2445 = vrot.slane %v2444, 4
    %v2446 = vadd.f32 %v2444, %v2445
    %v2447 = vrot.slane %v2446, 2
    %v2448 = vadd.f32 %v2446, %v2447
    %v2449 = vrot.slane %v2448, 1
    %v2450 = vadd.f32 %v2448, %v2449
    %v2451 = vadd.f32 %v2435, %v2437
    %v2452 = vadd.f32 %v2451, %v2439
    %v2453 = vadd.f32 %v2452, %v2441
    %v2454 = vrot.slane %v2453, 4
    %v2455 = vadd.f32 %v2453, %v2454
    %v2456 = vrot.slane %v2455, 2
    %v2457 = vadd.f32 %v2455, %v2456
    %v2458 = vrot.slane %v2457, 1
    %v2459 = vadd.f32 %v2457, %v2458
    %v2460 = vmul.f32 %v2434, %v2434
    %v2461 = vmul.f32 %v2435, %v2435
    %v2462 = vmul.f32 %v2436, %v2436
    %v2463 = vmul.f32 %v2437, %v2437
    %v2464 = vmul.f32 %v2438, %v2438
    %v2465 = vmul.f32 %v2439, %v2439
    %v2466 = vmul.f32 %v2440, %v2440
    %v2467 = vmul.f32 %v2441, %v2441
    %v2468 = vadd.f32 %v2460, %v2462
    %v2469 = vadd.f32 %v2468, %v2464
    %v2470 = vadd.f32 %v2469, %v2466
    %v2471 = vrot.slane %v2470, 4
    %v2472 = vadd.f32 %v2470, %v2471
    %v2473 = vrot.slane %v2472, 2
    %v2474 = vadd.f32 %v2472, %v2473
    %v2475 = vrot.slane %v2474, 1
    %v2476 = vadd.f32 %v2474, %v2475
    %v2477 = vadd.f32 %v2461, %v2463
    %v2478 = vadd.f32 %v2477, %v2465
    %v2479 = vadd.f32 %v2478, %v2467
    %v2480 = vrot.slane %v2479, 4
    %v2481 = vadd.f32 %v2479, %v2480
    %v2482 = vrot.slane %v2481, 2
    %v2483 = vadd.f32 %v2481, %v2482
    %v2484 = vrot.slane %v2483, 1
    %v2485 = vadd.f32 %v2483, %v2484
    %v2486 = vld [vmem:[%s7] sm:$0xff]
    %v2487 = vld [vmem:[%s7 + $0x8] sm:$0xff]
    %v2488 = vld [vmem:[%s7 + $0x10] sm:$0xff]
    %v2489 = vld [vmem:[%s7 + $0x18] sm:$0xff]
    %v2490 = vld [vmem:[%s7 + $0x20] sm:$0xff]
    %v2491 = vld [vmem:[%s7 + $0x28] sm:$0xff]
    %v2492 = vld [vmem:[%s7 + $0x30] sm:$0xff]
    %v2493 = vld [vmem:[%s7 + $0x38] sm:$0xff]
    %v2494 = vld [vmem:[%s7 + $0x40] sm:$0xff]
    %v2495 = vld [vmem:[%s7 + $0x48] sm:$0xff]
    %v2496 = vld [vmem:[%s7 + $0x50] sm:$0xff]
    %v2497 = vld [vmem:[%s7 + $0x58] sm:$0xff]
    %v2498 = vld [vmem:[%s7 + $0x60] sm:$0xff]
    %v2499 = vld [vmem:[%s7 + $0x68] sm:$0xff]
    %v2500 = vld [vmem:[%s7 + $0x70] sm:$0xff]
    %v2501 = vld [vmem:[%s7 + $0x78] sm:$0xff]
    %v2502 = vld [vmem:[%s7 + $0x80] sm:$0xff]
    %v2503 = vld [vmem:[%s7 + $0x88] sm:$0xff]
    %v2504 = vld [vmem:[%s7 + $0x90] sm:$0xff]
    %v2505 = vld [vmem:[%s7 + $0x98] sm:$0xff]
    %v2506 = vld [vmem:[%s7 + $0xa0] sm:$0xff]
    %v2507 = vld [vmem:[%s7 + $0xa8] sm:$0xff]
    %v2508 = vld [vmem:[%s7 + $0xb0] sm:$0xff]
    %v2509 = vld [vmem:[%s7 + $0xb8] sm:$0xff]
    %v2510 = vld [vmem:[%s7 + $0xc0] sm:$0xff]
    %v2511 = vld [vmem:[%s7 + $0xc8] sm:$0xff]
    %v2512 = vld [vmem:[%s7 + $0xd0] sm:$0xff]
    %v2513 = vld [vmem:[%s7 + $0xd8] sm:$0xff]
    %v2514 = vld [vmem:[%s7 + $0xe0] sm:$0xff]
    %v2515 = vld [vmem:[%s7 + $0xe8] sm:$0xff]
    %v2516 = vld [vmem:[%s7 + $0xf0] sm:$0xff]
    %v2517 = vld [vmem:[%s7 + $0xf8] sm:$0xff]
    %2518 = vmatprep.subr.mxu0 0.0
    %2519 = vmatpush1.msra.mxu0 %v2486
    %2520 = vmatprep.subr.mxu0 0.0
    %2521 = vmatpush1.msra.mxu0 %v2487
    %2522 = vmatprep.subr.mxu0 0.0
    %2523 = vmatpush1.msra.mxu0 %v2488
    %2524 = vmatprep.subr.mxu0 0.0
    %2525 = vmatpush1.msra.mxu0 %v2489
    %2526 = vmatprep.subr.mxu0 0.0
    %2527 = vmatpush1.msra.mxu0 %v2490
    %2528 = vmatprep.subr.mxu0 0.0
    %2529 = vmatpush1.msra.mxu0 %v2491
    %2530 = vmatprep.subr.mxu0 0.0
    %2531 = vmatpush1.msra.mxu0 %v2492
    %2532 = vmatprep.subr.mxu0 0.0
    %2533 = vmatpush1.msra.mxu0 %v2493
    %2534 = vmatprep.subr.mxu0 0.0
    %2535 = vmatpush1.msra.mxu0 %v2494
    %2536 = vmatprep.subr.mxu0 0.0
    %2537 = vmatpush1.msra.mxu0 %v2495
    %2538 = vmatprep.subr.mxu0 0.0
    %2539 = vmatpush1.msra.mxu0 %v2496
    %2540 = vmatprep.subr.mxu0 0.0
    %2541 = vmatpush1.msra.mxu0 %v2497
    %2542 = vmatprep.subr.mxu0 0.0
    %2543 = vmatpush1.msra.mxu0 %v2498
    %2544 = vmatprep.subr.mxu0 0.0
    %2545 = vmatpush1.msra.mxu0 %v2499
    %2546 = vmatprep.subr.mxu0 0.0
    %2547 = vmatpush1.msra.mxu0 %v2500
    %2548 = vmatprep.subr.mxu0 0.0
    %2549 = vmatpush1.msra.mxu0 %v2501
    %2550 = vmatprep.subr.mxu0 0.0
    %2551 = vmatpush1.msra.mxu0 %v2502
    %2552 = vmatprep.subr.mxu0 0.0
    %2553 = vmatpush1.msra.mxu0 %v2503
    %2554 = vmatprep.subr.mxu0 0.0
    %2555 = vmatpush1.msra.mxu0 %v2504
    %2556 = vmatprep.subr.mxu0 0.0
    %2557 = vmatpush1.msra.mxu0 %v2505
    %2558 = vmatprep.subr.mxu0 0.0
    %2559 = vmatpush1.msra.mxu0 %v2506
    %2560 = vmatprep.subr.mxu0 0.0
    %2561 = vmatpush1.msra.mxu0 %v2507
    %2562 = vmatprep.subr.mxu0 0.0
    %2563 = vmatpush1.msra.mxu0 %v2508
    %2564 = vmatprep.subr.mxu0 0.0
    %2565 = vmatpush1.msra.mxu0 %v2509
    %2566 = vmatprep.subr.mxu0 0.0
    %2567 = vmatpush1.msra.mxu0 %v2510
    %2568 = vmatprep.subr.mxu0 0.0
    %2569 = vmatpush1.msra.mxu0 %v2511
    %2570 = vmatprep.subr.mxu0 0.0
    %2571 = vmatpush1.msra.mxu0 %v2512
    %2572 = vmatprep.subr.mxu0 0.0
    %2573 = vmatpush1.msra.mxu0 %v2513
    %2574 = vmatprep.subr.mxu0 0.0
    %2575 = vmatpush1.msra.mxu0 %v2514
    %2576 = vmatprep.subr.mxu0 0.0
    %2577 = vmatpush1.msra.mxu0 %v2515
    %2578 = vmatprep.subr.mxu0 0.0
    %2579 = vmatpush1.msra.mxu0 %v2516
    %2580 = vmatprep.subr.mxu0 0.0
    %2581 = vmatpush1.msra.mxu0 %v2517
    %2582 = vmatprep.mubr.f32.mxu0 %v2459
    %2583 = vmatmul.mubr.f32.gmra.mrb[0].mxu0 %v2450
    %v2584 = vpop.f32.mrb[0].mxu0
    %v2585 = vadd.f32 0.0, %v2584
    %v2586 = vpop.f32.mrb[0].mxu0
    %2587 = vdwg.mxu0
    %v2588 = vrcp.pop 512.0
    %v2589 = vmul.f32 %v2585, %v2588
    %2590 = vmatprep.subr.mxu0 0.0
    %2591 = vmatpush1.msra.mxu0 %v2486
    %2592 = vmatprep.subr.mxu0 0.0
    %2593 = vmatpush1.msra.mxu0 %v2487
    %2594 = vmatprep.subr.mxu0 0.0
    %2595 = vmatpush1.msra.mxu0 %v2488
    %2596 = vmatprep.subr.mxu0 0.0
    %2597 = vmatpush1.msra.mxu0 %v2489
    %2598 = vmatprep.subr.mxu0 0.0
    %2599 = vmatpush1.msra.mxu0 %v2490
    %2600 = vmatprep.subr.mxu0 0.0
    %2601 = vmatpush1.msra.mxu0 %v2491
    %2602 = vmatprep.subr.mxu0 0.0
    %2603 = vmatpush1.msra.mxu0 %v2492
    %2604 = vmatprep.subr.mxu0 0.0
    %2605 = vmatpush1.msra.mxu0 %v2493
    %2606 = vmatprep.subr.mxu0 0.0
    %2607 = vmatpush1.msra.mxu0 %v2494
    %2608 = vmatprep.subr.mxu0 0.0
    %2609 = vmatpush1.msra.mxu0 %v2495
    %2610 = vmatprep.subr.mxu0 0.0
    %2611 = vmatpush1.msra.mxu0 %v2496
    %2612 = vmatprep.subr.mxu0 0.0
    %2613 = vmatpush1.msra.mxu0 %v2497
    %2614 = vmatprep.subr.mxu0 0.0
    %2615 = vmatpush1.msra.mxu0 %v2498
    %2616 = vmatprep.subr.mxu0 0.0
    %2617 = vmatpush1.msra.mxu0 %v2499
    %2618 = vmatprep.subr.mxu0 0.0
    %2619 = vmatpush1.msra.mxu0 %v2500
    %2620 = vmatprep.subr.mxu0 0.0
    %2621 = vmatpush1.msra.mxu0 %v2501
    %2622 = vmatprep.subr.mxu0 0.0
    %2623 = vmatpush1.msra.mxu0 %v2502
    %2624 = vmatprep.subr.mxu0 0.0
    %2625 = vmatpush1.msra.mxu0 %v2503
    %2626 = vmatprep.subr.mxu0 0.0
    %2627 = vmatpush1.msra.mxu0 %v2504
    %2628 = vmatprep.subr.mxu0 0.0
    %2629 = vmatpush1.msra.mxu0 %v2505
    %2630 = vmatprep.subr.mxu0 0.0
    %2631 = vmatpush1.msra.mxu0 %v2506
    %2632 = vmatprep.subr.mxu0 0.0
    %2633 = vmatpush1.msra.mxu0 %v2507
    %2634 = vmatprep.subr.mxu0 0.0
    %2635 = vmatpush1.msra.mxu0 %v2508
    %2636 = vmatprep.subr.mxu0 0.0
    %2637 = vmatpush1.msra.mxu0 %v2509
    %2638 = vmatprep.subr.mxu0 0.0
    %2639 = vmatpush1.msra.mxu0 %v2510
    %2640 = vmatprep.subr.mxu0 0.0
    %2641 = vmatpush1.msra.mxu0 %v2511
    %2642 = vmatprep.subr.mxu0 0.0
    %2643 = vmatpush1.msra.mxu0 %v2512
    %2644 = vmatprep.subr.mxu0 0.0
    %2645 = vmatpush1.msra.mxu0 %v2513
    %2646 = vmatprep.subr.mxu0 0.0
    %2647 = vmatpush1.msra.mxu0 %v2514
    %2648 = vmatprep.subr.mxu0 0.0
    %2649 = vmatpush1.msra.mxu0 %v2515
    %2650 = vmatprep.subr.mxu0 0.0
    %2651 = vmatpush1.msra.mxu0 %v2516
    %2652 = vmatprep.subr.mxu0 0.0
    %2653 = vmatpush1.msra.mxu0 %v2517
    %2654 = vmatprep.mubr.f32.mxu0 %v2485
    %2655 = vmatmul.mubr.f32.gmra.mrb[0].mxu0 %v2476
    %v2656 = vpop.f32.mrb[0].mxu0
    %v2657 = vadd.f32 0.0, %v2656
    %v2658 = vpop.f32.mrb[0].mxu0
    %2659 = vdwg.mxu0
    %v2660 = vmul.f32 %v2657, %v2588
    %v2661 = vmul.f32 %v2589, %v2589
    %v2662 = vsub.f32 %v2660, %v2661
    %v2663 = vld [vmem:[#allocation7] sm:$0x3]
    %v2664 = vadd.f32 %v2662, 1e-05
    %v2665 = vrsqrt.pop %v2664
    %v2666 = vmul.f32 %v2663, %v2665
    %v2667 = vmul.f32 %v2589, %v2666
    %v2669 = vrot.slane %v2667, 7
    %v2671 = vsub.f32 %v2663, %v2669
    %v2672 = vld [vmem:[#allocation8] sm:$0xff]
    %v2673 = vld [vmem:[#allocation8 + $0x8] sm:$0xff]
    %v2674 = vld [vmem:[#allocation8 + $0x10] sm:$0xff]
    %v2675 = vld [vmem:[#allocation8 + $0x18] sm:$0xff]
    %vm2676 = vcmask 130048
    %v2678 = vsel %vm2676, %v2666, 0
    %2680 = vmatprep.subr.mxu0 %v2673
    %2681 = vmatpush1.msra.mxu0 %v2672
    %2682 = vmatprep.subr.mxu0 %v2675
    %2683 = vmatpush1.msra.mxu0 %v2674
    %2684 = vmatprep.subr.mxu0 0.0
    %2685 = vmatpush1.msra.mxu0 0.0
    %2686 = vmatprep.subr.mxu0 0.0
    %2687 = vmatpush1.msra.mxu0 0.0
    %2688 = vmatprep.subr.mxu0 0.0
    %2689 = vmatpush1.msra.mxu0 0.0
    %2690 = vmatprep.subr.mxu0 0.0
    %2691 = vmatpush1.msra.mxu0 0.0
    %2692 = vmatprep.subr.mxu0 0.0
    %2693 = vmatpush1.msra.mxu0 0.0
    %2694 = vmatprep.subr.mxu0 0.0
    %2695 = vmatpush1.msra.mxu0 0.0
    %2696 = vmatprep.subr.mxu0 0.0
    %2697 = vmatpush1.msra.mxu0 0.0
    %2698 = vmatprep.subr.mxu0 0.0
    %2699 = vmatpush1.msra.mxu0 0.0
    %2700 = vmatprep.subr.mxu0 0.0
    %2701 = vmatpush1.msra.mxu0 0.0
    %2702 = vmatprep.subr.mxu0 0.0
    %2703 = vmatpush1.msra.mxu0 0.0
    %2704 = vmatprep.subr.mxu0 0.0
    %2705 = vmatpush1.msra.mxu0 0.0
    %2706 = vmatprep.subr.mxu0 0.0
    %2707 = vmatpush1.msra.mxu0 0.0
    %2708 = vmatprep.subr.mxu0 0.0
    %2709 = vmatpush1.msra.mxu0 0.0
    %2710 = vmatprep.subr.mxu0 0.0
    %2711 = vmatpush1.msra.mxu0 0.0
    %2712 = vmatprep.subr.mxu0 0.0
    %2713 = vmatpush1.msra.mxu0 0.0
    %2714 = vmatprep.subr.mxu0 0.0
    %2715 = vmatpush1.msra.mxu0 0.0
    %2716 = vmatprep.subr.mxu0 0.0
    %2717 = vmatpush1.msra.mxu0 0.0
    %2718 = vmatprep.subr.mxu0 0.0
    %2719 = vmatpush1.msra.mxu0 0.0
    %2720 = vmatprep.subr.mxu0 0.0
    %2721 = vmatpush1.msra.mxu0 0.0
    %2722 = vmatprep.subr.mxu0 0.0
    %2723 = vmatpush1.msra.mxu0 0.0
    %2724 = vmatprep.subr.mxu0 0.0
    %2725 = vmatpush1.msra.mxu0 0.0
    %2726 = vmatprep.subr.mxu0 0.0
    %2727 = vmatpush1.msra.mxu0 0.0
    %2728 = vmatprep.subr.mxu0 0.0
    %2729 = vmatpush1.msra.mxu0 0.0
    %2730 = vmatprep.subr.mxu0 0.0
    %2731 = vmatpush1.msra.mxu0 0.0
    %2732 = vmatprep.subr.mxu0 0.0
    %2733 = vmatpush1.msra.mxu0 0.0
    %2734 = vmatprep.subr.mxu0 0.0
    %2735 = vmatpush1.msra.mxu0 0.0
    %2736 = vmatprep.subr.mxu0 0.0
    %2737 = vmatpush1.msra.mxu0 0.0
    %2738 = vmatprep.subr.mxu0 0.0
    %2739 = vmatpush1.msra.mxu0 0.0
    %2740 = vmatprep.subr.mxu0 0.0
    %2741 = vmatpush1.msra.mxu0 0.0
    %2742 = vmatprep.subr.mxu0 0.0
    %2743 = vmatpush1.msra.mxu0 0.0
    %2744 = vmatprep.mubr.f32.mxu0 0.0
    %2745 = vmatmul.mubr.f32.gmra.mrb[0].mxu0 %v2678
    %v2746 = vpop.f32.mrb[0].mxu0
    %v2747 = vadd.f32 0.0, %v2746
    %v2748 = vpop.f32.mrb[0].mxu0
    %v2749 = vadd.f32 0.0, %v2748
    %2750 = vdwg.mxu0
    %v2752 = vrot.slane %v2671, 1
    %v2753 = vsel %vm2676, %v2752, 0
    %2755 = vmatprep.subr.mxu0 %v2673
    %2756 = vmatpush1.msra.mxu0 %v2672
    %2757 = vmatprep.subr.mxu0 %v2675
    %2758 = vmatpush1.msra.mxu0 %v2674
    %2759 = vmatprep.subr.mxu0 0.0
    %2760 = vmatpush1.msra.mxu0 0.0
    %2761 = vmatprep.subr.mxu0 0.0
    %2762 = vmatpush1.msra.mxu0 0.0
    %2763 = vmatprep.subr.mxu0 0.0
    %2764 = vmatpush1.msra.mxu0 0.0
    %2765 = vmatprep.subr.mxu0 0.0
    %2766 = vmatpush1.msra.mxu0 0.0
    %2767 = vmatprep.subr.mxu0 0.0
    %2768 = vmatpush1.msra.mxu0 0.0
    %2769 = vmatprep.subr.mxu0 0.0
    %2770 = vmatpush1.msra.mxu0 0.0
    %2771 = vmatprep.subr.mxu0 0.0
    %2772 = vmatpush1.msra.mxu0 0.0
    %2773 = vmatprep.subr.mxu0 0.0
    %2774 = vmatpush1.msra.mxu0 0.0
    %2775 = vmatprep.subr.mxu0 0.0
    %2776 = vmatpush1.msra.mxu0 0.0
    %2777 = vmatprep.subr.mxu0 0.0
    %2778 = vmatpush1.msra.mxu0 0.0
    %2779 = vmatprep.subr.mxu0 0.0
    %2780 = vmatpush1.msra.mxu0 0.0
    %2781 = vmatprep.subr.mxu0 0.0
    %2782 = vmatpush1.msra.mxu0 0.0
    %2783 = vmatprep.subr.mxu0 0.0
    %2784 = vmatpush1.msra.mxu0 0.0
    %2785 = vmatprep.subr.mxu0 0.0
    %2786 = vmatpush1.msra.mxu0 0.0
    %2787 = vmatprep.subr.mxu0 0.0
    %2788 = vmatpush1.msra.mxu0 0.0
    %2789 = vmatprep.subr.mxu0 0.0
    %2790 = vmatpush1.msra.mxu0 0.0
    %2791 = vmatprep.subr.mxu0 0.0
    %2792 = vmatpush1.msra.mxu0 0.0
    %2793 = vmatprep.subr.mxu0 0.0
    %2794 = vmatpush1.msra.mxu0 0.0
    %2795 = vmatprep.subr.mxu0 0.0
    %2796 = vmatpush1.msra.mxu0 0.0
    %2797 = vmatprep.subr.mxu0 0.0
    %2798 = vmatpush1.msra.mxu0 0.0
    %2799 = vmatprep.subr.mxu0 0.0
    %2800 = vmatpush1.msra.mxu0 0.0
    %2801 = vmatprep.subr.mxu0 0.0
    %2802 = vmatpush1.msra.mxu0 0.0
    %2803 = vmatprep.subr.mxu0 0.0
    %2804 = vmatpush1.msra.mxu0 0.0
    %2805 = vmatprep.subr.mxu0 0.0
    %2806 = vmatpush1.msra.mxu0 0.0
    %2807 = vmatprep.subr.mxu0 0.0
    %2808 = vmatpush1.msra.mxu0 0.0
    %2809 = vmatprep.subr.mxu0 0.0
    %2810 = vmatpush1.msra.mxu0 0.0
    %2811 = vmatprep.subr.mxu0 0.0
    %2812 = vmatpush1.msra.mxu0 0.0
    %2813 = vmatprep.subr.mxu0 0.0
    %2814 = vmatpush1.msra.mxu0 0.0
    %2815 = vmatprep.subr.mxu0 0.0
    %2816 = vmatpush1.msra.mxu0 0.0
    %2817 = vmatprep.subr.mxu0 0.0
    %2818 = vmatpush1.msra.mxu0 0.0
    %2819 = vmatprep.mubr.f32.mxu0 0.0
    %2820 = vmatmul.mubr.f32.gmra.mrb[0].mxu0 %v2753
    %v2821 = vpop.f32.mrb[0].mxu0
    %v2822 = vadd.f32 0.0, %v2821
    %v2823 = vpop.f32.mrb[0].mxu0
    %v2824 = vadd.f32 0.0, %v2823
    %2825 = vdwg.mxu0
    %v2826 = vlaneseq
    %v2827 = vshrl.u32 %v2826, 7
    %v2828 = vsub.s32 0, %v2827
    %v2829 = vrot.slane %v2747, %v2828
    %v2830 = vlaneseq
    %v2831 = vshrl.u32 %v2830, 7
    %v2832 = vsub.s32 0, %v2831
    %v2833 = vrot.slane %v2749, %v2832
    %v2834 = vmul.f32 %v2434, %v2829
    %v2835 = vmul.f32 %v2435, %v2833
    %v2836 = vmul.f32 %v2436, %v2829
    %v2837 = vmul.f32 %v2437, %v2833
    %v2838 = vmul.f32 %v2438, %v2829
    %v2839 = vmul.f32 %v2439, %v2833
    %v2840 = vmul.f32 %v2440, %v2829
    %v2841 = vmul.f32 %v2441, %v2833
    %v2842 = vlaneseq
    %v2843 = vshrl.u32 %v2842, 7
    %v2844 = vsub.s32 0, %v2843
    %v2845 = vrot.slane %v2822, %v2844
    %v2846 = vlaneseq
    %v2847 = vshrl.u32 %v2846, 7
    %v2848 = vsub.s32 0, %v2847
    %v2849 = vrot.slane %v2824, %v2848
    %v2850 = vadd.f32 %v2834, %v2845
    %v2851 = vadd.f32 %v2835, %v2849
    %v2852 = vadd.f32 %v2836, %v2845
    %v2853 = vadd.f32 %v2837, %v2849
    %v2854 = vadd.f32 %v2838, %v2845
    %v2855 = vadd.f32 %v2839, %v2849
    %v2856 = vadd.f32 %v2840, %v2845
    %v2857 = vadd.f32 %v2841, %v2849
    %vm2858 = vcmp.gt.f32.partialorder %v2850, 0.0
    %vm2859 = vcmp.gt.f32.partialorder %v2851, 0.0
    %vm2860 = vcmp.gt.f32.partialorder %v2852, 0.0
    %vm2861 = vcmp.gt.f32.partialorder %v2853, 0.0
    %vm2862 = vcmp.gt.f32.partialorder %v2854, 0.0
    %vm2863 = vcmp.gt.f32.partialorder %v2855, 0.0
    %vm2864 = vcmp.gt.f32.partialorder %v2856, 0.0
    %vm2865 = vcmp.gt.f32.partialorder %v2857, 0.0
    %v2866 = vmul.f32 %v2850, 0.2
    %v2867 = vmul.f32 %v2851, 0.2
    %v2868 = vmul.f32 %v2852, 0.2
    %v2869 = vmul.f32 %v2853, 0.2
    %v2870 = vmul.f32 %v2854, 0.2
    %v2871 = vmul.f32 %v2855, 0.2
    %v2872 = vmul.f32 %v2856, 0.2
    %v2873 = vmul.f32 %v2857, 0.2
    %v2874 = vsel %vm2858, %v2850, %v2866
    %v2875 = vsel %vm2859, %v2851, %v2867
    %v2876 = vsel %vm2860, %v2852, %v2868
    %v2877 = vsel %vm2861, %v2853, %v2869
    %v2878 = vsel %vm2862, %v2854, %v2870
    %v2879 = vsel %vm2863, %v2855, %v2871
    %v2880 = vsel %vm2864, %v2856, %v2872
    %v2881 = vsel %vm2865, %v2857, %v2873
    %v2882 = vld [vmem:[#allocation10] sm:$0xff]
    %v2883 = vld [vmem:[#allocation10 + $0x8] sm:$0xff]
    %vm2884 = vcmask 261120
    %v2886 = vsel %vm2884, %v2882, 0
    %v2889 = vsel %vm2884, %v2883, 0
    %2891 = vmatprep.subr.mxu0 %v2875
    %2892 = vmatpush1.msra.mxu0 %v2874
    %2893 = vmatprep.subr.mxu0 %v2877
    %2894 = vmatpush1.msra.mxu0 %v2876
    %2895 = vmatprep.subr.mxu0 %v2879
    %2896 = vmatpush1.msra.mxu0 %v2878
    %2897 = vmatprep.subr.mxu0 %v2881
    %2898 = vmatpush1.msra.mxu0 %v2880
    %2899 = vmatprep.subr.mxu0 0.0
    %2900 = vmatpush1.msra.mxu0 0.0
    %2901 = vmatprep.subr.mxu0 0.0
    %2902 = vmatpush1.msra.mxu0 0.0
    %2903 = vmatprep.subr.mxu0 0.0
    %2904 = vmatpush1.msra.mxu0 0.0
    %2905 = vmatprep.subr.mxu0 0.0
    %2906 = vmatpush1.msra.mxu0 0.0
    %2907 = vmatprep.subr.mxu0 0.0
    %2908 = vmatpush1.msra.mxu0 0.0
    %2909 = vmatprep.subr.mxu0 0.0
    %2910 = vmatpush1.msra.mxu0 0.0
    %2911 = vmatprep.subr.mxu0 0.0
    %2912 = vmatpush1.msra.mxu0 0.0
    %2913 = vmatprep.subr.mxu0 0.0
    %2914 = vmatpush1.msra.mxu0 0.0
    %2915 = vmatprep.subr.mxu0 0.0
    %2916 = vmatpush1.msra.mxu0 0.0
    %2917 = vmatprep.subr.mxu0 0.0
    %2918 = vmatpush1.msra.mxu0 0.0
    %2919 = vmatprep.subr.mxu0 0.0
    %2920 = vmatpush1.msra.mxu0 0.0
    %2921 = vmatprep.subr.mxu0 0.0
    %2922 = vmatpush1.msra.mxu0 0.0
    %2923 = vmatprep.subr.mxu0 0.0
    %2924 = vmatpush1.msra.mxu0 0.0
    %2925 = vmatprep.subr.mxu0 0.0
    %2926 = vmatpush1.msra.mxu0 0.0
    %2927 = vmatprep.subr.mxu0 0.0
    %2928 = vmatpush1.msra.mxu0 0.0
    %2929 = vmatprep.subr.mxu0 0.0
    %2930 = vmatpush1.msra.mxu0 0.0
    %2931 = vmatprep.subr.mxu0 0.0
    %2932 = vmatpush1.msra.mxu0 0.0
    %2933 = vmatprep.subr.mxu0 0.0
    %2934 = vmatpush1.msra.mxu0 0.0
    %2935 = vmatprep.subr.mxu0 0.0
    %2936 = vmatpush1.msra.mxu0 0.0
    %2937 = vmatprep.subr.mxu0 0.0
    %2938 = vmatpush1.msra.mxu0 0.0
    %2939 = vmatprep.subr.mxu0 0.0
    %2940 = vmatpush1.msra.mxu0 0.0
    %2941 = vmatprep.subr.mxu0 0.0
    %2942 = vmatpush1.msra.mxu0 0.0
    %2943 = vmatprep.subr.mxu0 0.0
    %2944 = vmatpush1.msra.mxu0 0.0
    %2945 = vmatprep.subr.mxu0 0.0
    %2946 = vmatpush1.msra.mxu0 0.0
    %2947 = vmatprep.subr.mxu0 0.0
    %2948 = vmatpush1.msra.mxu0 0.0
    %2949 = vmatprep.subr.mxu0 0.0
    %2950 = vmatpush1.msra.mxu0 0.0
    %2951 = vmatprep.subr.mxu0 0.0
    %2952 = vmatpush1.msra.mxu0 0.0
    %2953 = vmatprep.subr.mxu0 0.0
    %2954 = vmatpush1.msra.mxu0 0.0
    %2955 = vmatprep.mubr.f32.mxu0 0.0
    %2956 = vmatmul.mubr.f32.gmra.mrb[0].mxu0 %v2886
    %v2957 = vpop.f32.mrb[0].mxu0
    %v2958 = vadd.f32 0.0, %v2957
    %v2959 = vpop.f32.mrb[0].mxu0
    %v2960 = vadd.f32 0.0, %v2959
    %2961 = vmatprep.mubr.f32.mxu0 0.0
    %2962 = vmatmul.mubr.f32.gmra.mrb[0].mxu0 %v2889
    %v2963 = vpop.f32.mrb[0].mxu0
    %v2964 = vadd.f32 0.0, %v2963
    %v2965 = vpop.f32.mrb[0].mxu0
    %v2966 = vadd.f32 0.0, %v2965
    %2967 = vdwg.mxu0
    %v2968 = vld [vmem:[#allocation11] sm:$0xff]
    %v2969 = vld [vmem:[#allocation11 + $0x8] sm:$0xff]
    %v2970 = vld [vmem:[#allocation11 + $0x10] sm:$0xff]
    %v2971 = vld [vmem:[#allocation11 + $0x18] sm:$0xff]
    %v2972 = vld [vmem:[#allocation11 + $0x20] sm:$0xff]
    %v2973 = vld [vmem:[#allocation11 + $0x28] sm:$0xff]
    %v2974 = vld [vmem:[#allocation11 + $0x30] sm:$0xff]
    %v2975 = vld [vmem:[#allocation11 + $0x38] sm:$0xff]
    %v2976 = vld [vmem:[#allocation11 + $0x40] sm:$0xff]
    %v2977 = vld [vmem:[#allocation11 + $0x48] sm:$0xff]
    %v2978 = vld [vmem:[#allocation11 + $0x50] sm:$0xff]
    %v2979 = vld [vmem:[#allocation11 + $0x58] sm:$0xff]
    %v2980 = vld [vmem:[#allocation11 + $0x60] sm:$0xff]
    %v2981 = vld [vmem:[#allocation11 + $0x68] sm:$0xff]
    %v2982 = vld [vmem:[#allocation11 + $0x70] sm:$0xff]
    %v2983 = vld [vmem:[#allocation11 + $0x78] sm:$0xff]
    %v2984 = vld [vmem:[#allocation11 + $0x80] sm:$0xff]
    %v2985 = vld [vmem:[#allocation11 + $0x88] sm:$0xff]
    %v2986 = vld [vmem:[#allocation11 + $0x90] sm:$0xff]
    %v2987 = vld [vmem:[#allocation11 + $0x98] sm:$0xff]
    %v2988 = vld [vmem:[#allocation11 + $0xa0] sm:$0xff]
    %v2989 = vld [vmem:[#allocation11 + $0xa8] sm:$0xff]
    %v2990 = vld [vmem:[#allocation11 + $0xb0] sm:$0xff]
    %v2991 = vld [vmem:[#allocation11 + $0xb8] sm:$0xff]
    %v2992 = vld [vmem:[#allocation11 + $0xc0] sm:$0xff]
    %v2993 = vld [vmem:[#allocation11 + $0xc8] sm:$0xff]
    %v2994 = vld [vmem:[#allocation11 + $0xd0] sm:$0xff]
    %v2995 = vld [vmem:[#allocation11 + $0xd8] sm:$0xff]
    %v2996 = vld [vmem:[#allocation11 + $0xe0] sm:$0xff]
    %v2997 = vld [vmem:[#allocation11 + $0xe8] sm:$0xff]
    %v2998 = vld [vmem:[#allocation11 + $0xf0] sm:$0xff]
    %v2999 = vld [vmem:[#allocation11 + $0xf8] sm:$0xff]
    %v3000 = vld [vmem:[#allocation11 + $0x100] sm:$0xff]
    %v3001 = vld [vmem:[#allocation11 + $0x108] sm:$0xff]
    %v3002 = vld [vmem:[#allocation11 + $0x110] sm:$0xff]
    %v3003 = vld [vmem:[#allocation11 + $0x118] sm:$0xff]
    %v3004 = vld [vmem:[#allocation11 + $0x120] sm:$0xff]
    %v3005 = vld [vmem:[#allocation11 + $0x128] sm:$0xff]
    %v3006 = vld [vmem:[#allocation11 + $0x130] sm:$0xff]
    %v3007 = vld [vmem:[#allocation11 + $0x138] sm:$0xff]
    %v3008 = vld [vmem:[#allocation11 + $0x140] sm:$0xff]
    %v3009 = vld [vmem:[#allocation11 + $0x148] sm:$0xff]
    %v3010 = vld [vmem:[#allocation11 + $0x150] sm:$0xff]
    %v3011 = vld [vmem:[#allocation11 + $0x158] sm:$0xff]
    %v3012 = vld [vmem:[#allocation11 + $0x160] sm:$0xff]
    %v3013 = vld [vmem:[#allocation11 + $0x168] sm:$0xff]
    %v3014 = vld [vmem:[#allocation11 + $0x170] sm:$0xff]
    %v3015 = vld [vmem:[#allocation11 + $0x178] sm:$0xff]
    %v3016 = vld [vmem:[#allocation11 + $0x180] sm:$0xff]
    %v3017 = vld [vmem:[#allocation11 + $0x188] sm:$0xff]
    %v3018 = vld [vmem:[#allocation11 + $0x190] sm:$0xff]
    %v3019 = vld [vmem:[#allocation11 + $0x198] sm:$0xff]
    %v3020 = vld [vmem:[#allocation11 + $0x1a0] sm:$0xff]
    %v3021 = vld [vmem:[#allocation11 + $0x1a8] sm:$0xff]
    %v3022 = vld [vmem:[#allocation11 + $0x1b0] sm:$0xff]
    %v3023 = vld [vmem:[#allocation11 + $0x1b8] sm:$0xff]
    %v3024 = vld [vmem:[#allocation11 + $0x1c0] sm:$0xff]
    %v3025 = vld [vmem:[#allocation11 + $0x1c8] sm:$0xff]
    %v3026 = vld [vmem:[#allocation11 + $0x1d0] sm:$0xff]
    %v3027 = vld [vmem:[#allocation11 + $0x1d8] sm:$0xff]
    %v3028 = vld [vmem:[#allocation11 + $0x1e0] sm:$0xff]
    %v3029 = vld [vmem:[#allocation11 + $0x1e8] sm:$0xff]
    %v3030 = vld [vmem:[#allocation11 + $0x1f0] sm:$0xff]
    %v3031 = vld [vmem:[#allocation11 + $0x1f8] sm:$0xff]
    %s3032 = scalar_lea.vmem [#allocation10], 16
    %v3033 = vld [vmem:[%s3032] sm:$0xff]
    %v3034 = vld [vmem:[%s3032 + $0x8] sm:$0xff]
    %v3036 = vsel %vm2884, %v3033, 0
    %v3039 = vsel %vm2884, %v3034, 0
    %3041 = vmatprep.subr.mxu0 %v2875
    %3042 = vmatpush1.msra.mxu0 %v2874
    %3043 = vmatprep.subr.mxu0 %v2877
    %3044 = vmatpush1.msra.mxu0 %v2876
    %3045 = vmatprep.subr.mxu0 %v2879
    %3046 = vmatpush1.msra.mxu0 %v2878
    %3047 = vmatprep.subr.mxu0 %v2881
    %3048 = vmatpush1.msra.mxu0 %v2880
    %3049 = vmatprep.subr.mxu0 0.0
    %3050 = vmatpush1.msra.mxu0 0.0
    %3051 = vmatprep.subr.mxu0 0.0
    %3052 = vmatpush1.msra.mxu0 0.0
    %3053 = vmatprep.subr.mxu0 0.0
    %3054 = vmatpush1.msra.mxu0 0.0
    %3055 = vmatprep.subr.mxu0 0.0
    %3056 = vmatpush1.msra.mxu0 0.0
    %3057 = vmatprep.subr.mxu0 0.0
    %3058 = vmatpush1.msra.mxu0 0.0
    %3059 = vmatprep.subr.mxu0 0.0
    %3060 = vmatpush1.msra.mxu0 0.0
    %3061 = vmatprep.subr.mxu0 0.0
    %3062 = vmatpush1.msra.mxu0 0.0
    %3063 = vmatprep.subr.mxu0 0.0
    %3064 = vmatpush1.msra.mxu0 0.0
    %3065 = vmatprep.subr.mxu0 0.0
    %3066 = vmatpush1.msra.mxu0 0.0
    %3067 = vmatprep.subr.mxu0 0.0
    %3068 = vmatpush1.msra.mxu0 0.0
    %3069 = vmatprep.subr.mxu0 0.0
    %3070 = vmatpush1.msra.mxu0 0.0
    %3071 = vmatprep.subr.mxu0 0.0
    %3072 = vmatpush1.msra.mxu0 0.0
    %3073 = vmatprep.subr.mxu0 0.0
    %3074 = vmatpush1.msra.mxu0 0.0
    %3075 = vmatprep.subr.mxu0 0.0
    %3076 = vmatpush1.msra.mxu0 0.0
    %3077 = vmatprep.subr.mxu0 0.0
    %3078 = vmatpush1.msra.mxu0 0.0
    %3079 = vmatprep.subr.mxu0 0.0
    %3080 = vmatpush1.msra.mxu0 0.0
    %3081 = vmatprep.subr.mxu0 0.0
    %3082 = vmatpush1.msra.mxu0 0.0
    %3083 = vmatprep.subr.mxu0 0.0
    %3084 = vmatpush1.msra.mxu0 0.0
    %3085 = vmatprep.subr.mxu0 0.0
    %3086 = vmatpush1.msra.mxu0 0.0
    %3087 = vmatprep.subr.mxu0 0.0
    %3088 = vmatpush1.msra.mxu0 0.0
    %3089 = vmatprep.subr.mxu0 0.0
    %3090 = vmatpush1.msra.mxu0 0.0
    %3091 = vmatprep.subr.mxu0 0.0
    %3092 = vmatpush1.msra.mxu0 0.0
    %3093 = vmatprep.subr.mxu0 0.0
    %3094 = vmatpush1.msra.mxu0 0.0
    %3095 = vmatprep.subr.mxu0 0.0
    %3096 = vmatpush1.msra.mxu0 0.0
    %3097 = vmatprep.subr.mxu0 0.0
    %3098 = vmatpush1.msra.mxu0 0.0
    %3099 = vmatprep.subr.mxu0 0.0
    %3100 = vmatpush1.msra.mxu0 0.0
    %3101 = vmatprep.subr.mxu0 0.0
    %3102 = vmatpush1.msra.mxu0 0.0
    %3103 = vmatprep.subr.mxu0 0.0
    %3104 = vmatpush1.msra.mxu0 0.0
    %3105 = vmatprep.mubr.f32.mxu0 0.0
    %3106 = vmatmul.mubr.f32.gmra.mrb[0].mxu0 %v3036
    %v3107 = vpop.f32.mrb[0].mxu0
    %v3108 = vadd.f32 0.0, %v3107
    %v3109 = vpop.f32.mrb[0].mxu0
    %v3110 = vadd.f32 0.0, %v3109
    %3111 = vmatprep.mubr.f32.mxu0 0.0
    %3112 = vmatmul.mubr.f32.gmra.mrb[0].mxu0 %v3039
    %v3113 = vpop.f32.mrb[0].mxu0
    %v3114 = vadd.f32 0.0, %v3113
    %v3115 = vpop.f32.mrb[0].mxu0
    %v3116 = vadd.f32 0.0, %v3115
    %3117 = vdwg.mxu0
    %s3118 = scalar_lea.vmem [#allocation11], 512
    %v3119 = vld [vmem:[%s3118] sm:$0xff]
    %v3120 = vld [vmem:[%s3118 + $0x8] sm:$0xff]
    %v3121 = vld [vmem:[%s3118 + $0x10] sm:$0xff]
    %v3122 = vld [vmem:[%s3118 + $0x18] sm:$0xff]
    %v3123 = vld [vmem:[%s3118 + $0x20] sm:$0xff]
    %v3124 = vld [vmem:[%s3118 + $0x28] sm:$0xff]
    %v3125 = vld [vmem:[%s3118 + $0x30] sm:$0xff]
    %v3126 = vld [vmem:[%s3118 + $0x38] sm:$0xff]
    %v3127 = vld [vmem:[%s3118 + $0x40] sm:$0xff]
    %v3128 = vld [vmem:[%s3118 + $0x48] sm:$0xff]
    %v3129 = vld [vmem:[%s3118 + $0x50] sm:$0xff]
    %v3130 = vld [vmem:[%s3118 + $0x58] sm:$0xff]
    %v3131 = vld [vmem:[%s3118 + $0x60] sm:$0xff]
    %v3132 = vld [vmem:[%s3118 + $0x68] sm:$0xff]
    %v3133 = vld [vmem:[%s3118 + $0x70] sm:$0xff]
    %v3134 = vld [vmem:[%s3118 + $0x78] sm:$0xff]
    %v3135 = vld [vmem:[%s3118 + $0x80] sm:$0xff]
    %v3136 = vld [vmem:[%s3118 + $0x88] sm:$0xff]
    %v3137 = vld [vmem:[%s3118 + $0x90] sm:$0xff]
    %v3138 = vld [vmem:[%s3118 + $0x98] sm:$0xff]
    %v3139 = vld [vmem:[%s3118 + $0xa0] sm:$0xff]
    %v3140 = vld [vmem:[%s3118 + $0xa8] sm:$0xff]
    %v3141 = vld [vmem:[%s3118 + $0xb0] sm:$0xff]
    %v3142 = vld [vmem:[%s3118 + $0xb8] sm:$0xff]
    %v3143 = vld [vmem:[%s3118 + $0xc0] sm:$0xff]
    %v3144 = vld [vmem:[%s3118 + $0xc8] sm:$0xff]
    %v3145 = vld [vmem:[%s3118 + $0xd0] sm:$0xff]
    %v3146 = vld [vmem:[%s3118 + $0xd8] sm:$0xff]
    %v3147 = vld [vmem:[%s3118 + $0xe0] sm:$0xff]
    %v3148 = vld [vmem:[%s3118 + $0xe8] sm:$0xff]
    %v3149 = vld [vmem:[%s3118 + $0xf0] sm:$0xff]
    %v3150 = vld [vmem:[%s3118 + $0xf8] sm:$0xff]
    %v3151 = vld [vmem:[%s3118 + $0x100] sm:$0xff]
    %v3152 = vld [vmem:[%s3118 + $0x108] sm:$0xff]
    %v3153 = vld [vmem:[%s3118 + $0x110] sm:$0xff]
    %v3154 = vld [vmem:[%s3118 + $0x118] sm:$0xff]
    %v3155 = vld [vmem:[%s3118 + $0x120] sm:$0xff]
    %v3156 = vld [vmem:[%s3118 + $0x128] sm:$0xff]
    %v3157 = vld [vmem:[%s3118 + $0x130] sm:$0xff]
    %v3158 = vld [vmem:[%s3118 + $0x138] sm:$0xff]
    %v3159 = vld [vmem:[%s3118 + $0x140] sm:$0xff]
    %v3160 = vld [vmem:[%s3118 + $0x148] sm:$0xff]
    %v3161 = vld [vmem:[%s3118 + $0x150] sm:$0xff]
    %v3162 = vld [vmem:[%s3118 + $0x158] sm:$0xff]
    %v3163 = vld [vmem:[%s3118 + $0x160] sm:$0xff]
    %v3164 = vld [vmem:[%s3118 + $0x168] sm:$0xff]
    %v3165 = vld [vmem:[%s3118 + $0x170] sm:$0xff]
    %v3166 = vld [vmem:[%s3118 + $0x178] sm:$0xff]
    %v3167 = vld [vmem:[%s3118 + $0x180] sm:$0xff]
    %v3168 = vld [vmem:[%s3118 + $0x188] sm:$0xff]
    %v3169 = vld [vmem:[%s3118 + $0x190] sm:$0xff]
    %v3170 = vld [vmem:[%s3118 + $0x198] sm:$0xff]
    %v3171 = vld [vmem:[%s3118 + $0x1a0] sm:$0xff]
    %v3172 = vld [vmem:[%s3118 + $0x1a8] sm:$0xff]
    %v3173 = vld [vmem:[%s3118 + $0x1b0] sm:$0xff]
    %v3174 = vld [vmem:[%s3118 + $0x1b8] sm:$0xff]
    %v3175 = vld [vmem:[%s3118 + $0x1c0] sm:$0xff]
    %v3176 = vld [vmem:[%s3118 + $0x1c8] sm:$0xff]
    %v3177 = vld [vmem:[%s3118 + $0x1d0] sm:$0xff]
    %v3178 = vld [vmem:[%s3118 + $0x1d8] sm:$0xff]
    %v3179 = vld [vmem:[%s3118 + $0x1e0] sm:$0xff]
    %v3180 = vld [vmem:[%s3118 + $0x1e8] sm:$0xff]
    %v3181 = vld [vmem:[%s3118 + $0x1f0] sm:$0xff]
    %v3182 = vld [vmem:[%s3118 + $0x1f8] sm:$0xff]
    %3183 = vmatprep.subr.mxu0 %v3120
    %3184 = vmatpush1.msra.mxu0 %v3119
    %3185 = vmatprep.subr.mxu0 %v3122
    %3186 = vmatpush1.msra.mxu0 %v3121
    %3187 = vmatprep.subr.mxu0 %v3124
    %3188 = vmatpush1.msra.mxu0 %v3123
    %3189 = vmatprep.subr.mxu0 %v3126
    %3190 = vmatpush1.msra.mxu0 %v3125
    %3191 = vmatprep.subr.mxu0 %v3128
    %3192 = vmatpush1.msra.mxu0 %v3127
    %3193 = vmatprep.subr.mxu0 %v3130
    %3194 = vmatpush1.msra.mxu0 %v3129
    %3195 = vmatprep.subr.mxu0 %v3132
    %3196 = vmatpush1.msra.mxu0 %v3131
    %3197 = vmatprep.subr.mxu0 %v3134
    %3198 = vmatpush1.msra.mxu0 %v3133
    %3199 = vmatprep.subr.mxu0 %v3136
    %3200 = vmatpush1.msra.mxu0 %v3135
    %3201 = vmatprep.subr.mxu0 %v3138
    %3202 = vmatpush1.msra.mxu0 %v3137
    %3203 = vmatprep.subr.mxu0 %v3140
    %3204 = vmatpush1.msra.mxu0 %v3139
    %3205 = vmatprep.subr.mxu0 %v3142
    %3206 = vmatpush1.msra.mxu0 %v3141
    %3207 = vmatprep.subr.mxu0 %v3144
    %3208 = vmatpush1.msra.mxu0 %v3143
    %3209 = vmatprep.subr.mxu0 %v3146
    %3210 = vmatpush1.msra.mxu0 %v3145
    %3211 = vmatprep.subr.mxu0 %v3148
    %3212 = vmatpush1.msra.mxu0 %v3147
    %3213 = vmatprep.subr.mxu0 %v3150
    %3214 = vmatpush1.msra.mxu0 %v3149
    %3215 = vmatprep.subr.mxu0 %v3152
    %3216 = vmatpush1.msra.mxu0 %v3151
    %3217 = vmatprep.subr.mxu0 %v3154
    %3218 = vmatpush1.msra.mxu0 %v3153
    %3219 = vmatprep.subr.mxu0 %v3156
    %3220 = vmatpush1.msra.mxu0 %v3155
    %3221 = vmatprep.subr.mxu0 %v3158
    %3222 = vmatpush1.msra.mxu0 %v3157
    %3223 = vmatprep.subr.mxu0 %v3160
    %3224 = vmatpush1.msra.mxu0 %v3159
    %3225 = vmatprep.subr.mxu0 %v3162
    %3226 = vmatpush1.msra.mxu0 %v3161
    %3227 = vmatprep.subr.mxu0 %v3164
    %3228 = vmatpush1.msra.mxu0 %v3163
    %3229 = vmatprep.subr.mxu0 %v3166
    %3230 = vmatpush1.msra.mxu0 %v3165
    %3231 = vmatprep.subr.mxu0 %v3168
    %3232 = vmatpush1.msra.mxu0 %v3167
    %3233 = vmatprep.subr.mxu0 %v3170
    %3234 = vmatpush1.msra.mxu0 %v3169
    %3235 = vmatprep.subr.mxu0 %v3172
    %3236 = vmatpush1.msra.mxu0 %v3171
    %3237 = vmatprep.subr.mxu0 %v3174
    %3238 = vmatpush1.msra.mxu0 %v3173
    %3239 = vmatprep.subr.mxu0 %v3176
    %3240 = vmatpush1.msra.mxu0 %v3175
    %3241 = vmatprep.subr.mxu0 %v3178
    %3242 = vmatpush1.msra.mxu0 %v3177
    %3243 = vmatprep.subr.mxu0 %v3180
    %3244 = vmatpush1.msra.mxu0 %v3179
    %3245 = vmatprep.subr.mxu0 %v3182
    %3246 = vmatpush1.msra.mxu0 %v3181
    %3247 = vmatprep.mubr.f32.mxu0 %v3110
    %3248 = vmatmul.mubr.f32.gmra.mrb[0].mxu0 %v3108
    %v3249 = vpop.f32.mrb[0].mxu0
    %v3250 = vadd.f32 0.0, %v3249
    %v3251 = vpop.f32.mrb[0].mxu0
    %v3252 = vadd.f32 0.0, %v3251
    %3253 = vmatprep.mubr.f32.mxu0 %v3116
    %3254 = vmatmul.mubr.f32.gmra.mrb[0].mxu0 %v3114
    %v3255 = vpop.f32.mrb[0].mxu0
    %v3256 = vadd.f32 0.0, %v3255
    %v3257 = vpop.f32.mrb[0].mxu0
    %v3258 = vadd.f32 0.0, %v3257
    %3259 = vdwg.mxu0
    %3260 = vmatprep.subr.mxu0 %v2969
    %3261 = vmatpush1.msra.mxu0 %v2968
    %3262 = vmatprep.subr.mxu0 %v2971
    %3263 = vmatpush1.msra.mxu0 %v2970
    %3264 = vmatprep.subr.mxu0 %v2973
    %3265 = vmatpush1.msra.mxu0 %v2972
    %3266 = vmatprep.subr.mxu0 %v2975
    %3267 = vmatpush1.msra.mxu0 %v2974
    %3268 = vmatprep.subr.mxu0 %v2977
    %3269 = vmatpush1.msra.mxu0 %v2976
    %3270 = vmatprep.subr.mxu0 %v2979
    %3271 = vmatpush1.msra.mxu0 %v2978
    %3272 = vmatprep.subr.mxu0 %v2981
    %3273 = vmatpush1.msra.mxu0 %v2980
    %3274 = vmatprep.subr.mxu0 %v2983
    %3275 = vmatpush1.msra.mxu0 %v2982
    %3276 = vmatprep.subr.mxu0 %v2985
    %3277 = vmatpush1.msra.mxu0 %v2984
    %3278 = vmatprep.subr.mxu0 %v2987
    %3279 = vmatpush1.msra.mxu0 %v2986
    %3280 = vmatprep.subr.mxu0 %v2989
    %3281 = vmatpush1.msra.mxu0 %v2988
    %3282 = vmatprep.subr.mxu0 %v2991
    %3283 = vmatpush1.msra.mxu0 %v2990
    %3284 = vmatprep.subr.mxu0 %v2993
    %3285 = vmatpush1.msra.mxu0 %v2992
    %3286 = vmatprep.subr.mxu0 %v2995
    %3287 = vmatpush1.msra.mxu0 %v2994
    %3288 = vmatprep.subr.mxu0 %v2997
    %3289 = vmatpush1.msra.mxu0 %v2996
    %3290 = vmatprep.subr.mxu0 %v2999
    %3291 = vmatpush1.msra.mxu0 %v2998
    %3292 = vmatprep.subr.mxu0 %v3001
    %3293 = vmatpush1.msra.mxu0 %v3000
    %3294 = vmatprep.subr.mxu0 %v3003
    %3295 = vmatpush1.msra.mxu0 %v3002
    %3296 = vmatprep.subr.mxu0 %v3005
    %3297 = vmatpush1.msra.mxu0 %v3004
    %3298 = vmatprep.subr.mxu0 %v3007
    %3299 = vmatpush1.msra.mxu0 %v3006
    %3300 = vmatprep.subr.mxu0 %v3009
    %3301 = vmatpush1.msra.mxu0 %v3008
    %3302 = vmatprep.subr.mxu0 %v3011
    %3303 = vmatpush1.msra.mxu0 %v3010
    %3304 = vmatprep.subr.mxu0 %v3013
    %3305 = vmatpush1.msra.mxu0 %v3012
    %3306 = vmatprep.subr.mxu0 %v3015
    %3307 = vmatpush1.msra.mxu0 %v3014
    %3308 = vmatprep.subr.mxu0 %v3017
    %3309 = vmatpush1.msra.mxu0 %v3016
    %3310 = vmatprep.subr.mxu0 %v3019
    %3311 = vmatpush1.msra.mxu0 %v3018
    %3312 = vmatprep.subr.mxu0 %v3021
    %3313 = vmatpush1.msra.mxu0 %v3020
    %3314 = vmatprep.subr.mxu0 %v3023
    %3315 = vmatpush1.msra.mxu0 %v3022
    %3316 = vmatprep.subr.mxu0 %v3025
    %3317 = vmatpush1.msra.mxu0 %v3024
    %3318 = vmatprep.subr.mxu0 %v3027
    %3319 = vmatpush1.msra.mxu0 %v3026
    %3320 = vmatprep.subr.mxu0 %v3029
    %3321 = vmatpush1.msra.mxu0 %v3028
    %3322 = vmatprep.subr.mxu0 %v3031
    %3323 = vmatpush1.msra.mxu0 %v3030
    %3324 = vmatprep.mubr.f32.mxu0 %v2960
    %3325 = vmatmul.mubr.f32.gmra.mrb[0].mxu0 %v2958
    %v3326 = vpop.f32.mrb[0].mxu0
    %v3327 = vadd.f32 %v3250, %v3326
    %v3328 = vpop.f32.mrb[0].mxu0
    %v3329 = vadd.f32 %v3252, %v3328
    %3330 = vmatprep.mubr.f32.mxu0 %v2966
    %3331 = vmatmul.mubr.f32.gmra.mrb[0].mxu0 %v2964
    %v3332 = vpop.f32.mrb[0].mxu0
    %v3333 = vadd.f32 %v3256, %v3332
    %v3334 = vpop.f32.mrb[0].mxu0
    %v3335 = vadd.f32 %v3258, %v3334
    %3336 = vdwg.mxu0
    %s3337 = scalar_lea.vmem [#allocation10], 32
    %v3338 = vld [vmem:[%s3337] sm:$0xff]
    %v3339 = vld [vmem:[%s3337 + $0x8] sm:$0xff]
    %v3341 = vsel %vm2884, %v3338, 0
    %v3344 = vsel %vm2884, %v3339, 0
    %3346 = vmatprep.subr.mxu0 %v2875
    %3347 = vmatpush1.msra.mxu0 %v2874
    %3348 = vmatprep.subr.mxu0 %v2877
    %3349 = vmatpush1.msra.mxu0 %v2876
    %3350 = vmatprep.subr.mxu0 %v2879
    %3351 = vmatpush1.msra.mxu0 %v2878
    %3352 = vmatprep.subr.mxu0 %v2881
    %3353 = vmatpush1.msra.mxu0 %v2880
    %3354 = vmatprep.subr.mxu0 0.0
    %3355 = vmatpush1.msra.mxu0 0.0
    %3356 = vmatprep.subr.mxu0 0.0
    %3357 = vmatpush1.msra.mxu0 0.0
    %3358 = vmatprep.subr.mxu0 0.0
    %3359 = vmatpush1.msra.mxu0 0.0
    %3360 = vmatprep.subr.mxu0 0.0
    %3361 = vmatpush1.msra.mxu0 0.0
    %3362 = vmatprep.subr.mxu0 0.0
    %3363 = vmatpush1.msra.mxu0 0.0
    %3364 = vmatprep.subr.mxu0 0.0
    %3365 = vmatpush1.msra.mxu0 0.0
    %3366 = vmatprep.subr.mxu0 0.0
    %3367 = vmatpush1.msra.mxu0 0.0
    %3368 = vmatprep.subr.mxu0 0.0
    %3369 = vmatpush1.msra.mxu0 0.0
    %3370 = vmatprep.subr.mxu0 0.0
    %3371 = vmatpush1.msra.mxu0 0.0
    %3372 = vmatprep.subr.mxu0 0.0
    %3373 = vmatpush1.msra.mxu0 0.0
    %3374 = vmatprep.subr.mxu0 0.0
    %3375 = vmatpush1.msra.mxu0 0.0
    %3376 = vmatprep.subr.mxu0 0.0
    %3377 = vmatpush1.msra.mxu0 0.0
    %3378 = vmatprep.subr.mxu0 0.0
    %3379 = vmatpush1.msra.mxu0 0.0
    %3380 = vmatprep.subr.mxu0 0.0
    %3381 = vmatpush1.msra.mxu0 0.0
    %3382 = vmatprep.subr.mxu0 0.0
    %3383 = vmatpush1.msra.mxu0 0.0
    %3384 = vmatprep.subr.mxu0 0.0
    %3385 = vmatpush1.msra.mxu0 0.0
    %3386 = vmatprep.subr.mxu0 0.0
    %3387 = vmatpush1.msra.mxu0 0.0
    %3388 = vmatprep.subr.mxu0 0.0
    %3389 = vmatpush1.msra.mxu0 0.0
    %3390 = vmatprep.subr.mxu0 0.0
    %3391 = vmatpush1.msra.mxu0 0.0
    %3392 = vmatprep.subr.mxu0 0.0
    %3393 = vmatpush1.msra.mxu0 0.0
    %3394 = vmatprep.subr.mxu0 0.0
    %3395 = vmatpush1.msra.mxu0 0.0
    %3396 = vmatprep.subr.mxu0 0.0
    %3397 = vmatpush1.msra.mxu0 0.0
    %3398 = vmatprep.subr.mxu0 0.0
    %3399 = vmatpush1.msra.mxu0 0.0
    %3400 = vmatprep.subr.mxu0 0.0
    %3401 = vmatpush1.msra.mxu0 0.0
    %3402 = vmatprep.subr.mxu0 0.0
    %3403 = vmatpush1.msra.mxu0 0.0
    %3404 = vmatprep.subr.mxu0 0.0
    %3405 = vmatpush1.msra.mxu0 0.0
    %3406 = vmatprep.subr.mxu0 0.0
    %3407 = vmatpush1.msra.mxu0 0.0
    %3408 = vmatprep.subr.mxu0 0.0
    %3409 = vmatpush1.msra.mxu0 0.0
    %3410 = vmatprep.mubr.f32.mxu0 0.0
    %3411 = vmatmul.mubr.f32.gmra.mrb[0].mxu0 %v3341
    %v3412 = vpop.f32.mrb[0].mxu0
    %v3413 = vadd.f32 0.0, %v3412
    %v3414 = vpop.f32.mrb[0].mxu0
    %v3415 = vadd.f32 0.0, %v3414
    %3416 = vmatprep.mubr.f32.mxu0 0.0
    %3417 = vmatmul.mubr.f32.gmra.mrb[0].mxu0 %v3344
    %v3418 = vpop.f32.mrb[0].mxu0
    %v3419 = vadd.f32 0.0, %v3418
    %v3420 = vpop.f32.mrb[0].mxu0
    %v3421 = vadd.f32 0.0, %v3420
    %3422 = vdwg.mxu0
    %s3423 = scalar_lea.vmem [#allocation11], 1024
    %v3424 = vld [vmem:[%s3423] sm:$0xff]
    %v3425 = vld [vmem:[%s3423 + $0x8] sm:$0xff]
    %v3426 = vld [vmem:[%s3423 + $0x10] sm:$0xff]
    %v3427 = vld [vmem:[%s3423 + $0x18] sm:$0xff]
    %v3428 = vld [vmem:[%s3423 + $0x20] sm:$0xff]
    %v3429 = vld [vmem:[%s3423 + $0x28] sm:$0xff]
    %v3430 = vld [vmem:[%s3423 + $0x30] sm:$0xff]
    %v3431 = vld [vmem:[%s3423 + $0x38] sm:$0xff]
    %v3432 = vld [vmem:[%s3423 + $0x40] sm:$0xff]
    %v3433 = vld [vmem:[%s3423 + $0x48] sm:$0xff]
    %v3434 = vld [vmem:[%s3423 + $0x50] sm:$0xff]
    %v3435 = vld [vmem:[%s3423 + $0x58] sm:$0xff]
    %v3436 = vld [vmem:[%s3423 + $0x60] sm:$0xff]
    %v3437 = vld [vmem:[%s3423 + $0x68] sm:$0xff]
    %v3438 = vld [vmem:[%s3423 + $0x70] sm:$0xff]
    %v3439 = vld [vmem:[%s3423 + $0x78] sm:$0xff]
    %v3440 = vld [vmem:[%s3423 + $0x80] sm:$0xff]
    %v3441 = vld [vmem:[%s3423 + $0x88] sm:$0xff]
    %v3442 = vld [vmem:[%s3423 + $0x90] sm:$0xff]
    %v3443 = vld [vmem:[%s3423 + $0x98] sm:$0xff]
    %v3444 = vld [vmem:[%s3423 + $0xa0] sm:$0xff]
    %v3445 = vld [vmem:[%s3423 + $0xa8] sm:$0xff]
    %v3446 = vld [vmem:[%s3423 + $0xb0] sm:$0xff]
    %v3447 = vld [vmem:[%s3423 + $0xb8] sm:$0xff]
    %v3448 = vld [vmem:[%s3423 + $0xc0] sm:$0xff]
    %v3449 = vld [vmem:[%s3423 + $0xc8] sm:$0xff]
    %v3450 = vld [vmem:[%s3423 + $0xd0] sm:$0xff]
    %v3451 = vld [vmem:[%s3423 + $0xd8] sm:$0xff]
    %v3452 = vld [vmem:[%s3423 + $0xe0] sm:$0xff]
    %v3453 = vld [vmem:[%s3423 + $0xe8] sm:$0xff]
    %v3454 = vld [vmem:[%s3423 + $0xf0] sm:$0xff]
    %v3455 = vld [vmem:[%s3423 + $0xf8] sm:$0xff]
    %v3456 = vld [vmem:[%s3423 + $0x100] sm:$0xff]
    %v3457 = vld [vmem:[%s3423 + $0x108] sm:$0xff]
    %v3458 = vld [vmem:[%s3423 + $0x110] sm:$0xff]
    %v3459 = vld [vmem:[%s3423 + $0x118] sm:$0xff]
    %v3460 = vld [vmem:[%s3423 + $0x120] sm:$0xff]
    %v3461 = vld [vmem:[%s3423 + $0x128] sm:$0xff]
    %v3462 = vld [vmem:[%s3423 + $0x130] sm:$0xff]
    %v3463 = vld [vmem:[%s3423 + $0x138] sm:$0xff]
    %v3464 = vld [vmem:[%s3423 + $0x140] sm:$0xff]
    %v3465 = vld [vmem:[%s3423 + $0x148] sm:$0xff]
    %v3466 = vld [vmem:[%s3423 + $0x150] sm:$0xff]
    %v3467 = vld [vmem:[%s3423 + $0x158] sm:$0xff]
    %v3468 = vld [vmem:[%s3423 + $0x160] sm:$0xff]
    %v3469 = vld [vmem:[%s3423 + $0x168] sm:$0xff]
    %v3470 = vld [vmem:[%s3423 + $0x170] sm:$0xff]
    %v3471 = vld [vmem:[%s3423 + $0x178] sm:$0xff]
    %v3472 = vld [vmem:[%s3423 + $0x180] sm:$0xff]
    %v3473 = vld [vmem:[%s3423 + $0x188] sm:$0xff]
    %v3474 = vld [vmem:[%s3423 + $0x190] sm:$0xff]
    %v3475 = vld [vmem:[%s3423 + $0x198] sm:$0xff]
    %v3476 = vld [vmem:[%s3423 + $0x1a0] sm:$0xff]
    %v3477 = vld [vmem:[%s3423 + $0x1a8] sm:$0xff]
    %v3478 = vld [vmem:[%s3423 + $0x1b0] sm:$0xff]
    %v3479 = vld [vmem:[%s3423 + $0x1b8] sm:$0xff]
    %v3480 = vld [vmem:[%s3423 + $0x1c0] sm:$0xff]
    %v3481 = vld [vmem:[%s3423 + $0x1c8] sm:$0xff]
    %v3482 = vld [vmem:[%s3423 + $0x1d0] sm:$0xff]
    %v3483 = vld [vmem:[%s3423 + $0x1d8] sm:$0xff]
    %v3484 = vld [vmem:[%s3423 + $0x1e0] sm:$0xff]
    %v3485 = vld [vmem:[%s3423 + $0x1e8] sm:$0xff]
    %v3486 = vld [vmem:[%s3423 + $0x1f0] sm:$0xff]
    %v3487 = vld [vmem:[%s3423 + $0x1f8] sm:$0xff]
    %3488 = vmatprep.subr.mxu0 %v3425
    %3489 = vmatpush1.msra.mxu0 %v3424
    %3490 = vmatprep.subr.mxu0 %v3427
    %3491 = vmatpush1.msra.mxu0 %v3426
    %3492 = vmatprep.subr.mxu0 %v3429
    %3493 = vmatpush1.msra.mxu0 %v3428
    %3494 = vmatprep.subr.mxu0 %v3431
    %3495 = vmatpush1.msra.mxu0 %v3430
    %3496 = vmatprep.subr.mxu0 %v3433
    %3497 = vmatpush1.msra.mxu0 %v3432
    %3498 = vmatprep.subr.mxu0 %v3435
    %3499 = vmatpush1.msra.mxu0 %v3434
    %3500 = vmatprep.subr.mxu0 %v3437
    %3501 = vmatpush1.msra.mxu0 %v3436
    %3502 = vmatprep.subr.mxu0 %v3439
    %3503 = vmatpush1.msra.mxu0 %v3438
    %3504 = vmatprep.subr.mxu0 %v3441
    %3505 = vmatpush1.msra.mxu0 %v3440
    %3506 = vmatprep.subr.mxu0 %v3443
    %3507 = vmatpush1.msra.mxu0 %v3442
    %3508 = vmatprep.subr.mxu0 %v3445
    %3509 = vmatpush1.msra.mxu0 %v3444
    %3510 = vmatprep.subr.mxu0 %v3447
    %3511 = vmatpush1.msra.mxu0 %v3446
    %3512 = vmatprep.subr.mxu0 %v3449
    %3513 = vmatpush1.msra.mxu0 %v3448
    %3514 = vmatprep.subr.mxu0 %v3451
    %3515 = vmatpush1.msra.mxu0 %v3450
    %3516 = vmatprep.subr.mxu0 %v3453
    %3517 = vmatpush1.msra.mxu0 %v3452
    %3518 = vmatprep.subr.mxu0 %v3455
    %3519 = vmatpush1.msra.mxu0 %v3454
    %3520 = vmatprep.subr.mxu0 %v3457
    %3521 = vmatpush1.msra.mxu0 %v3456
    %3522 = vmatprep.subr.mxu0 %v3459
    %3523 = vmatpush1.msra.mxu0 %v3458
    %3524 = vmatprep.subr.mxu0 %v3461
    %3525 = vmatpush1.msra.mxu0 %v3460
    %3526 = vmatprep.subr.mxu0 %v3463
    %3527 = vmatpush1.msra.mxu0 %v3462
    %3528 = vmatprep.subr.mxu0 %v3465
    %3529 = vmatpush1.msra.mxu0 %v3464
    %3530 = vmatprep.subr.mxu0 %v3467
    %3531 = vmatpush1.msra.mxu0 %v3466
    %3532 = vmatprep.subr.mxu0 %v3469
    %3533 = vmatpush1.msra.mxu0 %v3468
    %3534 = vmatprep.subr.mxu0 %v3471
    %3535 = vmatpush1.msra.mxu0 %v3470
    %3536 = vmatprep.subr.mxu0 %v3473
    %3537 = vmatpush1.msra.mxu0 %v3472
    %3538 = vmatprep.subr.mxu0 %v3475
    %3539 = vmatpush1.msra.mxu0 %v3474
    %3540 = vmatprep.subr.mxu0 %v3477
    %3541 = vmatpush1.msra.mxu0 %v3476
    %3542 = vmatprep.subr.mxu0 %v3479
    %3543 = vmatpush1.msra.mxu0 %v3478
    %3544 = vmatprep.subr.mxu0 %v3481
    %3545 = vmatpush1.msra.mxu0 %v3480
    %3546 = vmatprep.subr.mxu0 %v3483
    %3547 = vmatpush1.msra.mxu0 %v3482
    %3548 = vmatprep.subr.mxu0 %v3485
    %3549 = vmatpush1.msra.mxu0 %v3484
    %3550 = vmatprep.subr.mxu0 %v3487
    %3551 = vmatpush1.msra.mxu0 %v3486
    %3552 = vmatprep.mubr.f32.mxu0 %v3415
    %3553 = vmatmul.mubr.f32.gmra.mrb[0].mxu0 %v3413
    %v3554 = vpop.f32.mrb[0].mxu0
    %v3555 = vadd.f32 0.0, %v3554
    %v3556 = vpop.f32.mrb[0].mxu0
    %v3557 = vadd.f32 0.0, %v3556
    %3558 = vmatprep.mubr.f32.mxu0 %v3421
    %3559 = vmatmul.mubr.f32.gmra.mrb[0].mxu0 %v3419
    %v3560 = vpop.f32.mrb[0].mxu0
    %v3561 = vadd.f32 0.0, %v3560
    %v3562 = vpop.f32.mrb[0].mxu0
    %v3563 = vadd.f32 0.0, %v3562
    %3564 = vdwg.mxu0
    %v3565 = vadd.f32 %v3327, %v3555
    %v3566 = vadd.f32 %v3329, %v3557
    %v3567 = vadd.f32 %v3333, %v3561
    %v3568 = vadd.f32 %v3335, %v3563
    %s3569 = scalar_lea.vmem [#allocation10], 48
    %v3570 = vld [vmem:[%s3569] sm:$0xff]
    %v3571 = vld [vmem:[%s3569 + $0x8] sm:$0xff]
    %v3573 = vsel %vm2884, %v3570, 0
    %v3576 = vsel %vm2884, %v3571, 0
    %3578 = vmatprep.subr.mxu0 %v2875
    %3579 = vmatpush1.msra.mxu0 %v2874
    %3580 = vmatprep.subr.mxu0 %v2877
    %3581 = vmatpush1.msra.mxu0 %v2876
    %3582 = vmatprep.subr.mxu0 %v2879
    %3583 = vmatpush1.msra.mxu0 %v2878
    %3584 = vmatprep.subr.mxu0 %v2881
    %3585 = vmatpush1.msra.mxu0 %v2880
    %3586 = vmatprep.subr.mxu0 0.0
    %3587 = vmatpush1.msra.mxu0 0.0
    %3588 = vmatprep.subr.mxu0 0.0
    %3589 = vmatpush1.msra.mxu0 0.0
    %3590 = vmatprep.subr.mxu0 0.0
    %3591 = vmatpush1.msra.mxu0 0.0
    %3592 = vmatprep.subr.mxu0 0.0
    %3593 = vmatpush1.msra.mxu0 0.0
    %3594 = vmatprep.subr.mxu0 0.0
    %3595 = vmatpush1.msra.mxu0 0.0
    %3596 = vmatprep.subr.mxu0 0.0
    %3597 = vmatpush1.msra.mxu0 0.0
    %3598 = vmatprep.subr.mxu0 0.0
    %3599 = vmatpush1.msra.mxu0 0.0
    %3600 = vmatprep.subr.mxu0 0.0
    %3601 = vmatpush1.msra.mxu0 0.0
    %3602 = vmatprep.subr.mxu0 0.0
    %3603 = vmatpush1.msra.mxu0 0.0
    %3604 = vmatprep.subr.mxu0 0.0
    %3605 = vmatpush1.msra.mxu0 0.0
    %3606 = vmatprep.subr.mxu0 0.0
    %3607 = vmatpush1.msra.mxu0 0.0
    %3608 = vmatprep.subr.mxu0 0.0
    %3609 = vmatpush1.msra.mxu0 0.0
    %3610 = vmatprep.subr.mxu0 0.0
    %3611 = vmatpush1.msra.mxu0 0.0
    %3612 = vmatprep.subr.mxu0 0.0
    %3613 = vmatpush1.msra.mxu0 0.0
    %3614 = vmatprep.subr.mxu0 0.0
    %3615 = vmatpush1.msra.mxu0 0.0
    %3616 = vmatprep.subr.mxu0 0.0
    %3617 = vmatpush1.msra.mxu0 0.0
    %3618 = vmatprep.subr.mxu0 0.0
    %3619 = vmatpush1.msra.mxu0 0.0
    %3620 = vmatprep.subr.mxu0 0.0
    %3621 = vmatpush1.msra.mxu0 0.0
    %3622 = vmatprep.subr.mxu0 0.0
    %3623 = vmatpush1.msra.mxu0 0.0
    %3624 = vmatprep.subr.mxu0 0.0
    %3625 = vmatpush1.msra.mxu0 0.0
    %3626 = vmatprep.subr.mxu0 0.0
    %3627 = vmatpush1.msra.mxu0 0.0
    %3628 = vmatprep.subr.mxu0 0.0
    %3629 = vmatpush1.msra.mxu0 0.0
    %3630 = vmatprep.subr.mxu0 0.0
    %3631 = vmatpush1.msra.mxu0 0.0
    %3632 = vmatprep.subr.mxu0 0.0
    %3633 = vmatpush1.msra.mxu0 0.0
    %3634 = vmatprep.subr.mxu0 0.0
    %3635 = vmatpush1.msra.mxu0 0.0
    %3636 = vmatprep.subr.mxu0 0.0
    %3637 = vmatpush1.msra.mxu0 0.0
    %3638 = vmatprep.subr.mxu0 0.0
    %3639 = vmatpush1.msra.mxu0 0.0
    %3640 = vmatprep.subr.mxu0 0.0
    %3641 = vmatpush1.msra.mxu0 0.0
    %3642 = vmatprep.mubr.f32.mxu0 0.0
    %3643 = vmatmul.mubr.f32.gmra.mrb[0].mxu0 %v3573
    %v3644 = vpop.f32.mrb[0].mxu0
    %v3645 = vadd.f32 0.0, %v3644
    %v3646 = vpop.f32.mrb[0].mxu0
    %v3647 = vadd.f32 0.0, %v3646
    %3648 = vmatprep.mubr.f32.mxu0 0.0
    %3649 = vmatmul.mubr.f32.gmra.mrb[0].mxu0 %v3576
    %v3650 = vpop.f32.mrb[0].mxu0
    %v3651 = vadd.f32 0.0, %v3650
    %v3652 = vpop.f32.mrb[0].mxu0
    %v3653 = vadd.f32 0.0, %v3652
    %3654 = vdwg.mxu0
    %s3655 = scalar_lea.vmem [#allocation11], 1536
    %v3656 = vld [vmem:[%s3655] sm:$0xff]
    %v3657 = vld [vmem:[%s3655 + $0x8] sm:$0xff]
    %v3658 = vld [vmem:[%s3655 + $0x10] sm:$0xff]
    %v3659 = vld [vmem:[%s3655 + $0x18] sm:$0xff]
    %v3660 = vld [vmem:[%s3655 + $0x20] sm:$0xff]
    %v3661 = vld [vmem:[%s3655 + $0x28] sm:$0xff]
    %v3662 = vld [vmem:[%s3655 + $0x30] sm:$0xff]
    %v3663 = vld [vmem:[%s3655 + $0x38] sm:$0xff]
    %v3664 = vld [vmem:[%s3655 + $0x40] sm:$0xff]
    %v3665 = vld [vmem:[%s3655 + $0x48] sm:$0xff]
    %v3666 = vld [vmem:[%s3655 + $0x50] sm:$0xff]
    %v3667 = vld [vmem:[%s3655 + $0x58] sm:$0xff]
    %v3668 = vld [vmem:[%s3655 + $0x60] sm:$0xff]
    %v3669 = vld [vmem:[%s3655 + $0x68] sm:$0xff]
    %v3670 = vld [vmem:[%s3655 + $0x70] sm:$0xff]
    %v3671 = vld [vmem:[%s3655 + $0x78] sm:$0xff]
    %v3672 = vld [vmem:[%s3655 + $0x80] sm:$0xff]
    %v3673 = vld [vmem:[%s3655 + $0x88] sm:$0xff]
    %v3674 = vld [vmem:[%s3655 + $0x90] sm:$0xff]
    %v3675 = vld [vmem:[%s3655 + $0x98] sm:$0xff]
    %v3676 = vld [vmem:[%s3655 + $0xa0] sm:$0xff]
    %v3677 = vld [vmem:[%s3655 + $0xa8] sm:$0xff]
    %v3678 = vld [vmem:[%s3655 + $0xb0] sm:$0xff]
    %v3679 = vld [vmem:[%s3655 + $0xb8] sm:$0xff]
    %v3680 = vld [vmem:[%s3655 + $0xc0] sm:$0xff]
    %v3681 = vld [vmem:[%s3655 + $0xc8] sm:$0xff]
    %v3682 = vld [vmem:[%s3655 + $0xd0] sm:$0xff]
    %v3683 = vld [vmem:[%s3655 + $0xd8] sm:$0xff]
    %v3684 = vld [vmem:[%s3655 + $0xe0] sm:$0xff]
    %v3685 = vld [vmem:[%s3655 + $0xe8] sm:$0xff]
    %v3686 = vld [vmem:[%s3655 + $0xf0] sm:$0xff]
    %v3687 = vld [vmem:[%s3655 + $0xf8] sm:$0xff]
    %v3688 = vld [vmem:[%s3655 + $0x100] sm:$0xff]
    %v3689 = vld [vmem:[%s3655 + $0x108] sm:$0xff]
    %v3690 = vld [vmem:[%s3655 + $0x110] sm:$0xff]
    %v3691 = vld [vmem:[%s3655 + $0x118] sm:$0xff]
    %v3692 = vld [vmem:[%s3655 + $0x120] sm:$0xff]
    %v3693 = vld [vmem:[%s3655 + $0x128] sm:$0xff]
    %v3694 = vld [vmem:[%s3655 + $0x130] sm:$0xff]
    %v3695 = vld [vmem:[%s3655 + $0x138] sm:$0xff]
    %v3696 = vld [vmem:[%s3655 + $0x140] sm:$0xff]
    %v3697 = vld [vmem:[%s3655 + $0x148] sm:$0xff]
    %v3698 = vld [vmem:[%s3655 + $0x150] sm:$0xff]
    %v3699 = vld [vmem:[%s3655 + $0x158] sm:$0xff]
    %v3700 = vld [vmem:[%s3655 + $0x160] sm:$0xff]
    %v3701 = vld [vmem:[%s3655 + $0x168] sm:$0xff]
    %v3702 = vld [vmem:[%s3655 + $0x170] sm:$0xff]
    %v3703 = vld [vmem:[%s3655 + $0x178] sm:$0xff]
    %v3704 = vld [vmem:[%s3655 + $0x180] sm:$0xff]
    %v3705 = vld [vmem:[%s3655 + $0x188] sm:$0xff]
    %v3706 = vld [vmem:[%s3655 + $0x190] sm:$0xff]
    %v3707 = vld [vmem:[%s3655 + $0x198] sm:$0xff]
    %v3708 = vld [vmem:[%s3655 + $0x1a0] sm:$0xff]
    %v3709 = vld [vmem:[%s3655 + $0x1a8] sm:$0xff]
    %v3710 = vld [vmem:[%s3655 + $0x1b0] sm:$0xff]
    %v3711 = vld [vmem:[%s3655 + $0x1b8] sm:$0xff]
    %v3712 = vld [vmem:[%s3655 + $0x1c0] sm:$0xff]
    %v3713 = vld [vmem:[%s3655 + $0x1c8] sm:$0xff]
    %v3714 = vld [vmem:[%s3655 + $0x1d0] sm:$0xff]
    %v3715 = vld [vmem:[%s3655 + $0x1d8] sm:$0xff]
    %v3716 = vld [vmem:[%s3655 + $0x1e0] sm:$0xff]
    %v3717 = vld [vmem:[%s3655 + $0x1e8] sm:$0xff]
    %v3718 = vld [vmem:[%s3655 + $0x1f0] sm:$0xff]
    %v3719 = vld [vmem:[%s3655 + $0x1f8] sm:$0xff]
    %3720 = vmatprep.subr.mxu0 %v3657
    %3721 = vmatpush1.msra.mxu0 %v3656
    %3722 = vmatprep.subr.mxu0 %v3659
    %3723 = vmatpush1.msra.mxu0 %v3658
    %3724 = vmatprep.subr.mxu0 %v3661
    %3725 = vmatpush1.msra.mxu0 %v3660
    %3726 = vmatprep.subr.mxu0 %v3663
    %3727 = vmatpush1.msra.mxu0 %v3662
    %3728 = vmatprep.subr.mxu0 %v3665
    %3729 = vmatpush1.msra.mxu0 %v3664
    %3730 = vmatprep.subr.mxu0 %v3667
    %3731 = vmatpush1.msra.mxu0 %v3666
    %3732 = vmatprep.subr.mxu0 %v3669
    %3733 = vmatpush1.msra.mxu0 %v3668
    %3734 = vmatprep.subr.mxu0 %v3671
    %3735 = vmatpush1.msra.mxu0 %v3670
    %3736 = vmatprep.subr.mxu0 %v3673
    %3737 = vmatpush1.msra.mxu0 %v3672
    %3738 = vmatprep.subr.mxu0 %v3675
    %3739 = vmatpush1.msra.mxu0 %v3674
    %3740 = vmatprep.subr.mxu0 %v3677
    %3741 = vmatpush1.msra.mxu0 %v3676
    %3742 = vmatprep.subr.mxu0 %v3679
    %3743 = vmatpush1.msra.mxu0 %v3678
    %3744 = vmatprep.subr.mxu0 %v3681
    %3745 = vmatpush1.msra.mxu0 %v3680
    %3746 = vmatprep.subr.mxu0 %v3683
    %3747 = vmatpush1.msra.mxu0 %v3682
    %3748 = vmatprep.subr.mxu0 %v3685
    %3749 = vmatpush1.msra.mxu0 %v3684
    %3750 = vmatprep.subr.mxu0 %v3687
    %3751 = vmatpush1.msra.mxu0 %v3686
    %3752 = vmatprep.subr.mxu0 %v3689
    %3753 = vmatpush1.msra.mxu0 %v3688
    %3754 = vmatprep.subr.mxu0 %v3691
    %3755 = vmatpush1.msra.mxu0 %v3690
    %3756 = vmatprep.subr.mxu0 %v3693
    %3757 = vmatpush1.msra.mxu0 %v3692
    %3758 = vmatprep.subr.mxu0 %v3695
    %3759 = vmatpush1.msra.mxu0 %v3694
    %3760 = vmatprep.subr.mxu0 %v3697
    %3761 = vmatpush1.msra.mxu0 %v3696
    %3762 = vmatprep.subr.mxu0 %v3699
    %3763 = vmatpush1.msra.mxu0 %v3698
    %3764 = vmatprep.subr.mxu0 %v3701
    %3765 = vmatpush1.msra.mxu0 %v3700
    %3766 = vmatprep.subr.mxu0 %v3703
    %3767 = vmatpush1.msra.mxu0 %v3702
    %3768 = vmatprep.subr.mxu0 %v3705
    %3769 = vmatpush1.msra.mxu0 %v3704
    %3770 = vmatprep.subr.mxu0 %v3707
    %3771 = vmatpush1.msra.mxu0 %v3706
    %3772 = vmatprep.subr.mxu0 %v3709
    %3773 = vmatpush1.msra.mxu0 %v3708
    %3774 = vmatprep.subr.mxu0 %v3711
    %3775 = vmatpush1.msra.mxu0 %v3710
    %3776 = vmatprep.subr.mxu0 %v3713
    %3777 = vmatpush1.msra.mxu0 %v3712
    %3778 = vmatprep.subr.mxu0 %v3715
    %3779 = vmatpush1.msra.mxu0 %v3714
    %3780 = vmatprep.subr.mxu0 %v3717
    %3781 = vmatpush1.msra.mxu0 %v3716
    %3782 = vmatprep.subr.mxu0 %v3719
    %3783 = vmatpush1.msra.mxu0 %v3718
    %3784 = vmatprep.mubr.f32.mxu0 %v3647
    %3785 = vmatmul.mubr.f32.gmra.mrb[0].mxu0 %v3645
    %v3786 = vpop.f32.mrb[0].mxu0
    %v3787 = vadd.f32 0.0, %v3786
    %v3788 = vpop.f32.mrb[0].mxu0
    %v3789 = vadd.f32 0.0, %v3788
    %3790 = vmatprep.mubr.f32.mxu0 %v3653
    %3791 = vmatmul.mubr.f32.gmra.mrb[0].mxu0 %v3651
    %v3792 = vpop.f32.mrb[0].mxu0
    %v3793 = vadd.f32 0.0, %v3792
    %v3794 = vpop.f32.mrb[0].mxu0
    %v3795 = vadd.f32 0.0, %v3794
    %3796 = vdwg.mxu0
    %v3797 = vadd.f32 %v3565, %v3787
    %v3798 = vadd.f32 %v3566, %v3789
    %v3799 = vadd.f32 %v3567, %v3793
    %v3800 = vadd.f32 %v3568, %v3795
    %v3801 = vadd.f32 %v3797, %v3799
    %v3802 = vrot.slane %v3801, 4
    %v3803 = vadd.f32 %v3801, %v3802
    %v3804 = vrot.slane %v3803, 2
    %v3805 = vadd.f32 %v3803, %v3804
    %v3806 = vrot.slane %v3805, 1
    %v3807 = vadd.f32 %v3805, %v3806
    %v3808 = vadd.f32 %v3798, %v3800
    %v3809 = vrot.slane %v3808, 4
    %v3810 = vadd.f32 %v3808, %v3809
    %v3811 = vrot.slane %v3810, 2
    %v3812 = vadd.f32 %v3810, %v3811
    %v3813 = vrot.slane %v3812, 1
    %v3814 = vadd.f32 %v3812, %v3813
    %v3815 = vmul.f32 %v3797, %v3797
    %v3816 = vmul.f32 %v3798, %v3798
    %v3817 = vmul.f32 %v3799, %v3799
    %v3818 = vmul.f32 %v3800, %v3800
    %v3819 = vadd.f32 %v3815, %v3817
    %v3820 = vrot.slane %v3819, 4
    %v3821 = vadd.f32 %v3819, %v3820
    %v3822 = vrot.slane %v3821, 2
    %v3823 = vadd.f32 %v3821, %v3822
    %v3824 = vrot.slane %v3823, 1
    %v3825 = vadd.f32 %v3823, %v3824
    %v3826 = vadd.f32 %v3816, %v3818
    %v3827 = vrot.slane %v3826, 4
    %v3828 = vadd.f32 %v3826, %v3827
    %v3829 = vrot.slane %v3828, 2
    %v3830 = vadd.f32 %v3828, %v3829
    %v3831 = vrot.slane %v3830, 1
    %v3832 = vadd.f32 %v3830, %v3831
    %v3833 = vld [vmem:[%s12] sm:$0xff]
    %v3834 = vld [vmem:[%s12 + $0x8] sm:$0xff]
    %v3835 = vld [vmem:[%s12 + $0x10] sm:$0xff]
    %v3836 = vld [vmem:[%s12 + $0x18] sm:$0xff]
    %v3837 = vld [vmem:[%s12 + $0x20] sm:$0xff]
    %v3838 = vld [vmem:[%s12 + $0x28] sm:$0xff]
    %v3839 = vld [vmem:[%s12 + $0x30] sm:$0xff]
    %v3840 = vld [vmem:[%s12 + $0x38] sm:$0xff]
    %v3841 = vld [vmem:[%s12 + $0x40] sm:$0xff]
    %v3842 = vld [vmem:[%s12 + $0x48] sm:$0xff]
    %v3843 = vld [vmem:[%s12 + $0x50] sm:$0xff]
    %v3844 = vld [vmem:[%s12 + $0x58] sm:$0xff]
    %v3845 = vld [vmem:[%s12 + $0x60] sm:$0xff]
    %v3846 = vld [vmem:[%s12 + $0x68] sm:$0xff]
    %v3847 = vld [vmem:[%s12 + $0x70] sm:$0xff]
    %v3848 = vld [vmem:[%s12 + $0x78] sm:$0xff]
    %v3849 = vld [vmem:[%s12 + $0x80] sm:$0xff]
    %v3850 = vld [vmem:[%s12 + $0x88] sm:$0xff]
    %v3851 = vld [vmem:[%s12 + $0x90] sm:$0xff]
    %v3852 = vld [vmem:[%s12 + $0x98] sm:$0xff]
    %v3853 = vld [vmem:[%s12 + $0xa0] sm:$0xff]
    %v3854 = vld [vmem:[%s12 + $0xa8] sm:$0xff]
    %v3855 = vld [vmem:[%s12 + $0xb0] sm:$0xff]
    %v3856 = vld [vmem:[%s12 + $0xb8] sm:$0xff]
    %v3857 = vld [vmem:[%s12 + $0xc0] sm:$0xff]
    %v3858 = vld [vmem:[%s12 + $0xc8] sm:$0xff]
    %v3859 = vld [vmem:[%s12 + $0xd0] sm:$0xff]
    %v3860 = vld [vmem:[%s12 + $0xd8] sm:$0xff]
    %v3861 = vld [vmem:[%s12 + $0xe0] sm:$0xff]
    %v3862 = vld [vmem:[%s12 + $0xe8] sm:$0xff]
    %v3863 = vld [vmem:[%s12 + $0xf0] sm:$0xff]
    %v3864 = vld [vmem:[%s12 + $0xf8] sm:$0xff]
    %3865 = vmatprep.subr.mxu0 0.0
    %3866 = vmatpush1.msra.mxu0 %v3833
    %3867 = vmatprep.subr.mxu0 0.0
    %3868 = vmatpush1.msra.mxu0 %v3834
    %3869 = vmatprep.subr.mxu0 0.0
    %3870 = vmatpush1.msra.mxu0 %v3835
    %3871 = vmatprep.subr.mxu0 0.0
    %3872 = vmatpush1.msra.mxu0 %v3836
    %3873 = vmatprep.subr.mxu0 0.0
    %3874 = vmatpush1.msra.mxu0 %v3837
    %3875 = vmatprep.subr.mxu0 0.0
    %3876 = vmatpush1.msra.mxu0 %v3838
    %3877 = vmatprep.subr.mxu0 0.0
    %3878 = vmatpush1.msra.mxu0 %v3839
    %3879 = vmatprep.subr.mxu0 0.0
    %3880 = vmatpush1.msra.mxu0 %v3840
    %3881 = vmatprep.subr.mxu0 0.0
    %3882 = vmatpush1.msra.mxu0 %v3841
    %3883 = vmatprep.subr.mxu0 0.0
    %3884 = vmatpush1.msra.mxu0 %v3842
    %3885 = vmatprep.subr.mxu0 0.0
    %3886 = vmatpush1.msra.mxu0 %v3843
    %3887 = vmatprep.subr.mxu0 0.0
    %3888 = vmatpush1.msra.mxu0 %v3844
    %3889 = vmatprep.subr.mxu0 0.0
    %3890 = vmatpush1.msra.mxu0 %v3845
    %3891 = vmatprep.subr.mxu0 0.0
    %3892 = vmatpush1.msra.mxu0 %v3846
    %3893 = vmatprep.subr.mxu0 0.0
    %3894 = vmatpush1.msra.mxu0 %v3847
    %3895 = vmatprep.subr.mxu0 0.0
    %3896 = vmatpush1.msra.mxu0 %v3848
    %3897 = vmatprep.subr.mxu0 0.0
    %3898 = vmatpush1.msra.mxu0 %v3849
    %3899 = vmatprep.subr.mxu0 0.0
    %3900 = vmatpush1.msra.mxu0 %v3850
    %3901 = vmatprep.subr.mxu0 0.0
    %3902 = vmatpush1.msra.mxu0 %v3851
    %3903 = vmatprep.subr.mxu0 0.0
    %3904 = vmatpush1.msra.mxu0 %v3852
    %3905 = vmatprep.subr.mxu0 0.0
    %3906 = vmatpush1.msra.mxu0 %v3853
    %3907 = vmatprep.subr.mxu0 0.0
    %3908 = vmatpush1.msra.mxu0 %v3854
    %3909 = vmatprep.subr.mxu0 0.0
    %3910 = vmatpush1.msra.mxu0 %v3855
    %3911 = vmatprep.subr.mxu0 0.0
    %3912 = vmatpush1.msra.mxu0 %v3856
    %3913 = vmatprep.subr.mxu0 0.0
    %3914 = vmatpush1.msra.mxu0 %v3857
    %3915 = vmatprep.subr.mxu0 0.0
    %3916 = vmatpush1.msra.mxu0 %v3858
    %3917 = vmatprep.subr.mxu0 0.0
    %3918 = vmatpush1.msra.mxu0 %v3859
    %3919 = vmatprep.subr.mxu0 0.0
    %3920 = vmatpush1.msra.mxu0 %v3860
    %3921 = vmatprep.subr.mxu0 0.0
    %3922 = vmatpush1.msra.mxu0 %v3861
    %3923 = vmatprep.subr.mxu0 0.0
    %3924 = vmatpush1.msra.mxu0 %v3862
    %3925 = vmatprep.subr.mxu0 0.0
    %3926 = vmatpush1.msra.mxu0 %v3863
    %3927 = vmatprep.subr.mxu0 0.0
    %3928 = vmatpush1.msra.mxu0 %v3864
    %3929 = vmatprep.mubr.f32.mxu0 %v3814
    %3930 = vmatmul.mubr.f32.gmra.mrb[0].mxu0 %v3807
    %v3931 = vpop.f32.mrb[0].mxu0
    %v3932 = vadd.f32 0.0, %v3931
    %v3933 = vpop.f32.mrb[0].mxu0
    %3934 = vdwg.mxu0
    %v3935 = vrcp.pop 128.0
    %v3936 = vmul.f32 %v3932, %v3935
    %3937 = vmatprep.subr.mxu0 0.0
    %3938 = vmatpush1.msra.mxu0 %v3833
    %3939 = vmatprep.subr.mxu0 0.0
    %3940 = vmatpush1.msra.mxu0 %v3834
    %3941 = vmatprep.subr.mxu0 0.0
    %3942 = vmatpush1.msra.mxu0 %v3835
    %3943 = vmatprep.subr.mxu0 0.0
    %3944 = vmatpush1.msra.mxu0 %v3836
    %3945 = vmatprep.subr.mxu0 0.0
    %3946 = vmatpush1.msra.mxu0 %v3837
    %3947 = vmatprep.subr.mxu0 0.0
    %3948 = vmatpush1.msra.mxu0 %v3838
    %3949 = vmatprep.subr.mxu0 0.0
    %3950 = vmatpush1.msra.mxu0 %v3839
    %3951 = vmatprep.subr.mxu0 0.0
    %3952 = vmatpush1.msra.mxu0 %v3840
    %3953 = vmatprep.subr.mxu0 0.0
    %3954 = vmatpush1.msra.mxu0 %v3841
    %3955 = vmatprep.subr.mxu0 0.0
    %3956 = vmatpush1.msra.mxu0 %v3842
    %3957 = vmatprep.subr.mxu0 0.0
    %3958 = vmatpush1.msra.mxu0 %v3843
    %3959 = vmatprep.subr.mxu0 0.0
    %3960 = vmatpush1.msra.mxu0 %v3844
    %3961 = vmatprep.subr.mxu0 0.0
    %3962 = vmatpush1.msra.mxu0 %v3845
    %3963 = vmatprep.subr.mxu0 0.0
    %3964 = vmatpush1.msra.mxu0 %v3846
    %3965 = vmatprep.subr.mxu0 0.0
    %3966 = vmatpush1.msra.mxu0 %v3847
    %3967 = vmatprep.subr.mxu0 0.0
    %3968 = vmatpush1.msra.mxu0 %v3848
    %3969 = vmatprep.subr.mxu0 0.0
    %3970 = vmatpush1.msra.mxu0 %v3849
    %3971 = vmatprep.subr.mxu0 0.0
    %3972 = vmatpush1.msra.mxu0 %v3850
    %3973 = vmatprep.subr.mxu0 0.0
    %3974 = vmatpush1.msra.mxu0 %v3851
    %3975 = vmatprep.subr.mxu0 0.0
    %3976 = vmatpush1.msra.mxu0 %v3852
    %3977 = vmatprep.subr.mxu0 0.0
    %3978 = vmatpush1.msra.mxu0 %v3853
    %3979 = vmatprep.subr.mxu0 0.0
    %3980 = vmatpush1.msra.mxu0 %v3854
    %3981 = vmatprep.subr.mxu0 0.0
    %3982 = vmatpush1.msra.mxu0 %v3855
    %3983 = vmatprep.subr.mxu0 0.0
    %3984 = vmatpush1.msra.mxu0 %v3856
    %3985 = vmatprep.subr.mxu0 0.0
    %3986 = vmatpush1.msra.mxu0 %v3857
    %3987 = vmatprep.subr.mxu0 0.0
    %3988 = vmatpush1.msra.mxu0 %v3858
    %3989 = vmatprep.subr.mxu0 0.0
    %3990 = vmatpush1.msra.mxu0 %v3859
    %3991 = vmatprep.subr.mxu0 0.0
    %3992 = vmatpush1.msra.mxu0 %v3860
    %3993 = vmatprep.subr.mxu0 0.0
    %3994 = vmatpush1.msra.mxu0 %v3861
    %3995 = vmatprep.subr.mxu0 0.0
    %3996 = vmatpush1.msra.mxu0 %v3862
    %3997 = vmatprep.subr.mxu0 0.0
    %3998 = vmatpush1.msra.mxu0 %v3863
    %3999 = vmatprep.subr.mxu0 0.0
    %4000 = vmatpush1.msra.mxu0 %v3864
    %4001 = vmatprep.mubr.f32.mxu0 %v3832
    %4002 = vmatmul.mubr.f32.gmra.mrb[0].mxu0 %v3825
    %v4003 = vpop.f32.mrb[0].mxu0
    %v4004 = vadd.f32 0.0, %v4003
    %v4005 = vpop.f32.mrb[0].mxu0
    %4006 = vdwg.mxu0
    %v4007 = vmul.f32 %v4004, %v3935
    %v4008 = vmul.f32 %v3936, %v3936
    %v4009 = vsub.f32 %v4007, %v4008
    %v4010 = vld [vmem:[%s11] sm:$0x3]
    %v4011 = vadd.f32 %v4009, 1e-05
    %v4012 = vrsqrt.pop %v4011
    %v4013 = vmul.f32 %v4010, %v4012
    %v4014 = vmul.f32 %v3936, %v4013
    %v4016 = vrot.slane %v4014, 7
    %v4018 = vsub.f32 %v4010, %v4016
    %v4019 = vld [vmem:[#allocation13] sm:$0xff]
    %v4020 = vld [vmem:[#allocation13 + $0x8] sm:$0xff]
    %v4021 = vld [vmem:[#allocation13 + $0x10] sm:$0xff]
    %v4022 = vld [vmem:[#allocation13 + $0x18] sm:$0xff]
    %v4023 = vld [vmem:[#allocation13 + $0x20] sm:$0xff]
    %v4024 = vld [vmem:[#allocation13 + $0x28] sm:$0xff]
    %v4025 = vld [vmem:[#allocation13 + $0x30] sm:$0xff]
    %v4026 = vld [vmem:[#allocation13 + $0x38] sm:$0xff]
    %v4028 = vsel %vm2884, %v4013, 0
    %4030 = vmatprep.subr.mxu0 %v4020
    %4031 = vmatpush1.msra.mxu0 %v4019
    %4032 = vmatprep.subr.mxu0 %v4022
    %4033 = vmatpush1.msra.mxu0 %v4021
    %4034 = vmatprep.subr.mxu0 %v4024
    %4035 = vmatpush1.msra.mxu0 %v4023
    %4036 = vmatprep.subr.mxu0 %v4026
    %4037 = vmatpush1.msra.mxu0 %v4025
    %4038 = vmatprep.subr.mxu0 0.0
    %4039 = vmatpush1.msra.mxu0 0.0
    %4040 = vmatprep.subr.mxu0 0.0
    %4041 = vmatpush1.msra.mxu0 0.0
    %4042 = vmatprep.subr.mxu0 0.0
    %4043 = vmatpush1.msra.mxu0 0.0
    %4044 = vmatprep.subr.mxu0 0.0
    %4045 = vmatpush1.msra.mxu0 0.0
    %4046 = vmatprep.subr.mxu0 0.0
    %4047 = vmatpush1.msra.mxu0 0.0
    %4048 = vmatprep.subr.mxu0 0.0
    %4049 = vmatpush1.msra.mxu0 0.0
    %4050 = vmatprep.subr.mxu0 0.0
    %4051 = vmatpush1.msra.mxu0 0.0
    %4052 = vmatprep.subr.mxu0 0.0
    %4053 = vmatpush1.msra.mxu0 0.0
    %4054 = vmatprep.subr.mxu0 0.0
    %4055 = vmatpush1.msra.mxu0 0.0
    %4056 = vmatprep.subr.mxu0 0.0
    %4057 = vmatpush1.msra.mxu0 0.0
    %4058 = vmatprep.subr.mxu0 0.0
    %4059 = vmatpush1.msra.mxu0 0.0
    %4060 = vmatprep.subr.mxu0 0.0
    %4061 = vmatpush1.msra.mxu0 0.0
    %4062 = vmatprep.subr.mxu0 0.0
    %4063 = vmatpush1.msra.mxu0 0.0
    %4064 = vmatprep.subr.mxu0 0.0
    %4065 = vmatpush1.msra.mxu0 0.0
    %4066 = vmatprep.subr.mxu0 0.0
    %4067 = vmatpush1.msra.mxu0 0.0
    %4068 = vmatprep.subr.mxu0 0.0
    %4069 = vmatpush1.msra.mxu0 0.0
    %4070 = vmatprep.subr.mxu0 0.0
    %4071 = vmatpush1.msra.mxu0 0.0
    %4072 = vmatprep.subr.mxu0 0.0
    %4073 = vmatpush1.msra.mxu0 0.0
    %4074 = vmatprep.subr.mxu0 0.0
    %4075 = vmatpush1.msra.mxu0 0.0
    %4076 = vmatprep.subr.mxu0 0.0
    %4077 = vmatpush1.msra.mxu0 0.0
    %4078 = vmatprep.subr.mxu0 0.0
    %4079 = vmatpush1.msra.mxu0 0.0
    %4080 = vmatprep.subr.mxu0 0.0
    %4081 = vmatpush1.msra.mxu0 0.0
    %4082 = vmatprep.subr.mxu0 0.0
    %4083 = vmatpush1.msra.mxu0 0.0
    %4084 = vmatprep.subr.mxu0 0.0
    %4085 = vmatpush1.msra.mxu0 0.0
    %4086 = vmatprep.subr.mxu0 0.0
    %4087 = vmatpush1.msra.mxu0 0.0
    %4088 = vmatprep.subr.mxu0 0.0
    %4089 = vmatpush1.msra.mxu0 0.0
    %4090 = vmatprep.subr.mxu0 0.0
    %4091 = vmatpush1.msra.mxu0 0.0
    %4092 = vmatprep.subr.mxu0 0.0
    %4093 = vmatpush1.msra.mxu0 0.0
    %4094 = vmatprep.mubr.f32.mxu0 0.0
    %4095 = vmatmul.mubr.f32.gmra.mrb[0].mxu0 %v4028
    %v4096 = vpop.f32.mrb[0].mxu0
    %v4097 = vadd.f32 0.0, %v4096
    %v4098 = vpop.f32.mrb[0].mxu0
    %v4099 = vadd.f32 0.0, %v4098
    %4100 = vdwg.mxu0
    %v4102 = vrot.slane %v4018, 1
    %v4103 = vsel %vm2884, %v4102, 0
    %4105 = vmatprep.subr.mxu0 %v4020
    %4106 = vmatpush1.msra.mxu0 %v4019
    %4107 = vmatprep.subr.mxu0 %v4022
    %4108 = vmatpush1.msra.mxu0 %v4021
    %4109 = vmatprep.subr.mxu0 %v4024
    %4110 = vmatpush1.msra.mxu0 %v4023
    %4111 = vmatprep.subr.mxu0 %v4026
    %4112 = vmatpush1.msra.mxu0 %v4025
    %4113 = vmatprep.subr.mxu0 0.0
    %4114 = vmatpush1.msra.mxu0 0.0
    %4115 = vmatprep.subr.mxu0 0.0
    %4116 = vmatpush1.msra.mxu0 0.0
    %4117 = vmatprep.subr.mxu0 0.0
    %4118 = vmatpush1.msra.mxu0 0.0
    %4119 = vmatprep.subr.mxu0 0.0
    %4120 = vmatpush1.msra.mxu0 0.0
    %4121 = vmatprep.subr.mxu0 0.0
    %4122 = vmatpush1.msra.mxu0 0.0
    %4123 = vmatprep.subr.mxu0 0.0
    %4124 = vmatpush1.msra.mxu0 0.0
    %4125 = vmatprep.subr.mxu0 0.0
    %4126 = vmatpush1.msra.mxu0 0.0
    %4127 = vmatprep.subr.mxu0 0.0
    %4128 = vmatpush1.msra.mxu0 0.0
    %4129 = vmatprep.subr.mxu0 0.0
    %4130 = vmatpush1.msra.mxu0 0.0
    %4131 = vmatprep.subr.mxu0 0.0
    %4132 = vmatpush1.msra.mxu0 0.0
    %4133 = vmatprep.subr.mxu0 0.0
    %4134 = vmatpush1.msra.mxu0 0.0
    %4135 = vmatprep.subr.mxu0 0.0
    %4136 = vmatpush1.msra.mxu0 0.0
    %4137 = vmatprep.subr.mxu0 0.0
    %4138 = vmatpush1.msra.mxu0 0.0
    %4139 = vmatprep.subr.mxu0 0.0
    %4140 = vmatpush1.msra.mxu0 0.0
    %4141 = vmatprep.subr.mxu0 0.0
    %4142 = vmatpush1.msra.mxu0 0.0
    %4143 = vmatprep.subr.mxu0 0.0
    %4144 = vmatpush1.msra.mxu0 0.0
    %4145 = vmatprep.subr.mxu0 0.0
    %4146 = vmatpush1.msra.mxu0 0.0
    %4147 = vmatprep.subr.mxu0 0.0
    %4148 = vmatpush1.msra.mxu0 0.0
    %4149 = vmatprep.subr.mxu0 0.0
    %4150 = vmatpush1.msra.mxu0 0.0
    %4151 = vmatprep.subr.mxu0 0.0
    %4152 = vmatpush1.msra.mxu0 0.0
    %4153 = vmatprep.subr.mxu0 0.0
    %4154 = vmatpush1.msra.mxu0 0.0
    %4155 = vmatprep.subr.mxu0 0.0
    %4156 = vmatpush1.msra.mxu0 0.0
    %4157 = vmatprep.subr.mxu0 0.0
    %4158 = vmatpush1.msra.mxu0 0.0
    %4159 = vmatprep.subr.mxu0 0.0
    %4160 = vmatpush1.msra.mxu0 0.0
    %4161 = vmatprep.subr.mxu0 0.0
    %4162 = vmatpush1.msra.mxu0 0.0
    %4163 = vmatprep.subr.mxu0 0.0
    %4164 = vmatpush1.msra.mxu0 0.0
    %4165 = vmatprep.subr.mxu0 0.0
    %4166 = vmatpush1.msra.mxu0 0.0
    %4167 = vmatprep.subr.mxu0 0.0
    %4168 = vmatpush1.msra.mxu0 0.0
    %4169 = vmatprep.mubr.f32.mxu0 0.0
    %4170 = vmatmul.mubr.f32.gmra.mrb[0].mxu0 %v4103
    %v4171 = vpop.f32.mrb[0].mxu0
    %v4172 = vadd.f32 0.0, %v4171
    %v4173 = vpop.f32.mrb[0].mxu0
    %v4174 = vadd.f32 0.0, %v4173
    %4175 = vdwg.mxu0
    %v4176 = vlaneseq
    %v4177 = vshrl.u32 %v4176, 7
    %v4178 = vsub.s32 0, %v4177
    %v4179 = vrot.slane %v4097, %v4178
    %v4180 = vlaneseq
    %v4181 = vshrl.u32 %v4180, 7
    %v4182 = vsub.s32 0, %v4181
    %v4183 = vrot.slane %v4099, %v4182
    %v4184 = vmul.f32 %v3797, %v4179
    %v4185 = vmul.f32 %v3798, %v4183
    %v4186 = vmul.f32 %v3799, %v4179
    %v4187 = vmul.f32 %v3800, %v4183
    %v4188 = vlaneseq
    %v4189 = vshrl.u32 %v4188, 7
    %v4190 = vsub.s32 0, %v4189
    %v4191 = vrot.slane %v4172, %v4190
    %v4192 = vlaneseq
    %v4193 = vshrl.u32 %v4192, 7
    %v4194 = vsub.s32 0, %v4193
    %v4195 = vrot.slane %v4174, %v4194
    %v4196 = vadd.f32 %v4184, %v4191
    %v4197 = vadd.f32 %v4185, %v4195
    %v4198 = vadd.f32 %v4186, %v4191
    %v4199 = vadd.f32 %v4187, %v4195
    %vm4200 = vcmp.gt.f32.partialorder %v4196, 0.0
    %vm4201 = vcmp.gt.f32.partialorder %v4197, 0.0
    %vm4202 = vcmp.gt.f32.partialorder %v4198, 0.0
    %vm4203 = vcmp.gt.f32.partialorder %v4199, 0.0
    %v4204 = vmul.f32 %v4196, 0.2
    %v4205 = vmul.f32 %v4197, 0.2
    %v4206 = vmul.f32 %v4198, 0.2
    %v4207 = vmul.f32 %v4199, 0.2
    %v4208 = vsel %vm4200, %v4196, %v4204
    %v4209 = vsel %vm4201, %v4197, %v4205
    %v4210 = vsel %vm4202, %v4198, %v4206
    %v4211 = vsel %vm4203, %v4199, %v4207
    %v4212 = vld [vmem:[#allocation14] sm:$0xff]
    %v4214 = vsel %vm2676, %v4212, 0
    %4216 = vmatprep.subr.mxu0 %v4209
    %4217 = vmatpush1.msra.mxu0 %v4208
    %4218 = vmatprep.subr.mxu0 %v4211
    %4219 = vmatpush1.msra.mxu0 %v4210
    %4220 = vmatprep.subr.mxu0 0.0
    %4221 = vmatpush1.msra.mxu0 0.0
    %4222 = vmatprep.subr.mxu0 0.0
    %4223 = vmatpush1.msra.mxu0 0.0
    %4224 = vmatprep.subr.mxu0 0.0
    %4225 = vmatpush1.msra.mxu0 0.0
    %4226 = vmatprep.subr.mxu0 0.0
    %4227 = vmatpush1.msra.mxu0 0.0
    %4228 = vmatprep.subr.mxu0 0.0
    %4229 = vmatpush1.msra.mxu0 0.0
    %4230 = vmatprep.subr.mxu0 0.0
    %4231 = vmatpush1.msra.mxu0 0.0
    %4232 = vmatprep.subr.mxu0 0.0
    %4233 = vmatpush1.msra.mxu0 0.0
    %4234 = vmatprep.subr.mxu0 0.0
    %4235 = vmatpush1.msra.mxu0 0.0
    %4236 = vmatprep.subr.mxu0 0.0
    %4237 = vmatpush1.msra.mxu0 0.0
    %4238 = vmatprep.subr.mxu0 0.0
    %4239 = vmatpush1.msra.mxu0 0.0
    %4240 = vmatprep.subr.mxu0 0.0
    %4241 = vmatpush1.msra.mxu0 0.0
    %4242 = vmatprep.subr.mxu0 0.0
    %4243 = vmatpush1.msra.mxu0 0.0
    %4244 = vmatprep.subr.mxu0 0.0
    %4245 = vmatpush1.msra.mxu0 0.0
    %4246 = vmatprep.subr.mxu0 0.0
    %4247 = vmatpush1.msra.mxu0 0.0
    %4248 = vmatprep.subr.mxu0 0.0
    %4249 = vmatpush1.msra.mxu0 0.0
    %4250 = vmatprep.subr.mxu0 0.0
    %4251 = vmatpush1.msra.mxu0 0.0
    %4252 = vmatprep.subr.mxu0 0.0
    %4253 = vmatpush1.msra.mxu0 0.0
    %4254 = vmatprep.subr.mxu0 0.0
    %4255 = vmatpush1.msra.mxu0 0.0
    %4256 = vmatprep.subr.mxu0 0.0
    %4257 = vmatpush1.msra.mxu0 0.0
    %4258 = vmatprep.subr.mxu0 0.0
    %4259 = vmatpush1.msra.mxu0 0.0
    %4260 = vmatprep.subr.mxu0 0.0
    %4261 = vmatpush1.msra.mxu0 0.0
    %4262 = vmatprep.subr.mxu0 0.0
    %4263 = vmatpush1.msra.mxu0 0.0
    %4264 = vmatprep.subr.mxu0 0.0
    %4265 = vmatpush1.msra.mxu0 0.0
    %4266 = vmatprep.subr.mxu0 0.0
    %4267 = vmatpush1.msra.mxu0 0.0
    %4268 = vmatprep.subr.mxu0 0.0
    %4269 = vmatpush1.msra.mxu0 0.0
    %4270 = vmatprep.subr.mxu0 0.0
    %4271 = vmatpush1.msra.mxu0 0.0
    %4272 = vmatprep.subr.mxu0 0.0
    %4273 = vmatpush1.msra.mxu0 0.0
    %4274 = vmatprep.subr.mxu0 0.0
    %4275 = vmatpush1.msra.mxu0 0.0
    %4276 = vmatprep.subr.mxu0 0.0
    %4277 = vmatpush1.msra.mxu0 0.0
    %4278 = vmatprep.subr.mxu0 0.0
    %4279 = vmatpush1.msra.mxu0 0.0
    %4280 = vmatprep.mubr.f32.mxu0 0.0
    %4281 = vmatmul.mubr.f32.gmra.mrb[0].mxu0 %v4214
    %v4282 = vpop.f32.mrb[0].mxu0
    %v4283 = vadd.f32 0.0, %v4282
    %v4284 = vpop.f32.mrb[0].mxu0
    %v4285 = vadd.f32 0.0, %v4284
    %4286 = vdwg.mxu0
    %v4287 = vld [vmem:[#allocation16] sm:$0xff]
    %v4288 = vld [vmem:[#allocation16 + $0x8] sm:$0xff]
    %v4289 = vld [vmem:[#allocation16 + $0x10] sm:$0xff]
    %v4290 = vld [vmem:[#allocation16 + $0x18] sm:$0xff]
    %v4291 = vld [vmem:[#allocation16 + $0x20] sm:$0xff]
    %v4292 = vld [vmem:[#allocation16 + $0x28] sm:$0xff]
    %v4293 = vld [vmem:[#allocation16 + $0x30] sm:$0xff]
    %v4294 = vld [vmem:[#allocation16 + $0x38] sm:$0xff]
    %v4295 = vld [vmem:[#allocation16 + $0x40] sm:$0xff]
    %v4296 = vld [vmem:[#allocation16 + $0x48] sm:$0xff]
    %v4297 = vld [vmem:[#allocation16 + $0x50] sm:$0xff]
    %v4298 = vld [vmem:[#allocation16 + $0x58] sm:$0xff]
    %v4299 = vld [vmem:[#allocation16 + $0x60] sm:$0xff]
    %v4300 = vld [vmem:[#allocation16 + $0x68] sm:$0xff]
    %v4301 = vld [vmem:[#allocation16 + $0x70] sm:$0xff]
    %v4302 = vld [vmem:[#allocation16 + $0x78] sm:$0xff]
    %v4303 = vld [vmem:[#allocation16 + $0x80] sm:$0xff]
    %v4304 = vld [vmem:[#allocation16 + $0x88] sm:$0xff]
    %v4305 = vld [vmem:[#allocation16 + $0x90] sm:$0xff]
    %v4306 = vld [vmem:[#allocation16 + $0x98] sm:$0xff]
    %v4307 = vld [vmem:[#allocation16 + $0xa0] sm:$0xff]
    %v4308 = vld [vmem:[#allocation16 + $0xa8] sm:$0xff]
    %v4309 = vld [vmem:[#allocation16 + $0xb0] sm:$0xff]
    %v4310 = vld [vmem:[#allocation16 + $0xb8] sm:$0xff]
    %v4311 = vld [vmem:[#allocation16 + $0xc0] sm:$0xff]
    %v4312 = vld [vmem:[#allocation16 + $0xc8] sm:$0xff]
    %v4313 = vld [vmem:[#allocation16 + $0xd0] sm:$0xff]
    %v4314 = vld [vmem:[#allocation16 + $0xd8] sm:$0xff]
    %v4315 = vld [vmem:[#allocation16 + $0xe0] sm:$0xff]
    %v4316 = vld [vmem:[#allocation16 + $0xe8] sm:$0xff]
    %v4317 = vld [vmem:[#allocation16 + $0xf0] sm:$0xff]
    %v4318 = vld [vmem:[#allocation16 + $0xf8] sm:$0xff]
    %v4319 = vld [vmem:[#allocation16 + $0x100] sm:$0xff]
    %v4320 = vld [vmem:[#allocation16 + $0x108] sm:$0xff]
    %v4321 = vld [vmem:[#allocation16 + $0x110] sm:$0xff]
    %v4322 = vld [vmem:[#allocation16 + $0x118] sm:$0xff]
    %v4323 = vld [vmem:[#allocation16 + $0x120] sm:$0xff]
    %v4324 = vld [vmem:[#allocation16 + $0x128] sm:$0xff]
    %v4325 = vld [vmem:[#allocation16 + $0x130] sm:$0xff]
    %v4326 = vld [vmem:[#allocation16 + $0x138] sm:$0xff]
    %v4327 = vld [vmem:[#allocation16 + $0x140] sm:$0xff]
    %v4328 = vld [vmem:[#allocation16 + $0x148] sm:$0xff]
    %v4329 = vld [vmem:[#allocation16 + $0x150] sm:$0xff]
    %v4330 = vld [vmem:[#allocation16 + $0x158] sm:$0xff]
    %v4331 = vld [vmem:[#allocation16 + $0x160] sm:$0xff]
    %v4332 = vld [vmem:[#allocation16 + $0x168] sm:$0xff]
    %v4333 = vld [vmem:[#allocation16 + $0x170] sm:$0xff]
    %v4334 = vld [vmem:[#allocation16 + $0x178] sm:$0xff]
    %v4335 = vld [vmem:[#allocation16 + $0x180] sm:$0xff]
    %v4336 = vld [vmem:[#allocation16 + $0x188] sm:$0xff]
    %v4337 = vld [vmem:[#allocation16 + $0x190] sm:$0xff]
    %v4338 = vld [vmem:[#allocation16 + $0x198] sm:$0xff]
    %v4339 = vld [vmem:[#allocation16 + $0x1a0] sm:$0xff]
    %v4340 = vld [vmem:[#allocation16 + $0x1a8] sm:$0xff]
    %v4341 = vld [vmem:[#allocation16 + $0x1b0] sm:$0xff]
    %v4342 = vld [vmem:[#allocation16 + $0x1b8] sm:$0xff]
    %v4343 = vld [vmem:[#allocation16 + $0x1c0] sm:$0xff]
    %v4344 = vld [vmem:[#allocation16 + $0x1c8] sm:$0xff]
    %v4345 = vld [vmem:[#allocation16 + $0x1d0] sm:$0xff]
    %v4346 = vld [vmem:[#allocation16 + $0x1d8] sm:$0xff]
    %v4347 = vld [vmem:[#allocation16 + $0x1e0] sm:$0xff]
    %v4348 = vld [vmem:[#allocation16 + $0x1e8] sm:$0xff]
    %v4349 = vld [vmem:[#allocation16 + $0x1f0] sm:$0xff]
    %v4350 = vld [vmem:[#allocation16 + $0x1f8] sm:$0xff]
    %s4351 = scalar_lea.vmem [#allocation14], 8
    %v4352 = vld [vmem:[%s4351] sm:$0xff]
    %v4354 = vsel %vm2676, %v4352, 0
    %4356 = vmatprep.subr.mxu0 %v4209
    %4357 = vmatpush1.msra.mxu0 %v4208
    %4358 = vmatprep.subr.mxu0 %v4211
    %4359 = vmatpush1.msra.mxu0 %v4210
    %4360 = vmatprep.subr.mxu0 0.0
    %4361 = vmatpush1.msra.mxu0 0.0
    %4362 = vmatprep.subr.mxu0 0.0
    %4363 = vmatpush1.msra.mxu0 0.0
    %4364 = vmatprep.subr.mxu0 0.0
    %4365 = vmatpush1.msra.mxu0 0.0
    %4366 = vmatprep.subr.mxu0 0.0
    %4367 = vmatpush1.msra.mxu0 0.0
    %4368 = vmatprep.subr.mxu0 0.0
    %4369 = vmatpush1.msra.mxu0 0.0
    %4370 = vmatprep.subr.mxu0 0.0
    %4371 = vmatpush1.msra.mxu0 0.0
    %4372 = vmatprep.subr.mxu0 0.0
    %4373 = vmatpush1.msra.mxu0 0.0
    %4374 = vmatprep.subr.mxu0 0.0
    %4375 = vmatpush1.msra.mxu0 0.0
    %4376 = vmatprep.subr.mxu0 0.0
    %4377 = vmatpush1.msra.mxu0 0.0
    %4378 = vmatprep.subr.mxu0 0.0
    %4379 = vmatpush1.msra.mxu0 0.0
    %4380 = vmatprep.subr.mxu0 0.0
    %4381 = vmatpush1.msra.mxu0 0.0
    %4382 = vmatprep.subr.mxu0 0.0
    %4383 = vmatpush1.msra.mxu0 0.0
    %4384 = vmatprep.subr.mxu0 0.0
    %4385 = vmatpush1.msra.mxu0 0.0
    %4386 = vmatprep.subr.mxu0 0.0
    %4387 = vmatpush1.msra.mxu0 0.0
    %4388 = vmatprep.subr.mxu0 0.0
    %4389 = vmatpush1.msra.mxu0 0.0
    %4390 = vmatprep.subr.mxu0 0.0
    %4391 = vmatpush1.msra.mxu0 0.0
    %4392 = vmatprep.subr.mxu0 0.0
    %4393 = vmatpush1.msra.mxu0 0.0
    %4394 = vmatprep.subr.mxu0 0.0
    %4395 = vmatpush1.msra.mxu0 0.0
    %4396 = vmatprep.subr.mxu0 0.0
    %4397 = vmatpush1.msra.mxu0 0.0
    %4398 = vmatprep.subr.mxu0 0.0
    %4399 = vmatpush1.msra.mxu0 0.0
    %4400 = vmatprep.subr.mxu0 0.0
    %4401 = vmatpush1.msra.mxu0 0.0
    %4402 = vmatprep.subr.mxu0 0.0
    %4403 = vmatpush1.msra.mxu0 0.0
    %4404 = vmatprep.subr.mxu0 0.0
    %4405 = vmatpush1.msra.mxu0 0.0
    %4406 = vmatprep.subr.mxu0 0.0
    %4407 = vmatpush1.msra.mxu0 0.0
    %4408 = vmatprep.subr.mxu0 0.0
    %4409 = vmatpush1.msra.mxu0 0.0
    %4410 = vmatprep.subr.mxu0 0.0
    %4411 = vmatpush1.msra.mxu0 0.0
    %4412 = vmatprep.subr.mxu0 0.0
    %4413 = vmatpush1.msra.mxu0 0.0
    %4414 = vmatprep.subr.mxu0 0.0
    %4415 = vmatpush1.msra.mxu0 0.0
    %4416 = vmatprep.subr.mxu0 0.0
    %4417 = vmatpush1.msra.mxu0 0.0
    %4418 = vmatprep.subr.mxu0 0.0
    %4419 = vmatpush1.msra.mxu0 0.0
    %4420 = vmatprep.mubr.f32.mxu0 0.0
    %4421 = vmatmul.mubr.f32.gmra.mrb[0].mxu0 %v4354
    %v4422 = vpop.f32.mrb[0].mxu0
    %v4423 = vadd.f32 0.0, %v4422
    %v4424 = vpop.f32.mrb[0].mxu0
    %v4425 = vadd.f32 0.0, %v4424
    %4426 = vdwg.mxu0
    %s4427 = scalar_lea.vmem [#allocation16], 512
    %v4428 = vld [vmem:[%s4427] sm:$0xff]
    %v4429 = vld [vmem:[%s4427 + $0x8] sm:$0xff]
    %v4430 = vld [vmem:[%s4427 + $0x10] sm:$0xff]
    %v4431 = vld [vmem:[%s4427 + $0x18] sm:$0xff]
    %v4432 = vld [vmem:[%s4427 + $0x20] sm:$0xff]
    %v4433 = vld [vmem:[%s4427 + $0x28] sm:$0xff]
    %v4434 = vld [vmem:[%s4427 + $0x30] sm:$0xff]
    %v4435 = vld [vmem:[%s4427 + $0x38] sm:$0xff]
    %v4436 = vld [vmem:[%s4427 + $0x40] sm:$0xff]
    %v4437 = vld [vmem:[%s4427 + $0x48] sm:$0xff]
    %v4438 = vld [vmem:[%s4427 + $0x50] sm:$0xff]
    %v4439 = vld [vmem:[%s4427 + $0x58] sm:$0xff]
    %v4440 = vld [vmem:[%s4427 + $0x60] sm:$0xff]
    %v4441 = vld [vmem:[%s4427 + $0x68] sm:$0xff]
    %v4442 = vld [vmem:[%s4427 + $0x70] sm:$0xff]
    %v4443 = vld [vmem:[%s4427 + $0x78] sm:$0xff]
    %v4444 = vld [vmem:[%s4427 + $0x80] sm:$0xff]
    %v4445 = vld [vmem:[%s4427 + $0x88] sm:$0xff]
    %v4446 = vld [vmem:[%s4427 + $0x90] sm:$0xff]
    %v4447 = vld [vmem:[%s4427 + $0x98] sm:$0xff]
    %v4448 = vld [vmem:[%s4427 + $0xa0] sm:$0xff]
    %v4449 = vld [vmem:[%s4427 + $0xa8] sm:$0xff]
    %v4450 = vld [vmem:[%s4427 + $0xb0] sm:$0xff]
    %v4451 = vld [vmem:[%s4427 + $0xb8] sm:$0xff]
    %v4452 = vld [vmem:[%s4427 + $0xc0] sm:$0xff]
    %v4453 = vld [vmem:[%s4427 + $0xc8] sm:$0xff]
    %v4454 = vld [vmem:[%s4427 + $0xd0] sm:$0xff]
    %v4455 = vld [vmem:[%s4427 + $0xd8] sm:$0xff]
    %v4456 = vld [vmem:[%s4427 + $0xe0] sm:$0xff]
    %v4457 = vld [vmem:[%s4427 + $0xe8] sm:$0xff]
    %v4458 = vld [vmem:[%s4427 + $0xf0] sm:$0xff]
    %v4459 = vld [vmem:[%s4427 + $0xf8] sm:$0xff]
    %v4460 = vld [vmem:[%s4427 + $0x100] sm:$0xff]
    %v4461 = vld [vmem:[%s4427 + $0x108] sm:$0xff]
    %v4462 = vld [vmem:[%s4427 + $0x110] sm:$0xff]
    %v4463 = vld [vmem:[%s4427 + $0x118] sm:$0xff]
    %v4464 = vld [vmem:[%s4427 + $0x120] sm:$0xff]
    %v4465 = vld [vmem:[%s4427 + $0x128] sm:$0xff]
    %v4466 = vld [vmem:[%s4427 + $0x130] sm:$0xff]
    %v4467 = vld [vmem:[%s4427 + $0x138] sm:$0xff]
    %v4468 = vld [vmem:[%s4427 + $0x140] sm:$0xff]
    %v4469 = vld [vmem:[%s4427 + $0x148] sm:$0xff]
    %v4470 = vld [vmem:[%s4427 + $0x150] sm:$0xff]
    %v4471 = vld [vmem:[%s4427 + $0x158] sm:$0xff]
    %v4472 = vld [vmem:[%s4427 + $0x160] sm:$0xff]
    %v4473 = vld [vmem:[%s4427 + $0x168] sm:$0xff]
    %v4474 = vld [vmem:[%s4427 + $0x170] sm:$0xff]
    %v4475 = vld [vmem:[%s4427 + $0x178] sm:$0xff]
    %v4476 = vld [vmem:[%s4427 + $0x180] sm:$0xff]
    %v4477 = vld [vmem:[%s4427 + $0x188] sm:$0xff]
    %v4478 = vld [vmem:[%s4427 + $0x190] sm:$0xff]
    %v4479 = vld [vmem:[%s4427 + $0x198] sm:$0xff]
    %v4480 = vld [vmem:[%s4427 + $0x1a0] sm:$0xff]
    %v4481 = vld [vmem:[%s4427 + $0x1a8] sm:$0xff]
    %v4482 = vld [vmem:[%s4427 + $0x1b0] sm:$0xff]
    %v4483 = vld [vmem:[%s4427 + $0x1b8] sm:$0xff]
    %v4484 = vld [vmem:[%s4427 + $0x1c0] sm:$0xff]
    %v4485 = vld [vmem:[%s4427 + $0x1c8] sm:$0xff]
    %v4486 = vld [vmem:[%s4427 + $0x1d0] sm:$0xff]
    %v4487 = vld [vmem:[%s4427 + $0x1d8] sm:$0xff]
    %v4488 = vld [vmem:[%s4427 + $0x1e0] sm:$0xff]
    %v4489 = vld [vmem:[%s4427 + $0x1e8] sm:$0xff]
    %v4490 = vld [vmem:[%s4427 + $0x1f0] sm:$0xff]
    %v4491 = vld [vmem:[%s4427 + $0x1f8] sm:$0xff]
    %4492 = vmatprep.subr.mxu0 %v4429
    %4493 = vmatpush1.msra.mxu0 %v4428
    %4494 = vmatprep.subr.mxu0 %v4431
    %4495 = vmatpush1.msra.mxu0 %v4430
    %4496 = vmatprep.subr.mxu0 %v4433
    %4497 = vmatpush1.msra.mxu0 %v4432
    %4498 = vmatprep.subr.mxu0 %v4435
    %4499 = vmatpush1.msra.mxu0 %v4434
    %4500 = vmatprep.subr.mxu0 %v4437
    %4501 = vmatpush1.msra.mxu0 %v4436
    %4502 = vmatprep.subr.mxu0 %v4439
    %4503 = vmatpush1.msra.mxu0 %v4438
    %4504 = vmatprep.subr.mxu0 %v4441
    %4505 = vmatpush1.msra.mxu0 %v4440
    %4506 = vmatprep.subr.mxu0 %v4443
    %4507 = vmatpush1.msra.mxu0 %v4442
    %4508 = vmatprep.subr.mxu0 %v4445
    %4509 = vmatpush1.msra.mxu0 %v4444
    %4510 = vmatprep.subr.mxu0 %v4447
    %4511 = vmatpush1.msra.mxu0 %v4446
    %4512 = vmatprep.subr.mxu0 %v4449
    %4513 = vmatpush1.msra.mxu0 %v4448
    %4514 = vmatprep.subr.mxu0 %v4451
    %4515 = vmatpush1.msra.mxu0 %v4450
    %4516 = vmatprep.subr.mxu0 %v4453
    %4517 = vmatpush1.msra.mxu0 %v4452
    %4518 = vmatprep.subr.mxu0 %v4455
    %4519 = vmatpush1.msra.mxu0 %v4454
    %4520 = vmatprep.subr.mxu0 %v4457
    %4521 = vmatpush1.msra.mxu0 %v4456
    %4522 = vmatprep.subr.mxu0 %v4459
    %4523 = vmatpush1.msra.mxu0 %v4458
    %4524 = vmatprep.subr.mxu0 %v4461
    %4525 = vmatpush1.msra.mxu0 %v4460
    %4526 = vmatprep.subr.mxu0 %v4463
    %4527 = vmatpush1.msra.mxu0 %v4462
    %4528 = vmatprep.subr.mxu0 %v4465
    %4529 = vmatpush1.msra.mxu0 %v4464
    %4530 = vmatprep.subr.mxu0 %v4467
    %4531 = vmatpush1.msra.mxu0 %v4466
    %4532 = vmatprep.subr.mxu0 %v4469
    %4533 = vmatpush1.msra.mxu0 %v4468
    %4534 = vmatprep.subr.mxu0 %v4471
    %4535 = vmatpush1.msra.mxu0 %v4470
    %4536 = vmatprep.subr.mxu0 %v4473
    %4537 = vmatpush1.msra.mxu0 %v4472
    %4538 = vmatprep.subr.mxu0 %v4475
    %4539 = vmatpush1.msra.mxu0 %v4474
    %4540 = vmatprep.subr.mxu0 %v4477
    %4541 = vmatpush1.msra.mxu0 %v4476
    %4542 = vmatprep.subr.mxu0 %v4479
    %4543 = vmatpush1.msra.mxu0 %v4478
    %4544 = vmatprep.subr.mxu0 %v4481
    %4545 = vmatpush1.msra.mxu0 %v4480
    %4546 = vmatprep.subr.mxu0 %v4483
    %4547 = vmatpush1.msra.mxu0 %v4482
    %4548 = vmatprep.subr.mxu0 %v4485
    %4549 = vmatpush1.msra.mxu0 %v4484
    %4550 = vmatprep.subr.mxu0 %v4487
    %4551 = vmatpush1.msra.mxu0 %v4486
    %4552 = vmatprep.subr.mxu0 %v4489
    %4553 = vmatpush1.msra.mxu0 %v4488
    %4554 = vmatprep.subr.mxu0 %v4491
    %4555 = vmatpush1.msra.mxu0 %v4490
    %4556 = vmatprep.mubr.f32.mxu0 %v4425
    %4557 = vmatmul.mubr.f32.gmra.mrb[0].mxu0 %v4423
    %v4558 = vpop.f32.mrb[0].mxu0
    %v4559 = vadd.f32 0.0, %v4558
    %v4560 = vpop.f32.mrb[0].mxu0
    %v4561 = vadd.f32 0.0, %v4560
    %4562 = vdwg.mxu0
    %4563 = vmatprep.subr.mxu0 %v4288
    %4564 = vmatpush1.msra.mxu0 %v4287
    %4565 = vmatprep.subr.mxu0 %v4290
    %4566 = vmatpush1.msra.mxu0 %v4289
    %4567 = vmatprep.subr.mxu0 %v4292
    %4568 = vmatpush1.msra.mxu0 %v4291
    %4569 = vmatprep.subr.mxu0 %v4294
    %4570 = vmatpush1.msra.mxu0 %v4293
    %4571 = vmatprep.subr.mxu0 %v4296
    %4572 = vmatpush1.msra.mxu0 %v4295
    %4573 = vmatprep.subr.mxu0 %v4298
    %4574 = vmatpush1.msra.mxu0 %v4297
    %4575 = vmatprep.subr.mxu0 %v4300
    %4576 = vmatpush1.msra.mxu0 %v4299
    %4577 = vmatprep.subr.mxu0 %v4302
    %4578 = vmatpush1.msra.mxu0 %v4301
    %4579 = vmatprep.subr.mxu0 %v4304
    %4580 = vmatpush1.msra.mxu0 %v4303
    %4581 = vmatprep.subr.mxu0 %v4306
    %4582 = vmatpush1.msra.mxu0 %v4305
    %4583 = vmatprep.subr.mxu0 %v4308
    %4584 = vmatpush1.msra.mxu0 %v4307
    %4585 = vmatprep.subr.mxu0 %v4310
    %4586 = vmatpush1.msra.mxu0 %v4309
    %4587 = vmatprep.subr.mxu0 %v4312
    %4588 = vmatpush1.msra.mxu0 %v4311
    %4589 = vmatprep.subr.mxu0 %v4314
    %4590 = vmatpush1.msra.mxu0 %v4313
    %4591 = vmatprep.subr.mxu0 %v4316
    %4592 = vmatpush1.msra.mxu0 %v4315
    %4593 = vmatprep.subr.mxu0 %v4318
    %4594 = vmatpush1.msra.mxu0 %v4317
    %4595 = vmatprep.subr.mxu0 %v4320
    %4596 = vmatpush1.msra.mxu0 %v4319
    %4597 = vmatprep.subr.mxu0 %v4322
    %4598 = vmatpush1.msra.mxu0 %v4321
    %4599 = vmatprep.subr.mxu0 %v4324
    %4600 = vmatpush1.msra.mxu0 %v4323
    %4601 = vmatprep.subr.mxu0 %v4326
    %4602 = vmatpush1.msra.mxu0 %v4325
    %4603 = vmatprep.subr.mxu0 %v4328
    %4604 = vmatpush1.msra.mxu0 %v4327
    %4605 = vmatprep.subr.mxu0 %v4330
    %4606 = vmatpush1.msra.mxu0 %v4329
    %4607 = vmatprep.subr.mxu0 %v4332
    %4608 = vmatpush1.msra.mxu0 %v4331
    %4609 = vmatprep.subr.mxu0 %v4334
    %4610 = vmatpush1.msra.mxu0 %v4333
    %4611 = vmatprep.subr.mxu0 %v4336
    %4612 = vmatpush1.msra.mxu0 %v4335
    %4613 = vmatprep.subr.mxu0 %v4338
    %4614 = vmatpush1.msra.mxu0 %v4337
    %4615 = vmatprep.subr.mxu0 %v4340
    %4616 = vmatpush1.msra.mxu0 %v4339
    %4617 = vmatprep.subr.mxu0 %v4342
    %4618 = vmatpush1.msra.mxu0 %v4341
    %4619 = vmatprep.subr.mxu0 %v4344
    %4620 = vmatpush1.msra.mxu0 %v4343
    %4621 = vmatprep.subr.mxu0 %v4346
    %4622 = vmatpush1.msra.mxu0 %v4345
    %4623 = vmatprep.subr.mxu0 %v4348
    %4624 = vmatpush1.msra.mxu0 %v4347
    %4625 = vmatprep.subr.mxu0 %v4350
    %4626 = vmatpush1.msra.mxu0 %v4349
    %4627 = vmatprep.mubr.f32.mxu0 %v4285
    %4628 = vmatmul.mubr.f32.gmra.mrb[0].mxu0 %v4283
    %v4629 = vpop.f32.mrb[0].mxu0
    %v4630 = vadd.f32 %v4559, %v4629
    %v4631 = vpop.f32.mrb[0].mxu0
    %v4632 = vadd.f32 %v4561, %v4631
    %4633 = vdwg.mxu0
    %s4634 = scalar_lea.vmem [#allocation14], 16
    %v4635 = vld [vmem:[%s4634] sm:$0xff]
    %v4637 = vsel %vm2676, %v4635, 0
    %4639 = vmatprep.subr.mxu0 %v4209
    %4640 = vmatpush1.msra.mxu0 %v4208
    %4641 = vmatprep.subr.mxu0 %v4211
    %4642 = vmatpush1.msra.mxu0 %v4210
    %4643 = vmatprep.subr.mxu0 0.0
    %4644 = vmatpush1.msra.mxu0 0.0
    %4645 = vmatprep.subr.mxu0 0.0
    %4646 = vmatpush1.msra.mxu0 0.0
    %4647 = vmatprep.subr.mxu0 0.0
    %4648 = vmatpush1.msra.mxu0 0.0
    %4649 = vmatprep.subr.mxu0 0.0
    %4650 = vmatpush1.msra.mxu0 0.0
    %4651 = vmatprep.subr.mxu0 0.0
    %4652 = vmatpush1.msra.mxu0 0.0
    %4653 = vmatprep.subr.mxu0 0.0
    %4654 = vmatpush1.msra.mxu0 0.0
    %4655 = vmatprep.subr.mxu0 0.0
    %4656 = vmatpush1.msra.mxu0 0.0
    %4657 = vmatprep.subr.mxu0 0.0
    %4658 = vmatpush1.msra.mxu0 0.0
    %4659 = vmatprep.subr.mxu0 0.0
    %4660 = vmatpush1.msra.mxu0 0.0
    %4661 = vmatprep.subr.mxu0 0.0
    %4662 = vmatpush1.msra.mxu0 0.0
    %4663 = vmatprep.subr.mxu0 0.0
    %4664 = vmatpush1.msra.mxu0 0.0
    %4665 = vmatprep.subr.mxu0 0.0
    %4666 = vmatpush1.msra.mxu0 0.0
    %4667 = vmatprep.subr.mxu0 0.0
    %4668 = vmatpush1.msra.mxu0 0.0
    %4669 = vmatprep.subr.mxu0 0.0
    %4670 = vmatpush1.msra.mxu0 0.0
    %4671 = vmatprep.subr.mxu0 0.0
    %4672 = vmatpush1.msra.mxu0 0.0
    %4673 = vmatprep.subr.mxu0 0.0
    %4674 = vmatpush1.msra.mxu0 0.0
    %4675 = vmatprep.subr.mxu0 0.0
    %4676 = vmatpush1.msra.mxu0 0.0
    %4677 = vmatprep.subr.mxu0 0.0
    %4678 = vmatpush1.msra.mxu0 0.0
    %4679 = vmatprep.subr.mxu0 0.0
    %4680 = vmatpush1.msra.mxu0 0.0
    %4681 = vmatprep.subr.mxu0 0.0
    %4682 = vmatpush1.msra.mxu0 0.0
    %4683 = vmatprep.subr.mxu0 0.0
    %4684 = vmatpush1.msra.mxu0 0.0
    %4685 = vmatprep.subr.mxu0 0.0
    %4686 = vmatpush1.msra.mxu0 0.0
    %4687 = vmatprep.subr.mxu0 0.0
    %4688 = vmatpush1.msra.mxu0 0.0
    %4689 = vmatprep.subr.mxu0 0.0
    %4690 = vmatpush1.msra.mxu0 0.0
    %4691 = vmatprep.subr.mxu0 0.0
    %4692 = vmatpush1.msra.mxu0 0.0
    %4693 = vmatprep.subr.mxu0 0.0
    %4694 = vmatpush1.msra.mxu0 0.0
    %4695 = vmatprep.subr.mxu0 0.0
    %4696 = vmatpush1.msra.mxu0 0.0
    %4697 = vmatprep.subr.mxu0 0.0
    %4698 = vmatpush1.msra.mxu0 0.0
    %4699 = vmatprep.subr.mxu0 0.0
    %4700 = vmatpush1.msra.mxu0 0.0
    %4701 = vmatprep.subr.mxu0 0.0
    %4702 = vmatpush1.msra.mxu0 0.0
    %4703 = vmatprep.mubr.f32.mxu0 0.0
    %4704 = vmatmul.mubr.f32.gmra.mrb[0].mxu0 %v4637
    %v4705 = vpop.f32.mrb[0].mxu0
    %v4706 = vadd.f32 0.0, %v4705
    %v4707 = vpop.f32.mrb[0].mxu0
    %v4708 = vadd.f32 0.0, %v4707
    %4709 = vdwg.mxu0
    %s4710 = scalar_lea.vmem [#allocation16], 1024
    %v4711 = vld [vmem:[%s4710] sm:$0xff]
    %v4712 = vld [vmem:[%s4710 + $0x8] sm:$0xff]
    %v4713 = vld [vmem:[%s4710 + $0x10] sm:$0xff]
    %v4714 = vld [vmem:[%s4710 + $0x18] sm:$0xff]
    %v4715 = vld [vmem:[%s4710 + $0x20] sm:$0xff]
    %v4716 = vld [vmem:[%s4710 + $0x28] sm:$0xff]
    %v4717 = vld [vmem:[%s4710 + $0x30] sm:$0xff]
    %v4718 = vld [vmem:[%s4710 + $0x38] sm:$0xff]
    %v4719 = vld [vmem:[%s4710 + $0x40] sm:$0xff]
    %v4720 = vld [vmem:[%s4710 + $0x48] sm:$0xff]
    %v4721 = vld [vmem:[%s4710 + $0x50] sm:$0xff]
    %v4722 = vld [vmem:[%s4710 + $0x58] sm:$0xff]
    %v4723 = vld [vmem:[%s4710 + $0x60] sm:$0xff]
    %v4724 = vld [vmem:[%s4710 + $0x68] sm:$0xff]
    %v4725 = vld [vmem:[%s4710 + $0x70] sm:$0xff]
    %v4726 = vld [vmem:[%s4710 + $0x78] sm:$0xff]
    %v4727 = vld [vmem:[%s4710 + $0x80] sm:$0xff]
    %v4728 = vld [vmem:[%s4710 + $0x88] sm:$0xff]
    %v4729 = vld [vmem:[%s4710 + $0x90] sm:$0xff]
    %v4730 = vld [vmem:[%s4710 + $0x98] sm:$0xff]
    %v4731 = vld [vmem:[%s4710 + $0xa0] sm:$0xff]
    %v4732 = vld [vmem:[%s4710 + $0xa8] sm:$0xff]
    %v4733 = vld [vmem:[%s4710 + $0xb0] sm:$0xff]
    %v4734 = vld [vmem:[%s4710 + $0xb8] sm:$0xff]
    %v4735 = vld [vmem:[%s4710 + $0xc0] sm:$0xff]
    %v4736 = vld [vmem:[%s4710 + $0xc8] sm:$0xff]
    %v4737 = vld [vmem:[%s4710 + $0xd0] sm:$0xff]
    %v4738 = vld [vmem:[%s4710 + $0xd8] sm:$0xff]
    %v4739 = vld [vmem:[%s4710 + $0xe0] sm:$0xff]
    %v4740 = vld [vmem:[%s4710 + $0xe8] sm:$0xff]
    %v4741 = vld [vmem:[%s4710 + $0xf0] sm:$0xff]
    %v4742 = vld [vmem:[%s4710 + $0xf8] sm:$0xff]
    %v4743 = vld [vmem:[%s4710 + $0x100] sm:$0xff]
    %v4744 = vld [vmem:[%s4710 + $0x108] sm:$0xff]
    %v4745 = vld [vmem:[%s4710 + $0x110] sm:$0xff]
    %v4746 = vld [vmem:[%s4710 + $0x118] sm:$0xff]
    %v4747 = vld [vmem:[%s4710 + $0x120] sm:$0xff]
    %v4748 = vld [vmem:[%s4710 + $0x128] sm:$0xff]
    %v4749 = vld [vmem:[%s4710 + $0x130] sm:$0xff]
    %v4750 = vld [vmem:[%s4710 + $0x138] sm:$0xff]
    %v4751 = vld [vmem:[%s4710 + $0x140] sm:$0xff]
    %v4752 = vld [vmem:[%s4710 + $0x148] sm:$0xff]
    %v4753 = vld [vmem:[%s4710 + $0x150] sm:$0xff]
    %v4754 = vld [vmem:[%s4710 + $0x158] sm:$0xff]
    %v4755 = vld [vmem:[%s4710 + $0x160] sm:$0xff]
    %v4756 = vld [vmem:[%s4710 + $0x168] sm:$0xff]
    %v4757 = vld [vmem:[%s4710 + $0x170] sm:$0xff]
    %v4758 = vld [vmem:[%s4710 + $0x178] sm:$0xff]
    %v4759 = vld [vmem:[%s4710 + $0x180] sm:$0xff]
    %v4760 = vld [vmem:[%s4710 + $0x188] sm:$0xff]
    %v4761 = vld [vmem:[%s4710 + $0x190] sm:$0xff]
    %v4762 = vld [vmem:[%s4710 + $0x198] sm:$0xff]
    %v4763 = vld [vmem:[%s4710 + $0x1a0] sm:$0xff]
    %v4764 = vld [vmem:[%s4710 + $0x1a8] sm:$0xff]
    %v4765 = vld [vmem:[%s4710 + $0x1b0] sm:$0xff]
    %v4766 = vld [vmem:[%s4710 + $0x1b8] sm:$0xff]
    %v4767 = vld [vmem:[%s4710 + $0x1c0] sm:$0xff]
    %v4768 = vld [vmem:[%s4710 + $0x1c8] sm:$0xff]
    %v4769 = vld [vmem:[%s4710 + $0x1d0] sm:$0xff]
    %v4770 = vld [vmem:[%s4710 + $0x1d8] sm:$0xff]
    %v4771 = vld [vmem:[%s4710 + $0x1e0] sm:$0xff]
    %v4772 = vld [vmem:[%s4710 + $0x1e8] sm:$0xff]
    %v4773 = vld [vmem:[%s4710 + $0x1f0] sm:$0xff]
    %v4774 = vld [vmem:[%s4710 + $0x1f8] sm:$0xff]
    %4775 = vmatprep.subr.mxu0 %v4712
    %4776 = vmatpush1.msra.mxu0 %v4711
    %4777 = vmatprep.subr.mxu0 %v4714
    %4778 = vmatpush1.msra.mxu0 %v4713
    %4779 = vmatprep.subr.mxu0 %v4716
    %4780 = vmatpush1.msra.mxu0 %v4715
    %4781 = vmatprep.subr.mxu0 %v4718
    %4782 = vmatpush1.msra.mxu0 %v4717
    %4783 = vmatprep.subr.mxu0 %v4720
    %4784 = vmatpush1.msra.mxu0 %v4719
    %4785 = vmatprep.subr.mxu0 %v4722
    %4786 = vmatpush1.msra.mxu0 %v4721
    %4787 = vmatprep.subr.mxu0 %v4724
    %4788 = vmatpush1.msra.mxu0 %v4723
    %4789 = vmatprep.subr.mxu0 %v4726
    %4790 = vmatpush1.msra.mxu0 %v4725
    %4791 = vmatprep.subr.mxu0 %v4728
    %4792 = vmatpush1.msra.mxu0 %v4727
    %4793 = vmatprep.subr.mxu0 %v4730
    %4794 = vmatpush1.msra.mxu0 %v4729
    %4795 = vmatprep.subr.mxu0 %v4732
    %4796 = vmatpush1.msra.mxu0 %v4731
    %4797 = vmatprep.subr.mxu0 %v4734
    %4798 = vmatpush1.msra.mxu0 %v4733
    %4799 = vmatprep.subr.mxu0 %v4736
    %4800 = vmatpush1.msra.mxu0 %v4735
    %4801 = vmatprep.subr.mxu0 %v4738
    %4802 = vmatpush1.msra.mxu0 %v4737
    %4803 = vmatprep.subr.mxu0 %v4740
    %4804 = vmatpush1.msra.mxu0 %v4739
    %4805 = vmatprep.subr.mxu0 %v4742
    %4806 = vmatpush1.msra.mxu0 %v4741
    %4807 = vmatprep.subr.mxu0 %v4744
    %4808 = vmatpush1.msra.mxu0 %v4743
    %4809 = vmatprep.subr.mxu0 %v4746
    %4810 = vmatpush1.msra.mxu0 %v4745
    %4811 = vmatprep.subr.mxu0 %v4748
    %4812 = vmatpush1.msra.mxu0 %v4747
    %4813 = vmatprep.subr.mxu0 %v4750
    %4814 = vmatpush1.msra.mxu0 %v4749
    %4815 = vmatprep.subr.mxu0 %v4752
    %4816 = vmatpush1.msra.mxu0 %v4751
    %4817 = vmatprep.subr.mxu0 %v4754
    %4818 = vmatpush1.msra.mxu0 %v4753
    %4819 = vmatprep.subr.mxu0 %v4756
    %4820 = vmatpush1.msra.mxu0 %v4755
    %4821 = vmatprep.subr.mxu0 %v4758
    %4822 = vmatpush1.msra.mxu0 %v4757
    %4823 = vmatprep.subr.mxu0 %v4760
    %4824 = vmatpush1.msra.mxu0 %v4759
    %4825 = vmatprep.subr.mxu0 %v4762
    %4826 = vmatpush1.msra.mxu0 %v4761
    %4827 = vmatprep.subr.mxu0 %v4764
    %4828 = vmatpush1.msra.mxu0 %v4763
    %4829 = vmatprep.subr.mxu0 %v4766
    %4830 = vmatpush1.msra.mxu0 %v4765
    %4831 = vmatprep.subr.mxu0 %v4768
    %4832 = vmatpush1.msra.mxu0 %v4767
    %4833 = vmatprep.subr.mxu0 %v4770
    %4834 = vmatpush1.msra.mxu0 %v4769
    %4835 = vmatprep.subr.mxu0 %v4772
    %4836 = vmatpush1.msra.mxu0 %v4771
    %4837 = vmatprep.subr.mxu0 %v4774
    %4838 = vmatpush1.msra.mxu0 %v4773
    %4839 = vmatprep.mubr.f32.mxu0 %v4708
    %4840 = vmatmul.mubr.f32.gmra.mrb[0].mxu0 %v4706
    %v4841 = vpop.f32.mrb[0].mxu0
    %v4842 = vadd.f32 0.0, %v4841
    %v4843 = vpop.f32.mrb[0].mxu0
    %v4844 = vadd.f32 0.0, %v4843
    %4845 = vdwg.mxu0
    %v4846 = vadd.f32 %v4630, %v4842
    %v4847 = vadd.f32 %v4632, %v4844
    %s4848 = scalar_lea.vmem [#allocation14], 24
    %v4849 = vld [vmem:[%s4848] sm:$0xff]
    %v4851 = vsel %vm2676, %v4849, 0
    %4853 = vmatprep.subr.mxu0 %v4209
    %4854 = vmatpush1.msra.mxu0 %v4208
    %4855 = vmatprep.subr.mxu0 %v4211
    %4856 = vmatpush1.msra.mxu0 %v4210
    %4857 = vmatprep.subr.mxu0 0.0
    %4858 = vmatpush1.msra.mxu0 0.0
    %4859 = vmatprep.subr.mxu0 0.0
    %4860 = vmatpush1.msra.mxu0 0.0
    %4861 = vmatprep.subr.mxu0 0.0
    %4862 = vmatpush1.msra.mxu0 0.0
    %4863 = vmatprep.subr.mxu0 0.0
    %4864 = vmatpush1.msra.mxu0 0.0
    %4865 = vmatprep.subr.mxu0 0.0
    %4866 = vmatpush1.msra.mxu0 0.0
    %4867 = vmatprep.subr.mxu0 0.0
    %4868 = vmatpush1.msra.mxu0 0.0
    %4869 = vmatprep.subr.mxu0 0.0
    %4870 = vmatpush1.msra.mxu0 0.0
    %4871 = vmatprep.subr.mxu0 0.0
    %4872 = vmatpush1.msra.mxu0 0.0
    %4873 = vmatprep.subr.mxu0 0.0
    %4874 = vmatpush1.msra.mxu0 0.0
    %4875 = vmatprep.subr.mxu0 0.0
    %4876 = vmatpush1.msra.mxu0 0.0
    %4877 = vmatprep.subr.mxu0 0.0
    %4878 = vmatpush1.msra.mxu0 0.0
    %4879 = vmatprep.subr.mxu0 0.0
    %4880 = vmatpush1.msra.mxu0 0.0
    %4881 = vmatprep.subr.mxu0 0.0
    %4882 = vmatpush1.msra.mxu0 0.0
    %4883 = vmatprep.subr.mxu0 0.0
    %4884 = vmatpush1.msra.mxu0 0.0
    %4885 = vmatprep.subr.mxu0 0.0
    %4886 = vmatpush1.msra.mxu0 0.0
    %4887 = vmatprep.subr.mxu0 0.0
    %4888 = vmatpush1.msra.mxu0 0.0
    %4889 = vmatprep.subr.mxu0 0.0
    %4890 = vmatpush1.msra.mxu0 0.0
    %4891 = vmatprep.subr.mxu0 0.0
    %4892 = vmatpush1.msra.mxu0 0.0
    %4893 = vmatprep.subr.mxu0 0.0
    %4894 = vmatpush1.msra.mxu0 0.0
    %4895 = vmatprep.subr.mxu0 0.0
    %4896 = vmatpush1.msra.mxu0 0.0
    %4897 = vmatprep.subr.mxu0 0.0
    %4898 = vmatpush1.msra.mxu0 0.0
    %4899 = vmatprep.subr.mxu0 0.0
    %4900 = vmatpush1.msra.mxu0 0.0
    %4901 = vmatprep.subr.mxu0 0.0
    %4902 = vmatpush1.msra.mxu0 0.0
    %4903 = vmatprep.subr.mxu0 0.0
    %4904 = vmatpush1.msra.mxu0 0.0
    %4905 = vmatprep.subr.mxu0 0.0
    %4906 = vmatpush1.msra.mxu0 0.0
    %4907 = vmatprep.subr.mxu0 0.0
    %4908 = vmatpush1.msra.mxu0 0.0
    %4909 = vmatprep.subr.mxu0 0.0
    %4910 = vmatpush1.msra.mxu0 0.0
    %4911 = vmatprep.subr.mxu0 0.0
    %4912 = vmatpush1.msra.mxu0 0.0
    %4913 = vmatprep.subr.mxu0 0.0
    %4914 = vmatpush1.msra.mxu0 0.0
    %4915 = vmatprep.subr.mxu0 0.0
    %4916 = vmatpush1.msra.mxu0 0.0
    %4917 = vmatprep.mubr.f32.mxu0 0.0
    %4918 = vmatmul.mubr.f32.gmra.mrb[0].mxu0 %v4851
    %v4919 = vpop.f32.mrb[0].mxu0
    %v4920 = vadd.f32 0.0, %v4919
    %v4921 = vpop.f32.mrb[0].mxu0
    %v4922 = vadd.f32 0.0, %v4921
    %4923 = vdwg.mxu0
    %s4924 = scalar_lea.vmem [#allocation16], 1536
    %v4925 = vld [vmem:[%s4924] sm:$0xff]
    %v4926 = vld [vmem:[%s4924 + $0x8] sm:$0xff]
    %v4927 = vld [vmem:[%s4924 + $0x10] sm:$0xff]
    %v4928 = vld [vmem:[%s4924 + $0x18] sm:$0xff]
    %v4929 = vld [vmem:[%s4924 + $0x20] sm:$0xff]
    %v4930 = vld [vmem:[%s4924 + $0x28] sm:$0xff]
    %v4931 = vld [vmem:[%s4924 + $0x30] sm:$0xff]
    %v4932 = vld [vmem:[%s4924 + $0x38] sm:$0xff]
    %v4933 = vld [vmem:[%s4924 + $0x40] sm:$0xff]
    %v4934 = vld [vmem:[%s4924 + $0x48] sm:$0xff]
    %v4935 = vld [vmem:[%s4924 + $0x50] sm:$0xff]
    %v4936 = vld [vmem:[%s4924 + $0x58] sm:$0xff]
    %v4937 = vld [vmem:[%s4924 + $0x60] sm:$0xff]
    %v4938 = vld [vmem:[%s4924 + $0x68] sm:$0xff]
    %v4939 = vld [vmem:[%s4924 + $0x70] sm:$0xff]
    %v4940 = vld [vmem:[%s4924 + $0x78] sm:$0xff]
    %v4941 = vld [vmem:[%s4924 + $0x80] sm:$0xff]
    %v4942 = vld [vmem:[%s4924 + $0x88] sm:$0xff]
    %v4943 = vld [vmem:[%s4924 + $0x90] sm:$0xff]
    %v4944 = vld [vmem:[%s4924 + $0x98] sm:$0xff]
    %v4945 = vld [vmem:[%s4924 + $0xa0] sm:$0xff]
    %v4946 = vld [vmem:[%s4924 + $0xa8] sm:$0xff]
    %v4947 = vld [vmem:[%s4924 + $0xb0] sm:$0xff]
    %v4948 = vld [vmem:[%s4924 + $0xb8] sm:$0xff]
    %v4949 = vld [vmem:[%s4924 + $0xc0] sm:$0xff]
    %v4950 = vld [vmem:[%s4924 + $0xc8] sm:$0xff]
    %v4951 = vld [vmem:[%s4924 + $0xd0] sm:$0xff]
    %v4952 = vld [vmem:[%s4924 + $0xd8] sm:$0xff]
    %v4953 = vld [vmem:[%s4924 + $0xe0] sm:$0xff]
    %v4954 = vld [vmem:[%s4924 + $0xe8] sm:$0xff]
    %v4955 = vld [vmem:[%s4924 + $0xf0] sm:$0xff]
    %v4956 = vld [vmem:[%s4924 + $0xf8] sm:$0xff]
    %v4957 = vld [vmem:[%s4924 + $0x100] sm:$0xff]
    %v4958 = vld [vmem:[%s4924 + $0x108] sm:$0xff]
    %v4959 = vld [vmem:[%s4924 + $0x110] sm:$0xff]
    %v4960 = vld [vmem:[%s4924 + $0x118] sm:$0xff]
    %v4961 = vld [vmem:[%s4924 + $0x120] sm:$0xff]
    %v4962 = vld [vmem:[%s4924 + $0x128] sm:$0xff]
    %v4963 = vld [vmem:[%s4924 + $0x130] sm:$0xff]
    %v4964 = vld [vmem:[%s4924 + $0x138] sm:$0xff]
    %v4965 = vld [vmem:[%s4924 + $0x140] sm:$0xff]
    %v4966 = vld [vmem:[%s4924 + $0x148] sm:$0xff]
    %v4967 = vld [vmem:[%s4924 + $0x150] sm:$0xff]
    %v4968 = vld [vmem:[%s4924 + $0x158] sm:$0xff]
    %v4969 = vld [vmem:[%s4924 + $0x160] sm:$0xff]
    %v4970 = vld [vmem:[%s4924 + $0x168] sm:$0xff]
    %v4971 = vld [vmem:[%s4924 + $0x170] sm:$0xff]
    %v4972 = vld [vmem:[%s4924 + $0x178] sm:$0xff]
    %v4973 = vld [vmem:[%s4924 + $0x180] sm:$0xff]
    %v4974 = vld [vmem:[%s4924 + $0x188] sm:$0xff]
    %v4975 = vld [vmem:[%s4924 + $0x190] sm:$0xff]
    %v4976 = vld [vmem:[%s4924 + $0x198] sm:$0xff]
    %v4977 = vld [vmem:[%s4924 + $0x1a0] sm:$0xff]
    %v4978 = vld [vmem:[%s4924 + $0x1a8] sm:$0xff]
    %v4979 = vld [vmem:[%s4924 + $0x1b0] sm:$0xff]
    %v4980 = vld [vmem:[%s4924 + $0x1b8] sm:$0xff]
    %v4981 = vld [vmem:[%s4924 + $0x1c0] sm:$0xff]
    %v4982 = vld [vmem:[%s4924 + $0x1c8] sm:$0xff]
    %v4983 = vld [vmem:[%s4924 + $0x1d0] sm:$0xff]
    %v4984 = vld [vmem:[%s4924 + $0x1d8] sm:$0xff]
    %v4985 = vld [vmem:[%s4924 + $0x1e0] sm:$0xff]
    %v4986 = vld [vmem:[%s4924 + $0x1e8] sm:$0xff]
    %v4987 = vld [vmem:[%s4924 + $0x1f0] sm:$0xff]
    %v4988 = vld [vmem:[%s4924 + $0x1f8] sm:$0xff]
    %4989 = vmatprep.subr.mxu0 %v4926
    %4990 = vmatpush1.msra.mxu0 %v4925
    %4991 = vmatprep.subr.mxu0 %v4928
    %4992 = vmatpush1.msra.mxu0 %v4927
    %4993 = vmatprep.subr.mxu0 %v4930
    %4994 = vmatpush1.msra.mxu0 %v4929
    %4995 = vmatprep.subr.mxu0 %v4932
    %4996 = vmatpush1.msra.mxu0 %v4931
    %4997 = vmatprep.subr.mxu0 %v4934
    %4998 = vmatpush1.msra.mxu0 %v4933
    %4999 = vmatprep.subr.mxu0 %v4936
    %5000 = vmatpush1.msra.mxu0 %v4935
    %5001 = vmatprep.subr.mxu0 %v4938
    %5002 = vmatpush1.msra.mxu0 %v4937
    %5003 = vmatprep.subr.mxu0 %v4940
    %5004 = vmatpush1.msra.mxu0 %v4939
    %5005 = vmatprep.subr.mxu0 %v4942
    %5006 = vmatpush1.msra.mxu0 %v4941
    %5007 = vmatprep.subr.mxu0 %v4944
    %5008 = vmatpush1.msra.mxu0 %v4943
    %5009 = vmatprep.subr.mxu0 %v4946
    %5010 = vmatpush1.msra.mxu0 %v4945
    %5011 = vmatprep.subr.mxu0 %v4948
    %5012 = vmatpush1.msra.mxu0 %v4947
    %5013 = vmatprep.subr.mxu0 %v4950
    %5014 = vmatpush1.msra.mxu0 %v4949
    %5015 = vmatprep.subr.mxu0 %v4952
    %5016 = vmatpush1.msra.mxu0 %v4951
    %5017 = vmatprep.subr.mxu0 %v4954
    %5018 = vmatpush1.msra.mxu0 %v4953
    %5019 = vmatprep.subr.mxu0 %v4956
    %5020 = vmatpush1.msra.mxu0 %v4955
    %5021 = vmatprep.subr.mxu0 %v4958
    %5022 = vmatpush1.msra.mxu0 %v4957
    %5023 = vmatprep.subr.mxu0 %v4960
    %5024 = vmatpush1.msra.mxu0 %v4959
    %5025 = vmatprep.subr.mxu0 %v4962
    %5026 = vmatpush1.msra.mxu0 %v4961
    %5027 = vmatprep.subr.mxu0 %v4964
    %5028 = vmatpush1.msra.mxu0 %v4963
    %5029 = vmatprep.subr.mxu0 %v4966
    %5030 = vmatpush1.msra.mxu0 %v4965
    %5031 = vmatprep.subr.mxu0 %v4968
    %5032 = vmatpush1.msra.mxu0 %v4967
    %5033 = vmatprep.subr.mxu0 %v4970
    %5034 = vmatpush1.msra.mxu0 %v4969
    %5035 = vmatprep.subr.mxu0 %v4972
    %5036 = vmatpush1.msra.mxu0 %v4971
    %5037 = vmatprep.subr.mxu0 %v4974
    %5038 = vmatpush1.msra.mxu0 %v4973
    %5039 = vmatprep.subr.mxu0 %v4976
    %5040 = vmatpush1.msra.mxu0 %v4975
    %5041 = vmatprep.subr.mxu0 %v4978
    %5042 = vmatpush1.msra.mxu0 %v4977
    %5043 = vmatprep.subr.mxu0 %v4980
    %5044 = vmatpush1.msra.mxu0 %v4979
    %5045 = vmatprep.subr.mxu0 %v4982
    %5046 = vmatpush1.msra.mxu0 %v4981
    %5047 = vmatprep.subr.mxu0 %v4984
    %5048 = vmatpush1.msra.mxu0 %v4983
    %5049 = vmatprep.subr.mxu0 %v4986
    %5050 = vmatpush1.msra.mxu0 %v4985
    %5051 = vmatprep.subr.mxu0 %v4988
    %5052 = vmatpush1.msra.mxu0 %v4987
    %5053 = vmatprep.mubr.f32.mxu0 %v4922
    %5054 = vmatmul.mubr.f32.gmra.mrb[0].mxu0 %v4920
    %v5055 = vpop.f32.mrb[0].mxu0
    %v5056 = vadd.f32 0.0, %v5055
    %v5057 = vpop.f32.mrb[0].mxu0
    %v5058 = vadd.f32 0.0, %v5057
    %5059 = vdwg.mxu0
    %v5060 = vadd.f32 %v4846, %v5056
    %v5061 = vadd.f32 %v4847, %v5058
    %v5062 = vrot.slane %v5060, 4
    %v5063 = vadd.f32 %v5060, %v5062
    %v5064 = vrot.slane %v5063, 2
    %v5065 = vadd.f32 %v5063, %v5064
    %v5066 = vrot.slane %v5065, 1
    %v5067 = vadd.f32 %v5065, %v5066
    %v5068 = vrot.slane %v5061, 4
    %v5069 = vadd.f32 %v5061, %v5068
    %v5070 = vrot.slane %v5069, 2
    %v5071 = vadd.f32 %v5069, %v5070
    %v5072 = vrot.slane %v5071, 1
    %v5073 = vadd.f32 %v5071, %v5072
    %v5074 = vmul.f32 %v5060, %v5060
    %v5075 = vmul.f32 %v5061, %v5061
    %v5076 = vrot.slane %v5074, 4
    %v5077 = vadd.f32 %v5074, %v5076
    %v5078 = vrot.slane %v5077, 2
    %v5079 = vadd.f32 %v5077, %v5078
    %v5080 = vrot.slane %v5079, 1
    %v5081 = vadd.f32 %v5079, %v5080
    %v5082 = vrot.slane %v5075, 4
    %v5083 = vadd.f32 %v5075, %v5082
    %v5084 = vrot.slane %v5083, 2
    %v5085 = vadd.f32 %v5083, %v5084
    %v5086 = vrot.slane %v5085, 1
    %v5087 = vadd.f32 %v5085, %v5086
    %v5088 = vld [vmem:[%s17] sm:$0xff]
    %v5089 = vld [vmem:[%s17 + $0x8] sm:$0xff]
    %v5090 = vld [vmem:[%s17 + $0x10] sm:$0xff]
    %v5091 = vld [vmem:[%s17 + $0x18] sm:$0xff]
    %v5092 = vld [vmem:[%s17 + $0x20] sm:$0xff]
    %v5093 = vld [vmem:[%s17 + $0x28] sm:$0xff]
    %v5094 = vld [vmem:[%s17 + $0x30] sm:$0xff]
    %v5095 = vld [vmem:[%s17 + $0x38] sm:$0xff]
    %v5096 = vld [vmem:[%s17 + $0x40] sm:$0xff]
    %v5097 = vld [vmem:[%s17 + $0x48] sm:$0xff]
    %v5098 = vld [vmem:[%s17 + $0x50] sm:$0xff]
    %v5099 = vld [vmem:[%s17 + $0x58] sm:$0xff]
    %v5100 = vld [vmem:[%s17 + $0x60] sm:$0xff]
    %v5101 = vld [vmem:[%s17 + $0x68] sm:$0xff]
    %v5102 = vld [vmem:[%s17 + $0x70] sm:$0xff]
    %v5103 = vld [vmem:[%s17 + $0x78] sm:$0xff]
    %v5104 = vld [vmem:[%s17 + $0x80] sm:$0xff]
    %v5105 = vld [vmem:[%s17 + $0x88] sm:$0xff]
    %v5106 = vld [vmem:[%s17 + $0x90] sm:$0xff]
    %v5107 = vld [vmem:[%s17 + $0x98] sm:$0xff]
    %v5108 = vld [vmem:[%s17 + $0xa0] sm:$0xff]
    %v5109 = vld [vmem:[%s17 + $0xa8] sm:$0xff]
    %v5110 = vld [vmem:[%s17 + $0xb0] sm:$0xff]
    %v5111 = vld [vmem:[%s17 + $0xb8] sm:$0xff]
    %v5112 = vld [vmem:[%s17 + $0xc0] sm:$0xff]
    %v5113 = vld [vmem:[%s17 + $0xc8] sm:$0xff]
    %v5114 = vld [vmem:[%s17 + $0xd0] sm:$0xff]
    %v5115 = vld [vmem:[%s17 + $0xd8] sm:$0xff]
    %v5116 = vld [vmem:[%s17 + $0xe0] sm:$0xff]
    %v5117 = vld [vmem:[%s17 + $0xe8] sm:$0xff]
    %v5118 = vld [vmem:[%s17 + $0xf0] sm:$0xff]
    %v5119 = vld [vmem:[%s17 + $0xf8] sm:$0xff]
    %5120 = vmatprep.subr.mxu0 0.0
    %5121 = vmatpush1.msra.mxu0 %v5088
    %5122 = vmatprep.subr.mxu0 0.0
    %5123 = vmatpush1.msra.mxu0 %v5089
    %5124 = vmatprep.subr.mxu0 0.0
    %5125 = vmatpush1.msra.mxu0 %v5090
    %5126 = vmatprep.subr.mxu0 0.0
    %5127 = vmatpush1.msra.mxu0 %v5091
    %5128 = vmatprep.subr.mxu0 0.0
    %5129 = vmatpush1.msra.mxu0 %v5092
    %5130 = vmatprep.subr.mxu0 0.0
    %5131 = vmatpush1.msra.mxu0 %v5093
    %5132 = vmatprep.subr.mxu0 0.0
    %5133 = vmatpush1.msra.mxu0 %v5094
    %5134 = vmatprep.subr.mxu0 0.0
    %5135 = vmatpush1.msra.mxu0 %v5095
    %5136 = vmatprep.subr.mxu0 0.0
    %5137 = vmatpush1.msra.mxu0 %v5096
    %5138 = vmatprep.subr.mxu0 0.0
    %5139 = vmatpush1.msra.mxu0 %v5097
    %5140 = vmatprep.subr.mxu0 0.0
    %5141 = vmatpush1.msra.mxu0 %v5098
    %5142 = vmatprep.subr.mxu0 0.0
    %5143 = vmatpush1.msra.mxu0 %v5099
    %5144 = vmatprep.subr.mxu0 0.0
    %5145 = vmatpush1.msra.mxu0 %v5100
    %5146 = vmatprep.subr.mxu0 0.0
    %5147 = vmatpush1.msra.mxu0 %v5101
    %5148 = vmatprep.subr.mxu0 0.0
    %5149 = vmatpush1.msra.mxu0 %v5102
    %5150 = vmatprep.subr.mxu0 0.0
    %5151 = vmatpush1.msra.mxu0 %v5103
    %5152 = vmatprep.subr.mxu0 0.0
    %5153 = vmatpush1.msra.mxu0 %v5104
    %5154 = vmatprep.subr.mxu0 0.0
    %5155 = vmatpush1.msra.mxu0 %v5105
    %5156 = vmatprep.subr.mxu0 0.0
    %5157 = vmatpush1.msra.mxu0 %v5106
    %5158 = vmatprep.subr.mxu0 0.0
    %5159 = vmatpush1.msra.mxu0 %v5107
    %5160 = vmatprep.subr.mxu0 0.0
    %5161 = vmatpush1.msra.mxu0 %v5108
    %5162 = vmatprep.subr.mxu0 0.0
    %5163 = vmatpush1.msra.mxu0 %v5109
    %5164 = vmatprep.subr.mxu0 0.0
    %5165 = vmatpush1.msra.mxu0 %v5110
    %5166 = vmatprep.subr.mxu0 0.0
    %5167 = vmatpush1.msra.mxu0 %v5111
    %5168 = vmatprep.subr.mxu0 0.0
    %5169 = vmatpush1.msra.mxu0 %v5112
    %5170 = vmatprep.subr.mxu0 0.0
    %5171 = vmatpush1.msra.mxu0 %v5113
    %5172 = vmatprep.subr.mxu0 0.0
    %5173 = vmatpush1.msra.mxu0 %v5114
    %5174 = vmatprep.subr.mxu0 0.0
    %5175 = vmatpush1.msra.mxu0 %v5115
    %5176 = vmatprep.subr.mxu0 0.0
    %5177 = vmatpush1.msra.mxu0 %v5116
    %5178 = vmatprep.subr.mxu0 0.0
    %5179 = vmatpush1.msra.mxu0 %v5117
    %5180 = vmatprep.subr.mxu0 0.0
    %5181 = vmatpush1.msra.mxu0 %v5118
    %5182 = vmatprep.subr.mxu0 0.0
    %5183 = vmatpush1.msra.mxu0 %v5119
    %5184 = vmatprep.mubr.f32.mxu0 %v5073
    %5185 = vmatmul.mubr.f32.gmra.mrb[0].mxu0 %v5067
    %v5186 = vpop.f32.mrb[0].mxu0
    %v5187 = vadd.f32 0.0, %v5186
    %v5188 = vpop.f32.mrb[0].mxu0
    %5189 = vdwg.mxu0
    %v5190 = vrcp.pop 32.0
    %v5191 = vmul.f32 %v5187, %v5190
    %5192 = vmatprep.subr.mxu0 0.0
    %5193 = vmatpush1.msra.mxu0 %v5088
    %5194 = vmatprep.subr.mxu0 0.0
    %5195 = vmatpush1.msra.mxu0 %v5089
    %5196 = vmatprep.subr.mxu0 0.0
    %5197 = vmatpush1.msra.mxu0 %v5090
    %5198 = vmatprep.subr.mxu0 0.0
    %5199 = vmatpush1.msra.mxu0 %v5091
    %5200 = vmatprep.subr.mxu0 0.0
    %5201 = vmatpush1.msra.mxu0 %v5092
    %5202 = vmatprep.subr.mxu0 0.0
    %5203 = vmatpush1.msra.mxu0 %v5093
    %5204 = vmatprep.subr.mxu0 0.0
    %5205 = vmatpush1.msra.mxu0 %v5094
    %5206 = vmatprep.subr.mxu0 0.0
    %5207 = vmatpush1.msra.mxu0 %v5095
    %5208 = vmatprep.subr.mxu0 0.0
    %5209 = vmatpush1.msra.mxu0 %v5096
    %5210 = vmatprep.subr.mxu0 0.0
    %5211 = vmatpush1.msra.mxu0 %v5097
    %5212 = vmatprep.subr.mxu0 0.0
    %5213 = vmatpush1.msra.mxu0 %v5098
    %5214 = vmatprep.subr.mxu0 0.0
    %5215 = vmatpush1.msra.mxu0 %v5099
    %5216 = vmatprep.subr.mxu0 0.0
    %5217 = vmatpush1.msra.mxu0 %v5100
    %5218 = vmatprep.subr.mxu0 0.0
    %5219 = vmatpush1.msra.mxu0 %v5101
    %5220 = vmatprep.subr.mxu0 0.0
    %5221 = vmatpush1.msra.mxu0 %v5102
    %5222 = vmatprep.subr.mxu0 0.0
    %5223 = vmatpush1.msra.mxu0 %v5103
    %5224 = vmatprep.subr.mxu0 0.0
    %5225 = vmatpush1.msra.mxu0 %v5104
    %5226 = vmatprep.subr.mxu0 0.0
    %5227 = vmatpush1.msra.mxu0 %v5105
    %5228 = vmatprep.subr.mxu0 0.0
    %5229 = vmatpush1.msra.mxu0 %v5106
    %5230 = vmatprep.subr.mxu0 0.0
    %5231 = vmatpush1.msra.mxu0 %v5107
    %5232 = vmatprep.subr.mxu0 0.0
    %5233 = vmatpush1.msra.mxu0 %v5108
    %5234 = vmatprep.subr.mxu0 0.0
    %5235 = vmatpush1.msra.mxu0 %v5109
    %5236 = vmatprep.subr.mxu0 0.0
    %5237 = vmatpush1.msra.mxu0 %v5110
    %5238 = vmatprep.subr.mxu0 0.0
    %5239 = vmatpush1.msra.mxu0 %v5111
    %5240 = vmatprep.subr.mxu0 0.0
    %5241 = vmatpush1.msra.mxu0 %v5112
    %5242 = vmatprep.subr.mxu0 0.0
    %5243 = vmatpush1.msra.mxu0 %v5113
    %5244 = vmatprep.subr.mxu0 0.0
    %5245 = vmatpush1.msra.mxu0 %v5114
    %5246 = vmatprep.subr.mxu0 0.0
    %5247 = vmatpush1.msra.mxu0 %v5115
    %5248 = vmatprep.subr.mxu0 0.0
    %5249 = vmatpush1.msra.mxu0 %v5116
    %5250 = vmatprep.subr.mxu0 0.0
    %5251 = vmatpush1.msra.mxu0 %v5117
    %5252 = vmatprep.subr.mxu0 0.0
    %5253 = vmatpush1.msra.mxu0 %v5118
    %5254 = vmatprep.subr.mxu0 0.0
    %5255 = vmatpush1.msra.mxu0 %v5119
    %5256 = vmatprep.mubr.f32.mxu0 %v5087
    %5257 = vmatmul.mubr.f32.gmra.mrb[0].mxu0 %v5081
    %v5258 = vpop.f32.mrb[0].mxu0
    %v5259 = vadd.f32 0.0, %v5258
    %v5260 = vpop.f32.mrb[0].mxu0
    %5261 = vdwg.mxu0
    %v5262 = vmul.f32 %v5259, %v5190
    %v5263 = vmul.f32 %v5191, %v5191
    %v5264 = vsub.f32 %v5262, %v5263
    %v5265 = vld [vmem:[%s16] sm:$0x3]
    %v5266 = vadd.f32 %v5264, 1e-05
    %v5267 = vrsqrt.pop %v5266
    %v5268 = vmul.f32 %v5265, %v5267
    %v5269 = vmul.f32 %v5191, %v5268
    %v5271 = vrot.slane %v5269, 7
    %v5273 = vsub.f32 %v5265, %v5271
    %v5274 = vld [vmem:[%s18] sm:$0xff]
    %v5275 = vld [vmem:[%s18 + $0x8] sm:$0xff]
    %v5276 = vld [vmem:[%s18 + $0x10] sm:$0xff]
    %v5277 = vld [vmem:[%s18 + $0x18] sm:$0xff]
    %v5278 = vld [vmem:[%s18 + $0x20] sm:$0xff]
    %v5279 = vld [vmem:[%s18 + $0x28] sm:$0xff]
    %v5280 = vld [vmem:[%s18 + $0x30] sm:$0xff]
    %v5281 = vld [vmem:[%s18 + $0x38] sm:$0xff]
    %v5282 = vld [vmem:[%s18 + $0x40] sm:$0xff]
    %v5283 = vld [vmem:[%s18 + $0x48] sm:$0xff]
    %v5284 = vld [vmem:[%s18 + $0x50] sm:$0xff]
    %v5285 = vld [vmem:[%s18 + $0x58] sm:$0xff]
    %v5286 = vld [vmem:[%s18 + $0x60] sm:$0xff]
    %v5287 = vld [vmem:[%s18 + $0x68] sm:$0xff]
    %v5288 = vld [vmem:[%s18 + $0x70] sm:$0xff]
    %v5289 = vld [vmem:[%s18 + $0x78] sm:$0xff]
    %v5291 = vsel %vm469, %v5268, 0
    %5293 = vmatprep.subr.mxu0 %v5275
    %5294 = vmatpush1.msra.mxu0 %v5274
    %5295 = vmatprep.subr.mxu0 %v5277
    %5296 = vmatpush1.msra.mxu0 %v5276
    %5297 = vmatprep.subr.mxu0 %v5279
    %5298 = vmatpush1.msra.mxu0 %v5278
    %5299 = vmatprep.subr.mxu0 %v5281
    %5300 = vmatpush1.msra.mxu0 %v5280
    %5301 = vmatprep.subr.mxu0 %v5283
    %5302 = vmatpush1.msra.mxu0 %v5282
    %5303 = vmatprep.subr.mxu0 %v5285
    %5304 = vmatpush1.msra.mxu0 %v5284
    %5305 = vmatprep.subr.mxu0 %v5287
    %5306 = vmatpush1.msra.mxu0 %v5286
    %5307 = vmatprep.subr.mxu0 %v5289
    %5308 = vmatpush1.msra.mxu0 %v5288
    %5309 = vmatprep.subr.mxu0 0.0
    %5310 = vmatpush1.msra.mxu0 0.0
    %5311 = vmatprep.subr.mxu0 0.0
    %5312 = vmatpush1.msra.mxu0 0.0
    %5313 = vmatprep.subr.mxu0 0.0
    %5314 = vmatpush1.msra.mxu0 0.0
    %5315 = vmatprep.subr.mxu0 0.0
    %5316 = vmatpush1.msra.mxu0 0.0
    %5317 = vmatprep.subr.mxu0 0.0
    %5318 = vmatpush1.msra.mxu0 0.0
    %5319 = vmatprep.subr.mxu0 0.0
    %5320 = vmatpush1.msra.mxu0 0.0
    %5321 = vmatprep.subr.mxu0 0.0
    %5322 = vmatpush1.msra.mxu0 0.0
    %5323 = vmatprep.subr.mxu0 0.0
    %5324 = vmatpush1.msra.mxu0 0.0
    %5325 = vmatprep.subr.mxu0 0.0
    %5326 = vmatpush1.msra.mxu0 0.0
    %5327 = vmatprep.subr.mxu0 0.0
    %5328 = vmatpush1.msra.mxu0 0.0
    %5329 = vmatprep.subr.mxu0 0.0
    %5330 = vmatpush1.msra.mxu0 0.0
    %5331 = vmatprep.subr.mxu0 0.0
    %5332 = vmatpush1.msra.mxu0 0.0
    %5333 = vmatprep.subr.mxu0 0.0
    %5334 = vmatpush1.msra.mxu0 0.0
    %5335 = vmatprep.subr.mxu0 0.0
    %5336 = vmatpush1.msra.mxu0 0.0
    %5337 = vmatprep.subr.mxu0 0.0
    %5338 = vmatpush1.msra.mxu0 0.0
    %5339 = vmatprep.subr.mxu0 0.0
    %5340 = vmatpush1.msra.mxu0 0.0
    %5341 = vmatprep.subr.mxu0 0.0
    %5342 = vmatpush1.msra.mxu0 0.0
    %5343 = vmatprep.subr.mxu0 0.0
    %5344 = vmatpush1.msra.mxu0 0.0
    %5345 = vmatprep.subr.mxu0 0.0
    %5346 = vmatpush1.msra.mxu0 0.0
    %5347 = vmatprep.subr.mxu0 0.0
    %5348 = vmatpush1.msra.mxu0 0.0
    %5349 = vmatprep.subr.mxu0 0.0
    %5350 = vmatpush1.msra.mxu0 0.0
    %5351 = vmatprep.subr.mxu0 0.0
    %5352 = vmatpush1.msra.mxu0 0.0
    %5353 = vmatprep.subr.mxu0 0.0
    %5354 = vmatpush1.msra.mxu0 0.0
    %5355 = vmatprep.subr.mxu0 0.0
    %5356 = vmatpush1.msra.mxu0 0.0
    %5357 = vmatprep.mubr.f32.mxu0 0.0
    %5358 = vmatmul.mubr.f32.gmra.mrb[0].mxu0 %v5291
    %v5359 = vpop.f32.mrb[0].mxu0
    %v5360 = vadd.f32 0.0, %v5359
    %v5361 = vpop.f32.mrb[0].mxu0
    %v5362 = vadd.f32 0.0, %v5361
    %5363 = vdwg.mxu0
    %v5365 = vrot.slane %v5273, 1
    %v5366 = vsel %vm469, %v5365, 0
    %5368 = vmatprep.subr.mxu0 %v5275
    %5369 = vmatpush1.msra.mxu0 %v5274
    %5370 = vmatprep.subr.mxu0 %v5277
    %5371 = vmatpush1.msra.mxu0 %v5276
    %5372 = vmatprep.subr.mxu0 %v5279
    %5373 = vmatpush1.msra.mxu0 %v5278
    %5374 = vmatprep.subr.mxu0 %v5281
    %5375 = vmatpush1.msra.mxu0 %v5280
    %5376 = vmatprep.subr.mxu0 %v5283
    %5377 = vmatpush1.msra.mxu0 %v5282
    %5378 = vmatprep.subr.mxu0 %v5285
    %5379 = vmatpush1.msra.mxu0 %v5284
    %5380 = vmatprep.subr.mxu0 %v5287
    %5381 = vmatpush1.msra.mxu0 %v5286
    %5382 = vmatprep.subr.mxu0 %v5289
    %5383 = vmatpush1.msra.mxu0 %v5288
    %5384 = vmatprep.subr.mxu0 0.0
    %5385 = vmatpush1.msra.mxu0 0.0
    %5386 = vmatprep.subr.mxu0 0.0
    %5387 = vmatpush1.msra.mxu0 0.0
    %5388 = vmatprep.subr.mxu0 0.0
    %5389 = vmatpush1.msra.mxu0 0.0
    %5390 = vmatprep.subr.mxu0 0.0
    %5391 = vmatpush1.msra.mxu0 0.0
    %5392 = vmatprep.subr.mxu0 0.0
    %5393 = vmatpush1.msra.mxu0 0.0
    %5394 = vmatprep.subr.mxu0 0.0
    %5395 = vmatpush1.msra.mxu0 0.0
    %5396 = vmatprep.subr.mxu0 0.0
    %5397 = vmatpush1.msra.mxu0 0.0
    %5398 = vmatprep.subr.mxu0 0.0
    %5399 = vmatpush1.msra.mxu0 0.0
    %5400 = vmatprep.subr.mxu0 0.0
    %5401 = vmatpush1.msra.mxu0 0.0
    %5402 = vmatprep.subr.mxu0 0.0
    %5403 = vmatpush1.msra.mxu0 0.0
    %5404 = vmatprep.subr.mxu0 0.0
    %5405 = vmatpush1.msra.mxu0 0.0
    %5406 = vmatprep.subr.mxu0 0.0
    %5407 = vmatpush1.msra.mxu0 0.0
    %5408 = vmatprep.subr.mxu0 0.0
    %5409 = vmatpush1.msra.mxu0 0.0
    %5410 = vmatprep.subr.mxu0 0.0
    %5411 = vmatpush1.msra.mxu0 0.0
    %5412 = vmatprep.subr.mxu0 0.0
    %5413 = vmatpush1.msra.mxu0 0.0
    %5414 = vmatprep.subr.mxu0 0.0
    %5415 = vmatpush1.msra.mxu0 0.0
    %5416 = vmatprep.subr.mxu0 0.0
    %5417 = vmatpush1.msra.mxu0 0.0
    %5418 = vmatprep.subr.mxu0 0.0
    %5419 = vmatpush1.msra.mxu0 0.0
    %5420 = vmatprep.subr.mxu0 0.0
    %5421 = vmatpush1.msra.mxu0 0.0
    %5422 = vmatprep.subr.mxu0 0.0
    %5423 = vmatpush1.msra.mxu0 0.0
    %5424 = vmatprep.subr.mxu0 0.0
    %5425 = vmatpush1.msra.mxu0 0.0
    %5426 = vmatprep.subr.mxu0 0.0
    %5427 = vmatpush1.msra.mxu0 0.0
    %5428 = vmatprep.subr.mxu0 0.0
    %5429 = vmatpush1.msra.mxu0 0.0
    %5430 = vmatprep.subr.mxu0 0.0
    %5431 = vmatpush1.msra.mxu0 0.0
    %5432 = vmatprep.mubr.f32.mxu0 0.0
    %5433 = vmatmul.mubr.f32.gmra.mrb[0].mxu0 %v5366
    %v5434 = vpop.f32.mrb[0].mxu0
    %v5435 = vadd.f32 0.0, %v5434
    %v5436 = vpop.f32.mrb[0].mxu0
    %v5437 = vadd.f32 0.0, %v5436
    %5438 = vdwg.mxu0
    %v5439 = vlaneseq
    %v5440 = vshrl.u32 %v5439, 7
    %v5441 = vsub.s32 0, %v5440
    %v5442 = vrot.slane %v5360, %v5441
    %v5443 = vlaneseq
    %v5444 = vshrl.u32 %v5443, 7
    %v5445 = vsub.s32 0, %v5444
    %v5446 = vrot.slane %v5362, %v5445
    %v5447 = vmul.f32 %v5060, %v5442
    %v5448 = vmul.f32 %v5061, %v5446
    %v5449 = vlaneseq
    %v5450 = vshrl.u32 %v5449, 7
    %v5451 = vsub.s32 0, %v5450
    %v5452 = vrot.slane %v5435, %v5451
    %v5453 = vlaneseq
    %v5454 = vshrl.u32 %v5453, 7
    %v5455 = vsub.s32 0, %v5454
    %v5456 = vrot.slane %v5437, %v5455
    %v5457 = vadd.f32 %v5447, %v5452
    %v5458 = vadd.f32 %v5448, %v5456
    %vm5459 = vcmp.gt.f32.partialorder %v5457, 0.0
    %vm5460 = vcmp.gt.f32.partialorder %v5458, 0.0
    %v5461 = vmul.f32 %v5457, 0.2
    %v5462 = vmul.f32 %v5458, 0.2
    %v5463 = vsel %vm5459, %v5457, %v5461
    %v5464 = vsel %vm5460, %v5458, %v5462
    %v5465 = vld [vmem:[%s19] sm:$0xff]
    %v5466 = vld [vmem:[%s19 + $0x8] sm:$0xff]
    %v5467 = vmul.f32 %v5463, %v5465
    %v5468 = vmul.f32 %v5464, %v5466
    %v5469 = vld [vmem:[%s20] sm:$0x3]
    %vm5470 = vcmask 64512
    %v5472 = vsel %vm5470, %v5469, 0
    %5474 = vmatprep.subr.mxu0 %v5468
    %5475 = vmatpush1.msra.mxu0 %v5467
    %5476 = vmatprep.subr.mxu0 0.0
    %5477 = vmatpush1.msra.mxu0 0.0
    %5478 = vmatprep.subr.mxu0 0.0
    %5479 = vmatpush1.msra.mxu0 0.0
    %5480 = vmatprep.subr.mxu0 0.0
    %5481 = vmatpush1.msra.mxu0 0.0
    %5482 = vmatprep.subr.mxu0 0.0
    %5483 = vmatpush1.msra.mxu0 0.0
    %5484 = vmatprep.subr.mxu0 0.0
    %5485 = vmatpush1.msra.mxu0 0.0
    %5486 = vmatprep.subr.mxu0 0.0
    %5487 = vmatpush1.msra.mxu0 0.0
    %5488 = vmatprep.subr.mxu0 0.0
    %5489 = vmatpush1.msra.mxu0 0.0
    %5490 = vmatprep.subr.mxu0 0.0
    %5491 = vmatpush1.msra.mxu0 0.0
    %5492 = vmatprep.subr.mxu0 0.0
    %5493 = vmatpush1.msra.mxu0 0.0
    %5494 = vmatprep.subr.mxu0 0.0
    %5495 = vmatpush1.msra.mxu0 0.0
    %5496 = vmatprep.subr.mxu0 0.0
    %5497 = vmatpush1.msra.mxu0 0.0
    %5498 = vmatprep.subr.mxu0 0.0
    %5499 = vmatpush1.msra.mxu0 0.0
    %5500 = vmatprep.subr.mxu0 0.0
    %5501 = vmatpush1.msra.mxu0 0.0
    %5502 = vmatprep.subr.mxu0 0.0
    %5503 = vmatpush1.msra.mxu0 0.0
    %5504 = vmatprep.subr.mxu0 0.0
    %5505 = vmatpush1.msra.mxu0 0.0
    %5506 = vmatprep.subr.mxu0 0.0
    %5507 = vmatpush1.msra.mxu0 0.0
    %5508 = vmatprep.subr.mxu0 0.0
    %5509 = vmatpush1.msra.mxu0 0.0
    %5510 = vmatprep.subr.mxu0 0.0
    %5511 = vmatpush1.msra.mxu0 0.0
    %5512 = vmatprep.subr.mxu0 0.0
    %5513 = vmatpush1.msra.mxu0 0.0
    %5514 = vmatprep.subr.mxu0 0.0
    %5515 = vmatpush1.msra.mxu0 0.0
    %5516 = vmatprep.subr.mxu0 0.0
    %5517 = vmatpush1.msra.mxu0 0.0
    %5518 = vmatprep.subr.mxu0 0.0
    %5519 = vmatpush1.msra.mxu0 0.0
    %5520 = vmatprep.subr.mxu0 0.0
    %5521 = vmatpush1.msra.mxu0 0.0
    %5522 = vmatprep.subr.mxu0 0.0
    %5523 = vmatpush1.msra.mxu0 0.0
    %5524 = vmatprep.subr.mxu0 0.0
    %5525 = vmatpush1.msra.mxu0 0.0
    %5526 = vmatprep.subr.mxu0 0.0
    %5527 = vmatpush1.msra.mxu0 0.0
    %5528 = vmatprep.subr.mxu0 0.0
    %5529 = vmatpush1.msra.mxu0 0.0
    %5530 = vmatprep.subr.mxu0 0.0
    %5531 = vmatpush1.msra.mxu0 0.0
    %5532 = vmatprep.subr.mxu0 0.0
    %5533 = vmatpush1.msra.mxu0 0.0
    %5534 = vmatprep.subr.mxu0 0.0
    %5535 = vmatpush1.msra.mxu0 0.0
    %5536 = vmatprep.subr.mxu0 0.0
    %5537 = vmatpush1.msra.mxu0 0.0
    %5538 = vmatprep.mubr.f32.mxu0 0.0
    %5539 = vmatmul.mubr.f32.gmra.mrb[0].mxu0 %v5472
    %v5540 = vpop.f32.mrb[0].mxu0
    %v5541 = vadd.f32 0.0, %v5540
    %v5542 = vpop.f32.mrb[0].mxu0
    %v5543 = vadd.f32 0.0, %v5542
    %5544 = vdwg.mxu0
    %vm5545 = vcmask 1041408
    %v5546 = vsel %vm5545, %v5541, 0.0
    %v5547 = vsel %vm5545, %v5543, 0.0
    %v5548 = vadd.f32 %v5546, %v5547
    %5549 = vadd.xlane.f32.xlu0 %v5548
    %v5550 = vpop.xlane.xlu0 %5549
    %v5551 = vld [vmem:[#allocation2] sm:$0x1]
    %v5553 = vlaneseq
    %v5554 = vshrl.u32 %v5553, 7
    %v5555 = vsub.s32 0, %v5554
    %v5556 = vrot.slane %v5551, %v5555
    %v5558 = vadd.f32 %v5550, %v5556
    %vm5559 = vcmask 1024
    %5560 = vst.msk [vmem:[%s22] sm:$0x3] %vm5559, %v5558
    // Predicated region
    $region126: #{dc_discriminator_forward.1} parent=1 // pred_check
      _
    $region127: #{dc_discriminator_forward.1} parent=1 // pred_check_branch
      %5562 = sbr.rel (0) target = $region129
    $region128: #{dc_discriminator_forward.1} parent=1 // pred_region
      _
    $region129: #{dc_discriminator_forward.1} parent=1 // pred_fallthru
      _
    // Predicated region
    $region130: #{dc_discriminator_forward.1} parent=1 // pred_check
      _
    $region131: #{dc_discriminator_forward.1} parent=1 // pred_check_branch
      %5564 = sbr.rel (0) target = $region133
    $region132: #{dc_discriminator_forward.1} parent=1 // pred_region
      _
    $region133: #{dc_discriminator_forward.1} parent=1 // pred_fallthru
      _
    %5565 = vsyncpa [#allocation4], 1
    %5566 = vsyncpa [#allocation6], 1
    %5567 = vsyncpa [#allocation9], 1
    %5568 = vsyncpa [#allocation12], 1
    %5569 = vsyncpa [#allocation15], 1

</llo_original>
